<compile_context>
chip_gen: v6e
topology: v6e:2x2x1
jax: 0.10.0
libtpu: 0.0.40
codegen_flags: <defaults>
</compile_context>

<pallas_src>
import jax
import jax.numpy as jnp
from jax.experimental import pallas as pl
from jax.experimental.pallas import tpu as pltpu


_CHANNELS = [(3, 16), (16, 32), (32, 64), (64, 128)]
_NUM_CLASSES = 5
_BN_EPS = 1e-5
_CPAD = 128      # lane-dense channel padding
_K1 = 32         # block-1 im2col K (3x3x3 = 27 padded to 32)


# ----------------------------- fused kernel ---------------------------------

def _pool2x2(y, n, h, w):
    """2x2 stride-2 max pool.  y: (n*h*w, C) f32, rows ordered (n, h, w)."""
    c = y.shape[-1]
    y = y.reshape(n * h * (w // 2), 2, c)
    y = jnp.maximum(y[:, 0, :], y[:, 1, :])              # pool along W
    y = y.reshape(n * (h // 2), 2, w // 2, c)
    y = jnp.maximum(y[:, 0, :, :], y[:, 1, :, :])        # pool along H (outer dim)
    return y.reshape(n, h // 2, w // 2, c)


def fused_flower_kernel(xcol_ref, w1_ref, w234_ref, sb_ref, wfc_ref, bfc_ref,
                        out_ref, pad2, pad3, pad4):
    n = out_ref.shape[0]

    # Zero the conv pad scratch once per call (single grid step).  Borders stay
    # zero; interiors are fully overwritten below.  ~30 vregs of stores total.
    pad2[...] = jnp.zeros(pad2.shape, pad2.dtype)
    pad3[...] = jnp.zeros(pad3.shape, pad3.dtype)
    pad4[...] = jnp.zeros(pad4.shape, pad4.dtype)

    # ---- Block 1: single im2col matmul (M=n*H*W, K=32, N=128) + BN/ReLU + pool.
    y = jnp.dot(xcol_ref[...], w1_ref[...], preferred_element_type=jnp.float32)
    y = jnp.maximum(y * sb_ref[0, 0:1, :] + sb_ref[0, 1:2, :], 0.0)
    h = (pad2.shape[1] - 2) * 2
    w = (pad2.shape[2] - 2) * 2
    a = _pool2x2(y, n, h, w)                             # (n, h/2, w/2, 128) f32

    # ---- Blocks 2-4: 3x3 conv as 9 shifted K=128 MXU matmuls (3-slab trick),
    #      folded BN + ReLU + 2x2 pool, all VMEM resident.
    for i, pad_ref in enumerate((pad2, pad3, pad4)):
        _, h, w, c = a.shape
        pad_ref[:, 1:h + 1, 1:w + 1, :] = a.astype(pad_ref.dtype)   # interior only
        acc = None
        for dw in range(3):
            # One relayout per dw shift; the dh taps are contiguous row slices.
            slab = pad_ref[:, :, dw:dw + w, :].reshape(n, (h + 2) * w, c)
            for dh in range(3):
                tap = slab[:, dh * w: dh * w + h * w, :].reshape(n * h * w, c)
                part = jnp.dot(tap, w234_ref[i, dh * 3 + dw],
                               preferred_element_type=jnp.float32)
                acc = part if acc is None else acc + part
        y = jnp.maximum(acc * sb_ref[i + 1, 0:1, :] + sb_ref[i + 1, 1:2, :], 0.0)
        a = _pool2x2(y, n, h, w)

    # ---- Global average pool + Linear(128 -> 5) + softmax (f32).
    feats = jnp.mean(a, axis=(1, 2))                     # (n, 128)
    logits = jnp.dot(feats, wfc_ref[...],
                     preferred_element_type=jnp.float32) + bfc_ref[...]
    m = jnp.max(logits, axis=-1, keepdims=True)
    e = jnp.exp(logits - m)
    out_ref[...] = e / jnp.sum(e, axis=-1, keepdims=True)


# ----------------------------- wrapper ---------------------------------------

def flower_forward(params, x_nchw):
    """params: output of prepare_params().  x_nchw: (N, 3, H, W) f32."""
    x = jnp.transpose(x_nchw, (0, 2, 3, 1)).astype(jnp.float32)      # NHWC
    n, h, w, _ = x.shape

    # Block-1 im2col (layout plumbing only): (n,h,w,3) -> (n*h*w, 32) bf16,
    # column order = (dh, dw, ci), matching w1 packing in prepare_params().
    xp = jnp.pad(x, ((0, 0), (1, 1), (1, 1), (0, 0)))
    cols = [xp[:, dh:dh + h, dw:dw + w, :] for dh in range(3) for dw in range(3)]
    xcol = jnp.concatenate(cols, axis=-1)                             # (n,h,w,27)
    xcol = jnp.pad(xcol, ((0, 0), (0, 0), (0, 0), (0, _K1 - 27)))
    xcol = xcol.reshape(n * h * w, _K1).astype(jnp.bfloat16)

    num_classes = params["wfc"].shape[-1]
    out = pl.pallas_call(
        fused_flower_kernel,
        out_shape=jax.ShapeDtypeStruct((n, num_classes), jnp.float32),
        grid_spec=pltpu.PrefetchScalarGridSpec(
            num_scalar_prefetch=0,
            grid=(1,),                       # whole batch in one grid step
            in_specs=[
                pl.BlockSpec(xcol.shape, lambda g: (0, 0)),
                pl.BlockSpec(params["w1"].shape, lambda g: (0, 0)),
                pl.BlockSpec(params["w234"].shape, lambda g: (0, 0, 0, 0)),
                pl.BlockSpec(params["sb"].shape, lambda g: (0, 0, 0)),
                pl.BlockSpec(params["wfc"].shape, lambda g: (0, 0)),
                pl.BlockSpec(params["bfc"].shape, lambda g: (0, 0)),
            ],
            out_specs=pl.BlockSpec((n, num_classes), lambda g: (0, 0)),
            scratch_shapes=[
                pltpu.VMEM((n, h // 2 + 2, w // 2 + 2, _CPAD), jnp.bfloat16),
                pltpu.VMEM((n, h // 4 + 2, w // 4 + 2, _CPAD), jnp.bfloat16),
                pltpu.VMEM((n, h // 8 + 2, w // 8 + 2, _CPAD), jnp.bfloat16),
            ]),
    )(xcol, params["w1"], params["w234"], params["sb"],
      params["wfc"], params["bfc"])
    return out                                            # (N, 5) probabilities


# -------------------- deterministic params + preparation ---------------------

def init_raw_params(key):
    """HWIO conv weights, conv bias, BN params/stats, FC weights."""
    blocks = []
    for cin, cout in _CHANNELS:
        key, kw, kb, kg, kbe, km, kv = jax.random.split(key, 7)
        blocks.append(dict(
            w=jax.random.normal(kw, (3, 3, cin, cout), jnp.float32) / jnp.sqrt(9.0 * cin),
            conv_b=0.05 * jax.random.normal(kb, (cout,), jnp.float32),
            gamma=1.0 + 0.1 * jax.random.normal(kg, (cout,), jnp.float32),
            beta=0.1 * jax.random.normal(kbe, (cout,), jnp.float32),
            mean=0.05 * jax.random.normal(km, (cout,), jnp.float32),
            var=1.0 + 0.1 * jnp.abs(jax.random.normal(kv, (cout,), jnp.float32)),
        ))
    key, kw, kb = jax.random.split(key, 3)
    return dict(
        blocks=blocks,
        wfc=jax.random.normal(kw, (128, _NUM_CLASSES), jnp.float32) / jnp.sqrt(128.0),
        bfc=0.05 * jax.random.normal(kb, (_NUM_CLASSES,), jnp.float32),
    )


def prepare_params(raw):
    """Fold eval-mode BN + conv bias into scale/bias, pack & pad weights."""
    scales, biases = [], []
    for blk in raw["blocks"]:
        cout = blk["w"].shape[-1]
        s = blk["gamma"] / jnp.sqrt(blk["var"] + _BN_EPS)
        b = (blk["conv_b"] - blk["mean"]) * s + blk["beta"]
        scales.append(jnp.pad(s, (0, _CPAD - cout)))
        biases.append(jnp.pad(b, (0, _CPAD - cout)))
    sb = jnp.stack([jnp.stack([s, b]) for s, b in zip(scales, biases)])  # (4,2,128)

    # Block 1: im2col-packed weight (rows ordered (dh, dw, ci)), K 27->32, Cout 16->128.
    w1 = raw["blocks"][0]["w"].reshape(27, 16)
    w1 = jnp.pad(w1, ((0, _K1 - 27), (0, _CPAD - 16))).astype(jnp.bfloat16)

    # Blocks 2-4: per-tap weights (tap index = dh*3 + dw), channels padded to 128.
    w234 = []
    for blk in raw["blocks"][1:]:
        _, _, cin, cout = blk["w"].shape
        w9 = blk["w"].reshape(9, cin, cout)
        w234.append(jnp.pad(w9, ((0, 0), (0, _CPAD - cin), (0, _CPAD - cout))))
    w234 = jnp.stack(w234).astype(jnp.bfloat16)                          # (3,9,128,128)

    return dict(w1=w1, w234=w234, sb=sb.astype(jnp.float32),
                wfc=raw["wfc"].astype(jnp.float32),
                bfc=raw["bfc"].reshape(1, _NUM_CLASSES).astype(jnp.float32))


# ----------------------------- pure-JAX reference -----------------------------

def flower_reference(raw, x_nchw):
    x = jnp.transpose(x_nchw, (0, 2, 3, 1)).astype(jnp.float32)
    for blk in raw["blocks"]:
        scale = blk["gamma"] / jnp.sqrt(blk["var"] + _BN_EPS)
        bias = (blk["conv_b"] - blk["mean"]) * scale + blk["beta"]
        y = jax.lax.conv_general_dilated(
            x.astype(jnp.bfloat16), blk["w"].astype(jnp.bfloat16),
            window_strides=(1, 1), padding="SAME",
            dimension_numbers=("NHWC", "HWIO", "NHWC"),
            preferred_element_type=jnp.float32)
        y = jnp.maximum(y * scale + bias, 0.0)
        nb, hb, wb, cb = y.shape
        x = y.reshape(nb, hb // 2, 2, wb // 2, 2, cb).max(axis=(2, 4))
    feats = jnp.mean(x, axis=(1, 2))
    logits = feats @ raw["wfc"] + raw["bfc"]
    return jax.nn.softmax(logits, axis=-1)


# ----------------------------- main -------------------------------------------

if __name__ == "__main__":
    key = jax.random.PRNGKey(0)
    kp, kx = jax.random.split(key)
    raw = init_raw_params(kp)
    params = prepare_params(raw)
    # Input consistent with Conv2d(3, ...): batch=2, channels=3, spatial=16x16.
    x = jax.random.normal(kx, (2, 3, 16, 16), jnp.float32)

    out = jax.block_until_ready(jax.jit(flower_forward)(params, x))
    ref = jax.block_until_ready(jax.jit(flower_reference)(raw, x))

    assert out.shape == (2, _NUM_CLASSES), out.shape
    assert bool(jnp.all(jnp.isfinite(out)))
    # softmax rows must sum to 1
    assert bool(jnp.allclose(jnp.sum(out, axis=1), 1.0, atol=1e-5))
    # match the pure-JAX (XLA conv) reference within bf16-matmul tolerance
    assert bool(jnp.allclose(out, ref, atol=2e-2)), (out, ref)
    print("KERNEL_OK")
</pallas_src>

<mosaic_0001>
module attributes {stable_mosaic.version = 11 : i64} {
  func.func @fused_flower_kernel(%arg0: i32, %arg1: memref<512x32xbf16, #tpu.memory_space<vmem>>, %arg2: memref<32x128xbf16, #tpu.memory_space<vmem>>, %arg3: memref<3x9x128x128xbf16, #tpu.memory_space<vmem>>, %arg4: memref<4x2x128xf32, #tpu.memory_space<vmem>>, %arg5: memref<128x5xf32, #tpu.memory_space<vmem>>, %arg6: memref<1x5xf32, #tpu.memory_space<vmem>>, %arg7: memref<2x5xf32, #tpu.memory_space<vmem>>, %arg8: memref<2x10x10x128xbf16, #tpu.memory_space<vmem>>, %arg9: memref<2x6x6x128xbf16, #tpu.memory_space<vmem>>, %arg10: memref<2x4x4x128xbf16, #tpu.memory_space<vmem>>) attributes {dimension_semantics = [#tpu.dimension_semantics<arbitrary>], iteration_bounds = array<i64: 1>, scalar_prefetch = 0 : i64, scratch_operands = 3 : i64, tpu.core_type = #tpu.core_type<tc>, window_params = [{pipeline_mode = #tpu.pipeline_mode<synchronous>, transform_indices = @transform_0, window_bounds = array<i64: 512, 32>}, {pipeline_mode = #tpu.pipeline_mode<synchronous>, transform_indices = @transform_1, window_bounds = array<i64: 32, 128>}, {pipeline_mode = #tpu.pipeline_mode<synchronous>, transform_indices = @transform_2, window_bounds = array<i64: 3, 9, 128, 128>}, {pipeline_mode = #tpu.pipeline_mode<synchronous>, transform_indices = @transform_3, window_bounds = array<i64: 4, 2, 128>}, {pipeline_mode = #tpu.pipeline_mode<synchronous>, transform_indices = @transform_4, window_bounds = array<i64: 128, 5>}, {pipeline_mode = #tpu.pipeline_mode<synchronous>, transform_indices = @transform_5, window_bounds = array<i64: 1, 5>}, {pipeline_mode = #tpu.pipeline_mode<synchronous>, transform_indices = @transform_6, window_bounds = array<i64: 2, 5>}]} {
    %cst = arith.constant 0.000000e+00 : bf16
    %0 = vector.broadcast %cst : bf16 to vector<2x10x10x128xbf16>
    %c0 = arith.constant 0 : index
    %c0_0 = arith.constant 0 : index
    %c0_1 = arith.constant 0 : index
    %c0_2 = arith.constant 0 : index
    %1 = vector.load %arg8[%c0, %c0_0, %c0_1, %c0_2] : memref<2x10x10x128xbf16, #tpu.memory_space<vmem>>, vector<2x10x10x128xbf16>
    tpu.vector_store %arg8[%c0, %c0_0, %c0_1, %c0_2], %0 {strides = array<i32>} : memref<2x10x10x128xbf16, #tpu.memory_space<vmem>>, vector<2x10x10x128xbf16>,
    %cst_3 = arith.constant 0.000000e+00 : bf16
    %2 = vector.broadcast %cst_3 : bf16 to vector<2x6x6x128xbf16>
    %c0_4 = arith.constant 0 : index
    %c0_5 = arith.constant 0 : index
    %c0_6 = arith.constant 0 : index
    %c0_7 = arith.constant 0 : index
    %3 = vector.load %arg9[%c0_4, %c0_5, %c0_6, %c0_7] : memref<2x6x6x128xbf16, #tpu.memory_space<vmem>>, vector<2x6x6x128xbf16>
    tpu.vector_store %arg9[%c0_4, %c0_5, %c0_6, %c0_7], %2 {strides = array<i32>} : memref<2x6x6x128xbf16, #tpu.memory_space<vmem>>, vector<2x6x6x128xbf16>,
    %cst_8 = arith.constant 0.000000e+00 : bf16
    %4 = vector.broadcast %cst_8 : bf16 to vector<2x4x4x128xbf16>
    %c0_9 = arith.constant 0 : index
    %c0_10 = arith.constant 0 : index
    %c0_11 = arith.constant 0 : index
    %c0_12 = arith.constant 0 : index
    %5 = vector.load %arg10[%c0_9, %c0_10, %c0_11, %c0_12] : memref<2x4x4x128xbf16, #tpu.memory_space<vmem>>, vector<2x4x4x128xbf16>
    tpu.vector_store %arg10[%c0_9, %c0_10, %c0_11, %c0_12], %4 {strides = array<i32>} : memref<2x4x4x128xbf16, #tpu.memory_space<vmem>>, vector<2x4x4x128xbf16>,
    %c0_13 = arith.constant 0 : index
    %c0_14 = arith.constant 0 : index
    %6 = vector.load %arg1[%c0_13, %c0_14] : memref<512x32xbf16, #tpu.memory_space<vmem>>, vector<512x32xbf16>
    %c0_15 = arith.constant 0 : index
    %c0_16 = arith.constant 0 : index
    %7 = vector.load %arg2[%c0_15, %c0_16] : memref<32x128xbf16, #tpu.memory_space<vmem>>, vector<32x128xbf16>
    %cst_17 = arith.constant dense<0.000000e+00> : vector<512x128xf32>
    %8 = tpu.matmul %6, %7, %cst_17 {dimension_numbers = #tpu.dot_dimension_numbers<[1], [0], [0], [1], [0, 0, 1, 1], [], []>} : vector<512x32xbf16>, vector<32x128xbf16>, vector<512x128xf32> -> vector<512x128xf32>
    %c0_18 = arith.constant 0 : index
    %c0_19 = arith.constant 0 : index
    %c0_20 = arith.constant 0 : index
    %9 = vector.load %arg4[%c0_18, %c0_19, %c0_20] : memref<4x2x128xf32, #tpu.memory_space<vmem>>, vector<1x1x128xf32>
    %10 = vector.shape_cast %9 : vector<1x1x128xf32> to vector<1x128xf32>
    %11 = vector.broadcast %10 : vector<1x128xf32> to vector<512x128xf32>
    %12 = arith.mulf %8, %11 : vector<512x128xf32>
    %c0_21 = arith.constant 0 : index
    %c1 = arith.constant 1 : index
    %c0_22 = arith.constant 0 : index
    %13 = vector.load %arg4[%c0_21, %c1, %c0_22] : memref<4x2x128xf32, #tpu.memory_space<vmem>>, vector<1x1x128xf32>
    %14 = vector.shape_cast %13 : vector<1x1x128xf32> to vector<1x128xf32>
    %15 = vector.broadcast %14 : vector<1x128xf32> to vector<512x128xf32>
    %16 = arith.addf %12, %15 : vector<512x128xf32>
    %cst_23 = arith.constant 0.000000e+00 : f32
    %17 = vector.broadcast %cst_23 : f32 to vector<512x128xf32>
    %18 = arith.maximumf %16, %17 : vector<512x128xf32>
    %19 = vector.shape_cast %18 : vector<512x128xf32> to vector<256x2x128xf32>
    %20 = vector.extract_strided_slice %19 {offsets = [0, 0, 0], sizes = [256, 1, 128], strides = [1, 1, 1]} : vector<256x2x128xf32> to vector<256x1x128xf32>
    %21 = vector.shape_cast %20 : vector<256x1x128xf32> to vector<256x128xf32>
    %22 = vector.extract_strided_slice %19 {offsets = [0, 1, 0], sizes = [256, 1, 128], strides = [1, 1, 1]} : vector<256x2x128xf32> to vector<256x1x128xf32>
    %23 = vector.shape_cast %22 : vector<256x1x128xf32> to vector<256x128xf32>
    %24 = arith.maximumf %21, %23 : vector<256x128xf32>
    %25 = vector.shape_cast %24 : vector<256x128xf32> to vector<16x2x8x128xf32>
    %26 = vector.extract_strided_slice %25 {offsets = [0, 0, 0, 0], sizes = [16, 1, 8, 128], strides = [1, 1, 1, 1]} : vector<16x2x8x128xf32> to vector<16x1x8x128xf32>
    %27 = vector.shape_cast %26 : vector<16x1x8x128xf32> to vector<16x8x128xf32>
    %28 = vector.extract_strided_slice %25 {offsets = [0, 1, 0, 0], sizes = [16, 1, 8, 128], strides = [1, 1, 1, 1]} : vector<16x2x8x128xf32> to vector<16x1x8x128xf32>
    %29 = vector.shape_cast %28 : vector<16x1x8x128xf32> to vector<16x8x128xf32>
    %30 = arith.maximumf %27, %29 : vector<16x8x128xf32>
    %31 = vector.shape_cast %30 : vector<16x8x128xf32> to vector<2x8x8x128xf32>
    %32 = arith.truncf %31 : vector<2x8x8x128xf32> to vector<2x8x8x128xbf16>
    %c0_24 = arith.constant 0 : index
    %c1_25 = arith.constant 1 : index
    %c1_26 = arith.constant 1 : index
    %c0_27 = arith.constant 0 : index
    %33 = vector.load %arg8[%c0_24, %c1_25, %c1_26, %c0_27] : memref<2x10x10x128xbf16, #tpu.memory_space<vmem>>, vector<2x8x8x128xbf16>
    tpu.vector_store %arg8[%c0_24, %c1_25, %c1_26, %c0_27], %32 {strides = array<i32>} : memref<2x10x10x128xbf16, #tpu.memory_space<vmem>>, vector<2x8x8x128xbf16>,
    %c0_28 = arith.constant 0 : index
    %c0_29 = arith.constant 0 : index
    %c0_30 = arith.constant 0 : index
    %c0_31 = arith.constant 0 : index
    %34 = vector.load %arg8[%c0_28, %c0_29, %c0_30, %c0_31] : memref<2x10x10x128xbf16, #tpu.memory_space<vmem>>, vector<2x10x8x128xbf16>
    %35 = vector.shape_cast %34 : vector<2x10x8x128xbf16> to vector<2x80x128xbf16>
    %36 = vector.extract_strided_slice %35 {offsets = [0, 0, 0], sizes = [2, 64, 128], strides = [1, 1, 1]} : vector<2x80x128xbf16> to vector<2x64x128xbf16>
    %37 = vector.shape_cast %36 : vector<2x64x128xbf16> to vector<128x128xbf16>
    %c0_32 = arith.constant 0 : index
    %c0_33 = arith.constant 0 : index
    %c0_34 = arith.constant 0 : index
    %c0_35 = arith.constant 0 : index
    %38 = vector.load %arg3[%c0_32, %c0_33, %c0_34, %c0_35] : memref<3x9x128x128xbf16, #tpu.memory_space<vmem>>, vector<1x1x128x128xbf16>
    %39 = vector.shape_cast %38 : vector<1x1x128x128xbf16> to vector<128x128xbf16>
    %cst_36 = arith.constant dense<0.000000e+00> : vector<128x128xf32>
    %40 = tpu.matmul %37, %39, %cst_36 {dimension_numbers = #tpu.dot_dimension_numbers<[1], [0], [0], [1], [0, 0, 1, 1], [], []>} : vector<128x128xbf16>, vector<128x128xbf16>, vector<128x128xf32> -> vector<128x128xf32>
    %41 = vector.extract_strided_slice %35 {offsets = [0, 8, 0], sizes = [2, 64, 128], strides = [1, 1, 1]} : vector<2x80x128xbf16> to vector<2x64x128xbf16>
    %42 = vector.shape_cast %41 : vector<2x64x128xbf16> to vector<128x128xbf16>
    %c0_37 = arith.constant 0 : index
    %c3 = arith.constant 3 : index
    %c0_38 = arith.constant 0 : index
    %c0_39 = arith.constant 0 : index
    %43 = vector.load %arg3[%c0_37, %c3, %c0_38, %c0_39] : memref<3x9x128x128xbf16, #tpu.memory_space<vmem>>, vector<1x1x128x128xbf16>
    %44 = vector.shape_cast %43 : vector<1x1x128x128xbf16> to vector<128x128xbf16>
    %cst_40 = arith.constant dense<0.000000e+00> : vector<128x128xf32>
    %45 = tpu.matmul %42, %44, %cst_40 {dimension_numbers = #tpu.dot_dimension_numbers<[1], [0], [0], [1], [0, 0, 1, 1], [], []>} : vector<128x128xbf16>, vector<128x128xbf16>, vector<128x128xf32> -> vector<128x128xf32>
    %46 = arith.addf %40, %45 : vector<128x128xf32>
    %47 = vector.extract_strided_slice %35 {offsets = [0, 16, 0], sizes = [2, 64, 128], strides = [1, 1, 1]} : vector<2x80x128xbf16> to vector<2x64x128xbf16>
    %48 = vector.shape_cast %47 : vector<2x64x128xbf16> to vector<128x128xbf16>
    %c0_41 = arith.constant 0 : index
    %c6 = arith.constant 6 : index
    %c0_42 = arith.constant 0 : index
    %c0_43 = arith.constant 0 : index
    %49 = vector.load %arg3[%c0_41, %c6, %c0_42, %c0_43] : memref<3x9x128x128xbf16, #tpu.memory_space<vmem>>, vector<1x1x128x128xbf16>
    %50 = vector.shape_cast %49 : vector<1x1x128x128xbf16> to vector<128x128xbf16>
    %cst_44 = arith.constant dense<0.000000e+00> : vector<128x128xf32>
    %51 = tpu.matmul %48, %50, %cst_44 {dimension_numbers = #tpu.dot_dimension_numbers<[1], [0], [0], [1], [0, 0, 1, 1], [], []>} : vector<128x128xbf16>, vector<128x128xbf16>, vector<128x128xf32> -> vector<128x128xf32>
    %52 = arith.addf %46, %51 : vector<128x128xf32>
    %c0_45 = arith.constant 0 : index
    %c0_46 = arith.constant 0 : index
    %c1_47 = arith.constant 1 : index
    %c0_48 = arith.constant 0 : index
    %53 = vector.load %arg8[%c0_45, %c0_46, %c1_47, %c0_48] : memref<2x10x10x128xbf16, #tpu.memory_space<vmem>>, vector<2x10x8x128xbf16>
    %54 = vector.shape_cast %53 : vector<2x10x8x128xbf16> to vector<2x80x128xbf16>
    %55 = vector.extract_strided_slice %54 {offsets = [0, 0, 0], sizes = [2, 64, 128], strides = [1, 1, 1]} : vector<2x80x128xbf16> to vector<2x64x128xbf16>
    %56 = vector.shape_cast %55 : vector<2x64x128xbf16> to vector<128x128xbf16>
    %c0_49 = arith.constant 0 : index
    %c1_50 = arith.constant 1 : index
    %c0_51 = arith.constant 0 : index
    %c0_52 = arith.constant 0 : index
    %57 = vector.load %arg3[%c0_49, %c1_50, %c0_51, %c0_52] : memref<3x9x128x128xbf16, #tpu.memory_space<vmem>>, vector<1x1x128x128xbf16>
    %58 = vector.shape_cast %57 : vector<1x1x128x128xbf16> to vector<128x128xbf16>
    %cst_53 = arith.constant dense<0.000000e+00> : vector<128x128xf32>
    %59 = tpu.matmul %56, %58, %cst_53 {dimension_numbers = #tpu.dot_dimension_numbers<[1], [0], [0], [1], [0, 0, 1, 1], [], []>} : vector<128x128xbf16>, vector<128x128xbf16>, vector<128x128xf32> -> vector<128x128xf32>
    %60 = arith.addf %52, %59 : vector<128x128xf32>
    %61 = vector.extract_strided_slice %54 {offsets = [0, 8, 0], sizes = [2, 64, 128], strides = [1, 1, 1]} : vector<2x80x128xbf16> to vector<2x64x128xbf16>
    %62 = vector.shape_cast %61 : vector<2x64x128xbf16> to vector<128x128xbf16>
    %c0_54 = arith.constant 0 : index
    %c4 = arith.constant 4 : index
    %c0_55 = arith.constant 0 : index
    %c0_56 = arith.constant 0 : index
    %63 = vector.load %arg3[%c0_54, %c4, %c0_55, %c0_56] : memref<3x9x128x128xbf16, #tpu.memory_space<vmem>>, vector<1x1x128x128xbf16>
    %64 = vector.shape_cast %63 : vector<1x1x128x128xbf16> to vector<128x128xbf16>
    %cst_57 = arith.constant dense<0.000000e+00> : vector<128x128xf32>
    %65 = tpu.matmul %62, %64, %cst_57 {dimension_numbers = #tpu.dot_dimension_numbers<[1], [0], [0], [1], [0, 0, 1, 1], [], []>} : vector<128x128xbf16>, vector<128x128xbf16>, vector<128x128xf32> -> vector<128x128xf32>
    %66 = arith.addf %60, %65 : vector<128x128xf32>
    %67 = vector.extract_strided_slice %54 {offsets = [0, 16, 0], sizes = [2, 64, 128], strides = [1, 1, 1]} : vector<2x80x128xbf16> to vector<2x64x128xbf16>
    %68 = vector.shape_cast %67 : vector<2x64x128xbf16> to vector<128x128xbf16>
    %c0_58 = arith.constant 0 : index
    %c7 = arith.constant 7 : index
    %c0_59 = arith.constant 0 : index
    %c0_60 = arith.constant 0 : index
    %69 = vector.load %arg3[%c0_58, %c7, %c0_59, %c0_60] : memref<3x9x128x128xbf16, #tpu.memory_space<vmem>>, vector<1x1x128x128xbf16>
    %70 = vector.shape_cast %69 : vector<1x1x128x128xbf16> to vector<128x128xbf16>
    %cst_61 = arith.constant dense<0.000000e+00> : vector<128x128xf32>
    %71 = tpu.matmul %68, %70, %cst_61 {dimension_numbers = #tpu.dot_dimension_numbers<[1], [0], [0], [1], [0, 0, 1, 1], [], []>} : vector<128x128xbf16>, vector<128x128xbf16>, vector<128x128xf32> -> vector<128x128xf32>
    %72 = arith.addf %66, %71 : vector<128x128xf32>
    %c0_62 = arith.constant 0 : index
    %c0_63 = arith.constant 0 : index
    %c2 = arith.constant 2 : index
    %c0_64 = arith.constant 0 : index
    %73 = vector.load %arg8[%c0_62, %c0_63, %c2, %c0_64] : memref<2x10x10x128xbf16, #tpu.memory_space<vmem>>, vector<2x10x8x128xbf16>
    %74 = vector.shape_cast %73 : vector<2x10x8x128xbf16> to vector<2x80x128xbf16>
    %75 = vector.extract_strided_slice %74 {offsets = [0, 0, 0], sizes = [2, 64, 128], strides = [1, 1, 1]} : vector<2x80x128xbf16> to vector<2x64x128xbf16>
    %76 = vector.shape_cast %75 : vector<2x64x128xbf16> to vector<128x128xbf16>
    %c0_65 = arith.constant 0 : index
    %c2_66 = arith.constant 2 : index
    %c0_67 = arith.constant 0 : index
    %c0_68 = arith.constant 0 : index
    %77 = vector.load %arg3[%c0_65, %c2_66, %c0_67, %c0_68] : memref<3x9x128x128xbf16, #tpu.memory_space<vmem>>, vector<1x1x128x128xbf16>
    %78 = vector.shape_cast %77 : vector<1x1x128x128xbf16> to vector<128x128xbf16>
    %cst_69 = arith.constant dense<0.000000e+00> : vector<128x128xf32>
    %79 = tpu.matmul %76, %78, %cst_69 {dimension_numbers = #tpu.dot_dimension_numbers<[1], [0], [0], [1], [0, 0, 1, 1], [], []>} : vector<128x128xbf16>, vector<128x128xbf16>, vector<128x128xf32> -> vector<128x128xf32>
    %80 = arith.addf %72, %79 : vector<128x128xf32>
    %81 = vector.extract_strided_slice %74 {offsets = [0, 8, 0], sizes = [2, 64, 128], strides = [1, 1, 1]} : vector<2x80x128xbf16> to vector<2x64x128xbf16>
    %82 = vector.shape_cast %81 : vector<2x64x128xbf16> to vector<128x128xbf16>
    %c0_70 = arith.constant 0 : index
    %c5 = arith.constant 5 : index
    %c0_71 = arith.constant 0 : index
    %c0_72 = arith.constant 0 : index
    %83 = vector.load %arg3[%c0_70, %c5, %c0_71, %c0_72] : memref<3x9x128x128xbf16, #tpu.memory_space<vmem>>, vector<1x1x128x128xbf16>
    %84 = vector.shape_cast %83 : vector<1x1x128x128xbf16> to vector<128x128xbf16>
    %cst_73 = arith.constant dense<0.000000e+00> : vector<128x128xf32>
    %85 = tpu.matmul %82, %84, %cst_73 {dimension_numbers = #tpu.dot_dimension_numbers<[1], [0], [0], [1], [0, 0, 1, 1], [], []>} : vector<128x128xbf16>, vector<128x128xbf16>, vector<128x128xf32> -> vector<128x128xf32>
    %86 = arith.addf %80, %85 : vector<128x128xf32>
    %87 = vector.extract_strided_slice %74 {offsets = [0, 16, 0], sizes = [2, 64, 128], strides = [1, 1, 1]} : vector<2x80x128xbf16> to vector<2x64x128xbf16>
    %88 = vector.shape_cast %87 : vector<2x64x128xbf16> to vector<128x128xbf16>
    %c0_74 = arith.constant 0 : index
    %c8 = arith.constant 8 : index
    %c0_75 = arith.constant 0 : index
    %c0_76 = arith.constant 0 : index
    %89 = vector.load %arg3[%c0_74, %c8, %c0_75, %c0_76] : memref<3x9x128x128xbf16, #tpu.memory_space<vmem>>, vector<1x1x128x128xbf16>
    %90 = vector.shape_cast %89 : vector<1x1x128x128xbf16> to vector<128x128xbf16>
    %cst_77 = arith.constant dense<0.000000e+00> : vector<128x128xf32>
    %91 = tpu.matmul %88, %90, %cst_77 {dimension_numbers = #tpu.dot_dimension_numbers<[1], [0], [0], [1], [0, 0, 1, 1], [], []>} : vector<128x128xbf16>, vector<128x128xbf16>, vector<128x128xf32> -> vector<128x128xf32>
    %92 = arith.addf %86, %91 : vector<128x128xf32>
    %c1_78 = arith.constant 1 : index
    %c0_79 = arith.constant 0 : index
    %c0_80 = arith.constant 0 : index
    %93 = vector.load %arg4[%c1_78, %c0_79, %c0_80] : memref<4x2x128xf32, #tpu.memory_space<vmem>>, vector<1x1x128xf32>
    %94 = vector.shape_cast %93 : vector<1x1x128xf32> to vector<1x128xf32>
    %95 = vector.broadcast %94 : vector<1x128xf32> to vector<128x128xf32>
    %96 = arith.mulf %92, %95 : vector<128x128xf32>
    %c1_81 = arith.constant 1 : index
    %c1_82 = arith.constant 1 : index
    %c0_83 = arith.constant 0 : index
    %97 = vector.load %arg4[%c1_81, %c1_82, %c0_83] : memref<4x2x128xf32, #tpu.memory_space<vmem>>, vector<1x1x128xf32>
    %98 = vector.shape_cast %97 : vector<1x1x128xf32> to vector<1x128xf32>
    %99 = vector.broadcast %98 : vector<1x128xf32> to vector<128x128xf32>
    %100 = arith.addf %96, %99 : vector<128x128xf32>
    %cst_84 = arith.constant 0.000000e+00 : f32
    %101 = vector.broadcast %cst_84 : f32 to vector<128x128xf32>
    %102 = arith.maximumf %100, %101 : vector<128x128xf32>
    %103 = vector.shape_cast %102 : vector<128x128xf32> to vector<64x2x128xf32>
    %104 = vector.extract_strided_slice %103 {offsets = [0, 0, 0], sizes = [64, 1, 128], strides = [1, 1, 1]} : vector<64x2x128xf32> to vector<64x1x128xf32>
    %105 = vector.shape_cast %104 : vector<64x1x128xf32> to vector<64x128xf32>
    %106 = vector.extract_strided_slice %103 {offsets = [0, 1, 0], sizes = [64, 1, 128], strides = [1, 1, 1]} : vector<64x2x128xf32> to vector<64x1x128xf32>
    %107 = vector.shape_cast %106 : vector<64x1x128xf32> to vector<64x128xf32>
    %108 = arith.maximumf %105, %107 : vector<64x128xf32>
    %109 = vector.shape_cast %108 : vector<64x128xf32> to vector<8x2x4x128xf32>
    %110 = vector.extract_strided_slice %109 {offsets = [0, 0, 0, 0], sizes = [8, 1, 4, 128], strides = [1, 1, 1, 1]} : vector<8x2x4x128xf32> to vector<8x1x4x128xf32>
    %111 = vector.shape_cast %110 : vector<8x1x4x128xf32> to vector<8x4x128xf32>
    %112 = vector.extract_strided_slice %109 {offsets = [0, 1, 0, 0], sizes = [8, 1, 4, 128], strides = [1, 1, 1, 1]} : vector<8x2x4x128xf32> to vector<8x1x4x128xf32>
    %113 = vector.shape_cast %112 : vector<8x1x4x128xf32> to vector<8x4x128xf32>
    %114 = arith.maximumf %111, %113 : vector<8x4x128xf32>
    %115 = vector.shape_cast %114 : vector<8x4x128xf32> to vector<2x4x4x128xf32>
    %116 = arith.truncf %115 : vector<2x4x4x128xf32> to vector<2x4x4x128xbf16>
    %c0_85 = arith.constant 0 : index
    %c1_86 = arith.constant 1 : index
    %c1_87 = arith.constant 1 : index
    %c0_88 = arith.constant 0 : index
    %117 = vector.load %arg9[%c0_85, %c1_86, %c1_87, %c0_88] : memref<2x6x6x128xbf16, #tpu.memory_space<vmem>>, vector<2x4x4x128xbf16>
    tpu.vector_store %arg9[%c0_85, %c1_86, %c1_87, %c0_88], %116 {strides = array<i32>} : memref<2x6x6x128xbf16, #tpu.memory_space<vmem>>, vector<2x4x4x128xbf16>,
    %c0_89 = arith.constant 0 : index
    %c0_90 = arith.constant 0 : index
    %c0_91 = arith.constant 0 : index
    %c0_92 = arith.constant 0 : index
    %118 = vector.load %arg9[%c0_89, %c0_90, %c0_91, %c0_92] : memref<2x6x6x128xbf16, #tpu.memory_space<vmem>>, vector<2x6x4x128xbf16>
    %119 = vector.shape_cast %118 : vector<2x6x4x128xbf16> to vector<2x24x128xbf16>
    %120 = vector.extract_strided_slice %119 {offsets = [0, 0, 0], sizes = [2, 16, 128], strides = [1, 1, 1]} : vector<2x24x128xbf16> to vector<2x16x128xbf16>
    %121 = vector.shape_cast %120 : vector<2x16x128xbf16> to vector<32x128xbf16>
    %c1_93 = arith.constant 1 : index
    %c0_94 = arith.constant 0 : index
    %c0_95 = arith.constant 0 : index
    %c0_96 = arith.constant 0 : index
    %122 = vector.load %arg3[%c1_93, %c0_94, %c0_95, %c0_96] : memref<3x9x128x128xbf16, #tpu.memory_space<vmem>>, vector<1x1x128x128xbf16>
    %123 = vector.shape_cast %122 : vector<1x1x128x128xbf16> to vector<128x128xbf16>
    %cst_97 = arith.constant dense<0.000000e+00> : vector<32x128xf32>
    %124 = tpu.matmul %121, %123, %cst_97 {dimension_numbers = #tpu.dot_dimension_numbers<[1], [0], [0], [1], [0, 0, 1, 1], [], []>} : vector<32x128xbf16>, vector<128x128xbf16>, vector<32x128xf32> -> vector<32x128xf32>
    %125 = vector.extract_strided_slice %119 {offsets = [0, 4, 0], sizes = [2, 16, 128], strides = [1, 1, 1]} : vector<2x24x128xbf16> to vector<2x16x128xbf16>
    %126 = vector.shape_cast %125 : vector<2x16x128xbf16> to vector<32x128xbf16>
    %c1_98 = arith.constant 1 : index
    %c3_99 = arith.constant 3 : index
    %c0_100 = arith.constant 0 : index
    %c0_101 = arith.constant 0 : index
    %127 = vector.load %arg3[%c1_98, %c3_99, %c0_100, %c0_101] : memref<3x9x128x128xbf16, #tpu.memory_space<vmem>>, vector<1x1x128x128xbf16>
    %128 = vector.shape_cast %127 : vector<1x1x128x128xbf16> to vector<128x128xbf16>
    %cst_102 = arith.constant dense<0.000000e+00> : vector<32x128xf32>
    %129 = tpu.matmul %126, %128, %cst_102 {dimension_numbers = #tpu.dot_dimension_numbers<[1], [0], [0], [1], [0, 0, 1, 1], [], []>} : vector<32x128xbf16>, vector<128x128xbf16>, vector<32x128xf32> -> vector<32x128xf32>
    %130 = arith.addf %124, %129 : vector<32x128xf32>
    %131 = vector.extract_strided_slice %119 {offsets = [0, 8, 0], sizes = [2, 16, 128], strides = [1, 1, 1]} : vector<2x24x128xbf16> to vector<2x16x128xbf16>
    %132 = vector.shape_cast %131 : vector<2x16x128xbf16> to vector<32x128xbf16>
    %c1_103 = arith.constant 1 : index
    %c6_104 = arith.constant 6 : index
    %c0_105 = arith.constant 0 : index
    %c0_106 = arith.constant 0 : index
    %133 = vector.load %arg3[%c1_103, %c6_104, %c0_105, %c0_106] : memref<3x9x128x128xbf16, #tpu.memory_space<vmem>>, vector<1x1x128x128xbf16>
    %134 = vector.shape_cast %133 : vector<1x1x128x128xbf16> to vector<128x128xbf16>
    %cst_107 = arith.constant dense<0.000000e+00> : vector<32x128xf32>
    %135 = tpu.matmul %132, %134, %cst_107 {dimension_numbers = #tpu.dot_dimension_numbers<[1], [0], [0], [1], [0, 0, 1, 1], [], []>} : vector<32x128xbf16>, vector<128x128xbf16>, vector<32x128xf32> -> vector<32x128xf32>
    %136 = arith.addf %130, %135 : vector<32x128xf32>
    %c0_108 = arith.constant 0 : index
    %c0_109 = arith.constant 0 : index
    %c1_110 = arith.constant 1 : index
    %c0_111 = arith.constant 0 : index
    %137 = vector.load %arg9[%c0_108, %c0_109, %c1_110, %c0_111] : memref<2x6x6x128xbf16, #tpu.memory_space<vmem>>, vector<2x6x4x128xbf16>
    %138 = vector.shape_cast %137 : vector<2x6x4x128xbf16> to vector<2x24x128xbf16>
    %139 = vector.extract_strided_slice %138 {offsets = [0, 0, 0], sizes = [2, 16, 128], strides = [1, 1, 1]} : vector<2x24x128xbf16> to vector<2x16x128xbf16>
    %140 = vector.shape_cast %139 : vector<2x16x128xbf16> to vector<32x128xbf16>
    %c1_112 = arith.constant 1 : index
    %c1_113 = arith.constant 1 : index
    %c0_114 = arith.constant 0 : index
    %c0_115 = arith.constant 0 : index
    %141 = vector.load %arg3[%c1_112, %c1_113, %c0_114, %c0_115] : memref<3x9x128x128xbf16, #tpu.memory_space<vmem>>, vector<1x1x128x128xbf16>
    %142 = vector.shape_cast %141 : vector<1x1x128x128xbf16> to vector<128x128xbf16>
    %cst_116 = arith.constant dense<0.000000e+00> : vector<32x128xf32>
    %143 = tpu.matmul %140, %142, %cst_116 {dimension_numbers = #tpu.dot_dimension_numbers<[1], [0], [0], [1], [0, 0, 1, 1], [], []>} : vector<32x128xbf16>, vector<128x128xbf16>, vector<32x128xf32> -> vector<32x128xf32>
    %144 = arith.addf %136, %143 : vector<32x128xf32>
    %145 = vector.extract_strided_slice %138 {offsets = [0, 4, 0], sizes = [2, 16, 128], strides = [1, 1, 1]} : vector<2x24x128xbf16> to vector<2x16x128xbf16>
    %146 = vector.shape_cast %145 : vector<2x16x128xbf16> to vector<32x128xbf16>
    %c1_117 = arith.constant 1 : index
    %c4_118 = arith.constant 4 : index
    %c0_119 = arith.constant 0 : index
    %c0_120 = arith.constant 0 : index
    %147 = vector.load %arg3[%c1_117, %c4_118, %c0_119, %c0_120] : memref<3x9x128x128xbf16, #tpu.memory_space<vmem>>, vector<1x1x128x128xbf16>
    %148 = vector.shape_cast %147 : vector<1x1x128x128xbf16> to vector<128x128xbf16>
    %cst_121 = arith.constant dense<0.000000e+00> : vector<32x128xf32>
    %149 = tpu.matmul %146, %148, %cst_121 {dimension_numbers = #tpu.dot_dimension_numbers<[1], [0], [0], [1], [0, 0, 1, 1], [], []>} : vector<32x128xbf16>, vector<128x128xbf16>, vector<32x128xf32> -> vector<32x128xf32>
    %150 = arith.addf %144, %149 : vector<32x128xf32>
    %151 = vector.extract_strided_slice %138 {offsets = [0, 8, 0], sizes = [2, 16, 128], strides = [1, 1, 1]} : vector<2x24x128xbf16> to vector<2x16x128xbf16>
    %152 = vector.shape_cast %151 : vector<2x16x128xbf16> to vector<32x128xbf16>
    %c1_122 = arith.constant 1 : index
    %c7_123 = arith.constant 7 : index
    %c0_124 = arith.constant 0 : index
    %c0_125 = arith.constant 0 : index
    %153 = vector.load %arg3[%c1_122, %c7_123, %c0_124, %c0_125] : memref<3x9x128x128xbf16, #tpu.memory_space<vmem>>, vector<1x1x128x128xbf16>
    %154 = vector.shape_cast %153 : vector<1x1x128x128xbf16> to vector<128x128xbf16>
    %cst_126 = arith.constant dense<0.000000e+00> : vector<32x128xf32>
    %155 = tpu.matmul %152, %154, %cst_126 {dimension_numbers = #tpu.dot_dimension_numbers<[1], [0], [0], [1], [0, 0, 1, 1], [], []>} : vector<32x128xbf16>, vector<128x128xbf16>, vector<32x128xf32> -> vector<32x128xf32>
    %156 = arith.addf %150, %155 : vector<32x128xf32>
    %c0_127 = arith.constant 0 : index
    %c0_128 = arith.constant 0 : index
    %c2_129 = arith.constant 2 : index
    %c0_130 = arith.constant 0 : index
    %157 = vector.load %arg9[%c0_127, %c0_128, %c2_129, %c0_130] : memref<2x6x6x128xbf16, #tpu.memory_space<vmem>>, vector<2x6x4x128xbf16>
    %158 = vector.shape_cast %157 : vector<2x6x4x128xbf16> to vector<2x24x128xbf16>
    %159 = vector.extract_strided_slice %158 {offsets = [0, 0, 0], sizes = [2, 16, 128], strides = [1, 1, 1]} : vector<2x24x128xbf16> to vector<2x16x128xbf16>
    %160 = vector.shape_cast %159 : vector<2x16x128xbf16> to vector<32x128xbf16>
    %c1_131 = arith.constant 1 : index
    %c2_132 = arith.constant 2 : index
    %c0_133 = arith.constant 0 : index
    %c0_134 = arith.constant 0 : index
    %161 = vector.load %arg3[%c1_131, %c2_132, %c0_133, %c0_134] : memref<3x9x128x128xbf16, #tpu.memory_space<vmem>>, vector<1x1x128x128xbf16>
    %162 = vector.shape_cast %161 : vector<1x1x128x128xbf16> to vector<128x128xbf16>
    %cst_135 = arith.constant dense<0.000000e+00> : vector<32x128xf32>
    %163 = tpu.matmul %160, %162, %cst_135 {dimension_numbers = #tpu.dot_dimension_numbers<[1], [0], [0], [1], [0, 0, 1, 1], [], []>} : vector<32x128xbf16>, vector<128x128xbf16>, vector<32x128xf32> -> vector<32x128xf32>
    %164 = arith.addf %156, %163 : vector<32x128xf32>
    %165 = vector.extract_strided_slice %158 {offsets = [0, 4, 0], sizes = [2, 16, 128], strides = [1, 1, 1]} : vector<2x24x128xbf16> to vector<2x16x128xbf16>
    %166 = vector.shape_cast %165 : vector<2x16x128xbf16> to vector<32x128xbf16>
    %c1_136 = arith.constant 1 : index
    %c5_137 = arith.constant 5 : index
    %c0_138 = arith.constant 0 : index
    %c0_139 = arith.constant 0 : index
    %167 = vector.load %arg3[%c1_136, %c5_137, %c0_138, %c0_139] : memref<3x9x128x128xbf16, #tpu.memory_space<vmem>>, vector<1x1x128x128xbf16>
    %168 = vector.shape_cast %167 : vector<1x1x128x128xbf16> to vector<128x128xbf16>
    %cst_140 = arith.constant dense<0.000000e+00> : vector<32x128xf32>
    %169 = tpu.matmul %166, %168, %cst_140 {dimension_numbers = #tpu.dot_dimension_numbers<[1], [0], [0], [1], [0, 0, 1, 1], [], []>} : vector<32x128xbf16>, vector<128x128xbf16>, vector<32x128xf32> -> vector<32x128xf32>
    %170 = arith.addf %164, %169 : vector<32x128xf32>
    %171 = vector.extract_strided_slice %158 {offsets = [0, 8, 0], sizes = [2, 16, 128], strides = [1, 1, 1]} : vector<2x24x128xbf16> to vector<2x16x128xbf16>
    %172 = vector.shape_cast %171 : vector<2x16x128xbf16> to vector<32x128xbf16>
    %c1_141 = arith.constant 1 : index
    %c8_142 = arith.constant 8 : index
    %c0_143 = arith.constant 0 : index
    %c0_144 = arith.constant 0 : index
    %173 = vector.load %arg3[%c1_141, %c8_142, %c0_143, %c0_144] : memref<3x9x128x128xbf16, #tpu.memory_space<vmem>>, vector<1x1x128x128xbf16>
    %174 = vector.shape_cast %173 : vector<1x1x128x128xbf16> to vector<128x128xbf16>
    %cst_145 = arith.constant dense<0.000000e+00> : vector<32x128xf32>
    %175 = tpu.matmul %172, %174, %cst_145 {dimension_numbers = #tpu.dot_dimension_numbers<[1], [0], [0], [1], [0, 0, 1, 1], [], []>} : vector<32x128xbf16>, vector<128x128xbf16>, vector<32x128xf32> -> vector<32x128xf32>
    %176 = arith.addf %170, %175 : vector<32x128xf32>
    %c2_146 = arith.constant 2 : index
    %c0_147 = arith.constant 0 : index
    %c0_148 = arith.constant 0 : index
    %177 = vector.load %arg4[%c2_146, %c0_147, %c0_148] : memref<4x2x128xf32, #tpu.memory_space<vmem>>, vector<1x1x128xf32>
    %178 = vector.shape_cast %177 : vector<1x1x128xf32> to vector<1x128xf32>
    %179 = vector.broadcast %178 : vector<1x128xf32> to vector<32x128xf32>
    %180 = arith.mulf %176, %179 : vector<32x128xf32>
    %c2_149 = arith.constant 2 : index
    %c1_150 = arith.constant 1 : index
    %c0_151 = arith.constant 0 : index
    %181 = vector.load %arg4[%c2_149, %c1_150, %c0_151] : memref<4x2x128xf32, #tpu.memory_space<vmem>>, vector<1x1x128xf32>
    %182 = vector.shape_cast %181 : vector<1x1x128xf32> to vector<1x128xf32>
    %183 = vector.broadcast %182 : vector<1x128xf32> to vector<32x128xf32>
    %184 = arith.addf %180, %183 : vector<32x128xf32>
    %cst_152 = arith.constant 0.000000e+00 : f32
    %185 = vector.broadcast %cst_152 : f32 to vector<32x128xf32>
    %186 = arith.maximumf %184, %185 : vector<32x128xf32>
    %187 = vector.shape_cast %186 : vector<32x128xf32> to vector<16x2x128xf32>
    %188 = vector.extract_strided_slice %187 {offsets = [0, 0, 0], sizes = [16, 1, 128], strides = [1, 1, 1]} : vector<16x2x128xf32> to vector<16x1x128xf32>
    %189 = vector.shape_cast %188 : vector<16x1x128xf32> to vector<16x128xf32>
    %190 = vector.extract_strided_slice %187 {offsets = [0, 1, 0], sizes = [16, 1, 128], strides = [1, 1, 1]} : vector<16x2x128xf32> to vector<16x1x128xf32>
    %191 = vector.shape_cast %190 : vector<16x1x128xf32> to vector<16x128xf32>
    %192 = arith.maximumf %189, %191 : vector<16x128xf32>
    %193 = vector.shape_cast %192 : vector<16x128xf32> to vector<4x2x2x128xf32>
    %194 = vector.extract_strided_slice %193 {offsets = [0, 0, 0, 0], sizes = [4, 1, 2, 128], strides = [1, 1, 1, 1]} : vector<4x2x2x128xf32> to vector<4x1x2x128xf32>
    %195 = vector.shape_cast %194 : vector<4x1x2x128xf32> to vector<4x2x128xf32>
    %196 = vector.extract_strided_slice %193 {offsets = [0, 1, 0, 0], sizes = [4, 1, 2, 128], strides = [1, 1, 1, 1]} : vector<4x2x2x128xf32> to vector<4x1x2x128xf32>
    %197 = vector.shape_cast %196 : vector<4x1x2x128xf32> to vector<4x2x128xf32>
    %198 = arith.maximumf %195, %197 : vector<4x2x128xf32>
    %199 = vector.shape_cast %198 : vector<4x2x128xf32> to vector<2x2x2x128xf32>
    %200 = arith.truncf %199 : vector<2x2x2x128xf32> to vector<2x2x2x128xbf16>
    %c0_153 = arith.constant 0 : index
    %c1_154 = arith.constant 1 : index
    %c1_155 = arith.constant 1 : index
    %c0_156 = arith.constant 0 : index
    %201 = vector.load %arg10[%c0_153, %c1_154, %c1_155, %c0_156] : memref<2x4x4x128xbf16, #tpu.memory_space<vmem>>, vector<2x2x2x128xbf16>
    tpu.vector_store %arg10[%c0_153, %c1_154, %c1_155, %c0_156], %200 {strides = array<i32>} : memref<2x4x4x128xbf16, #tpu.memory_space<vmem>>, vector<2x2x2x128xbf16>,
    %c0_157 = arith.constant 0 : index
    %c0_158 = arith.constant 0 : index
    %c0_159 = arith.constant 0 : index
    %c0_160 = arith.constant 0 : index
    %202 = vector.load %arg10[%c0_157, %c0_158, %c0_159, %c0_160] : memref<2x4x4x128xbf16, #tpu.memory_space<vmem>>, vector<2x4x2x128xbf16>
    %203 = vector.shape_cast %202 : vector<2x4x2x128xbf16> to vector<2x8x128xbf16>
    %204 = vector.extract_strided_slice %203 {offsets = [0, 0, 0], sizes = [2, 4, 128], strides = [1, 1, 1]} : vector<2x8x128xbf16> to vector<2x4x128xbf16>
    %205 = vector.shape_cast %204 : vector<2x4x128xbf16> to vector<8x128xbf16>
    %c2_161 = arith.constant 2 : index
    %c0_162 = arith.constant 0 : index
    %c0_163 = arith.constant 0 : index
    %c0_164 = arith.constant 0 : index
    %206 = vector.load %arg3[%c2_161, %c0_162, %c0_163, %c0_164] : memref<3x9x128x128xbf16, #tpu.memory_space<vmem>>, vector<1x1x128x128xbf16>
    %207 = vector.shape_cast %206 : vector<1x1x128x128xbf16> to vector<128x128xbf16>
    %cst_165 = arith.constant dense<0.000000e+00> : vector<8x128xf32>
    %208 = tpu.matmul %205, %207, %cst_165 {dimension_numbers = #tpu.dot_dimension_numbers<[1], [0], [0], [1], [0, 0, 1, 1], [], []>} : vector<8x128xbf16>, vector<128x128xbf16>, vector<8x128xf32> -> vector<8x128xf32>
    %209 = vector.extract_strided_slice %203 {offsets = [0, 2, 0], sizes = [2, 4, 128], strides = [1, 1, 1]} : vector<2x8x128xbf16> to vector<2x4x128xbf16>
    %210 = vector.shape_cast %209 : vector<2x4x128xbf16> to vector<8x128xbf16>
    %c2_166 = arith.constant 2 : index
    %c3_167 = arith.constant 3 : index
    %c0_168 = arith.constant 0 : index
    %c0_169 = arith.constant 0 : index
    %211 = vector.load %arg3[%c2_166, %c3_167, %c0_168, %c0_169] : memref<3x9x128x128xbf16, #tpu.memory_space<vmem>>, vector<1x1x128x128xbf16>
    %212 = vector.shape_cast %211 : vector<1x1x128x128xbf16> to vector<128x128xbf16>
    %cst_170 = arith.constant dense<0.000000e+00> : vector<8x128xf32>
    %213 = tpu.matmul %210, %212, %cst_170 {dimension_numbers = #tpu.dot_dimension_numbers<[1], [0], [0], [1], [0, 0, 1, 1], [], []>} : vector<8x128xbf16>, vector<128x128xbf16>, vector<8x128xf32> -> vector<8x128xf32>
    %214 = arith.addf %208, %213 : vector<8x128xf32>
    %215 = vector.extract_strided_slice %203 {offsets = [0, 4, 0], sizes = [2, 4, 128], strides = [1, 1, 1]} : vector<2x8x128xbf16> to vector<2x4x128xbf16>
    %216 = vector.shape_cast %215 : vector<2x4x128xbf16> to vector<8x128xbf16>
    %c2_171 = arith.constant 2 : index
    %c6_172 = arith.constant 6 : index
    %c0_173 = arith.constant 0 : index
    %c0_174 = arith.constant 0 : index
    %217 = vector.load %arg3[%c2_171, %c6_172, %c0_173, %c0_174] : memref<3x9x128x128xbf16, #tpu.memory_space<vmem>>, vector<1x1x128x128xbf16>
    %218 = vector.shape_cast %217 : vector<1x1x128x128xbf16> to vector<128x128xbf16>
    %cst_175 = arith.constant dense<0.000000e+00> : vector<8x128xf32>
    %219 = tpu.matmul %216, %218, %cst_175 {dimension_numbers = #tpu.dot_dimension_numbers<[1], [0], [0], [1], [0, 0, 1, 1], [], []>} : vector<8x128xbf16>, vector<128x128xbf16>, vector<8x128xf32> -> vector<8x128xf32>
    %220 = arith.addf %214, %219 : vector<8x128xf32>
    %c0_176 = arith.constant 0 : index
    %c0_177 = arith.constant 0 : index
    %c1_178 = arith.constant 1 : index
    %c0_179 = arith.constant 0 : index
    %221 = vector.load %arg10[%c0_176, %c0_177, %c1_178, %c0_179] : memref<2x4x4x128xbf16, #tpu.memory_space<vmem>>, vector<2x4x2x128xbf16>
    %222 = vector.shape_cast %221 : vector<2x4x2x128xbf16> to vector<2x8x128xbf16>
    %223 = vector.extract_strided_slice %222 {offsets = [0, 0, 0], sizes = [2, 4, 128], strides = [1, 1, 1]} : vector<2x8x128xbf16> to vector<2x4x128xbf16>
    %224 = vector.shape_cast %223 : vector<2x4x128xbf16> to vector<8x128xbf16>
    %c2_180 = arith.constant 2 : index
    %c1_181 = arith.constant 1 : index
    %c0_182 = arith.constant 0 : index
    %c0_183 = arith.constant 0 : index
    %225 = vector.load %arg3[%c2_180, %c1_181, %c0_182, %c0_183] : memref<3x9x128x128xbf16, #tpu.memory_space<vmem>>, vector<1x1x128x128xbf16>
    %226 = vector.shape_cast %225 : vector<1x1x128x128xbf16> to vector<128x128xbf16>
    %cst_184 = arith.constant dense<0.000000e+00> : vector<8x128xf32>
    %227 = tpu.matmul %224, %226, %cst_184 {dimension_numbers = #tpu.dot_dimension_numbers<[1], [0], [0], [1], [0, 0, 1, 1], [], []>} : vector<8x128xbf16>, vector<128x128xbf16>, vector<8x128xf32> -> vector<8x128xf32>
    %228 = arith.addf %220, %227 : vector<8x128xf32>
    %229 = vector.extract_strided_slice %222 {offsets = [0, 2, 0], sizes = [2, 4, 128], strides = [1, 1, 1]} : vector<2x8x128xbf16> to vector<2x4x128xbf16>
    %230 = vector.shape_cast %229 : vector<2x4x128xbf16> to vector<8x128xbf16>
    %c2_185 = arith.constant 2 : index
    %c4_186 = arith.constant 4 : index
    %c0_187 = arith.constant 0 : index
    %c0_188 = arith.constant 0 : index
    %231 = vector.load %arg3[%c2_185, %c4_186, %c0_187, %c0_188] : memref<3x9x128x128xbf16, #tpu.memory_space<vmem>>, vector<1x1x128x128xbf16>
    %232 = vector.shape_cast %231 : vector<1x1x128x128xbf16> to vector<128x128xbf16>
    %cst_189 = arith.constant dense<0.000000e+00> : vector<8x128xf32>
    %233 = tpu.matmul %230, %232, %cst_189 {dimension_numbers = #tpu.dot_dimension_numbers<[1], [0], [0], [1], [0, 0, 1, 1], [], []>} : vector<8x128xbf16>, vector<128x128xbf16>, vector<8x128xf32> -> vector<8x128xf32>
    %234 = arith.addf %228, %233 : vector<8x128xf32>
    %235 = vector.extract_strided_slice %222 {offsets = [0, 4, 0], sizes = [2, 4, 128], strides = [1, 1, 1]} : vector<2x8x128xbf16> to vector<2x4x128xbf16>
    %236 = vector.shape_cast %235 : vector<2x4x128xbf16> to vector<8x128xbf16>
    %c2_190 = arith.constant 2 : index
    %c7_191 = arith.constant 7 : index
    %c0_192 = arith.constant 0 : index
    %c0_193 = arith.constant 0 : index
    %237 = vector.load %arg3[%c2_190, %c7_191, %c0_192, %c0_193] : memref<3x9x128x128xbf16, #tpu.memory_space<vmem>>, vector<1x1x128x128xbf16>
    %238 = vector.shape_cast %237 : vector<1x1x128x128xbf16> to vector<128x128xbf16>
    %cst_194 = arith.constant dense<0.000000e+00> : vector<8x128xf32>
    %239 = tpu.matmul %236, %238, %cst_194 {dimension_numbers = #tpu.dot_dimension_numbers<[1], [0], [0], [1], [0, 0, 1, 1], [], []>} : vector<8x128xbf16>, vector<128x128xbf16>, vector<8x128xf32> -> vector<8x128xf32>
    %240 = arith.addf %234, %239 : vector<8x128xf32>
    %c0_195 = arith.constant 0 : index
    %c0_196 = arith.constant 0 : index
    %c2_197 = arith.constant 2 : index
    %c0_198 = arith.constant 0 : index
    %241 = vector.load %arg10[%c0_195, %c0_196, %c2_197, %c0_198] : memref<2x4x4x128xbf16, #tpu.memory_space<vmem>>, vector<2x4x2x128xbf16>
    %242 = vector.shape_cast %241 : vector<2x4x2x128xbf16> to vector<2x8x128xbf16>
    %243 = vector.extract_strided_slice %242 {offsets = [0, 0, 0], sizes = [2, 4, 128], strides = [1, 1, 1]} : vector<2x8x128xbf16> to vector<2x4x128xbf16>
    %244 = vector.shape_cast %243 : vector<2x4x128xbf16> to vector<8x128xbf16>
    %c2_199 = arith.constant 2 : index
    %c2_200 = arith.constant 2 : index
    %c0_201 = arith.constant 0 : index
    %c0_202 = arith.constant 0 : index
    %245 = vector.load %arg3[%c2_199, %c2_200, %c0_201, %c0_202] : memref<3x9x128x128xbf16, #tpu.memory_space<vmem>>, vector<1x1x128x128xbf16>
    %246 = vector.shape_cast %245 : vector<1x1x128x128xbf16> to vector<128x128xbf16>
    %cst_203 = arith.constant dense<0.000000e+00> : vector<8x128xf32>
    %247 = tpu.matmul %244, %246, %cst_203 {dimension_numbers = #tpu.dot_dimension_numbers<[1], [0], [0], [1], [0, 0, 1, 1], [], []>} : vector<8x128xbf16>, vector<128x128xbf16>, vector<8x128xf32> -> vector<8x128xf32>
    %248 = arith.addf %240, %247 : vector<8x128xf32>
    %249 = vector.extract_strided_slice %242 {offsets = [0, 2, 0], sizes = [2, 4, 128], strides = [1, 1, 1]} : vector<2x8x128xbf16> to vector<2x4x128xbf16>
    %250 = vector.shape_cast %249 : vector<2x4x128xbf16> to vector<8x128xbf16>
    %c2_204 = arith.constant 2 : index
    %c5_205 = arith.constant 5 : index
    %c0_206 = arith.constant 0 : index
    %c0_207 = arith.constant 0 : index
    %251 = vector.load %arg3[%c2_204, %c5_205, %c0_206, %c0_207] : memref<3x9x128x128xbf16, #tpu.memory_space<vmem>>, vector<1x1x128x128xbf16>
    %252 = vector.shape_cast %251 : vector<1x1x128x128xbf16> to vector<128x128xbf16>
    %cst_208 = arith.constant dense<0.000000e+00> : vector<8x128xf32>
    %253 = tpu.matmul %250, %252, %cst_208 {dimension_numbers = #tpu.dot_dimension_numbers<[1], [0], [0], [1], [0, 0, 1, 1], [], []>} : vector<8x128xbf16>, vector<128x128xbf16>, vector<8x128xf32> -> vector<8x128xf32>
    %254 = arith.addf %248, %253 : vector<8x128xf32>
    %255 = vector.extract_strided_slice %242 {offsets = [0, 4, 0], sizes = [2, 4, 128], strides = [1, 1, 1]} : vector<2x8x128xbf16> to vector<2x4x128xbf16>
    %256 = vector.shape_cast %255 : vector<2x4x128xbf16> to vector<8x128xbf16>
    %c2_209 = arith.constant 2 : index
    %c8_210 = arith.constant 8 : index
    %c0_211 = arith.constant 0 : index
    %c0_212 = arith.constant 0 : index
    %257 = vector.load %arg3[%c2_209, %c8_210, %c0_211, %c0_212] : memref<3x9x128x128xbf16, #tpu.memory_space<vmem>>, vector<1x1x128x128xbf16>
    %258 = vector.shape_cast %257 : vector<1x1x128x128xbf16> to vector<128x128xbf16>
    %cst_213 = arith.constant dense<0.000000e+00> : vector<8x128xf32>
    %259 = tpu.matmul %256, %258, %cst_213 {dimension_numbers = #tpu.dot_dimension_numbers<[1], [0], [0], [1], [0, 0, 1, 1], [], []>} : vector<8x128xbf16>, vector<128x128xbf16>, vector<8x128xf32> -> vector<8x128xf32>
    %260 = arith.addf %254, %259 : vector<8x128xf32>
    %c3_214 = arith.constant 3 : index
    %c0_215 = arith.constant 0 : index
    %c0_216 = arith.constant 0 : index
    %261 = vector.load %arg4[%c3_214, %c0_215, %c0_216] : memref<4x2x128xf32, #tpu.memory_space<vmem>>, vector<1x1x128xf32>
    %262 = vector.shape_cast %261 : vector<1x1x128xf32> to vector<1x128xf32>
    %263 = vector.broadcast %262 : vector<1x128xf32> to vector<8x128xf32>
    %264 = arith.mulf %260, %263 : vector<8x128xf32>
    %c3_217 = arith.constant 3 : index
    %c1_218 = arith.constant 1 : index
    %c0_219 = arith.constant 0 : index
    %265 = vector.load %arg4[%c3_217, %c1_218, %c0_219] : memref<4x2x128xf32, #tpu.memory_space<vmem>>, vector<1x1x128xf32>
    %266 = vector.shape_cast %265 : vector<1x1x128xf32> to vector<1x128xf32>
    %267 = vector.broadcast %266 : vector<1x128xf32> to vector<8x128xf32>
    %268 = arith.addf %264, %267 : vector<8x128xf32>
    %cst_220 = arith.constant 0.000000e+00 : f32
    %269 = vector.broadcast %cst_220 : f32 to vector<8x128xf32>
    %270 = arith.maximumf %268, %269 : vector<8x128xf32>
    %271 = vector.shape_cast %270 : vector<8x128xf32> to vector<4x2x128xf32>
    %272 = vector.extract_strided_slice %271 {offsets = [0, 0, 0], sizes = [4, 1, 128], strides = [1, 1, 1]} : vector<4x2x128xf32> to vector<4x1x128xf32>
    %273 = vector.shape_cast %272 : vector<4x1x128xf32> to vector<4x128xf32>
    %274 = vector.extract_strided_slice %271 {offsets = [0, 1, 0], sizes = [4, 1, 128], strides = [1, 1, 1]} : vector<4x2x128xf32> to vector<4x1x128xf32>
    %275 = vector.shape_cast %274 : vector<4x1x128xf32> to vector<4x128xf32>
    %276 = arith.maximumf %273, %275 : vector<4x128xf32>
    %277 = vector.shape_cast %276 : vector<4x128xf32> to vector<2x2x1x128xf32>
    %278 = vector.extract_strided_slice %277 {offsets = [0, 0, 0, 0], sizes = [2, 1, 1, 128], strides = [1, 1, 1, 1]} : vector<2x2x1x128xf32> to vector<2x1x1x128xf32>
    %279 = vector.shape_cast %278 : vector<2x1x1x128xf32> to vector<2x1x128xf32>
    %280 = vector.extract_strided_slice %277 {offsets = [0, 1, 0, 0], sizes = [2, 1, 1, 128], strides = [1, 1, 1, 1]} : vector<2x2x1x128xf32> to vector<2x1x1x128xf32>
    %281 = vector.shape_cast %280 : vector<2x1x1x128xf32> to vector<2x1x128xf32>
    %282 = arith.maximumf %279, %281 : vector<2x1x128xf32>
    %283 = vector.shape_cast %282 : vector<2x1x128xf32> to vector<2x1x1x128xf32>
    %cst_221 = arith.constant dense<0.000000e+00> : vector<2x128xf32>
    %284 = vector.multi_reduction <add>, %283, %cst_221 [1, 2] : vector<2x1x1x128xf32> to vector<2x128xf32>
    %cst_222 = arith.constant 1.000000e+00 : f32
    %285 = vector.broadcast %cst_222 : f32 to vector<2x128xf32>
    %286 = arith.divf %284, %285 : vector<2x128xf32>
    %c0_223 = arith.constant 0 : index
    %c0_224 = arith.constant 0 : index
    %287 = vector.load %arg5[%c0_223, %c0_224] : memref<128x5xf32, #tpu.memory_space<vmem>>, vector<128x5xf32>
    %cst_225 = arith.constant dense<0.000000e+00> : vector<2x5xf32>
    %288 = tpu.matmul %286, %287, %cst_225 {dimension_numbers = #tpu.dot_dimension_numbers<[1], [0], [0], [1], [0, 0, 1, 1], [], []>} : vector<2x128xf32>, vector<128x5xf32>, vector<2x5xf32> -> vector<2x5xf32>
    %c0_226 = arith.constant 0 : index
    %c0_227 = arith.constant 0 : index
    %289 = vector.load %arg6[%c0_226, %c0_227] : memref<1x5xf32, #tpu.memory_space<vmem>>, vector<1x5xf32>
    %290 = vector.broadcast %289 : vector<1x5xf32> to vector<2x5xf32>
    %291 = arith.addf %288, %290 : vector<2x5xf32>
    %cst_228 = arith.constant dense<0xFF800000> : vector<2xf32>
    %292 = vector.multi_reduction <maximumf>, %291, %cst_228 [1] : vector<2x5xf32> to vector<2xf32>
    %293 = vector.shape_cast %292 : vector<2xf32> to vector<2x1xf32>
    %294 = vector.broadcast %293 : vector<2x1xf32> to vector<2x5xf32>
    %295 = arith.subf %291, %294 : vector<2x5xf32>
    %296 = math.exp %295 : vector<2x5xf32>
    %cst_229 = arith.constant dense<0.000000e+00> : vector<2xf32>
    %297 = vector.multi_reduction <add>, %296, %cst_229 [1] : vector<2x5xf32> to vector<2xf32>
    %298 = vector.shape_cast %297 : vector<2xf32> to vector<2x1xf32>
    %299 = vector.broadcast %298 : vector<2x1xf32> to vector<2x5xf32>
    %300 = arith.divf %296, %299 : vector<2x5xf32>
    %c0_230 = arith.constant 0 : index
    %c0_231 = arith.constant 0 : index
    %301 = vector.load %arg7[%c0_230, %c0_231] : memref<2x5xf32, #tpu.memory_space<vmem>>, vector<2x5xf32>
    tpu.vector_store %arg7[%c0_230, %c0_231], %300 {strides = array<i32>} : memref<2x5xf32, #tpu.memory_space<vmem>>, vector<2x5xf32>,
    return
  }
  func.func @transform_0(%arg0: i32) -> (i32, i32) {
    %c0_i32 = arith.constant 0 : i32
    %c0_i32_0 = arith.constant 0 : i32
    %c0_i32_1 = arith.constant 0 : i32
    return %c0_i32, %c0_i32_0 : i32, i32
  }
  func.func @transform_1(%arg0: i32) -> (i32, i32) {
    %c0_i32 = arith.constant 0 : i32
    %c0_i32_0 = arith.constant 0 : i32
    %c0_i32_1 = arith.constant 0 : i32
    return %c0_i32, %c0_i32_0 : i32, i32
  }
  func.func @transform_2(%arg0: i32) -> (i32, i32, i32, i32) {
    %c0_i32 = arith.constant 0 : i32
    %c0_i32_0 = arith.constant 0 : i32
    %c0_i32_1 = arith.constant 0 : i32
    %c0_i32_2 = arith.constant 0 : i32
    %c0_i32_3 = arith.constant 0 : i32
    return %c0_i32, %c0_i32_0, %c0_i32_1, %c0_i32_2 : i32, i32, i32, i32
  }
  func.func @transform_3(%arg0: i32) -> (i32, i32, i32) {
    %c0_i32 = arith.constant 0 : i32
    %c0_i32_0 = arith.constant 0 : i32
    %c0_i32_1 = arith.constant 0 : i32
    %c0_i32_2 = arith.constant 0 : i32
    return %c0_i32, %c0_i32_0, %c0_i32_1 : i32, i32, i32
  }
  func.func @transform_4(%arg0: i32) -> (i32, i32) {
    %c0_i32 = arith.constant 0 : i32
    %c0_i32_0 = arith.constant 0 : i32
    %c0_i32_1 = arith.constant 0 : i32
    return %c0_i32, %c0_i32_0 : i32, i32
  }
  func.func @transform_5(%arg0: i32) -> (i32, i32) {
    %c0_i32 = arith.constant 0 : i32
    %c0_i32_0 = arith.constant 0 : i32
    %c0_i32_1 = arith.constant 0 : i32
    return %c0_i32, %c0_i32_0 : i32, i32
  }
  func.func @transform_6(%arg0: i32) -> (i32, i32) {
    %c0_i32 = arith.constant 0 : i32
    %c0_i32_0 = arith.constant 0 : i32
    %c0_i32_1 = arith.constant 0 : i32
    return %c0_i32, %c0_i32_0 : i32, i32
  }
}

</mosaic_0001>

<llo_original>
// kernel: flower_forward.1
$region0: #{flower_forward.1}
  #allocation0 [shape = 'u32[]', space=smem, size = 0x4, offset = 0x4, fixed_abs, tag = 'smem constant byte address 0x4 - core index']
  #allocation1 [shape = 'u32[144,128]{1,0:T(1,128)}', space=vmem, size = 0x12000, scoped, tag = 'internal scratch']
  #allocation2 [shape = 'bf16[2,10,10,128]{3,2,1,0:T(8,128)(2,1)}', space=vmem, size = 0x14000, scoped, tag = 'scratch operand']
  #allocation3 [shape = 'bf16[2,6,6,128]{3,2,1,0:T(8,128)(2,1)}', space=vmem, size = 0x6000, scoped, tag = 'scratch operand']
  #allocation4 [shape = 'bf16[2,4,4,128]{3,2,1,0:T(4,128)(2,1)}', space=vmem, size = 0x2000, scoped, tag = 'scratch operand']
  %s0 = inlined_call_operand.vmem [shape: bf16[512,32], index: 0, kind: input, shape index: {}]
  %s1 = inlined_call_operand.vmem [shape: bf16[32,128], index: 1, kind: input, shape index: {}]
  %s2 = inlined_call_operand.vmem [shape: bf16[3,9,128,128], index: 2, kind: input, shape index: {}]
  %s3 = inlined_call_operand.vmem [shape: f32[4,2,128], index: 3, kind: input, shape index: {}]
  %s4 = inlined_call_operand.vmem [shape: f32[128,5], index: 4, kind: input, shape index: {}]
  %s5 = inlined_call_operand.vmem [shape: f32[1,5], index: 5, kind: input, shape index: {}]
  %s6 = inlined_call_operand.hbm [shape: f32[2,5], index: 6, kind: output, shape index: {}]
  %s7 = sld [smem:[#allocation0]]
  $region34: #{flower_forward.1} parent=0
    _
  %s9 = ssub.s32 1, %s7
  %s10 = scalar_select 0, %s9, %s7
  $region1: #{flower_forward.1} parent=0
    #allocation5 [shape = 'u8[1024]{0}', space=vmem, size = 0x400, scoped, tag = 'output window, operand 0, single buffered']
    #allocation6 [shape = 's32[1]{0}', space=sflag, size = 0x4, scoped, tag = 'scoped memory for flower_forward.1']
    %11 = vsyncpa [#allocation6], 0
    // Predicated region
    $region2: #{flower_forward.1} parent=1 // pred_check
      _
    $region3: #{flower_forward.1} parent=1 // pred_check_branch
      %13 = sbr.rel (0) target = $region5
    $region4: #{flower_forward.1} parent=1 // pred_region
      _
    $region5: #{flower_forward.1} parent=1 // pred_fallthru
      _
    // Predicated region
    $region6: #{flower_forward.1} parent=1 // pred_check
      _
    $region7: #{flower_forward.1} parent=1 // pred_check_branch
      %15 = sbr.rel (0) target = $region9
    $region8: #{flower_forward.1} parent=1 // pred_region
      _
    $region9: #{flower_forward.1} parent=1 // pred_fallthru
      _
    // Predicated region
    $region10: #{flower_forward.1} parent=1 // pred_check
      _
    $region11: #{flower_forward.1} parent=1 // pred_check_branch
      %17 = sbr.rel (0) target = $region13
    $region12: #{flower_forward.1} parent=1 // pred_region
      _
    $region13: #{flower_forward.1} parent=1 // pred_fallthru
      _
    // Predicated region
    $region14: #{flower_forward.1} parent=1 // pred_check
      _
    $region15: #{flower_forward.1} parent=1 // pred_check_branch
      %19 = sbr.rel (0) target = $region17
    $region16: #{flower_forward.1} parent=1 // pred_region
      _
    $region17: #{flower_forward.1} parent=1 // pred_fallthru
      _
    // Predicated region
    $region18: #{flower_forward.1} parent=1 // pred_check
      _
    $region19: #{flower_forward.1} parent=1 // pred_check_branch
      %21 = sbr.rel (0) target = $region21
    $region20: #{flower_forward.1} parent=1 // pred_region
      _
    $region21: #{flower_forward.1} parent=1 // pred_fallthru
      _
    // Predicated region
    $region22: #{flower_forward.1} parent=1 // pred_check
      _
    $region23: #{flower_forward.1} parent=1 // pred_check_branch
      %23 = sbr.rel (0) target = $region25
    $region24: #{flower_forward.1} parent=1 // pred_region
      _
    $region25: #{flower_forward.1} parent=1 // pred_fallthru
      _
    %25 = vst [vmem:[#allocation2] sm:$0xf] 0
    %26 = vst [vmem:[#allocation2 + $0x4] sm:$0x1] 0
    %27 = vst [vmem:[#allocation2 + $0x8] sm:$0xf] 0
    %28 = vst [vmem:[#allocation2 + $0xc] sm:$0x1] 0
    %29 = vst [vmem:[#allocation2 + $0x10] sm:$0xf] 0
    %30 = vst [vmem:[#allocation2 + $0x14] sm:$0x1] 0
    %31 = vst [vmem:[#allocation2 + $0x18] sm:$0xf] 0
    %32 = vst [vmem:[#allocation2 + $0x1c] sm:$0x1] 0
    %33 = vst [vmem:[#allocation2 + $0x20] sm:$0xf] 0
    %34 = vst [vmem:[#allocation2 + $0x24] sm:$0x1] 0
    %35 = vst [vmem:[#allocation2 + $0x28] sm:$0xf] 0
    %36 = vst [vmem:[#allocation2 + $0x2c] sm:$0x1] 0
    %37 = vst [vmem:[#allocation2 + $0x30] sm:$0xf] 0
    %38 = vst [vmem:[#allocation2 + $0x34] sm:$0x1] 0
    %39 = vst [vmem:[#allocation2 + $0x38] sm:$0xf] 0
    %40 = vst [vmem:[#allocation2 + $0x3c] sm:$0x1] 0
    %41 = vst [vmem:[#allocation2 + $0x40] sm:$0xf] 0
    %42 = vst [vmem:[#allocation2 + $0x44] sm:$0x1] 0
    %43 = vst [vmem:[#allocation2 + $0x48] sm:$0xf] 0
    %44 = vst [vmem:[#allocation2 + $0x4c] sm:$0x1] 0
    %45 = vst [vmem:[#allocation2 + $0x50] sm:$0xf] 0
    %46 = vst [vmem:[#allocation2 + $0x54] sm:$0x1] 0
    %47 = vst [vmem:[#allocation2 + $0x58] sm:$0xf] 0
    %48 = vst [vmem:[#allocation2 + $0x5c] sm:$0x1] 0
    %49 = vst [vmem:[#allocation2 + $0x60] sm:$0xf] 0
    %50 = vst [vmem:[#allocation2 + $0x64] sm:$0x1] 0
    %51 = vst [vmem:[#allocation2 + $0x68] sm:$0xf] 0
    %52 = vst [vmem:[#allocation2 + $0x6c] sm:$0x1] 0
    %53 = vst [vmem:[#allocation2 + $0x70] sm:$0xf] 0
    %54 = vst [vmem:[#allocation2 + $0x74] sm:$0x1] 0
    %55 = vst [vmem:[#allocation2 + $0x78] sm:$0xf] 0
    %56 = vst [vmem:[#allocation2 + $0x7c] sm:$0x1] 0
    %57 = vst [vmem:[#allocation2 + $0x80] sm:$0xf] 0
    %58 = vst [vmem:[#allocation2 + $0x84] sm:$0x1] 0
    %59 = vst [vmem:[#allocation2 + $0x88] sm:$0xf] 0
    %60 = vst [vmem:[#allocation2 + $0x8c] sm:$0x1] 0
    %61 = vst [vmem:[#allocation2 + $0x90] sm:$0xf] 0
    %62 = vst [vmem:[#allocation2 + $0x94] sm:$0x1] 0
    %63 = vst [vmem:[#allocation2 + $0x98] sm:$0xf] 0
    %64 = vst [vmem:[#allocation2 + $0x9c] sm:$0x1] 0
    %65 = vst [vmem:[#allocation3] sm:$0x7] 0
    %66 = vst [vmem:[#allocation3 + $0x4] sm:$0x7] 0
    %67 = vst [vmem:[#allocation3 + $0x8] sm:$0x7] 0
    %68 = vst [vmem:[#allocation3 + $0xc] sm:$0x7] 0
    %69 = vst [vmem:[#allocation3 + $0x10] sm:$0x7] 0
    %70 = vst [vmem:[#allocation3 + $0x14] sm:$0x7] 0
    %71 = vst [vmem:[#allocation3 + $0x18] sm:$0x7] 0
    %72 = vst [vmem:[#allocation3 + $0x1c] sm:$0x7] 0
    %73 = vst [vmem:[#allocation3 + $0x20] sm:$0x7] 0
    %74 = vst [vmem:[#allocation3 + $0x24] sm:$0x7] 0
    %75 = vst [vmem:[#allocation3 + $0x28] sm:$0x7] 0
    %76 = vst [vmem:[#allocation3 + $0x2c] sm:$0x7] 0
    %77 = vst [vmem:[#allocation4] sm:$0x3] 0
    %78 = vst [vmem:[#allocation4 + $0x2] sm:$0x3] 0
    %79 = vst [vmem:[#allocation4 + $0x4] sm:$0x3] 0
    %80 = vst [vmem:[#allocation4 + $0x6] sm:$0x3] 0
    %81 = vst [vmem:[#allocation4 + $0x8] sm:$0x3] 0
    %82 = vst [vmem:[#allocation4 + $0xa] sm:$0x3] 0
    %83 = vst [vmem:[#allocation4 + $0xc] sm:$0x3] 0
    %84 = vst [vmem:[#allocation4 + $0xe] sm:$0x3] 0
    %v85 = vld [vmem:[%s0] sm:$0xf]
    %v86 = vld [vmem:[%s0 + $0x4] sm:$0xf]
    %v87 = vld [vmem:[%s0 + $0x8] sm:$0xf]
    %v88 = vld [vmem:[%s0 + $0xc] sm:$0xf]
    %v89 = vld [vmem:[%s0 + $0x10] sm:$0xf]
    %v90 = vld [vmem:[%s0 + $0x14] sm:$0xf]
    %v91 = vld [vmem:[%s0 + $0x18] sm:$0xf]
    %v92 = vld [vmem:[%s0 + $0x1c] sm:$0xf]
    %v93 = vld [vmem:[%s0 + $0x20] sm:$0xf]
    %v94 = vld [vmem:[%s0 + $0x24] sm:$0xf]
    %v95 = vld [vmem:[%s0 + $0x28] sm:$0xf]
    %v96 = vld [vmem:[%s0 + $0x2c] sm:$0xf]
    %v97 = vld [vmem:[%s0 + $0x30] sm:$0xf]
    %v98 = vld [vmem:[%s0 + $0x34] sm:$0xf]
    %v99 = vld [vmem:[%s0 + $0x38] sm:$0xf]
    %v100 = vld [vmem:[%s0 + $0x3c] sm:$0xf]
    %v101 = vld [vmem:[%s0 + $0x40] sm:$0xf]
    %v102 = vld [vmem:[%s0 + $0x44] sm:$0xf]
    %v103 = vld [vmem:[%s0 + $0x48] sm:$0xf]
    %v104 = vld [vmem:[%s0 + $0x4c] sm:$0xf]
    %v105 = vld [vmem:[%s0 + $0x50] sm:$0xf]
    %v106 = vld [vmem:[%s0 + $0x54] sm:$0xf]
    %v107 = vld [vmem:[%s0 + $0x58] sm:$0xf]
    %v108 = vld [vmem:[%s0 + $0x5c] sm:$0xf]
    %v109 = vld [vmem:[%s0 + $0x60] sm:$0xf]
    %v110 = vld [vmem:[%s0 + $0x64] sm:$0xf]
    %v111 = vld [vmem:[%s0 + $0x68] sm:$0xf]
    %v112 = vld [vmem:[%s0 + $0x6c] sm:$0xf]
    %v113 = vld [vmem:[%s0 + $0x70] sm:$0xf]
    %v114 = vld [vmem:[%s0 + $0x74] sm:$0xf]
    %v115 = vld [vmem:[%s0 + $0x78] sm:$0xf]
    %v116 = vld [vmem:[%s0 + $0x7c] sm:$0xf]
    %v117 = vld [vmem:[%s0 + $0x80] sm:$0xf]
    %v118 = vld [vmem:[%s0 + $0x84] sm:$0xf]
    %v119 = vld [vmem:[%s0 + $0x88] sm:$0xf]
    %v120 = vld [vmem:[%s0 + $0x8c] sm:$0xf]
    %v121 = vld [vmem:[%s0 + $0x90] sm:$0xf]
    %v122 = vld [vmem:[%s0 + $0x94] sm:$0xf]
    %v123 = vld [vmem:[%s0 + $0x98] sm:$0xf]
    %v124 = vld [vmem:[%s0 + $0x9c] sm:$0xf]
    %v125 = vld [vmem:[%s0 + $0xa0] sm:$0xf]
    %v126 = vld [vmem:[%s0 + $0xa4] sm:$0xf]
    %v127 = vld [vmem:[%s0 + $0xa8] sm:$0xf]
    %v128 = vld [vmem:[%s0 + $0xac] sm:$0xf]
    %v129 = vld [vmem:[%s0 + $0xb0] sm:$0xf]
    %v130 = vld [vmem:[%s0 + $0xb4] sm:$0xf]
    %v131 = vld [vmem:[%s0 + $0xb8] sm:$0xf]
    %v132 = vld [vmem:[%s0 + $0xbc] sm:$0xf]
    %v133 = vld [vmem:[%s0 + $0xc0] sm:$0xf]
    %v134 = vld [vmem:[%s0 + $0xc4] sm:$0xf]
    %v135 = vld [vmem:[%s0 + $0xc8] sm:$0xf]
    %v136 = vld [vmem:[%s0 + $0xcc] sm:$0xf]
    %v137 = vld [vmem:[%s0 + $0xd0] sm:$0xf]
    %v138 = vld [vmem:[%s0 + $0xd4] sm:$0xf]
    %v139 = vld [vmem:[%s0 + $0xd8] sm:$0xf]
    %v140 = vld [vmem:[%s0 + $0xdc] sm:$0xf]
    %v141 = vld [vmem:[%s0 + $0xe0] sm:$0xf]
    %v142 = vld [vmem:[%s0 + $0xe4] sm:$0xf]
    %v143 = vld [vmem:[%s0 + $0xe8] sm:$0xf]
    %v144 = vld [vmem:[%s0 + $0xec] sm:$0xf]
    %v145 = vld [vmem:[%s0 + $0xf0] sm:$0xf]
    %v146 = vld [vmem:[%s0 + $0xf4] sm:$0xf]
    %v147 = vld [vmem:[%s0 + $0xf8] sm:$0xf]
    %v148 = vld [vmem:[%s0 + $0xfc] sm:$0xf]
    %v149 = vld [vmem:[%s1] sm:$0xf]
    %v150 = vld [vmem:[%s1 + $0x4] sm:$0xf]
    %v151 = vld [vmem:[%s1 + $0x8] sm:$0xf]
    %v152 = vld [vmem:[%s1 + $0xc] sm:$0xf]
    %v217 = vunpack.c.l.b16 %v85
    %v218 = vunpack.c.l.b16 %v86
    %v219 = vunpack.c.l.b16 %v87
    %v220 = vunpack.c.l.b16 %v88
    %v221 = vunpack.c.l.b16 %v89
    %v222 = vunpack.c.l.b16 %v90
    %v223 = vunpack.c.l.b16 %v91
    %v224 = vunpack.c.l.b16 %v92
    %v225 = vunpack.c.l.b16 %v93
    %v226 = vunpack.c.l.b16 %v94
    %v227 = vunpack.c.l.b16 %v95
    %v228 = vunpack.c.l.b16 %v96
    %v229 = vunpack.c.l.b16 %v97
    %v230 = vunpack.c.l.b16 %v98
    %v231 = vunpack.c.l.b16 %v99
    %v232 = vunpack.c.l.b16 %v100
    %v233 = vunpack.c.l.b16 %v101
    %v234 = vunpack.c.l.b16 %v102
    %v235 = vunpack.c.l.b16 %v103
    %v236 = vunpack.c.l.b16 %v104
    %v237 = vunpack.c.l.b16 %v105
    %v238 = vunpack.c.l.b16 %v106
    %v239 = vunpack.c.l.b16 %v107
    %v240 = vunpack.c.l.b16 %v108
    %v241 = vunpack.c.l.b16 %v109
    %v242 = vunpack.c.l.b16 %v110
    %v243 = vunpack.c.l.b16 %v111
    %v244 = vunpack.c.l.b16 %v112
    %v245 = vunpack.c.l.b16 %v113
    %v246 = vunpack.c.l.b16 %v114
    %v247 = vunpack.c.l.b16 %v115
    %v248 = vunpack.c.l.b16 %v116
    %v249 = vunpack.c.l.b16 %v117
    %v250 = vunpack.c.l.b16 %v118
    %v251 = vunpack.c.l.b16 %v119
    %v252 = vunpack.c.l.b16 %v120
    %v253 = vunpack.c.l.b16 %v121
    %v254 = vunpack.c.l.b16 %v122
    %v255 = vunpack.c.l.b16 %v123
    %v256 = vunpack.c.l.b16 %v124
    %v257 = vunpack.c.l.b16 %v125
    %v258 = vunpack.c.l.b16 %v126
    %v259 = vunpack.c.l.b16 %v127
    %v260 = vunpack.c.l.b16 %v128
    %v261 = vunpack.c.l.b16 %v129
    %v262 = vunpack.c.l.b16 %v130
    %v263 = vunpack.c.l.b16 %v131
    %v264 = vunpack.c.l.b16 %v132
    %v265 = vunpack.c.l.b16 %v133
    %v266 = vunpack.c.l.b16 %v134
    %v267 = vunpack.c.l.b16 %v135
    %v268 = vunpack.c.l.b16 %v136
    %v269 = vunpack.c.l.b16 %v137
    %v270 = vunpack.c.l.b16 %v138
    %v271 = vunpack.c.l.b16 %v139
    %v272 = vunpack.c.l.b16 %v140
    %v273 = vunpack.c.l.b16 %v141
    %v274 = vunpack.c.l.b16 %v142
    %v275 = vunpack.c.l.b16 %v143
    %v276 = vunpack.c.l.b16 %v144
    %v277 = vunpack.c.l.b16 %v145
    %v278 = vunpack.c.l.b16 %v146
    %v279 = vunpack.c.l.b16 %v147
    %v280 = vunpack.c.l.b16 %v148
    %v281 = vpack.c.b16 %v218, %v217
    %v282 = vpack.c.b16 %v220, %v219
    %v283 = vpack.c.b16 %v222, %v221
    %v284 = vpack.c.b16 %v224, %v223
    %v285 = vpack.c.b16 %v226, %v225
    %v286 = vpack.c.b16 %v228, %v227
    %v287 = vpack.c.b16 %v230, %v229
    %v288 = vpack.c.b16 %v232, %v231
    %v289 = vpack.c.b16 %v234, %v233
    %v290 = vpack.c.b16 %v236, %v235
    %v291 = vpack.c.b16 %v238, %v237
    %v292 = vpack.c.b16 %v240, %v239
    %v293 = vpack.c.b16 %v242, %v241
    %v294 = vpack.c.b16 %v244, %v243
    %v295 = vpack.c.b16 %v246, %v245
    %v296 = vpack.c.b16 %v248, %v247
    %v297 = vpack.c.b16 %v250, %v249
    %v298 = vpack.c.b16 %v252, %v251
    %v299 = vpack.c.b16 %v254, %v253
    %v300 = vpack.c.b16 %v256, %v255
    %v301 = vpack.c.b16 %v258, %v257
    %v302 = vpack.c.b16 %v260, %v259
    %v303 = vpack.c.b16 %v262, %v261
    %v304 = vpack.c.b16 %v264, %v263
    %v305 = vpack.c.b16 %v266, %v265
    %v306 = vpack.c.b16 %v268, %v267
    %v307 = vpack.c.b16 %v270, %v269
    %v308 = vpack.c.b16 %v272, %v271
    %v309 = vpack.c.b16 %v274, %v273
    %v310 = vpack.c.b16 %v276, %v275
    %v311 = vpack.c.b16 %v278, %v277
    %v312 = vpack.c.b16 %v280, %v279
    %v317 = vunpack.c.l.b16 %v149
    %v318 = vunpack.c.l.b16 %v150
    %v319 = vunpack.c.l.b16 %v151
    %v320 = vunpack.c.l.b16 %v152
    %v321 = vpack.c.b16 %v318, %v317
    %v322 = vpack.c.b16 %v320, %v319
    %vm325 = vcmask 261120
    %v327 = vsel %vm325, %v281, 0
    %v330 = vsel %vm325, %v282, 0
    %v333 = vsel %vm325, %v283, 0
    %v336 = vsel %vm325, %v284, 0
    %v339 = vsel %vm325, %v285, 0
    %v342 = vsel %vm325, %v286, 0
    %v345 = vsel %vm325, %v287, 0
    %v348 = vsel %vm325, %v288, 0
    %v351 = vsel %vm325, %v289, 0
    %v354 = vsel %vm325, %v290, 0
    %v357 = vsel %vm325, %v291, 0
    %v360 = vsel %vm325, %v292, 0
    %v363 = vsel %vm325, %v293, 0
    %v366 = vsel %vm325, %v294, 0
    %v369 = vsel %vm325, %v295, 0
    %v372 = vsel %vm325, %v296, 0
    %v375 = vsel %vm325, %v297, 0
    %v378 = vsel %vm325, %v298, 0
    %v381 = vsel %vm325, %v299, 0
    %v384 = vsel %vm325, %v300, 0
    %v387 = vsel %vm325, %v301, 0
    %v390 = vsel %vm325, %v302, 0
    %v393 = vsel %vm325, %v303, 0
    %v396 = vsel %vm325, %v304, 0
    %v399 = vsel %vm325, %v305, 0
    %v402 = vsel %vm325, %v306, 0
    %v405 = vsel %vm325, %v307, 0
    %v408 = vsel %vm325, %v308, 0
    %v411 = vsel %vm325, %v309, 0
    %v414 = vsel %vm325, %v310, 0
    %v417 = vsel %vm325, %v311, 0
    %v420 = vsel %vm325, %v312, 0
    %422 = vmatprep.subr.bf16.mxu0 0
    %423 = vmatpush1.bf16.msra.mxu0 0
    %424 = vmatprep.subr.bf16.mxu0 0
    %425 = vmatpush1.bf16.msra.mxu0 0
    %426 = vmatprep.subr.bf16.mxu0 0
    %427 = vmatpush1.bf16.msra.mxu0 0
    %428 = vmatprep.subr.bf16.mxu0 0
    %429 = vmatpush1.bf16.msra.mxu0 0
    %430 = vmatprep.subr.bf16.mxu0 0
    %431 = vmatpush1.bf16.msra.mxu0 0
    %432 = vmatprep.subr.bf16.mxu0 0
    %433 = vmatpush1.bf16.msra.mxu0 0
    %434 = vmatprep.subr.bf16.mxu0 0
    %435 = vmatpush1.bf16.msra.mxu0 %v322
    %436 = vmatprep.subr.bf16.mxu0 0
    %437 = vmatpush1.bf16.msra.mxu0 %v321
    %438 = vmatprep.subr.bf16.mxu0 0
    %439 = vmatpush2.bf16.msra.mxu0 0
    %440 = vmatprep.subr.bf16.mxu0 0
    %441 = vmatpush2.bf16.msra.mxu0 0
    %442 = vmatprep.subr.bf16.mxu0 0
    %443 = vmatpush2.bf16.msra.mxu0 0
    %444 = vmatprep.subr.bf16.mxu0 0
    %445 = vmatpush2.bf16.msra.mxu0 0
    %446 = vmatprep.subr.bf16.mxu0 0
    %447 = vmatpush2.bf16.msra.mxu0 0
    %448 = vmatprep.subr.bf16.mxu0 0
    %449 = vmatpush2.bf16.msra.mxu0 0
    %450 = vmatprep.subr.bf16.mxu0 0
    %451 = vmatpush2.bf16.msra.mxu0 0
    %452 = vmatprep.subr.bf16.mxu0 0
    %453 = vmatpush2.bf16.msra.mxu0 0
    %454 = vmatprep.mubr.bf16.mxu0 0
    %455 = vmatmul.mubr.bf16.gmra.mxu0 %v327
    %v456 = vpop.f32.mrf.mxu0
    %v457 = vadd.f32 0.0, %v456
    %v458 = vpop.f32.mrf.mxu0
    %v459 = vpop.f32.mrf.mxu0
    %v460 = vadd.f32 0.0, %v459
    %v461 = vpop.f32.mrf.mxu0
    %462 = vmatprep.mubr.bf16.mxu0 0
    %463 = vmatmul.mubr.bf16.gmra.mxu0 %v330
    %v464 = vpop.f32.mrf.mxu0
    %v465 = vadd.f32 0.0, %v464
    %v466 = vpop.f32.mrf.mxu0
    %v467 = vpop.f32.mrf.mxu0
    %v468 = vadd.f32 0.0, %v467
    %v469 = vpop.f32.mrf.mxu0
    %470 = vmatprep.mubr.bf16.mxu0 0
    %471 = vmatmul.mubr.bf16.gmra.mxu0 %v333
    %v472 = vpop.f32.mrf.mxu0
    %v473 = vadd.f32 0.0, %v472
    %v474 = vpop.f32.mrf.mxu0
    %v475 = vpop.f32.mrf.mxu0
    %v476 = vadd.f32 0.0, %v475
    %v477 = vpop.f32.mrf.mxu0
    %478 = vmatprep.mubr.bf16.mxu0 0
    %479 = vmatmul.mubr.bf16.gmra.mxu0 %v336
    %v480 = vpop.f32.mrf.mxu0
    %v481 = vadd.f32 0.0, %v480
    %v482 = vpop.f32.mrf.mxu0
    %v483 = vpop.f32.mrf.mxu0
    %v484 = vadd.f32 0.0, %v483
    %v485 = vpop.f32.mrf.mxu0
    %486 = vmatprep.mubr.bf16.mxu0 0
    %487 = vmatmul.mubr.bf16.gmra.mxu0 %v339
    %v488 = vpop.f32.mrf.mxu0
    %v489 = vadd.f32 0.0, %v488
    %v490 = vpop.f32.mrf.mxu0
    %v491 = vpop.f32.mrf.mxu0
    %v492 = vadd.f32 0.0, %v491
    %v493 = vpop.f32.mrf.mxu0
    %494 = vmatprep.mubr.bf16.mxu0 0
    %495 = vmatmul.mubr.bf16.gmra.mxu0 %v342
    %v496 = vpop.f32.mrf.mxu0
    %v497 = vadd.f32 0.0, %v496
    %v498 = vpop.f32.mrf.mxu0
    %v499 = vpop.f32.mrf.mxu0
    %v500 = vadd.f32 0.0, %v499
    %v501 = vpop.f32.mrf.mxu0
    %502 = vmatprep.mubr.bf16.mxu0 0
    %503 = vmatmul.mubr.bf16.gmra.mxu0 %v345
    %v504 = vpop.f32.mrf.mxu0
    %v505 = vadd.f32 0.0, %v504
    %v506 = vpop.f32.mrf.mxu0
    %v507 = vpop.f32.mrf.mxu0
    %v508 = vadd.f32 0.0, %v507
    %v509 = vpop.f32.mrf.mxu0
    %510 = vmatprep.mubr.bf16.mxu0 0
    %511 = vmatmul.mubr.bf16.gmra.mxu0 %v348
    %v512 = vpop.f32.mrf.mxu0
    %v513 = vadd.f32 0.0, %v512
    %v514 = vpop.f32.mrf.mxu0
    %v515 = vpop.f32.mrf.mxu0
    %v516 = vadd.f32 0.0, %v515
    %v517 = vpop.f32.mrf.mxu0
    %518 = vmatprep.mubr.bf16.mxu0 0
    %519 = vmatmul.mubr.bf16.gmra.mxu0 %v351
    %v520 = vpop.f32.mrf.mxu0
    %v521 = vadd.f32 0.0, %v520
    %v522 = vpop.f32.mrf.mxu0
    %v523 = vpop.f32.mrf.mxu0
    %v524 = vadd.f32 0.0, %v523
    %v525 = vpop.f32.mrf.mxu0
    %526 = vmatprep.mubr.bf16.mxu0 0
    %527 = vmatmul.mubr.bf16.gmra.mxu0 %v354
    %v528 = vpop.f32.mrf.mxu0
    %v529 = vadd.f32 0.0, %v528
    %v530 = vpop.f32.mrf.mxu0
    %v531 = vpop.f32.mrf.mxu0
    %v532 = vadd.f32 0.0, %v531
    %v533 = vpop.f32.mrf.mxu0
    %534 = vmatprep.mubr.bf16.mxu0 0
    %535 = vmatmul.mubr.bf16.gmra.mxu0 %v357
    %v536 = vpop.f32.mrf.mxu0
    %v537 = vadd.f32 0.0, %v536
    %v538 = vpop.f32.mrf.mxu0
    %v539 = vpop.f32.mrf.mxu0
    %v540 = vadd.f32 0.0, %v539
    %v541 = vpop.f32.mrf.mxu0
    %542 = vmatprep.mubr.bf16.mxu0 0
    %543 = vmatmul.mubr.bf16.gmra.mxu0 %v360
    %v544 = vpop.f32.mrf.mxu0
    %v545 = vadd.f32 0.0, %v544
    %v546 = vpop.f32.mrf.mxu0
    %v547 = vpop.f32.mrf.mxu0
    %v548 = vadd.f32 0.0, %v547
    %v549 = vpop.f32.mrf.mxu0
    %550 = vmatprep.mubr.bf16.mxu0 0
    %551 = vmatmul.mubr.bf16.gmra.mxu0 %v363
    %v552 = vpop.f32.mrf.mxu0
    %v553 = vadd.f32 0.0, %v552
    %v554 = vpop.f32.mrf.mxu0
    %v555 = vpop.f32.mrf.mxu0
    %v556 = vadd.f32 0.0, %v555
    %v557 = vpop.f32.mrf.mxu0
    %558 = vmatprep.mubr.bf16.mxu0 0
    %559 = vmatmul.mubr.bf16.gmra.mxu0 %v366
    %v560 = vpop.f32.mrf.mxu0
    %v561 = vadd.f32 0.0, %v560
    %v562 = vpop.f32.mrf.mxu0
    %v563 = vpop.f32.mrf.mxu0
    %v564 = vadd.f32 0.0, %v563
    %v565 = vpop.f32.mrf.mxu0
    %566 = vmatprep.mubr.bf16.mxu0 0
    %567 = vmatmul.mubr.bf16.gmra.mxu0 %v369
    %v568 = vpop.f32.mrf.mxu0
    %v569 = vadd.f32 0.0, %v568
    %v570 = vpop.f32.mrf.mxu0
    %v571 = vpop.f32.mrf.mxu0
    %v572 = vadd.f32 0.0, %v571
    %v573 = vpop.f32.mrf.mxu0
    %574 = vmatprep.mubr.bf16.mxu0 0
    %575 = vmatmul.mubr.bf16.gmra.mxu0 %v372
    %v576 = vpop.f32.mrf.mxu0
    %v577 = vadd.f32 0.0, %v576
    %v578 = vpop.f32.mrf.mxu0
    %v579 = vpop.f32.mrf.mxu0
    %v580 = vadd.f32 0.0, %v579
    %v581 = vpop.f32.mrf.mxu0
    %582 = vmatprep.mubr.bf16.mxu0 0
    %583 = vmatmul.mubr.bf16.gmra.mxu0 %v375
    %v584 = vpop.f32.mrf.mxu0
    %v585 = vadd.f32 0.0, %v584
    %v586 = vpop.f32.mrf.mxu0
    %v587 = vpop.f32.mrf.mxu0
    %v588 = vadd.f32 0.0, %v587
    %v589 = vpop.f32.mrf.mxu0
    %590 = vmatprep.mubr.bf16.mxu0 0
    %591 = vmatmul.mubr.bf16.gmra.mxu0 %v378
    %v592 = vpop.f32.mrf.mxu0
    %v593 = vadd.f32 0.0, %v592
    %v594 = vpop.f32.mrf.mxu0
    %v595 = vpop.f32.mrf.mxu0
    %v596 = vadd.f32 0.0, %v595
    %v597 = vpop.f32.mrf.mxu0
    %598 = vmatprep.mubr.bf16.mxu0 0
    %599 = vmatmul.mubr.bf16.gmra.mxu0 %v381
    %v600 = vpop.f32.mrf.mxu0
    %v601 = vadd.f32 0.0, %v600
    %v602 = vpop.f32.mrf.mxu0
    %v603 = vpop.f32.mrf.mxu0
    %v604 = vadd.f32 0.0, %v603
    %v605 = vpop.f32.mrf.mxu0
    %606 = vmatprep.mubr.bf16.mxu0 0
    %607 = vmatmul.mubr.bf16.gmra.mxu0 %v384
    %v608 = vpop.f32.mrf.mxu0
    %v609 = vadd.f32 0.0, %v608
    %v610 = vpop.f32.mrf.mxu0
    %v611 = vpop.f32.mrf.mxu0
    %v612 = vadd.f32 0.0, %v611
    %v613 = vpop.f32.mrf.mxu0
    %614 = vmatprep.mubr.bf16.mxu0 0
    %615 = vmatmul.mubr.bf16.gmra.mxu0 %v387
    %v616 = vpop.f32.mrf.mxu0
    %v617 = vadd.f32 0.0, %v616
    %v618 = vpop.f32.mrf.mxu0
    %v619 = vpop.f32.mrf.mxu0
    %v620 = vadd.f32 0.0, %v619
    %v621 = vpop.f32.mrf.mxu0
    %622 = vmatprep.mubr.bf16.mxu0 0
    %623 = vmatmul.mubr.bf16.gmra.mxu0 %v390
    %v624 = vpop.f32.mrf.mxu0
    %v625 = vadd.f32 0.0, %v624
    %v626 = vpop.f32.mrf.mxu0
    %v627 = vpop.f32.mrf.mxu0
    %v628 = vadd.f32 0.0, %v627
    %v629 = vpop.f32.mrf.mxu0
    %630 = vmatprep.mubr.bf16.mxu0 0
    %631 = vmatmul.mubr.bf16.gmra.mxu0 %v393
    %v632 = vpop.f32.mrf.mxu0
    %v633 = vadd.f32 0.0, %v632
    %v634 = vpop.f32.mrf.mxu0
    %v635 = vpop.f32.mrf.mxu0
    %v636 = vadd.f32 0.0, %v635
    %v637 = vpop.f32.mrf.mxu0
    %638 = vmatprep.mubr.bf16.mxu0 0
    %639 = vmatmul.mubr.bf16.gmra.mxu0 %v396
    %v640 = vpop.f32.mrf.mxu0
    %v641 = vadd.f32 0.0, %v640
    %v642 = vpop.f32.mrf.mxu0
    %v643 = vpop.f32.mrf.mxu0
    %v644 = vadd.f32 0.0, %v643
    %v645 = vpop.f32.mrf.mxu0
    %646 = vmatprep.mubr.bf16.mxu0 0
    %647 = vmatmul.mubr.bf16.gmra.mxu0 %v399
    %v648 = vpop.f32.mrf.mxu0
    %v649 = vadd.f32 0.0, %v648
    %v650 = vpop.f32.mrf.mxu0
    %v651 = vpop.f32.mrf.mxu0
    %v652 = vadd.f32 0.0, %v651
    %v653 = vpop.f32.mrf.mxu0
    %654 = vmatprep.mubr.bf16.mxu0 0
    %655 = vmatmul.mubr.bf16.gmra.mxu0 %v402
    %v656 = vpop.f32.mrf.mxu0
    %v657 = vadd.f32 0.0, %v656
    %v658 = vpop.f32.mrf.mxu0
    %v659 = vpop.f32.mrf.mxu0
    %v660 = vadd.f32 0.0, %v659
    %v661 = vpop.f32.mrf.mxu0
    %662 = vmatprep.mubr.bf16.mxu0 0
    %663 = vmatmul.mubr.bf16.gmra.mxu0 %v405
    %v664 = vpop.f32.mrf.mxu0
    %v665 = vadd.f32 0.0, %v664
    %v666 = vpop.f32.mrf.mxu0
    %v667 = vpop.f32.mrf.mxu0
    %v668 = vadd.f32 0.0, %v667
    %v669 = vpop.f32.mrf.mxu0
    %670 = vmatprep.mubr.bf16.mxu0 0
    %671 = vmatmul.mubr.bf16.gmra.mxu0 %v408
    %v672 = vpop.f32.mrf.mxu0
    %v673 = vadd.f32 0.0, %v672
    %v674 = vpop.f32.mrf.mxu0
    %v675 = vpop.f32.mrf.mxu0
    %v676 = vadd.f32 0.0, %v675
    %v677 = vpop.f32.mrf.mxu0
    %678 = vmatprep.mubr.bf16.mxu0 0
    %679 = vmatmul.mubr.bf16.gmra.mxu0 %v411
    %v680 = vpop.f32.mrf.mxu0
    %v681 = vadd.f32 0.0, %v680
    %v682 = vpop.f32.mrf.mxu0
    %v683 = vpop.f32.mrf.mxu0
    %v684 = vadd.f32 0.0, %v683
    %v685 = vpop.f32.mrf.mxu0
    %686 = vmatprep.mubr.bf16.mxu0 0
    %687 = vmatmul.mubr.bf16.gmra.mxu0 %v414
    %v688 = vpop.f32.mrf.mxu0
    %v689 = vadd.f32 0.0, %v688
    %v690 = vpop.f32.mrf.mxu0
    %v691 = vpop.f32.mrf.mxu0
    %v692 = vadd.f32 0.0, %v691
    %v693 = vpop.f32.mrf.mxu0
    %694 = vmatprep.mubr.bf16.mxu0 0
    %695 = vmatmul.mubr.bf16.gmra.mxu0 %v417
    %v696 = vpop.f32.mrf.mxu0
    %v697 = vadd.f32 0.0, %v696
    %v698 = vpop.f32.mrf.mxu0
    %v699 = vpop.f32.mrf.mxu0
    %v700 = vadd.f32 0.0, %v699
    %v701 = vpop.f32.mrf.mxu0
    %702 = vmatprep.mubr.bf16.mxu0 0
    %703 = vmatmul.mubr.bf16.gmra.mxu0 %v420
    %v704 = vpop.f32.mrf.mxu0
    %v705 = vadd.f32 0.0, %v704
    %v706 = vpop.f32.mrf.mxu0
    %v707 = vpop.f32.mrf.mxu0
    %v708 = vadd.f32 0.0, %v707
    %v709 = vpop.f32.mrf.mxu0
    %710 = vdwg.mxu0
    %v711 = vld [vmem:[%s3] sm:$0x1]
    %v712 = vlaneseq
    %v713 = vshrl.u32 %v712, 7
    %v714 = vsub.s32 0, %v713
    %v715 = vrot.slane %v711, %v714
    %v716 = vmul.f32 %v457, %v715
    %v717 = vmul.f32 %v460, %v715
    %v718 = vmul.f32 %v465, %v715
    %v719 = vmul.f32 %v468, %v715
    %v720 = vmul.f32 %v473, %v715
    %v721 = vmul.f32 %v476, %v715
    %v722 = vmul.f32 %v481, %v715
    %v723 = vmul.f32 %v484, %v715
    %v724 = vmul.f32 %v489, %v715
    %v725 = vmul.f32 %v492, %v715
    %v726 = vmul.f32 %v497, %v715
    %v727 = vmul.f32 %v500, %v715
    %v728 = vmul.f32 %v505, %v715
    %v729 = vmul.f32 %v508, %v715
    %v730 = vmul.f32 %v513, %v715
    %v731 = vmul.f32 %v516, %v715
    %v732 = vmul.f32 %v521, %v715
    %v733 = vmul.f32 %v524, %v715
    %v734 = vmul.f32 %v529, %v715
    %v735 = vmul.f32 %v532, %v715
    %v736 = vmul.f32 %v537, %v715
    %v737 = vmul.f32 %v540, %v715
    %v738 = vmul.f32 %v545, %v715
    %v739 = vmul.f32 %v548, %v715
    %v740 = vmul.f32 %v553, %v715
    %v741 = vmul.f32 %v556, %v715
    %v742 = vmul.f32 %v561, %v715
    %v743 = vmul.f32 %v564, %v715
    %v744 = vmul.f32 %v569, %v715
    %v745 = vmul.f32 %v572, %v715
    %v746 = vmul.f32 %v577, %v715
    %v747 = vmul.f32 %v580, %v715
    %v748 = vmul.f32 %v585, %v715
    %v749 = vmul.f32 %v588, %v715
    %v750 = vmul.f32 %v593, %v715
    %v751 = vmul.f32 %v596, %v715
    %v752 = vmul.f32 %v601, %v715
    %v753 = vmul.f32 %v604, %v715
    %v754 = vmul.f32 %v609, %v715
    %v755 = vmul.f32 %v612, %v715
    %v756 = vmul.f32 %v617, %v715
    %v757 = vmul.f32 %v620, %v715
    %v758 = vmul.f32 %v625, %v715
    %v759 = vmul.f32 %v628, %v715
    %v760 = vmul.f32 %v633, %v715
    %v761 = vmul.f32 %v636, %v715
    %v762 = vmul.f32 %v641, %v715
    %v763 = vmul.f32 %v644, %v715
    %v764 = vmul.f32 %v649, %v715
    %v765 = vmul.f32 %v652, %v715
    %v766 = vmul.f32 %v657, %v715
    %v767 = vmul.f32 %v660, %v715
    %v768 = vmul.f32 %v665, %v715
    %v769 = vmul.f32 %v668, %v715
    %v770 = vmul.f32 %v673, %v715
    %v771 = vmul.f32 %v676, %v715
    %v772 = vmul.f32 %v681, %v715
    %v773 = vmul.f32 %v684, %v715
    %v774 = vmul.f32 %v689, %v715
    %v775 = vmul.f32 %v692, %v715
    %v776 = vmul.f32 %v697, %v715
    %v777 = vmul.f32 %v700, %v715
    %v778 = vmul.f32 %v705, %v715
    %v779 = vmul.f32 %v708, %v715
    %v780 = vld [vmem:[%s3 + $0x1] sm:$0x1]
    %v781 = vlaneseq
    %v782 = vshrl.u32 %v781, 7
    %v783 = vsub.s32 0, %v782
    %v784 = vrot.slane %v780, %v783
    %v785 = vadd.f32 %v716, %v784
    %v786 = vadd.f32 %v717, %v784
    %v787 = vadd.f32 %v718, %v784
    %v788 = vadd.f32 %v719, %v784
    %v789 = vadd.f32 %v720, %v784
    %v790 = vadd.f32 %v721, %v784
    %v791 = vadd.f32 %v722, %v784
    %v792 = vadd.f32 %v723, %v784
    %v793 = vadd.f32 %v724, %v784
    %v794 = vadd.f32 %v725, %v784
    %v795 = vadd.f32 %v726, %v784
    %v796 = vadd.f32 %v727, %v784
    %v797 = vadd.f32 %v728, %v784
    %v798 = vadd.f32 %v729, %v784
    %v799 = vadd.f32 %v730, %v784
    %v800 = vadd.f32 %v731, %v784
    %v801 = vadd.f32 %v732, %v784
    %v802 = vadd.f32 %v733, %v784
    %v803 = vadd.f32 %v734, %v784
    %v804 = vadd.f32 %v735, %v784
    %v805 = vadd.f32 %v736, %v784
    %v806 = vadd.f32 %v737, %v784
    %v807 = vadd.f32 %v738, %v784
    %v808 = vadd.f32 %v739, %v784
    %v809 = vadd.f32 %v740, %v784
    %v810 = vadd.f32 %v741, %v784
    %v811 = vadd.f32 %v742, %v784
    %v812 = vadd.f32 %v743, %v784
    %v813 = vadd.f32 %v744, %v784
    %v814 = vadd.f32 %v745, %v784
    %v815 = vadd.f32 %v746, %v784
    %v816 = vadd.f32 %v747, %v784
    %v817 = vadd.f32 %v748, %v784
    %v818 = vadd.f32 %v749, %v784
    %v819 = vadd.f32 %v750, %v784
    %v820 = vadd.f32 %v751, %v784
    %v821 = vadd.f32 %v752, %v784
    %v822 = vadd.f32 %v753, %v784
    %v823 = vadd.f32 %v754, %v784
    %v824 = vadd.f32 %v755, %v784
    %v825 = vadd.f32 %v756, %v784
    %v826 = vadd.f32 %v757, %v784
    %v827 = vadd.f32 %v758, %v784
    %v828 = vadd.f32 %v759, %v784
    %v829 = vadd.f32 %v760, %v784
    %v830 = vadd.f32 %v761, %v784
    %v831 = vadd.f32 %v762, %v784
    %v832 = vadd.f32 %v763, %v784
    %v833 = vadd.f32 %v764, %v784
    %v834 = vadd.f32 %v765, %v784
    %v835 = vadd.f32 %v766, %v784
    %v836 = vadd.f32 %v767, %v784
    %v837 = vadd.f32 %v768, %v784
    %v838 = vadd.f32 %v769, %v784
    %v839 = vadd.f32 %v770, %v784
    %v840 = vadd.f32 %v771, %v784
    %v841 = vadd.f32 %v772, %v784
    %v842 = vadd.f32 %v773, %v784
    %v843 = vadd.f32 %v774, %v784
    %v844 = vadd.f32 %v775, %v784
    %v845 = vadd.f32 %v776, %v784
    %v846 = vadd.f32 %v777, %v784
    %v847 = vadd.f32 %v778, %v784
    %v848 = vadd.f32 %v779, %v784
    %v849 = vmax.f32 %v785, 0.0
    %v850 = vmax.f32 %v786, 0.0
    %v851 = vmax.f32 %v787, 0.0
    %v852 = vmax.f32 %v788, 0.0
    %v853 = vmax.f32 %v789, 0.0
    %v854 = vmax.f32 %v790, 0.0
    %v855 = vmax.f32 %v791, 0.0
    %v856 = vmax.f32 %v792, 0.0
    %v857 = vmax.f32 %v793, 0.0
    %v858 = vmax.f32 %v794, 0.0
    %v859 = vmax.f32 %v795, 0.0
    %v860 = vmax.f32 %v796, 0.0
    %v861 = vmax.f32 %v797, 0.0
    %v862 = vmax.f32 %v798, 0.0
    %v863 = vmax.f32 %v799, 0.0
    %v864 = vmax.f32 %v800, 0.0
    %v865 = vmax.f32 %v801, 0.0
    %v866 = vmax.f32 %v802, 0.0
    %v867 = vmax.f32 %v803, 0.0
    %v868 = vmax.f32 %v804, 0.0
    %v869 = vmax.f32 %v805, 0.0
    %v870 = vmax.f32 %v806, 0.0
    %v871 = vmax.f32 %v807, 0.0
    %v872 = vmax.f32 %v808, 0.0
    %v873 = vmax.f32 %v809, 0.0
    %v874 = vmax.f32 %v810, 0.0
    %v875 = vmax.f32 %v811, 0.0
    %v876 = vmax.f32 %v812, 0.0
    %v877 = vmax.f32 %v813, 0.0
    %v878 = vmax.f32 %v814, 0.0
    %v879 = vmax.f32 %v815, 0.0
    %v880 = vmax.f32 %v816, 0.0
    %v881 = vmax.f32 %v817, 0.0
    %v882 = vmax.f32 %v818, 0.0
    %v883 = vmax.f32 %v819, 0.0
    %v884 = vmax.f32 %v820, 0.0
    %v885 = vmax.f32 %v821, 0.0
    %v886 = vmax.f32 %v822, 0.0
    %v887 = vmax.f32 %v823, 0.0
    %v888 = vmax.f32 %v824, 0.0
    %v889 = vmax.f32 %v825, 0.0
    %v890 = vmax.f32 %v826, 0.0
    %v891 = vmax.f32 %v827, 0.0
    %v892 = vmax.f32 %v828, 0.0
    %v893 = vmax.f32 %v829, 0.0
    %v894 = vmax.f32 %v830, 0.0
    %v895 = vmax.f32 %v831, 0.0
    %v896 = vmax.f32 %v832, 0.0
    %v897 = vmax.f32 %v833, 0.0
    %v898 = vmax.f32 %v834, 0.0
    %v899 = vmax.f32 %v835, 0.0
    %v900 = vmax.f32 %v836, 0.0
    %v901 = vmax.f32 %v837, 0.0
    %v902 = vmax.f32 %v838, 0.0
    %v903 = vmax.f32 %v839, 0.0
    %v904 = vmax.f32 %v840, 0.0
    %v905 = vmax.f32 %v841, 0.0
    %v906 = vmax.f32 %v842, 0.0
    %v907 = vmax.f32 %v843, 0.0
    %v908 = vmax.f32 %v844, 0.0
    %v909 = vmax.f32 %v845, 0.0
    %v910 = vmax.f32 %v846, 0.0
    %v911 = vmax.f32 %v847, 0.0
    %v912 = vmax.f32 %v848, 0.0
    %v977 = vcombine.high %v849, %v849
    %v979 = vunpack.c.l.s4 1983009808
    %v980 = vunpack.c.0.s8 %v979
    %v981 = vlaneseq
    %v982 = vshrl.u32 %v981, 7
    %v983 = vsub.s32 %v980, %v982
    %v984 = vrot.slane %v849, %v983
    %v986 = vunpack.c.l.s4 1983009808
    %v987 = vunpack.c.0.s8 %v986
    %v988 = vlaneseq
    %v989 = vshrl.u32 %v988, 7
    %v990 = vsub.s32 %v987, %v989
    %v991 = vrot.slane %v977, %v990
    %v992 = vcombine.high %v984, %v984
    %v993 = vcombine.high %v991, %v991
    %v994 = vcombine.high %v850, %v850
    %v996 = vunpack.c.l.s4 1983009808
    %v997 = vunpack.c.0.s8 %v996
    %v998 = vlaneseq
    %v999 = vshrl.u32 %v998, 7
    %v1000 = vsub.s32 %v997, %v999
    %v1001 = vrot.slane %v850, %v1000
    %v1003 = vunpack.c.l.s4 1983009808
    %v1004 = vunpack.c.0.s8 %v1003
    %v1005 = vlaneseq
    %v1006 = vshrl.u32 %v1005, 7
    %v1007 = vsub.s32 %v1004, %v1006
    %v1008 = vrot.slane %v994, %v1007
    %v1009 = vcombine.high %v1001, %v1001
    %v1010 = vcombine.high %v1008, %v1008
    %v1011 = vcombine.high %v851, %v851
    %v1013 = vunpack.c.l.s4 1983009808
    %v1014 = vunpack.c.0.s8 %v1013
    %v1015 = vlaneseq
    %v1016 = vshrl.u32 %v1015, 7
    %v1017 = vsub.s32 %v1014, %v1016
    %v1018 = vrot.slane %v851, %v1017
    %v1020 = vunpack.c.l.s4 1983009808
    %v1021 = vunpack.c.0.s8 %v1020
    %v1022 = vlaneseq
    %v1023 = vshrl.u32 %v1022, 7
    %v1024 = vsub.s32 %v1021, %v1023
    %v1025 = vrot.slane %v1011, %v1024
    %v1026 = vcombine.high %v1018, %v1018
    %v1027 = vcombine.high %v1025, %v1025
    %v1028 = vcombine.high %v852, %v852
    %v1030 = vunpack.c.l.s4 1983009808
    %v1031 = vunpack.c.0.s8 %v1030
    %v1032 = vlaneseq
    %v1033 = vshrl.u32 %v1032, 7
    %v1034 = vsub.s32 %v1031, %v1033
    %v1035 = vrot.slane %v852, %v1034
    %v1037 = vunpack.c.l.s4 1983009808
    %v1038 = vunpack.c.0.s8 %v1037
    %v1039 = vlaneseq
    %v1040 = vshrl.u32 %v1039, 7
    %v1041 = vsub.s32 %v1038, %v1040
    %v1042 = vrot.slane %v1028, %v1041
    %v1043 = vcombine.high %v1035, %v1035
    %v1044 = vcombine.high %v1042, %v1042
    %v1045 = vcombine.high %v853, %v853
    %v1047 = vunpack.c.l.s4 1983009808
    %v1048 = vunpack.c.0.s8 %v1047
    %v1049 = vlaneseq
    %v1050 = vshrl.u32 %v1049, 7
    %v1051 = vsub.s32 %v1048, %v1050
    %v1052 = vrot.slane %v853, %v1051
    %v1054 = vunpack.c.l.s4 1983009808
    %v1055 = vunpack.c.0.s8 %v1054
    %v1056 = vlaneseq
    %v1057 = vshrl.u32 %v1056, 7
    %v1058 = vsub.s32 %v1055, %v1057
    %v1059 = vrot.slane %v1045, %v1058
    %v1060 = vcombine.high %v1052, %v1052
    %v1061 = vcombine.high %v1059, %v1059
    %v1062 = vcombine.high %v854, %v854
    %v1064 = vunpack.c.l.s4 1983009808
    %v1065 = vunpack.c.0.s8 %v1064
    %v1066 = vlaneseq
    %v1067 = vshrl.u32 %v1066, 7
    %v1068 = vsub.s32 %v1065, %v1067
    %v1069 = vrot.slane %v854, %v1068
    %v1071 = vunpack.c.l.s4 1983009808
    %v1072 = vunpack.c.0.s8 %v1071
    %v1073 = vlaneseq
    %v1074 = vshrl.u32 %v1073, 7
    %v1075 = vsub.s32 %v1072, %v1074
    %v1076 = vrot.slane %v1062, %v1075
    %v1077 = vcombine.high %v1069, %v1069
    %v1078 = vcombine.high %v1076, %v1076
    %v1079 = vcombine.high %v855, %v855
    %v1081 = vunpack.c.l.s4 1983009808
    %v1082 = vunpack.c.0.s8 %v1081
    %v1083 = vlaneseq
    %v1084 = vshrl.u32 %v1083, 7
    %v1085 = vsub.s32 %v1082, %v1084
    %v1086 = vrot.slane %v855, %v1085
    %v1088 = vunpack.c.l.s4 1983009808
    %v1089 = vunpack.c.0.s8 %v1088
    %v1090 = vlaneseq
    %v1091 = vshrl.u32 %v1090, 7
    %v1092 = vsub.s32 %v1089, %v1091
    %v1093 = vrot.slane %v1079, %v1092
    %v1094 = vcombine.high %v1086, %v1086
    %v1095 = vcombine.high %v1093, %v1093
    %v1096 = vcombine.high %v856, %v856
    %v1098 = vunpack.c.l.s4 1983009808
    %v1099 = vunpack.c.0.s8 %v1098
    %v1100 = vlaneseq
    %v1101 = vshrl.u32 %v1100, 7
    %v1102 = vsub.s32 %v1099, %v1101
    %v1103 = vrot.slane %v856, %v1102
    %v1105 = vunpack.c.l.s4 1983009808
    %v1106 = vunpack.c.0.s8 %v1105
    %v1107 = vlaneseq
    %v1108 = vshrl.u32 %v1107, 7
    %v1109 = vsub.s32 %v1106, %v1108
    %v1110 = vrot.slane %v1096, %v1109
    %v1111 = vcombine.high %v1103, %v1103
    %v1112 = vcombine.high %v1110, %v1110
    %v1113 = vcombine.high %v857, %v857
    %v1115 = vunpack.c.l.s4 1983009808
    %v1116 = vunpack.c.0.s8 %v1115
    %v1117 = vlaneseq
    %v1118 = vshrl.u32 %v1117, 7
    %v1119 = vsub.s32 %v1116, %v1118
    %v1120 = vrot.slane %v857, %v1119
    %v1122 = vunpack.c.l.s4 1983009808
    %v1123 = vunpack.c.0.s8 %v1122
    %v1124 = vlaneseq
    %v1125 = vshrl.u32 %v1124, 7
    %v1126 = vsub.s32 %v1123, %v1125
    %v1127 = vrot.slane %v1113, %v1126
    %v1128 = vcombine.high %v1120, %v1120
    %v1129 = vcombine.high %v1127, %v1127
    %v1130 = vcombine.high %v858, %v858
    %v1132 = vunpack.c.l.s4 1983009808
    %v1133 = vunpack.c.0.s8 %v1132
    %v1134 = vlaneseq
    %v1135 = vshrl.u32 %v1134, 7
    %v1136 = vsub.s32 %v1133, %v1135
    %v1137 = vrot.slane %v858, %v1136
    %v1139 = vunpack.c.l.s4 1983009808
    %v1140 = vunpack.c.0.s8 %v1139
    %v1141 = vlaneseq
    %v1142 = vshrl.u32 %v1141, 7
    %v1143 = vsub.s32 %v1140, %v1142
    %v1144 = vrot.slane %v1130, %v1143
    %v1145 = vcombine.high %v1137, %v1137
    %v1146 = vcombine.high %v1144, %v1144
    %v1147 = vcombine.high %v859, %v859
    %v1149 = vunpack.c.l.s4 1983009808
    %v1150 = vunpack.c.0.s8 %v1149
    %v1151 = vlaneseq
    %v1152 = vshrl.u32 %v1151, 7
    %v1153 = vsub.s32 %v1150, %v1152
    %v1154 = vrot.slane %v859, %v1153
    %v1156 = vunpack.c.l.s4 1983009808
    %v1157 = vunpack.c.0.s8 %v1156
    %v1158 = vlaneseq
    %v1159 = vshrl.u32 %v1158, 7
    %v1160 = vsub.s32 %v1157, %v1159
    %v1161 = vrot.slane %v1147, %v1160
    %v1162 = vcombine.high %v1154, %v1154
    %v1163 = vcombine.high %v1161, %v1161
    %v1164 = vcombine.high %v860, %v860
    %v1166 = vunpack.c.l.s4 1983009808
    %v1167 = vunpack.c.0.s8 %v1166
    %v1168 = vlaneseq
    %v1169 = vshrl.u32 %v1168, 7
    %v1170 = vsub.s32 %v1167, %v1169
    %v1171 = vrot.slane %v860, %v1170
    %v1173 = vunpack.c.l.s4 1983009808
    %v1174 = vunpack.c.0.s8 %v1173
    %v1175 = vlaneseq
    %v1176 = vshrl.u32 %v1175, 7
    %v1177 = vsub.s32 %v1174, %v1176
    %v1178 = vrot.slane %v1164, %v1177
    %v1179 = vcombine.high %v1171, %v1171
    %v1180 = vcombine.high %v1178, %v1178
    %v1181 = vcombine.high %v861, %v861
    %v1183 = vunpack.c.l.s4 1983009808
    %v1184 = vunpack.c.0.s8 %v1183
    %v1185 = vlaneseq
    %v1186 = vshrl.u32 %v1185, 7
    %v1187 = vsub.s32 %v1184, %v1186
    %v1188 = vrot.slane %v861, %v1187
    %v1190 = vunpack.c.l.s4 1983009808
    %v1191 = vunpack.c.0.s8 %v1190
    %v1192 = vlaneseq
    %v1193 = vshrl.u32 %v1192, 7
    %v1194 = vsub.s32 %v1191, %v1193
    %v1195 = vrot.slane %v1181, %v1194
    %v1196 = vcombine.high %v1188, %v1188
    %v1197 = vcombine.high %v1195, %v1195
    %v1198 = vcombine.high %v862, %v862
    %v1200 = vunpack.c.l.s4 1983009808
    %v1201 = vunpack.c.0.s8 %v1200
    %v1202 = vlaneseq
    %v1203 = vshrl.u32 %v1202, 7
    %v1204 = vsub.s32 %v1201, %v1203
    %v1205 = vrot.slane %v862, %v1204
    %v1207 = vunpack.c.l.s4 1983009808
    %v1208 = vunpack.c.0.s8 %v1207
    %v1209 = vlaneseq
    %v1210 = vshrl.u32 %v1209, 7
    %v1211 = vsub.s32 %v1208, %v1210
    %v1212 = vrot.slane %v1198, %v1211
    %v1213 = vcombine.high %v1205, %v1205
    %v1214 = vcombine.high %v1212, %v1212
    %v1215 = vcombine.high %v863, %v863
    %v1217 = vunpack.c.l.s4 1983009808
    %v1218 = vunpack.c.0.s8 %v1217
    %v1219 = vlaneseq
    %v1220 = vshrl.u32 %v1219, 7
    %v1221 = vsub.s32 %v1218, %v1220
    %v1222 = vrot.slane %v863, %v1221
    %v1224 = vunpack.c.l.s4 1983009808
    %v1225 = vunpack.c.0.s8 %v1224
    %v1226 = vlaneseq
    %v1227 = vshrl.u32 %v1226, 7
    %v1228 = vsub.s32 %v1225, %v1227
    %v1229 = vrot.slane %v1215, %v1228
    %v1230 = vcombine.high %v1222, %v1222
    %v1231 = vcombine.high %v1229, %v1229
    %v1232 = vcombine.high %v864, %v864
    %v1234 = vunpack.c.l.s4 1983009808
    %v1235 = vunpack.c.0.s8 %v1234
    %v1236 = vlaneseq
    %v1237 = vshrl.u32 %v1236, 7
    %v1238 = vsub.s32 %v1235, %v1237
    %v1239 = vrot.slane %v864, %v1238
    %v1241 = vunpack.c.l.s4 1983009808
    %v1242 = vunpack.c.0.s8 %v1241
    %v1243 = vlaneseq
    %v1244 = vshrl.u32 %v1243, 7
    %v1245 = vsub.s32 %v1242, %v1244
    %v1246 = vrot.slane %v1232, %v1245
    %v1247 = vcombine.high %v1239, %v1239
    %v1248 = vcombine.high %v1246, %v1246
    %v1249 = vcombine.high %v865, %v865
    %v1251 = vunpack.c.l.s4 1983009808
    %v1252 = vunpack.c.0.s8 %v1251
    %v1253 = vlaneseq
    %v1254 = vshrl.u32 %v1253, 7
    %v1255 = vsub.s32 %v1252, %v1254
    %v1256 = vrot.slane %v865, %v1255
    %v1258 = vunpack.c.l.s4 1983009808
    %v1259 = vunpack.c.0.s8 %v1258
    %v1260 = vlaneseq
    %v1261 = vshrl.u32 %v1260, 7
    %v1262 = vsub.s32 %v1259, %v1261
    %v1263 = vrot.slane %v1249, %v1262
    %v1264 = vcombine.high %v1256, %v1256
    %v1265 = vcombine.high %v1263, %v1263
    %v1266 = vcombine.high %v866, %v866
    %v1268 = vunpack.c.l.s4 1983009808
    %v1269 = vunpack.c.0.s8 %v1268
    %v1270 = vlaneseq
    %v1271 = vshrl.u32 %v1270, 7
    %v1272 = vsub.s32 %v1269, %v1271
    %v1273 = vrot.slane %v866, %v1272
    %v1275 = vunpack.c.l.s4 1983009808
    %v1276 = vunpack.c.0.s8 %v1275
    %v1277 = vlaneseq
    %v1278 = vshrl.u32 %v1277, 7
    %v1279 = vsub.s32 %v1276, %v1278
    %v1280 = vrot.slane %v1266, %v1279
    %v1281 = vcombine.high %v1273, %v1273
    %v1282 = vcombine.high %v1280, %v1280
    %v1283 = vcombine.high %v867, %v867
    %v1285 = vunpack.c.l.s4 1983009808
    %v1286 = vunpack.c.0.s8 %v1285
    %v1287 = vlaneseq
    %v1288 = vshrl.u32 %v1287, 7
    %v1289 = vsub.s32 %v1286, %v1288
    %v1290 = vrot.slane %v867, %v1289
    %v1292 = vunpack.c.l.s4 1983009808
    %v1293 = vunpack.c.0.s8 %v1292
    %v1294 = vlaneseq
    %v1295 = vshrl.u32 %v1294, 7
    %v1296 = vsub.s32 %v1293, %v1295
    %v1297 = vrot.slane %v1283, %v1296
    %v1298 = vcombine.high %v1290, %v1290
    %v1299 = vcombine.high %v1297, %v1297
    %v1300 = vcombine.high %v868, %v868
    %v1302 = vunpack.c.l.s4 1983009808
    %v1303 = vunpack.c.0.s8 %v1302
    %v1304 = vlaneseq
    %v1305 = vshrl.u32 %v1304, 7
    %v1306 = vsub.s32 %v1303, %v1305
    %v1307 = vrot.slane %v868, %v1306
    %v1309 = vunpack.c.l.s4 1983009808
    %v1310 = vunpack.c.0.s8 %v1309
    %v1311 = vlaneseq
    %v1312 = vshrl.u32 %v1311, 7
    %v1313 = vsub.s32 %v1310, %v1312
    %v1314 = vrot.slane %v1300, %v1313
    %v1315 = vcombine.high %v1307, %v1307
    %v1316 = vcombine.high %v1314, %v1314
    %v1317 = vcombine.high %v869, %v869
    %v1319 = vunpack.c.l.s4 1983009808
    %v1320 = vunpack.c.0.s8 %v1319
    %v1321 = vlaneseq
    %v1322 = vshrl.u32 %v1321, 7
    %v1323 = vsub.s32 %v1320, %v1322
    %v1324 = vrot.slane %v869, %v1323
    %v1326 = vunpack.c.l.s4 1983009808
    %v1327 = vunpack.c.0.s8 %v1326
    %v1328 = vlaneseq
    %v1329 = vshrl.u32 %v1328, 7
    %v1330 = vsub.s32 %v1327, %v1329
    %v1331 = vrot.slane %v1317, %v1330
    %v1332 = vcombine.high %v1324, %v1324
    %v1333 = vcombine.high %v1331, %v1331
    %v1334 = vcombine.high %v870, %v870
    %v1336 = vunpack.c.l.s4 1983009808
    %v1337 = vunpack.c.0.s8 %v1336
    %v1338 = vlaneseq
    %v1339 = vshrl.u32 %v1338, 7
    %v1340 = vsub.s32 %v1337, %v1339
    %v1341 = vrot.slane %v870, %v1340
    %v1343 = vunpack.c.l.s4 1983009808
    %v1344 = vunpack.c.0.s8 %v1343
    %v1345 = vlaneseq
    %v1346 = vshrl.u32 %v1345, 7
    %v1347 = vsub.s32 %v1344, %v1346
    %v1348 = vrot.slane %v1334, %v1347
    %v1349 = vcombine.high %v1341, %v1341
    %v1350 = vcombine.high %v1348, %v1348
    %v1351 = vcombine.high %v871, %v871
    %v1353 = vunpack.c.l.s4 1983009808
    %v1354 = vunpack.c.0.s8 %v1353
    %v1355 = vlaneseq
    %v1356 = vshrl.u32 %v1355, 7
    %v1357 = vsub.s32 %v1354, %v1356
    %v1358 = vrot.slane %v871, %v1357
    %v1360 = vunpack.c.l.s4 1983009808
    %v1361 = vunpack.c.0.s8 %v1360
    %v1362 = vlaneseq
    %v1363 = vshrl.u32 %v1362, 7
    %v1364 = vsub.s32 %v1361, %v1363
    %v1365 = vrot.slane %v1351, %v1364
    %v1366 = vcombine.high %v1358, %v1358
    %v1367 = vcombine.high %v1365, %v1365
    %v1368 = vcombine.high %v872, %v872
    %v1370 = vunpack.c.l.s4 1983009808
    %v1371 = vunpack.c.0.s8 %v1370
    %v1372 = vlaneseq
    %v1373 = vshrl.u32 %v1372, 7
    %v1374 = vsub.s32 %v1371, %v1373
    %v1375 = vrot.slane %v872, %v1374
    %v1377 = vunpack.c.l.s4 1983009808
    %v1378 = vunpack.c.0.s8 %v1377
    %v1379 = vlaneseq
    %v1380 = vshrl.u32 %v1379, 7
    %v1381 = vsub.s32 %v1378, %v1380
    %v1382 = vrot.slane %v1368, %v1381
    %v1383 = vcombine.high %v1375, %v1375
    %v1384 = vcombine.high %v1382, %v1382
    %v1385 = vcombine.high %v873, %v873
    %v1387 = vunpack.c.l.s4 1983009808
    %v1388 = vunpack.c.0.s8 %v1387
    %v1389 = vlaneseq
    %v1390 = vshrl.u32 %v1389, 7
    %v1391 = vsub.s32 %v1388, %v1390
    %v1392 = vrot.slane %v873, %v1391
    %v1394 = vunpack.c.l.s4 1983009808
    %v1395 = vunpack.c.0.s8 %v1394
    %v1396 = vlaneseq
    %v1397 = vshrl.u32 %v1396, 7
    %v1398 = vsub.s32 %v1395, %v1397
    %v1399 = vrot.slane %v1385, %v1398
    %v1400 = vcombine.high %v1392, %v1392
    %v1401 = vcombine.high %v1399, %v1399
    %v1402 = vcombine.high %v874, %v874
    %v1404 = vunpack.c.l.s4 1983009808
    %v1405 = vunpack.c.0.s8 %v1404
    %v1406 = vlaneseq
    %v1407 = vshrl.u32 %v1406, 7
    %v1408 = vsub.s32 %v1405, %v1407
    %v1409 = vrot.slane %v874, %v1408
    %v1411 = vunpack.c.l.s4 1983009808
    %v1412 = vunpack.c.0.s8 %v1411
    %v1413 = vlaneseq
    %v1414 = vshrl.u32 %v1413, 7
    %v1415 = vsub.s32 %v1412, %v1414
    %v1416 = vrot.slane %v1402, %v1415
    %v1417 = vcombine.high %v1409, %v1409
    %v1418 = vcombine.high %v1416, %v1416
    %v1419 = vcombine.high %v875, %v875
    %v1421 = vunpack.c.l.s4 1983009808
    %v1422 = vunpack.c.0.s8 %v1421
    %v1423 = vlaneseq
    %v1424 = vshrl.u32 %v1423, 7
    %v1425 = vsub.s32 %v1422, %v1424
    %v1426 = vrot.slane %v875, %v1425
    %v1428 = vunpack.c.l.s4 1983009808
    %v1429 = vunpack.c.0.s8 %v1428
    %v1430 = vlaneseq
    %v1431 = vshrl.u32 %v1430, 7
    %v1432 = vsub.s32 %v1429, %v1431
    %v1433 = vrot.slane %v1419, %v1432
    %v1434 = vcombine.high %v1426, %v1426
    %v1435 = vcombine.high %v1433, %v1433
    %v1436 = vcombine.high %v876, %v876
    %v1438 = vunpack.c.l.s4 1983009808
    %v1439 = vunpack.c.0.s8 %v1438
    %v1440 = vlaneseq
    %v1441 = vshrl.u32 %v1440, 7
    %v1442 = vsub.s32 %v1439, %v1441
    %v1443 = vrot.slane %v876, %v1442
    %v1445 = vunpack.c.l.s4 1983009808
    %v1446 = vunpack.c.0.s8 %v1445
    %v1447 = vlaneseq
    %v1448 = vshrl.u32 %v1447, 7
    %v1449 = vsub.s32 %v1446, %v1448
    %v1450 = vrot.slane %v1436, %v1449
    %v1451 = vcombine.high %v1443, %v1443
    %v1452 = vcombine.high %v1450, %v1450
    %v1453 = vcombine.high %v877, %v877
    %v1455 = vunpack.c.l.s4 1983009808
    %v1456 = vunpack.c.0.s8 %v1455
    %v1457 = vlaneseq
    %v1458 = vshrl.u32 %v1457, 7
    %v1459 = vsub.s32 %v1456, %v1458
    %v1460 = vrot.slane %v877, %v1459
    %v1462 = vunpack.c.l.s4 1983009808
    %v1463 = vunpack.c.0.s8 %v1462
    %v1464 = vlaneseq
    %v1465 = vshrl.u32 %v1464, 7
    %v1466 = vsub.s32 %v1463, %v1465
    %v1467 = vrot.slane %v1453, %v1466
    %v1468 = vcombine.high %v1460, %v1460
    %v1469 = vcombine.high %v1467, %v1467
    %v1470 = vcombine.high %v878, %v878
    %v1472 = vunpack.c.l.s4 1983009808
    %v1473 = vunpack.c.0.s8 %v1472
    %v1474 = vlaneseq
    %v1475 = vshrl.u32 %v1474, 7
    %v1476 = vsub.s32 %v1473, %v1475
    %v1477 = vrot.slane %v878, %v1476
    %v1479 = vunpack.c.l.s4 1983009808
    %v1480 = vunpack.c.0.s8 %v1479
    %v1481 = vlaneseq
    %v1482 = vshrl.u32 %v1481, 7
    %v1483 = vsub.s32 %v1480, %v1482
    %v1484 = vrot.slane %v1470, %v1483
    %v1485 = vcombine.high %v1477, %v1477
    %v1486 = vcombine.high %v1484, %v1484
    %v1487 = vcombine.high %v879, %v879
    %v1489 = vunpack.c.l.s4 1983009808
    %v1490 = vunpack.c.0.s8 %v1489
    %v1491 = vlaneseq
    %v1492 = vshrl.u32 %v1491, 7
    %v1493 = vsub.s32 %v1490, %v1492
    %v1494 = vrot.slane %v879, %v1493
    %v1496 = vunpack.c.l.s4 1983009808
    %v1497 = vunpack.c.0.s8 %v1496
    %v1498 = vlaneseq
    %v1499 = vshrl.u32 %v1498, 7
    %v1500 = vsub.s32 %v1497, %v1499
    %v1501 = vrot.slane %v1487, %v1500
    %v1502 = vcombine.high %v1494, %v1494
    %v1503 = vcombine.high %v1501, %v1501
    %v1504 = vcombine.high %v880, %v880
    %v1506 = vunpack.c.l.s4 1983009808
    %v1507 = vunpack.c.0.s8 %v1506
    %v1508 = vlaneseq
    %v1509 = vshrl.u32 %v1508, 7
    %v1510 = vsub.s32 %v1507, %v1509
    %v1511 = vrot.slane %v880, %v1510
    %v1513 = vunpack.c.l.s4 1983009808
    %v1514 = vunpack.c.0.s8 %v1513
    %v1515 = vlaneseq
    %v1516 = vshrl.u32 %v1515, 7
    %v1517 = vsub.s32 %v1514, %v1516
    %v1518 = vrot.slane %v1504, %v1517
    %v1519 = vcombine.high %v1511, %v1511
    %v1520 = vcombine.high %v1518, %v1518
    %v1521 = vcombine.high %v881, %v881
    %v1523 = vunpack.c.l.s4 1983009808
    %v1524 = vunpack.c.0.s8 %v1523
    %v1525 = vlaneseq
    %v1526 = vshrl.u32 %v1525, 7
    %v1527 = vsub.s32 %v1524, %v1526
    %v1528 = vrot.slane %v881, %v1527
    %v1530 = vunpack.c.l.s4 1983009808
    %v1531 = vunpack.c.0.s8 %v1530
    %v1532 = vlaneseq
    %v1533 = vshrl.u32 %v1532, 7
    %v1534 = vsub.s32 %v1531, %v1533
    %v1535 = vrot.slane %v1521, %v1534
    %v1536 = vcombine.high %v1528, %v1528
    %v1537 = vcombine.high %v1535, %v1535
    %v1538 = vcombine.high %v882, %v882
    %v1540 = vunpack.c.l.s4 1983009808
    %v1541 = vunpack.c.0.s8 %v1540
    %v1542 = vlaneseq
    %v1543 = vshrl.u32 %v1542, 7
    %v1544 = vsub.s32 %v1541, %v1543
    %v1545 = vrot.slane %v882, %v1544
    %v1547 = vunpack.c.l.s4 1983009808
    %v1548 = vunpack.c.0.s8 %v1547
    %v1549 = vlaneseq
    %v1550 = vshrl.u32 %v1549, 7
    %v1551 = vsub.s32 %v1548, %v1550
    %v1552 = vrot.slane %v1538, %v1551
    %v1553 = vcombine.high %v1545, %v1545
    %v1554 = vcombine.high %v1552, %v1552
    %v1555 = vcombine.high %v883, %v883
    %v1557 = vunpack.c.l.s4 1983009808
    %v1558 = vunpack.c.0.s8 %v1557
    %v1559 = vlaneseq
    %v1560 = vshrl.u32 %v1559, 7
    %v1561 = vsub.s32 %v1558, %v1560
    %v1562 = vrot.slane %v883, %v1561
    %v1564 = vunpack.c.l.s4 1983009808
    %v1565 = vunpack.c.0.s8 %v1564
    %v1566 = vlaneseq
    %v1567 = vshrl.u32 %v1566, 7
    %v1568 = vsub.s32 %v1565, %v1567
    %v1569 = vrot.slane %v1555, %v1568
    %v1570 = vcombine.high %v1562, %v1562
    %v1571 = vcombine.high %v1569, %v1569
    %v1572 = vcombine.high %v884, %v884
    %v1574 = vunpack.c.l.s4 1983009808
    %v1575 = vunpack.c.0.s8 %v1574
    %v1576 = vlaneseq
    %v1577 = vshrl.u32 %v1576, 7
    %v1578 = vsub.s32 %v1575, %v1577
    %v1579 = vrot.slane %v884, %v1578
    %v1581 = vunpack.c.l.s4 1983009808
    %v1582 = vunpack.c.0.s8 %v1581
    %v1583 = vlaneseq
    %v1584 = vshrl.u32 %v1583, 7
    %v1585 = vsub.s32 %v1582, %v1584
    %v1586 = vrot.slane %v1572, %v1585
    %v1587 = vcombine.high %v1579, %v1579
    %v1588 = vcombine.high %v1586, %v1586
    %v1589 = vcombine.high %v885, %v885
    %v1591 = vunpack.c.l.s4 1983009808
    %v1592 = vunpack.c.0.s8 %v1591
    %v1593 = vlaneseq
    %v1594 = vshrl.u32 %v1593, 7
    %v1595 = vsub.s32 %v1592, %v1594
    %v1596 = vrot.slane %v885, %v1595
    %v1598 = vunpack.c.l.s4 1983009808
    %v1599 = vunpack.c.0.s8 %v1598
    %v1600 = vlaneseq
    %v1601 = vshrl.u32 %v1600, 7
    %v1602 = vsub.s32 %v1599, %v1601
    %v1603 = vrot.slane %v1589, %v1602
    %v1604 = vcombine.high %v1596, %v1596
    %v1605 = vcombine.high %v1603, %v1603
    %v1606 = vcombine.high %v886, %v886
    %v1608 = vunpack.c.l.s4 1983009808
    %v1609 = vunpack.c.0.s8 %v1608
    %v1610 = vlaneseq
    %v1611 = vshrl.u32 %v1610, 7
    %v1612 = vsub.s32 %v1609, %v1611
    %v1613 = vrot.slane %v886, %v1612
    %v1615 = vunpack.c.l.s4 1983009808
    %v1616 = vunpack.c.0.s8 %v1615
    %v1617 = vlaneseq
    %v1618 = vshrl.u32 %v1617, 7
    %v1619 = vsub.s32 %v1616, %v1618
    %v1620 = vrot.slane %v1606, %v1619
    %v1621 = vcombine.high %v1613, %v1613
    %v1622 = vcombine.high %v1620, %v1620
    %v1623 = vcombine.high %v887, %v887
    %v1625 = vunpack.c.l.s4 1983009808
    %v1626 = vunpack.c.0.s8 %v1625
    %v1627 = vlaneseq
    %v1628 = vshrl.u32 %v1627, 7
    %v1629 = vsub.s32 %v1626, %v1628
    %v1630 = vrot.slane %v887, %v1629
    %v1632 = vunpack.c.l.s4 1983009808
    %v1633 = vunpack.c.0.s8 %v1632
    %v1634 = vlaneseq
    %v1635 = vshrl.u32 %v1634, 7
    %v1636 = vsub.s32 %v1633, %v1635
    %v1637 = vrot.slane %v1623, %v1636
    %v1638 = vcombine.high %v1630, %v1630
    %v1639 = vcombine.high %v1637, %v1637
    %v1640 = vcombine.high %v888, %v888
    %v1642 = vunpack.c.l.s4 1983009808
    %v1643 = vunpack.c.0.s8 %v1642
    %v1644 = vlaneseq
    %v1645 = vshrl.u32 %v1644, 7
    %v1646 = vsub.s32 %v1643, %v1645
    %v1647 = vrot.slane %v888, %v1646
    %v1649 = vunpack.c.l.s4 1983009808
    %v1650 = vunpack.c.0.s8 %v1649
    %v1651 = vlaneseq
    %v1652 = vshrl.u32 %v1651, 7
    %v1653 = vsub.s32 %v1650, %v1652
    %v1654 = vrot.slane %v1640, %v1653
    %v1655 = vcombine.high %v1647, %v1647
    %v1656 = vcombine.high %v1654, %v1654
    %v1657 = vcombine.high %v889, %v889
    %v1659 = vunpack.c.l.s4 1983009808
    %v1660 = vunpack.c.0.s8 %v1659
    %v1661 = vlaneseq
    %v1662 = vshrl.u32 %v1661, 7
    %v1663 = vsub.s32 %v1660, %v1662
    %v1664 = vrot.slane %v889, %v1663
    %v1666 = vunpack.c.l.s4 1983009808
    %v1667 = vunpack.c.0.s8 %v1666
    %v1668 = vlaneseq
    %v1669 = vshrl.u32 %v1668, 7
    %v1670 = vsub.s32 %v1667, %v1669
    %v1671 = vrot.slane %v1657, %v1670
    %v1672 = vcombine.high %v1664, %v1664
    %v1673 = vcombine.high %v1671, %v1671
    %v1674 = vcombine.high %v890, %v890
    %v1676 = vunpack.c.l.s4 1983009808
    %v1677 = vunpack.c.0.s8 %v1676
    %v1678 = vlaneseq
    %v1679 = vshrl.u32 %v1678, 7
    %v1680 = vsub.s32 %v1677, %v1679
    %v1681 = vrot.slane %v890, %v1680
    %v1683 = vunpack.c.l.s4 1983009808
    %v1684 = vunpack.c.0.s8 %v1683
    %v1685 = vlaneseq
    %v1686 = vshrl.u32 %v1685, 7
    %v1687 = vsub.s32 %v1684, %v1686
    %v1688 = vrot.slane %v1674, %v1687
    %v1689 = vcombine.high %v1681, %v1681
    %v1690 = vcombine.high %v1688, %v1688
    %v1691 = vcombine.high %v891, %v891
    %v1693 = vunpack.c.l.s4 1983009808
    %v1694 = vunpack.c.0.s8 %v1693
    %v1695 = vlaneseq
    %v1696 = vshrl.u32 %v1695, 7
    %v1697 = vsub.s32 %v1694, %v1696
    %v1698 = vrot.slane %v891, %v1697
    %v1700 = vunpack.c.l.s4 1983009808
    %v1701 = vunpack.c.0.s8 %v1700
    %v1702 = vlaneseq
    %v1703 = vshrl.u32 %v1702, 7
    %v1704 = vsub.s32 %v1701, %v1703
    %v1705 = vrot.slane %v1691, %v1704
    %v1706 = vcombine.high %v1698, %v1698
    %v1707 = vcombine.high %v1705, %v1705
    %v1708 = vcombine.high %v892, %v892
    %v1710 = vunpack.c.l.s4 1983009808
    %v1711 = vunpack.c.0.s8 %v1710
    %v1712 = vlaneseq
    %v1713 = vshrl.u32 %v1712, 7
    %v1714 = vsub.s32 %v1711, %v1713
    %v1715 = vrot.slane %v892, %v1714
    %v1717 = vunpack.c.l.s4 1983009808
    %v1718 = vunpack.c.0.s8 %v1717
    %v1719 = vlaneseq
    %v1720 = vshrl.u32 %v1719, 7
    %v1721 = vsub.s32 %v1718, %v1720
    %v1722 = vrot.slane %v1708, %v1721
    %v1723 = vcombine.high %v1715, %v1715
    %v1724 = vcombine.high %v1722, %v1722
    %v1725 = vcombine.high %v893, %v893
    %v1727 = vunpack.c.l.s4 1983009808
    %v1728 = vunpack.c.0.s8 %v1727
    %v1729 = vlaneseq
    %v1730 = vshrl.u32 %v1729, 7
    %v1731 = vsub.s32 %v1728, %v1730
    %v1732 = vrot.slane %v893, %v1731
    %v1734 = vunpack.c.l.s4 1983009808
    %v1735 = vunpack.c.0.s8 %v1734
    %v1736 = vlaneseq
    %v1737 = vshrl.u32 %v1736, 7
    %v1738 = vsub.s32 %v1735, %v1737
    %v1739 = vrot.slane %v1725, %v1738
    %v1740 = vcombine.high %v1732, %v1732
    %v1741 = vcombine.high %v1739, %v1739
    %v1742 = vcombine.high %v894, %v894
    %v1744 = vunpack.c.l.s4 1983009808
    %v1745 = vunpack.c.0.s8 %v1744
    %v1746 = vlaneseq
    %v1747 = vshrl.u32 %v1746, 7
    %v1748 = vsub.s32 %v1745, %v1747
    %v1749 = vrot.slane %v894, %v1748
    %v1751 = vunpack.c.l.s4 1983009808
    %v1752 = vunpack.c.0.s8 %v1751
    %v1753 = vlaneseq
    %v1754 = vshrl.u32 %v1753, 7
    %v1755 = vsub.s32 %v1752, %v1754
    %v1756 = vrot.slane %v1742, %v1755
    %v1757 = vcombine.high %v1749, %v1749
    %v1758 = vcombine.high %v1756, %v1756
    %v1759 = vcombine.high %v895, %v895
    %v1761 = vunpack.c.l.s4 1983009808
    %v1762 = vunpack.c.0.s8 %v1761
    %v1763 = vlaneseq
    %v1764 = vshrl.u32 %v1763, 7
    %v1765 = vsub.s32 %v1762, %v1764
    %v1766 = vrot.slane %v895, %v1765
    %v1768 = vunpack.c.l.s4 1983009808
    %v1769 = vunpack.c.0.s8 %v1768
    %v1770 = vlaneseq
    %v1771 = vshrl.u32 %v1770, 7
    %v1772 = vsub.s32 %v1769, %v1771
    %v1773 = vrot.slane %v1759, %v1772
    %v1774 = vcombine.high %v1766, %v1766
    %v1775 = vcombine.high %v1773, %v1773
    %v1776 = vcombine.high %v896, %v896
    %v1778 = vunpack.c.l.s4 1983009808
    %v1779 = vunpack.c.0.s8 %v1778
    %v1780 = vlaneseq
    %v1781 = vshrl.u32 %v1780, 7
    %v1782 = vsub.s32 %v1779, %v1781
    %v1783 = vrot.slane %v896, %v1782
    %v1785 = vunpack.c.l.s4 1983009808
    %v1786 = vunpack.c.0.s8 %v1785
    %v1787 = vlaneseq
    %v1788 = vshrl.u32 %v1787, 7
    %v1789 = vsub.s32 %v1786, %v1788
    %v1790 = vrot.slane %v1776, %v1789
    %v1791 = vcombine.high %v1783, %v1783
    %v1792 = vcombine.high %v1790, %v1790
    %v1793 = vcombine.high %v897, %v897
    %v1795 = vunpack.c.l.s4 1983009808
    %v1796 = vunpack.c.0.s8 %v1795
    %v1797 = vlaneseq
    %v1798 = vshrl.u32 %v1797, 7
    %v1799 = vsub.s32 %v1796, %v1798
    %v1800 = vrot.slane %v897, %v1799
    %v1802 = vunpack.c.l.s4 1983009808
    %v1803 = vunpack.c.0.s8 %v1802
    %v1804 = vlaneseq
    %v1805 = vshrl.u32 %v1804, 7
    %v1806 = vsub.s32 %v1803, %v1805
    %v1807 = vrot.slane %v1793, %v1806
    %v1808 = vcombine.high %v1800, %v1800
    %v1809 = vcombine.high %v1807, %v1807
    %v1810 = vcombine.high %v898, %v898
    %v1812 = vunpack.c.l.s4 1983009808
    %v1813 = vunpack.c.0.s8 %v1812
    %v1814 = vlaneseq
    %v1815 = vshrl.u32 %v1814, 7
    %v1816 = vsub.s32 %v1813, %v1815
    %v1817 = vrot.slane %v898, %v1816
    %v1819 = vunpack.c.l.s4 1983009808
    %v1820 = vunpack.c.0.s8 %v1819
    %v1821 = vlaneseq
    %v1822 = vshrl.u32 %v1821, 7
    %v1823 = vsub.s32 %v1820, %v1822
    %v1824 = vrot.slane %v1810, %v1823
    %v1825 = vcombine.high %v1817, %v1817
    %v1826 = vcombine.high %v1824, %v1824
    %v1827 = vcombine.high %v899, %v899
    %v1829 = vunpack.c.l.s4 1983009808
    %v1830 = vunpack.c.0.s8 %v1829
    %v1831 = vlaneseq
    %v1832 = vshrl.u32 %v1831, 7
    %v1833 = vsub.s32 %v1830, %v1832
    %v1834 = vrot.slane %v899, %v1833
    %v1836 = vunpack.c.l.s4 1983009808
    %v1837 = vunpack.c.0.s8 %v1836
    %v1838 = vlaneseq
    %v1839 = vshrl.u32 %v1838, 7
    %v1840 = vsub.s32 %v1837, %v1839
    %v1841 = vrot.slane %v1827, %v1840
    %v1842 = vcombine.high %v1834, %v1834
    %v1843 = vcombine.high %v1841, %v1841
    %v1844 = vcombine.high %v900, %v900
    %v1846 = vunpack.c.l.s4 1983009808
    %v1847 = vunpack.c.0.s8 %v1846
    %v1848 = vlaneseq
    %v1849 = vshrl.u32 %v1848, 7
    %v1850 = vsub.s32 %v1847, %v1849
    %v1851 = vrot.slane %v900, %v1850
    %v1853 = vunpack.c.l.s4 1983009808
    %v1854 = vunpack.c.0.s8 %v1853
    %v1855 = vlaneseq
    %v1856 = vshrl.u32 %v1855, 7
    %v1857 = vsub.s32 %v1854, %v1856
    %v1858 = vrot.slane %v1844, %v1857
    %v1859 = vcombine.high %v1851, %v1851
    %v1860 = vcombine.high %v1858, %v1858
    %v1861 = vcombine.high %v901, %v901
    %v1863 = vunpack.c.l.s4 1983009808
    %v1864 = vunpack.c.0.s8 %v1863
    %v1865 = vlaneseq
    %v1866 = vshrl.u32 %v1865, 7
    %v1867 = vsub.s32 %v1864, %v1866
    %v1868 = vrot.slane %v901, %v1867
    %v1870 = vunpack.c.l.s4 1983009808
    %v1871 = vunpack.c.0.s8 %v1870
    %v1872 = vlaneseq
    %v1873 = vshrl.u32 %v1872, 7
    %v1874 = vsub.s32 %v1871, %v1873
    %v1875 = vrot.slane %v1861, %v1874
    %v1876 = vcombine.high %v1868, %v1868
    %v1877 = vcombine.high %v1875, %v1875
    %v1878 = vcombine.high %v902, %v902
    %v1880 = vunpack.c.l.s4 1983009808
    %v1881 = vunpack.c.0.s8 %v1880
    %v1882 = vlaneseq
    %v1883 = vshrl.u32 %v1882, 7
    %v1884 = vsub.s32 %v1881, %v1883
    %v1885 = vrot.slane %v902, %v1884
    %v1887 = vunpack.c.l.s4 1983009808
    %v1888 = vunpack.c.0.s8 %v1887
    %v1889 = vlaneseq
    %v1890 = vshrl.u32 %v1889, 7
    %v1891 = vsub.s32 %v1888, %v1890
    %v1892 = vrot.slane %v1878, %v1891
    %v1893 = vcombine.high %v1885, %v1885
    %v1894 = vcombine.high %v1892, %v1892
    %v1895 = vcombine.high %v903, %v903
    %v1897 = vunpack.c.l.s4 1983009808
    %v1898 = vunpack.c.0.s8 %v1897
    %v1899 = vlaneseq
    %v1900 = vshrl.u32 %v1899, 7
    %v1901 = vsub.s32 %v1898, %v1900
    %v1902 = vrot.slane %v903, %v1901
    %v1904 = vunpack.c.l.s4 1983009808
    %v1905 = vunpack.c.0.s8 %v1904
    %v1906 = vlaneseq
    %v1907 = vshrl.u32 %v1906, 7
    %v1908 = vsub.s32 %v1905, %v1907
    %v1909 = vrot.slane %v1895, %v1908
    %v1910 = vcombine.high %v1902, %v1902
    %v1911 = vcombine.high %v1909, %v1909
    %v1912 = vcombine.high %v904, %v904
    %v1914 = vunpack.c.l.s4 1983009808
    %v1915 = vunpack.c.0.s8 %v1914
    %v1916 = vlaneseq
    %v1917 = vshrl.u32 %v1916, 7
    %v1918 = vsub.s32 %v1915, %v1917
    %v1919 = vrot.slane %v904, %v1918
    %v1921 = vunpack.c.l.s4 1983009808
    %v1922 = vunpack.c.0.s8 %v1921
    %v1923 = vlaneseq
    %v1924 = vshrl.u32 %v1923, 7
    %v1925 = vsub.s32 %v1922, %v1924
    %v1926 = vrot.slane %v1912, %v1925
    %v1927 = vcombine.high %v1919, %v1919
    %v1928 = vcombine.high %v1926, %v1926
    %v1929 = vcombine.high %v905, %v905
    %v1931 = vunpack.c.l.s4 1983009808
    %v1932 = vunpack.c.0.s8 %v1931
    %v1933 = vlaneseq
    %v1934 = vshrl.u32 %v1933, 7
    %v1935 = vsub.s32 %v1932, %v1934
    %v1936 = vrot.slane %v905, %v1935
    %v1938 = vunpack.c.l.s4 1983009808
    %v1939 = vunpack.c.0.s8 %v1938
    %v1940 = vlaneseq
    %v1941 = vshrl.u32 %v1940, 7
    %v1942 = vsub.s32 %v1939, %v1941
    %v1943 = vrot.slane %v1929, %v1942
    %v1944 = vcombine.high %v1936, %v1936
    %v1945 = vcombine.high %v1943, %v1943
    %v1946 = vcombine.high %v906, %v906
    %v1948 = vunpack.c.l.s4 1983009808
    %v1949 = vunpack.c.0.s8 %v1948
    %v1950 = vlaneseq
    %v1951 = vshrl.u32 %v1950, 7
    %v1952 = vsub.s32 %v1949, %v1951
    %v1953 = vrot.slane %v906, %v1952
    %v1955 = vunpack.c.l.s4 1983009808
    %v1956 = vunpack.c.0.s8 %v1955
    %v1957 = vlaneseq
    %v1958 = vshrl.u32 %v1957, 7
    %v1959 = vsub.s32 %v1956, %v1958
    %v1960 = vrot.slane %v1946, %v1959
    %v1961 = vcombine.high %v1953, %v1953
    %v1962 = vcombine.high %v1960, %v1960
    %v1963 = vcombine.high %v907, %v907
    %v1965 = vunpack.c.l.s4 1983009808
    %v1966 = vunpack.c.0.s8 %v1965
    %v1967 = vlaneseq
    %v1968 = vshrl.u32 %v1967, 7
    %v1969 = vsub.s32 %v1966, %v1968
    %v1970 = vrot.slane %v907, %v1969
    %v1972 = vunpack.c.l.s4 1983009808
    %v1973 = vunpack.c.0.s8 %v1972
    %v1974 = vlaneseq
    %v1975 = vshrl.u32 %v1974, 7
    %v1976 = vsub.s32 %v1973, %v1975
    %v1977 = vrot.slane %v1963, %v1976
    %v1978 = vcombine.high %v1970, %v1970
    %v1979 = vcombine.high %v1977, %v1977
    %v1980 = vcombine.high %v908, %v908
    %v1982 = vunpack.c.l.s4 1983009808
    %v1983 = vunpack.c.0.s8 %v1982
    %v1984 = vlaneseq
    %v1985 = vshrl.u32 %v1984, 7
    %v1986 = vsub.s32 %v1983, %v1985
    %v1987 = vrot.slane %v908, %v1986
    %v1989 = vunpack.c.l.s4 1983009808
    %v1990 = vunpack.c.0.s8 %v1989
    %v1991 = vlaneseq
    %v1992 = vshrl.u32 %v1991, 7
    %v1993 = vsub.s32 %v1990, %v1992
    %v1994 = vrot.slane %v1980, %v1993
    %v1995 = vcombine.high %v1987, %v1987
    %v1996 = vcombine.high %v1994, %v1994
    %v1997 = vcombine.high %v909, %v909
    %v1999 = vunpack.c.l.s4 1983009808
    %v2000 = vunpack.c.0.s8 %v1999
    %v2001 = vlaneseq
    %v2002 = vshrl.u32 %v2001, 7
    %v2003 = vsub.s32 %v2000, %v2002
    %v2004 = vrot.slane %v909, %v2003
    %v2006 = vunpack.c.l.s4 1983009808
    %v2007 = vunpack.c.0.s8 %v2006
    %v2008 = vlaneseq
    %v2009 = vshrl.u32 %v2008, 7
    %v2010 = vsub.s32 %v2007, %v2009
    %v2011 = vrot.slane %v1997, %v2010
    %v2012 = vcombine.high %v2004, %v2004
    %v2013 = vcombine.high %v2011, %v2011
    %v2014 = vcombine.high %v910, %v910
    %v2016 = vunpack.c.l.s4 1983009808
    %v2017 = vunpack.c.0.s8 %v2016
    %v2018 = vlaneseq
    %v2019 = vshrl.u32 %v2018, 7
    %v2020 = vsub.s32 %v2017, %v2019
    %v2021 = vrot.slane %v910, %v2020
    %v2023 = vunpack.c.l.s4 1983009808
    %v2024 = vunpack.c.0.s8 %v2023
    %v2025 = vlaneseq
    %v2026 = vshrl.u32 %v2025, 7
    %v2027 = vsub.s32 %v2024, %v2026
    %v2028 = vrot.slane %v2014, %v2027
    %v2029 = vcombine.high %v2021, %v2021
    %v2030 = vcombine.high %v2028, %v2028
    %v2031 = vcombine.high %v911, %v911
    %v2033 = vunpack.c.l.s4 1983009808
    %v2034 = vunpack.c.0.s8 %v2033
    %v2035 = vlaneseq
    %v2036 = vshrl.u32 %v2035, 7
    %v2037 = vsub.s32 %v2034, %v2036
    %v2038 = vrot.slane %v911, %v2037
    %v2040 = vunpack.c.l.s4 1983009808
    %v2041 = vunpack.c.0.s8 %v2040
    %v2042 = vlaneseq
    %v2043 = vshrl.u32 %v2042, 7
    %v2044 = vsub.s32 %v2041, %v2043
    %v2045 = vrot.slane %v2031, %v2044
    %v2046 = vcombine.high %v2038, %v2038
    %v2047 = vcombine.high %v2045, %v2045
    %v2048 = vcombine.high %v912, %v912
    %v2050 = vunpack.c.l.s4 1983009808
    %v2051 = vunpack.c.0.s8 %v2050
    %v2052 = vlaneseq
    %v2053 = vshrl.u32 %v2052, 7
    %v2054 = vsub.s32 %v2051, %v2053
    %v2055 = vrot.slane %v912, %v2054
    %v2057 = vunpack.c.l.s4 1983009808
    %v2058 = vunpack.c.0.s8 %v2057
    %v2059 = vlaneseq
    %v2060 = vshrl.u32 %v2059, 7
    %v2061 = vsub.s32 %v2058, %v2060
    %v2062 = vrot.slane %v2048, %v2061
    %v2063 = vcombine.high %v2055, %v2055
    %v2064 = vcombine.high %v2062, %v2062
    %v2321 = vrot.slane %v984, 7
    %v2322 = vrot.slane %v2321, 2
    %v2323 = vrot.slane %v992, 7
    %v2324 = vrot.slane %v2323, 2
    %v2325 = vrot.slane %v991, 7
    %v2326 = vrot.slane %v2325, 2
    %v2327 = vrot.slane %v993, 7
    %v2328 = vrot.slane %v2327, 2
    %v2329 = vrot.slane %v1001, 7
    %v2330 = vrot.slane %v2329, 2
    %v2331 = vrot.slane %v1009, 7
    %v2332 = vrot.slane %v2331, 2
    %v2333 = vrot.slane %v1008, 7
    %v2334 = vrot.slane %v2333, 2
    %v2335 = vrot.slane %v1010, 7
    %v2336 = vrot.slane %v2335, 2
    %v2337 = vrot.slane %v1018, 7
    %v2338 = vrot.slane %v2337, 2
    %v2339 = vrot.slane %v1026, 7
    %v2340 = vrot.slane %v2339, 2
    %v2341 = vrot.slane %v1025, 7
    %v2342 = vrot.slane %v2341, 2
    %v2343 = vrot.slane %v1027, 7
    %v2344 = vrot.slane %v2343, 2
    %v2345 = vrot.slane %v1035, 7
    %v2346 = vrot.slane %v2345, 2
    %v2347 = vrot.slane %v1043, 7
    %v2348 = vrot.slane %v2347, 2
    %v2349 = vrot.slane %v1042, 7
    %v2350 = vrot.slane %v2349, 2
    %v2351 = vrot.slane %v1044, 7
    %v2352 = vrot.slane %v2351, 2
    %v2353 = vrot.slane %v1052, 7
    %v2354 = vrot.slane %v2353, 2
    %v2355 = vrot.slane %v1060, 7
    %v2356 = vrot.slane %v2355, 2
    %v2357 = vrot.slane %v1059, 7
    %v2358 = vrot.slane %v2357, 2
    %v2359 = vrot.slane %v1061, 7
    %v2360 = vrot.slane %v2359, 2
    %v2361 = vrot.slane %v1069, 7
    %v2362 = vrot.slane %v2361, 2
    %v2363 = vrot.slane %v1077, 7
    %v2364 = vrot.slane %v2363, 2
    %v2365 = vrot.slane %v1076, 7
    %v2366 = vrot.slane %v2365, 2
    %v2367 = vrot.slane %v1078, 7
    %v2368 = vrot.slane %v2367, 2
    %v2369 = vrot.slane %v1086, 7
    %v2370 = vrot.slane %v2369, 2
    %v2371 = vrot.slane %v1094, 7
    %v2372 = vrot.slane %v2371, 2
    %v2373 = vrot.slane %v1093, 7
    %v2374 = vrot.slane %v2373, 2
    %v2375 = vrot.slane %v1095, 7
    %v2376 = vrot.slane %v2375, 2
    %v2377 = vrot.slane %v1103, 7
    %v2378 = vrot.slane %v2377, 2
    %v2379 = vrot.slane %v1111, 7
    %v2380 = vrot.slane %v2379, 2
    %v2381 = vrot.slane %v1110, 7
    %v2382 = vrot.slane %v2381, 2
    %v2383 = vrot.slane %v1112, 7
    %v2384 = vrot.slane %v2383, 2
    %v2385 = vrot.slane %v1120, 7
    %v2386 = vrot.slane %v2385, 2
    %v2387 = vrot.slane %v1128, 7
    %v2388 = vrot.slane %v2387, 2
    %v2389 = vrot.slane %v1127, 7
    %v2390 = vrot.slane %v2389, 2
    %v2391 = vrot.slane %v1129, 7
    %v2392 = vrot.slane %v2391, 2
    %v2393 = vrot.slane %v1137, 7
    %v2394 = vrot.slane %v2393, 2
    %v2395 = vrot.slane %v1145, 7
    %v2396 = vrot.slane %v2395, 2
    %v2397 = vrot.slane %v1144, 7
    %v2398 = vrot.slane %v2397, 2
    %v2399 = vrot.slane %v1146, 7
    %v2400 = vrot.slane %v2399, 2
    %v2401 = vrot.slane %v1154, 7
    %v2402 = vrot.slane %v2401, 2
    %v2403 = vrot.slane %v1162, 7
    %v2404 = vrot.slane %v2403, 2
    %v2405 = vrot.slane %v1161, 7
    %v2406 = vrot.slane %v2405, 2
    %v2407 = vrot.slane %v1163, 7
    %v2408 = vrot.slane %v2407, 2
    %v2409 = vrot.slane %v1171, 7
    %v2410 = vrot.slane %v2409, 2
    %v2411 = vrot.slane %v1179, 7
    %v2412 = vrot.slane %v2411, 2
    %v2413 = vrot.slane %v1178, 7
    %v2414 = vrot.slane %v2413, 2
    %v2415 = vrot.slane %v1180, 7
    %v2416 = vrot.slane %v2415, 2
    %v2417 = vrot.slane %v1188, 7
    %v2418 = vrot.slane %v2417, 2
    %v2419 = vrot.slane %v1196, 7
    %v2420 = vrot.slane %v2419, 2
    %v2421 = vrot.slane %v1195, 7
    %v2422 = vrot.slane %v2421, 2
    %v2423 = vrot.slane %v1197, 7
    %v2424 = vrot.slane %v2423, 2
    %v2425 = vrot.slane %v1205, 7
    %v2426 = vrot.slane %v2425, 2
    %v2427 = vrot.slane %v1213, 7
    %v2428 = vrot.slane %v2427, 2
    %v2429 = vrot.slane %v1212, 7
    %v2430 = vrot.slane %v2429, 2
    %v2431 = vrot.slane %v1214, 7
    %v2432 = vrot.slane %v2431, 2
    %v2433 = vrot.slane %v1222, 7
    %v2434 = vrot.slane %v2433, 2
    %v2435 = vrot.slane %v1230, 7
    %v2436 = vrot.slane %v2435, 2
    %v2437 = vrot.slane %v1229, 7
    %v2438 = vrot.slane %v2437, 2
    %v2439 = vrot.slane %v1231, 7
    %v2440 = vrot.slane %v2439, 2
    %v2441 = vrot.slane %v1239, 7
    %v2442 = vrot.slane %v2441, 2
    %v2443 = vrot.slane %v1247, 7
    %v2444 = vrot.slane %v2443, 2
    %v2445 = vrot.slane %v1246, 7
    %v2446 = vrot.slane %v2445, 2
    %v2447 = vrot.slane %v1248, 7
    %v2448 = vrot.slane %v2447, 2
    %v2449 = vrot.slane %v1256, 7
    %v2450 = vrot.slane %v2449, 2
    %v2451 = vrot.slane %v1264, 7
    %v2452 = vrot.slane %v2451, 2
    %v2453 = vrot.slane %v1263, 7
    %v2454 = vrot.slane %v2453, 2
    %v2455 = vrot.slane %v1265, 7
    %v2456 = vrot.slane %v2455, 2
    %v2457 = vrot.slane %v1273, 7
    %v2458 = vrot.slane %v2457, 2
    %v2459 = vrot.slane %v1281, 7
    %v2460 = vrot.slane %v2459, 2
    %v2461 = vrot.slane %v1280, 7
    %v2462 = vrot.slane %v2461, 2
    %v2463 = vrot.slane %v1282, 7
    %v2464 = vrot.slane %v2463, 2
    %v2465 = vrot.slane %v1290, 7
    %v2466 = vrot.slane %v2465, 2
    %v2467 = vrot.slane %v1298, 7
    %v2468 = vrot.slane %v2467, 2
    %v2469 = vrot.slane %v1297, 7
    %v2470 = vrot.slane %v2469, 2
    %v2471 = vrot.slane %v1299, 7
    %v2472 = vrot.slane %v2471, 2
    %v2473 = vrot.slane %v1307, 7
    %v2474 = vrot.slane %v2473, 2
    %v2475 = vrot.slane %v1315, 7
    %v2476 = vrot.slane %v2475, 2
    %v2477 = vrot.slane %v1314, 7
    %v2478 = vrot.slane %v2477, 2
    %v2479 = vrot.slane %v1316, 7
    %v2480 = vrot.slane %v2479, 2
    %v2481 = vrot.slane %v1324, 7
    %v2482 = vrot.slane %v2481, 2
    %v2483 = vrot.slane %v1332, 7
    %v2484 = vrot.slane %v2483, 2
    %v2485 = vrot.slane %v1331, 7
    %v2486 = vrot.slane %v2485, 2
    %v2487 = vrot.slane %v1333, 7
    %v2488 = vrot.slane %v2487, 2
    %v2489 = vrot.slane %v1341, 7
    %v2490 = vrot.slane %v2489, 2
    %v2491 = vrot.slane %v1349, 7
    %v2492 = vrot.slane %v2491, 2
    %v2493 = vrot.slane %v1348, 7
    %v2494 = vrot.slane %v2493, 2
    %v2495 = vrot.slane %v1350, 7
    %v2496 = vrot.slane %v2495, 2
    %v2497 = vrot.slane %v1358, 7
    %v2498 = vrot.slane %v2497, 2
    %v2499 = vrot.slane %v1366, 7
    %v2500 = vrot.slane %v2499, 2
    %v2501 = vrot.slane %v1365, 7
    %v2502 = vrot.slane %v2501, 2
    %v2503 = vrot.slane %v1367, 7
    %v2504 = vrot.slane %v2503, 2
    %v2505 = vrot.slane %v1375, 7
    %v2506 = vrot.slane %v2505, 2
    %v2507 = vrot.slane %v1383, 7
    %v2508 = vrot.slane %v2507, 2
    %v2509 = vrot.slane %v1382, 7
    %v2510 = vrot.slane %v2509, 2
    %v2511 = vrot.slane %v1384, 7
    %v2512 = vrot.slane %v2511, 2
    %v2513 = vrot.slane %v1392, 7
    %v2514 = vrot.slane %v2513, 2
    %v2515 = vrot.slane %v1400, 7
    %v2516 = vrot.slane %v2515, 2
    %v2517 = vrot.slane %v1399, 7
    %v2518 = vrot.slane %v2517, 2
    %v2519 = vrot.slane %v1401, 7
    %v2520 = vrot.slane %v2519, 2
    %v2521 = vrot.slane %v1409, 7
    %v2522 = vrot.slane %v2521, 2
    %v2523 = vrot.slane %v1417, 7
    %v2524 = vrot.slane %v2523, 2
    %v2525 = vrot.slane %v1416, 7
    %v2526 = vrot.slane %v2525, 2
    %v2527 = vrot.slane %v1418, 7
    %v2528 = vrot.slane %v2527, 2
    %v2529 = vrot.slane %v1426, 7
    %v2530 = vrot.slane %v2529, 2
    %v2531 = vrot.slane %v1434, 7
    %v2532 = vrot.slane %v2531, 2
    %v2533 = vrot.slane %v1433, 7
    %v2534 = vrot.slane %v2533, 2
    %v2535 = vrot.slane %v1435, 7
    %v2536 = vrot.slane %v2535, 2
    %v2537 = vrot.slane %v1443, 7
    %v2538 = vrot.slane %v2537, 2
    %v2539 = vrot.slane %v1451, 7
    %v2540 = vrot.slane %v2539, 2
    %v2541 = vrot.slane %v1450, 7
    %v2542 = vrot.slane %v2541, 2
    %v2543 = vrot.slane %v1452, 7
    %v2544 = vrot.slane %v2543, 2
    %v2545 = vrot.slane %v1460, 7
    %v2546 = vrot.slane %v2545, 2
    %v2547 = vrot.slane %v1468, 7
    %v2548 = vrot.slane %v2547, 2
    %v2549 = vrot.slane %v1467, 7
    %v2550 = vrot.slane %v2549, 2
    %v2551 = vrot.slane %v1469, 7
    %v2552 = vrot.slane %v2551, 2
    %v2553 = vrot.slane %v1477, 7
    %v2554 = vrot.slane %v2553, 2
    %v2555 = vrot.slane %v1485, 7
    %v2556 = vrot.slane %v2555, 2
    %v2557 = vrot.slane %v1484, 7
    %v2558 = vrot.slane %v2557, 2
    %v2559 = vrot.slane %v1486, 7
    %v2560 = vrot.slane %v2559, 2
    %v2561 = vrot.slane %v1494, 7
    %v2562 = vrot.slane %v2561, 2
    %v2563 = vrot.slane %v1502, 7
    %v2564 = vrot.slane %v2563, 2
    %v2565 = vrot.slane %v1501, 7
    %v2566 = vrot.slane %v2565, 2
    %v2567 = vrot.slane %v1503, 7
    %v2568 = vrot.slane %v2567, 2
    %v2569 = vrot.slane %v1511, 7
    %v2570 = vrot.slane %v2569, 2
    %v2571 = vrot.slane %v1519, 7
    %v2572 = vrot.slane %v2571, 2
    %v2573 = vrot.slane %v1518, 7
    %v2574 = vrot.slane %v2573, 2
    %v2575 = vrot.slane %v1520, 7
    %v2576 = vrot.slane %v2575, 2
    %v2577 = vrot.slane %v1528, 7
    %v2578 = vrot.slane %v2577, 2
    %v2579 = vrot.slane %v1536, 7
    %v2580 = vrot.slane %v2579, 2
    %v2581 = vrot.slane %v1535, 7
    %v2582 = vrot.slane %v2581, 2
    %v2583 = vrot.slane %v1537, 7
    %v2584 = vrot.slane %v2583, 2
    %v2585 = vrot.slane %v1545, 7
    %v2586 = vrot.slane %v2585, 2
    %v2587 = vrot.slane %v1553, 7
    %v2588 = vrot.slane %v2587, 2
    %v2589 = vrot.slane %v1552, 7
    %v2590 = vrot.slane %v2589, 2
    %v2591 = vrot.slane %v1554, 7
    %v2592 = vrot.slane %v2591, 2
    %v2593 = vrot.slane %v1562, 7
    %v2594 = vrot.slane %v2593, 2
    %v2595 = vrot.slane %v1570, 7
    %v2596 = vrot.slane %v2595, 2
    %v2597 = vrot.slane %v1569, 7
    %v2598 = vrot.slane %v2597, 2
    %v2599 = vrot.slane %v1571, 7
    %v2600 = vrot.slane %v2599, 2
    %v2601 = vrot.slane %v1579, 7
    %v2602 = vrot.slane %v2601, 2
    %v2603 = vrot.slane %v1587, 7
    %v2604 = vrot.slane %v2603, 2
    %v2605 = vrot.slane %v1586, 7
    %v2606 = vrot.slane %v2605, 2
    %v2607 = vrot.slane %v1588, 7
    %v2608 = vrot.slane %v2607, 2
    %v2609 = vrot.slane %v1596, 7
    %v2610 = vrot.slane %v2609, 2
    %v2611 = vrot.slane %v1604, 7
    %v2612 = vrot.slane %v2611, 2
    %v2613 = vrot.slane %v1603, 7
    %v2614 = vrot.slane %v2613, 2
    %v2615 = vrot.slane %v1605, 7
    %v2616 = vrot.slane %v2615, 2
    %v2617 = vrot.slane %v1613, 7
    %v2618 = vrot.slane %v2617, 2
    %v2619 = vrot.slane %v1621, 7
    %v2620 = vrot.slane %v2619, 2
    %v2621 = vrot.slane %v1620, 7
    %v2622 = vrot.slane %v2621, 2
    %v2623 = vrot.slane %v1622, 7
    %v2624 = vrot.slane %v2623, 2
    %v2625 = vrot.slane %v1630, 7
    %v2626 = vrot.slane %v2625, 2
    %v2627 = vrot.slane %v1638, 7
    %v2628 = vrot.slane %v2627, 2
    %v2629 = vrot.slane %v1637, 7
    %v2630 = vrot.slane %v2629, 2
    %v2631 = vrot.slane %v1639, 7
    %v2632 = vrot.slane %v2631, 2
    %v2633 = vrot.slane %v1647, 7
    %v2634 = vrot.slane %v2633, 2
    %v2635 = vrot.slane %v1655, 7
    %v2636 = vrot.slane %v2635, 2
    %v2637 = vrot.slane %v1654, 7
    %v2638 = vrot.slane %v2637, 2
    %v2639 = vrot.slane %v1656, 7
    %v2640 = vrot.slane %v2639, 2
    %v2641 = vrot.slane %v1664, 7
    %v2642 = vrot.slane %v2641, 2
    %v2643 = vrot.slane %v1672, 7
    %v2644 = vrot.slane %v2643, 2
    %v2645 = vrot.slane %v1671, 7
    %v2646 = vrot.slane %v2645, 2
    %v2647 = vrot.slane %v1673, 7
    %v2648 = vrot.slane %v2647, 2
    %v2649 = vrot.slane %v1681, 7
    %v2650 = vrot.slane %v2649, 2
    %v2651 = vrot.slane %v1689, 7
    %v2652 = vrot.slane %v2651, 2
    %v2653 = vrot.slane %v1688, 7
    %v2654 = vrot.slane %v2653, 2
    %v2655 = vrot.slane %v1690, 7
    %v2656 = vrot.slane %v2655, 2
    %v2657 = vrot.slane %v1698, 7
    %v2658 = vrot.slane %v2657, 2
    %v2659 = vrot.slane %v1706, 7
    %v2660 = vrot.slane %v2659, 2
    %v2661 = vrot.slane %v1705, 7
    %v2662 = vrot.slane %v2661, 2
    %v2663 = vrot.slane %v1707, 7
    %v2664 = vrot.slane %v2663, 2
    %v2665 = vrot.slane %v1715, 7
    %v2666 = vrot.slane %v2665, 2
    %v2667 = vrot.slane %v1723, 7
    %v2668 = vrot.slane %v2667, 2
    %v2669 = vrot.slane %v1722, 7
    %v2670 = vrot.slane %v2669, 2
    %v2671 = vrot.slane %v1724, 7
    %v2672 = vrot.slane %v2671, 2
    %v2673 = vrot.slane %v1732, 7
    %v2674 = vrot.slane %v2673, 2
    %v2675 = vrot.slane %v1740, 7
    %v2676 = vrot.slane %v2675, 2
    %v2677 = vrot.slane %v1739, 7
    %v2678 = vrot.slane %v2677, 2
    %v2679 = vrot.slane %v1741, 7
    %v2680 = vrot.slane %v2679, 2
    %v2681 = vrot.slane %v1749, 7
    %v2682 = vrot.slane %v2681, 2
    %v2683 = vrot.slane %v1757, 7
    %v2684 = vrot.slane %v2683, 2
    %v2685 = vrot.slane %v1756, 7
    %v2686 = vrot.slane %v2685, 2
    %v2687 = vrot.slane %v1758, 7
    %v2688 = vrot.slane %v2687, 2
    %v2689 = vrot.slane %v1766, 7
    %v2690 = vrot.slane %v2689, 2
    %v2691 = vrot.slane %v1774, 7
    %v2692 = vrot.slane %v2691, 2
    %v2693 = vrot.slane %v1773, 7
    %v2694 = vrot.slane %v2693, 2
    %v2695 = vrot.slane %v1775, 7
    %v2696 = vrot.slane %v2695, 2
    %v2697 = vrot.slane %v1783, 7
    %v2698 = vrot.slane %v2697, 2
    %v2699 = vrot.slane %v1791, 7
    %v2700 = vrot.slane %v2699, 2
    %v2701 = vrot.slane %v1790, 7
    %v2702 = vrot.slane %v2701, 2
    %v2703 = vrot.slane %v1792, 7
    %v2704 = vrot.slane %v2703, 2
    %v2705 = vrot.slane %v1800, 7
    %v2706 = vrot.slane %v2705, 2
    %v2707 = vrot.slane %v1808, 7
    %v2708 = vrot.slane %v2707, 2
    %v2709 = vrot.slane %v1807, 7
    %v2710 = vrot.slane %v2709, 2
    %v2711 = vrot.slane %v1809, 7
    %v2712 = vrot.slane %v2711, 2
    %v2713 = vrot.slane %v1817, 7
    %v2714 = vrot.slane %v2713, 2
    %v2715 = vrot.slane %v1825, 7
    %v2716 = vrot.slane %v2715, 2
    %v2717 = vrot.slane %v1824, 7
    %v2718 = vrot.slane %v2717, 2
    %v2719 = vrot.slane %v1826, 7
    %v2720 = vrot.slane %v2719, 2
    %v2721 = vrot.slane %v1834, 7
    %v2722 = vrot.slane %v2721, 2
    %v2723 = vrot.slane %v1842, 7
    %v2724 = vrot.slane %v2723, 2
    %v2725 = vrot.slane %v1841, 7
    %v2726 = vrot.slane %v2725, 2
    %v2727 = vrot.slane %v1843, 7
    %v2728 = vrot.slane %v2727, 2
    %v2729 = vrot.slane %v1851, 7
    %v2730 = vrot.slane %v2729, 2
    %v2731 = vrot.slane %v1859, 7
    %v2732 = vrot.slane %v2731, 2
    %v2733 = vrot.slane %v1858, 7
    %v2734 = vrot.slane %v2733, 2
    %v2735 = vrot.slane %v1860, 7
    %v2736 = vrot.slane %v2735, 2
    %v2737 = vrot.slane %v1868, 7
    %v2738 = vrot.slane %v2737, 2
    %v2739 = vrot.slane %v1876, 7
    %v2740 = vrot.slane %v2739, 2
    %v2741 = vrot.slane %v1875, 7
    %v2742 = vrot.slane %v2741, 2
    %v2743 = vrot.slane %v1877, 7
    %v2744 = vrot.slane %v2743, 2
    %v2745 = vrot.slane %v1885, 7
    %v2746 = vrot.slane %v2745, 2
    %v2747 = vrot.slane %v1893, 7
    %v2748 = vrot.slane %v2747, 2
    %v2749 = vrot.slane %v1892, 7
    %v2750 = vrot.slane %v2749, 2
    %v2751 = vrot.slane %v1894, 7
    %v2752 = vrot.slane %v2751, 2
    %v2753 = vrot.slane %v1902, 7
    %v2754 = vrot.slane %v2753, 2
    %v2755 = vrot.slane %v1910, 7
    %v2756 = vrot.slane %v2755, 2
    %v2757 = vrot.slane %v1909, 7
    %v2758 = vrot.slane %v2757, 2
    %v2759 = vrot.slane %v1911, 7
    %v2760 = vrot.slane %v2759, 2
    %v2761 = vrot.slane %v1919, 7
    %v2762 = vrot.slane %v2761, 2
    %v2763 = vrot.slane %v1927, 7
    %v2764 = vrot.slane %v2763, 2
    %v2765 = vrot.slane %v1926, 7
    %v2766 = vrot.slane %v2765, 2
    %v2767 = vrot.slane %v1928, 7
    %v2768 = vrot.slane %v2767, 2
    %v2769 = vrot.slane %v1936, 7
    %v2770 = vrot.slane %v2769, 2
    %v2771 = vrot.slane %v1944, 7
    %v2772 = vrot.slane %v2771, 2
    %v2773 = vrot.slane %v1943, 7
    %v2774 = vrot.slane %v2773, 2
    %v2775 = vrot.slane %v1945, 7
    %v2776 = vrot.slane %v2775, 2
    %v2777 = vrot.slane %v1953, 7
    %v2778 = vrot.slane %v2777, 2
    %v2779 = vrot.slane %v1961, 7
    %v2780 = vrot.slane %v2779, 2
    %v2781 = vrot.slane %v1960, 7
    %v2782 = vrot.slane %v2781, 2
    %v2783 = vrot.slane %v1962, 7
    %v2784 = vrot.slane %v2783, 2
    %v2785 = vrot.slane %v1970, 7
    %v2786 = vrot.slane %v2785, 2
    %v2787 = vrot.slane %v1978, 7
    %v2788 = vrot.slane %v2787, 2
    %v2789 = vrot.slane %v1977, 7
    %v2790 = vrot.slane %v2789, 2
    %v2791 = vrot.slane %v1979, 7
    %v2792 = vrot.slane %v2791, 2
    %v2793 = vrot.slane %v1987, 7
    %v2794 = vrot.slane %v2793, 2
    %v2795 = vrot.slane %v1995, 7
    %v2796 = vrot.slane %v2795, 2
    %v2797 = vrot.slane %v1994, 7
    %v2798 = vrot.slane %v2797, 2
    %v2799 = vrot.slane %v1996, 7
    %v2800 = vrot.slane %v2799, 2
    %v2801 = vrot.slane %v2004, 7
    %v2802 = vrot.slane %v2801, 2
    %v2803 = vrot.slane %v2012, 7
    %v2804 = vrot.slane %v2803, 2
    %v2805 = vrot.slane %v2011, 7
    %v2806 = vrot.slane %v2805, 2
    %v2807 = vrot.slane %v2013, 7
    %v2808 = vrot.slane %v2807, 2
    %v2809 = vrot.slane %v2021, 7
    %v2810 = vrot.slane %v2809, 2
    %v2811 = vrot.slane %v2029, 7
    %v2812 = vrot.slane %v2811, 2
    %v2813 = vrot.slane %v2028, 7
    %v2814 = vrot.slane %v2813, 2
    %v2815 = vrot.slane %v2030, 7
    %v2816 = vrot.slane %v2815, 2
    %v2817 = vrot.slane %v2038, 7
    %v2818 = vrot.slane %v2817, 2
    %v2819 = vrot.slane %v2046, 7
    %v2820 = vrot.slane %v2819, 2
    %v2821 = vrot.slane %v2045, 7
    %v2822 = vrot.slane %v2821, 2
    %v2823 = vrot.slane %v2047, 7
    %v2824 = vrot.slane %v2823, 2
    %v2825 = vrot.slane %v2055, 7
    %v2826 = vrot.slane %v2825, 2
    %v2827 = vrot.slane %v2063, 7
    %v2828 = vrot.slane %v2827, 2
    %v2829 = vrot.slane %v2062, 7
    %v2830 = vrot.slane %v2829, 2
    %v2831 = vrot.slane %v2064, 7
    %v2832 = vrot.slane %v2831, 2
    %v3089 = vmax.f32 %v984, %v2322
    %v3090 = vmax.f32 %v992, %v2324
    %v3091 = vmax.f32 %v991, %v2326
    %v3092 = vmax.f32 %v993, %v2328
    %v3093 = vmax.f32 %v1001, %v2330
    %v3094 = vmax.f32 %v1009, %v2332
    %v3095 = vmax.f32 %v1008, %v2334
    %v3096 = vmax.f32 %v1010, %v2336
    %v3097 = vmax.f32 %v1018, %v2338
    %v3098 = vmax.f32 %v1026, %v2340
    %v3099 = vmax.f32 %v1025, %v2342
    %v3100 = vmax.f32 %v1027, %v2344
    %v3101 = vmax.f32 %v1035, %v2346
    %v3102 = vmax.f32 %v1043, %v2348
    %v3103 = vmax.f32 %v1042, %v2350
    %v3104 = vmax.f32 %v1044, %v2352
    %v3105 = vmax.f32 %v1052, %v2354
    %v3106 = vmax.f32 %v1060, %v2356
    %v3107 = vmax.f32 %v1059, %v2358
    %v3108 = vmax.f32 %v1061, %v2360
    %v3109 = vmax.f32 %v1069, %v2362
    %v3110 = vmax.f32 %v1077, %v2364
    %v3111 = vmax.f32 %v1076, %v2366
    %v3112 = vmax.f32 %v1078, %v2368
    %v3113 = vmax.f32 %v1086, %v2370
    %v3114 = vmax.f32 %v1094, %v2372
    %v3115 = vmax.f32 %v1093, %v2374
    %v3116 = vmax.f32 %v1095, %v2376
    %v3117 = vmax.f32 %v1103, %v2378
    %v3118 = vmax.f32 %v1111, %v2380
    %v3119 = vmax.f32 %v1110, %v2382
    %v3120 = vmax.f32 %v1112, %v2384
    %v3121 = vmax.f32 %v1120, %v2386
    %v3122 = vmax.f32 %v1128, %v2388
    %v3123 = vmax.f32 %v1127, %v2390
    %v3124 = vmax.f32 %v1129, %v2392
    %v3125 = vmax.f32 %v1137, %v2394
    %v3126 = vmax.f32 %v1145, %v2396
    %v3127 = vmax.f32 %v1144, %v2398
    %v3128 = vmax.f32 %v1146, %v2400
    %v3129 = vmax.f32 %v1154, %v2402
    %v3130 = vmax.f32 %v1162, %v2404
    %v3131 = vmax.f32 %v1161, %v2406
    %v3132 = vmax.f32 %v1163, %v2408
    %v3133 = vmax.f32 %v1171, %v2410
    %v3134 = vmax.f32 %v1179, %v2412
    %v3135 = vmax.f32 %v1178, %v2414
    %v3136 = vmax.f32 %v1180, %v2416
    %v3137 = vmax.f32 %v1188, %v2418
    %v3138 = vmax.f32 %v1196, %v2420
    %v3139 = vmax.f32 %v1195, %v2422
    %v3140 = vmax.f32 %v1197, %v2424
    %v3141 = vmax.f32 %v1205, %v2426
    %v3142 = vmax.f32 %v1213, %v2428
    %v3143 = vmax.f32 %v1212, %v2430
    %v3144 = vmax.f32 %v1214, %v2432
    %v3145 = vmax.f32 %v1222, %v2434
    %v3146 = vmax.f32 %v1230, %v2436
    %v3147 = vmax.f32 %v1229, %v2438
    %v3148 = vmax.f32 %v1231, %v2440
    %v3149 = vmax.f32 %v1239, %v2442
    %v3150 = vmax.f32 %v1247, %v2444
    %v3151 = vmax.f32 %v1246, %v2446
    %v3152 = vmax.f32 %v1248, %v2448
    %v3153 = vmax.f32 %v1256, %v2450
    %v3154 = vmax.f32 %v1264, %v2452
    %v3155 = vmax.f32 %v1263, %v2454
    %v3156 = vmax.f32 %v1265, %v2456
    %v3157 = vmax.f32 %v1273, %v2458
    %v3158 = vmax.f32 %v1281, %v2460
    %v3159 = vmax.f32 %v1280, %v2462
    %v3160 = vmax.f32 %v1282, %v2464
    %v3161 = vmax.f32 %v1290, %v2466
    %v3162 = vmax.f32 %v1298, %v2468
    %v3163 = vmax.f32 %v1297, %v2470
    %v3164 = vmax.f32 %v1299, %v2472
    %v3165 = vmax.f32 %v1307, %v2474
    %v3166 = vmax.f32 %v1315, %v2476
    %v3167 = vmax.f32 %v1314, %v2478
    %v3168 = vmax.f32 %v1316, %v2480
    %v3169 = vmax.f32 %v1324, %v2482
    %v3170 = vmax.f32 %v1332, %v2484
    %v3171 = vmax.f32 %v1331, %v2486
    %v3172 = vmax.f32 %v1333, %v2488
    %v3173 = vmax.f32 %v1341, %v2490
    %v3174 = vmax.f32 %v1349, %v2492
    %v3175 = vmax.f32 %v1348, %v2494
    %v3176 = vmax.f32 %v1350, %v2496
    %v3177 = vmax.f32 %v1358, %v2498
    %v3178 = vmax.f32 %v1366, %v2500
    %v3179 = vmax.f32 %v1365, %v2502
    %v3180 = vmax.f32 %v1367, %v2504
    %v3181 = vmax.f32 %v1375, %v2506
    %v3182 = vmax.f32 %v1383, %v2508
    %v3183 = vmax.f32 %v1382, %v2510
    %v3184 = vmax.f32 %v1384, %v2512
    %v3185 = vmax.f32 %v1392, %v2514
    %v3186 = vmax.f32 %v1400, %v2516
    %v3187 = vmax.f32 %v1399, %v2518
    %v3188 = vmax.f32 %v1401, %v2520
    %v3189 = vmax.f32 %v1409, %v2522
    %v3190 = vmax.f32 %v1417, %v2524
    %v3191 = vmax.f32 %v1416, %v2526
    %v3192 = vmax.f32 %v1418, %v2528
    %v3193 = vmax.f32 %v1426, %v2530
    %v3194 = vmax.f32 %v1434, %v2532
    %v3195 = vmax.f32 %v1433, %v2534
    %v3196 = vmax.f32 %v1435, %v2536
    %v3197 = vmax.f32 %v1443, %v2538
    %v3198 = vmax.f32 %v1451, %v2540
    %v3199 = vmax.f32 %v1450, %v2542
    %v3200 = vmax.f32 %v1452, %v2544
    %v3201 = vmax.f32 %v1460, %v2546
    %v3202 = vmax.f32 %v1468, %v2548
    %v3203 = vmax.f32 %v1467, %v2550
    %v3204 = vmax.f32 %v1469, %v2552
    %v3205 = vmax.f32 %v1477, %v2554
    %v3206 = vmax.f32 %v1485, %v2556
    %v3207 = vmax.f32 %v1484, %v2558
    %v3208 = vmax.f32 %v1486, %v2560
    %v3209 = vmax.f32 %v1494, %v2562
    %v3210 = vmax.f32 %v1502, %v2564
    %v3211 = vmax.f32 %v1501, %v2566
    %v3212 = vmax.f32 %v1503, %v2568
    %v3213 = vmax.f32 %v1511, %v2570
    %v3214 = vmax.f32 %v1519, %v2572
    %v3215 = vmax.f32 %v1518, %v2574
    %v3216 = vmax.f32 %v1520, %v2576
    %v3217 = vmax.f32 %v1528, %v2578
    %v3218 = vmax.f32 %v1536, %v2580
    %v3219 = vmax.f32 %v1535, %v2582
    %v3220 = vmax.f32 %v1537, %v2584
    %v3221 = vmax.f32 %v1545, %v2586
    %v3222 = vmax.f32 %v1553, %v2588
    %v3223 = vmax.f32 %v1552, %v2590
    %v3224 = vmax.f32 %v1554, %v2592
    %v3225 = vmax.f32 %v1562, %v2594
    %v3226 = vmax.f32 %v1570, %v2596
    %v3227 = vmax.f32 %v1569, %v2598
    %v3228 = vmax.f32 %v1571, %v2600
    %v3229 = vmax.f32 %v1579, %v2602
    %v3230 = vmax.f32 %v1587, %v2604
    %v3231 = vmax.f32 %v1586, %v2606
    %v3232 = vmax.f32 %v1588, %v2608
    %v3233 = vmax.f32 %v1596, %v2610
    %v3234 = vmax.f32 %v1604, %v2612
    %v3235 = vmax.f32 %v1603, %v2614
    %v3236 = vmax.f32 %v1605, %v2616
    %v3237 = vmax.f32 %v1613, %v2618
    %v3238 = vmax.f32 %v1621, %v2620
    %v3239 = vmax.f32 %v1620, %v2622
    %v3240 = vmax.f32 %v1622, %v2624
    %v3241 = vmax.f32 %v1630, %v2626
    %v3242 = vmax.f32 %v1638, %v2628
    %v3243 = vmax.f32 %v1637, %v2630
    %v3244 = vmax.f32 %v1639, %v2632
    %v3245 = vmax.f32 %v1647, %v2634
    %v3246 = vmax.f32 %v1655, %v2636
    %v3247 = vmax.f32 %v1654, %v2638
    %v3248 = vmax.f32 %v1656, %v2640
    %v3249 = vmax.f32 %v1664, %v2642
    %v3250 = vmax.f32 %v1672, %v2644
    %v3251 = vmax.f32 %v1671, %v2646
    %v3252 = vmax.f32 %v1673, %v2648
    %v3253 = vmax.f32 %v1681, %v2650
    %v3254 = vmax.f32 %v1689, %v2652
    %v3255 = vmax.f32 %v1688, %v2654
    %v3256 = vmax.f32 %v1690, %v2656
    %v3257 = vmax.f32 %v1698, %v2658
    %v3258 = vmax.f32 %v1706, %v2660
    %v3259 = vmax.f32 %v1705, %v2662
    %v3260 = vmax.f32 %v1707, %v2664
    %v3261 = vmax.f32 %v1715, %v2666
    %v3262 = vmax.f32 %v1723, %v2668
    %v3263 = vmax.f32 %v1722, %v2670
    %v3264 = vmax.f32 %v1724, %v2672
    %v3265 = vmax.f32 %v1732, %v2674
    %v3266 = vmax.f32 %v1740, %v2676
    %v3267 = vmax.f32 %v1739, %v2678
    %v3268 = vmax.f32 %v1741, %v2680
    %v3269 = vmax.f32 %v1749, %v2682
    %v3270 = vmax.f32 %v1757, %v2684
    %v3271 = vmax.f32 %v1756, %v2686
    %v3272 = vmax.f32 %v1758, %v2688
    %v3273 = vmax.f32 %v1766, %v2690
    %v3274 = vmax.f32 %v1774, %v2692
    %v3275 = vmax.f32 %v1773, %v2694
    %v3276 = vmax.f32 %v1775, %v2696
    %v3277 = vmax.f32 %v1783, %v2698
    %v3278 = vmax.f32 %v1791, %v2700
    %v3279 = vmax.f32 %v1790, %v2702
    %v3280 = vmax.f32 %v1792, %v2704
    %v3281 = vmax.f32 %v1800, %v2706
    %v3282 = vmax.f32 %v1808, %v2708
    %v3283 = vmax.f32 %v1807, %v2710
    %v3284 = vmax.f32 %v1809, %v2712
    %v3285 = vmax.f32 %v1817, %v2714
    %v3286 = vmax.f32 %v1825, %v2716
    %v3287 = vmax.f32 %v1824, %v2718
    %v3288 = vmax.f32 %v1826, %v2720
    %v3289 = vmax.f32 %v1834, %v2722
    %v3290 = vmax.f32 %v1842, %v2724
    %v3291 = vmax.f32 %v1841, %v2726
    %v3292 = vmax.f32 %v1843, %v2728
    %v3293 = vmax.f32 %v1851, %v2730
    %v3294 = vmax.f32 %v1859, %v2732
    %v3295 = vmax.f32 %v1858, %v2734
    %v3296 = vmax.f32 %v1860, %v2736
    %v3297 = vmax.f32 %v1868, %v2738
    %v3298 = vmax.f32 %v1876, %v2740
    %v3299 = vmax.f32 %v1875, %v2742
    %v3300 = vmax.f32 %v1877, %v2744
    %v3301 = vmax.f32 %v1885, %v2746
    %v3302 = vmax.f32 %v1893, %v2748
    %v3303 = vmax.f32 %v1892, %v2750
    %v3304 = vmax.f32 %v1894, %v2752
    %v3305 = vmax.f32 %v1902, %v2754
    %v3306 = vmax.f32 %v1910, %v2756
    %v3307 = vmax.f32 %v1909, %v2758
    %v3308 = vmax.f32 %v1911, %v2760
    %v3309 = vmax.f32 %v1919, %v2762
    %v3310 = vmax.f32 %v1927, %v2764
    %v3311 = vmax.f32 %v1926, %v2766
    %v3312 = vmax.f32 %v1928, %v2768
    %v3313 = vmax.f32 %v1936, %v2770
    %v3314 = vmax.f32 %v1944, %v2772
    %v3315 = vmax.f32 %v1943, %v2774
    %v3316 = vmax.f32 %v1945, %v2776
    %v3317 = vmax.f32 %v1953, %v2778
    %v3318 = vmax.f32 %v1961, %v2780
    %v3319 = vmax.f32 %v1960, %v2782
    %v3320 = vmax.f32 %v1962, %v2784
    %v3321 = vmax.f32 %v1970, %v2786
    %v3322 = vmax.f32 %v1978, %v2788
    %v3323 = vmax.f32 %v1977, %v2790
    %v3324 = vmax.f32 %v1979, %v2792
    %v3325 = vmax.f32 %v1987, %v2794
    %v3326 = vmax.f32 %v1995, %v2796
    %v3327 = vmax.f32 %v1994, %v2798
    %v3328 = vmax.f32 %v1996, %v2800
    %v3329 = vmax.f32 %v2004, %v2802
    %v3330 = vmax.f32 %v2012, %v2804
    %v3331 = vmax.f32 %v2011, %v2806
    %v3332 = vmax.f32 %v2013, %v2808
    %v3333 = vmax.f32 %v2021, %v2810
    %v3334 = vmax.f32 %v2029, %v2812
    %v3335 = vmax.f32 %v2028, %v2814
    %v3336 = vmax.f32 %v2030, %v2816
    %v3337 = vmax.f32 %v2038, %v2818
    %v3338 = vmax.f32 %v2046, %v2820
    %v3339 = vmax.f32 %v2045, %v2822
    %v3340 = vmax.f32 %v2047, %v2824
    %v3341 = vmax.f32 %v2055, %v2826
    %v3342 = vmax.f32 %v2063, %v2828
    %v3343 = vmax.f32 %v2062, %v2830
    %v3344 = vmax.f32 %v2064, %v2832
    %v3345 = vmax.f32 %v3089, %v3097
    %v3346 = vmax.f32 %v3090, %v3098
    %v3347 = vmax.f32 %v3091, %v3099
    %v3348 = vmax.f32 %v3092, %v3100
    %v3349 = vmax.f32 %v3093, %v3101
    %v3350 = vmax.f32 %v3094, %v3102
    %v3351 = vmax.f32 %v3095, %v3103
    %v3352 = vmax.f32 %v3096, %v3104
    %v3353 = vmax.f32 %v3105, %v3113
    %v3354 = vmax.f32 %v3106, %v3114
    %v3355 = vmax.f32 %v3107, %v3115
    %v3356 = vmax.f32 %v3108, %v3116
    %v3357 = vmax.f32 %v3109, %v3117
    %v3358 = vmax.f32 %v3110, %v3118
    %v3359 = vmax.f32 %v3111, %v3119
    %v3360 = vmax.f32 %v3112, %v3120
    %v3361 = vmax.f32 %v3121, %v3129
    %v3362 = vmax.f32 %v3122, %v3130
    %v3363 = vmax.f32 %v3123, %v3131
    %v3364 = vmax.f32 %v3124, %v3132
    %v3365 = vmax.f32 %v3125, %v3133
    %v3366 = vmax.f32 %v3126, %v3134
    %v3367 = vmax.f32 %v3127, %v3135
    %v3368 = vmax.f32 %v3128, %v3136
    %v3369 = vmax.f32 %v3137, %v3145
    %v3370 = vmax.f32 %v3138, %v3146
    %v3371 = vmax.f32 %v3139, %v3147
    %v3372 = vmax.f32 %v3140, %v3148
    %v3373 = vmax.f32 %v3141, %v3149
    %v3374 = vmax.f32 %v3142, %v3150
    %v3375 = vmax.f32 %v3143, %v3151
    %v3376 = vmax.f32 %v3144, %v3152
    %v3377 = vmax.f32 %v3153, %v3161
    %v3378 = vmax.f32 %v3154, %v3162
    %v3379 = vmax.f32 %v3155, %v3163
    %v3380 = vmax.f32 %v3156, %v3164
    %v3381 = vmax.f32 %v3157, %v3165
    %v3382 = vmax.f32 %v3158, %v3166
    %v3383 = vmax.f32 %v3159, %v3167
    %v3384 = vmax.f32 %v3160, %v3168
    %v3385 = vmax.f32 %v3169, %v3177
    %v3386 = vmax.f32 %v3170, %v3178
    %v3387 = vmax.f32 %v3171, %v3179
    %v3388 = vmax.f32 %v3172, %v3180
    %v3389 = vmax.f32 %v3173, %v3181
    %v3390 = vmax.f32 %v3174, %v3182
    %v3391 = vmax.f32 %v3175, %v3183
    %v3392 = vmax.f32 %v3176, %v3184
    %v3393 = vmax.f32 %v3185, %v3193
    %v3394 = vmax.f32 %v3186, %v3194
    %v3395 = vmax.f32 %v3187, %v3195
    %v3396 = vmax.f32 %v3188, %v3196
    %v3397 = vmax.f32 %v3189, %v3197
    %v3398 = vmax.f32 %v3190, %v3198
    %v3399 = vmax.f32 %v3191, %v3199
    %v3400 = vmax.f32 %v3192, %v3200
    %v3401 = vmax.f32 %v3201, %v3209
    %v3402 = vmax.f32 %v3202, %v3210
    %v3403 = vmax.f32 %v3203, %v3211
    %v3404 = vmax.f32 %v3204, %v3212
    %v3405 = vmax.f32 %v3205, %v3213
    %v3406 = vmax.f32 %v3206, %v3214
    %v3407 = vmax.f32 %v3207, %v3215
    %v3408 = vmax.f32 %v3208, %v3216
    %v3409 = vmax.f32 %v3217, %v3225
    %v3410 = vmax.f32 %v3218, %v3226
    %v3411 = vmax.f32 %v3219, %v3227
    %v3412 = vmax.f32 %v3220, %v3228
    %v3413 = vmax.f32 %v3221, %v3229
    %v3414 = vmax.f32 %v3222, %v3230
    %v3415 = vmax.f32 %v3223, %v3231
    %v3416 = vmax.f32 %v3224, %v3232
    %v3417 = vmax.f32 %v3233, %v3241
    %v3418 = vmax.f32 %v3234, %v3242
    %v3419 = vmax.f32 %v3235, %v3243
    %v3420 = vmax.f32 %v3236, %v3244
    %v3421 = vmax.f32 %v3237, %v3245
    %v3422 = vmax.f32 %v3238, %v3246
    %v3423 = vmax.f32 %v3239, %v3247
    %v3424 = vmax.f32 %v3240, %v3248
    %v3425 = vmax.f32 %v3249, %v3257
    %v3426 = vmax.f32 %v3250, %v3258
    %v3427 = vmax.f32 %v3251, %v3259
    %v3428 = vmax.f32 %v3252, %v3260
    %v3429 = vmax.f32 %v3253, %v3261
    %v3430 = vmax.f32 %v3254, %v3262
    %v3431 = vmax.f32 %v3255, %v3263
    %v3432 = vmax.f32 %v3256, %v3264
    %v3433 = vmax.f32 %v3265, %v3273
    %v3434 = vmax.f32 %v3266, %v3274
    %v3435 = vmax.f32 %v3267, %v3275
    %v3436 = vmax.f32 %v3268, %v3276
    %v3437 = vmax.f32 %v3269, %v3277
    %v3438 = vmax.f32 %v3270, %v3278
    %v3439 = vmax.f32 %v3271, %v3279
    %v3440 = vmax.f32 %v3272, %v3280
    %v3441 = vmax.f32 %v3281, %v3289
    %v3442 = vmax.f32 %v3282, %v3290
    %v3443 = vmax.f32 %v3283, %v3291
    %v3444 = vmax.f32 %v3284, %v3292
    %v3445 = vmax.f32 %v3285, %v3293
    %v3446 = vmax.f32 %v3286, %v3294
    %v3447 = vmax.f32 %v3287, %v3295
    %v3448 = vmax.f32 %v3288, %v3296
    %v3449 = vmax.f32 %v3297, %v3305
    %v3450 = vmax.f32 %v3298, %v3306
    %v3451 = vmax.f32 %v3299, %v3307
    %v3452 = vmax.f32 %v3300, %v3308
    %v3453 = vmax.f32 %v3301, %v3309
    %v3454 = vmax.f32 %v3302, %v3310
    %v3455 = vmax.f32 %v3303, %v3311
    %v3456 = vmax.f32 %v3304, %v3312
    %v3457 = vmax.f32 %v3313, %v3321
    %v3458 = vmax.f32 %v3314, %v3322
    %v3459 = vmax.f32 %v3315, %v3323
    %v3460 = vmax.f32 %v3316, %v3324
    %v3461 = vmax.f32 %v3317, %v3325
    %v3462 = vmax.f32 %v3318, %v3326
    %v3463 = vmax.f32 %v3319, %v3327
    %v3464 = vmax.f32 %v3320, %v3328
    %v3465 = vmax.f32 %v3329, %v3337
    %v3466 = vmax.f32 %v3330, %v3338
    %v3467 = vmax.f32 %v3331, %v3339
    %v3468 = vmax.f32 %v3332, %v3340
    %v3469 = vmax.f32 %v3333, %v3341
    %v3470 = vmax.f32 %v3334, %v3342
    %v3471 = vmax.f32 %v3335, %v3343
    %v3472 = vmax.f32 %v3336, %v3344
    %v3473 = vpack.c.bf16 %v3345, %v3345
    %v3474 = vpack.c.bf16 %v3346, %v3346
    %v3475 = vpack.c.bf16 %v3347, %v3347
    %v3476 = vpack.c.bf16 %v3348, %v3348
    %v3477 = vpack.c.bf16 %v3349, %v3349
    %v3478 = vpack.c.bf16 %v3350, %v3350
    %v3479 = vpack.c.bf16 %v3351, %v3351
    %v3480 = vpack.c.bf16 %v3352, %v3352
    %v3481 = vpack.c.bf16 %v3353, %v3353
    %v3482 = vpack.c.bf16 %v3354, %v3354
    %v3483 = vpack.c.bf16 %v3355, %v3355
    %v3484 = vpack.c.bf16 %v3356, %v3356
    %v3485 = vpack.c.bf16 %v3357, %v3357
    %v3486 = vpack.c.bf16 %v3358, %v3358
    %v3487 = vpack.c.bf16 %v3359, %v3359
    %v3488 = vpack.c.bf16 %v3360, %v3360
    %v3489 = vpack.c.bf16 %v3361, %v3361
    %v3490 = vpack.c.bf16 %v3362, %v3362
    %v3491 = vpack.c.bf16 %v3363, %v3363
    %v3492 = vpack.c.bf16 %v3364, %v3364
    %v3493 = vpack.c.bf16 %v3365, %v3365
    %v3494 = vpack.c.bf16 %v3366, %v3366
    %v3495 = vpack.c.bf16 %v3367, %v3367
    %v3496 = vpack.c.bf16 %v3368, %v3368
    %v3497 = vpack.c.bf16 %v3369, %v3369
    %v3498 = vpack.c.bf16 %v3370, %v3370
    %v3499 = vpack.c.bf16 %v3371, %v3371
    %v3500 = vpack.c.bf16 %v3372, %v3372
    %v3501 = vpack.c.bf16 %v3373, %v3373
    %v3502 = vpack.c.bf16 %v3374, %v3374
    %v3503 = vpack.c.bf16 %v3375, %v3375
    %v3504 = vpack.c.bf16 %v3376, %v3376
    %v3505 = vpack.c.bf16 %v3377, %v3377
    %v3506 = vpack.c.bf16 %v3378, %v3378
    %v3507 = vpack.c.bf16 %v3379, %v3379
    %v3508 = vpack.c.bf16 %v3380, %v3380
    %v3509 = vpack.c.bf16 %v3381, %v3381
    %v3510 = vpack.c.bf16 %v3382, %v3382
    %v3511 = vpack.c.bf16 %v3383, %v3383
    %v3512 = vpack.c.bf16 %v3384, %v3384
    %v3513 = vpack.c.bf16 %v3385, %v3385
    %v3514 = vpack.c.bf16 %v3386, %v3386
    %v3515 = vpack.c.bf16 %v3387, %v3387
    %v3516 = vpack.c.bf16 %v3388, %v3388
    %v3517 = vpack.c.bf16 %v3389, %v3389
    %v3518 = vpack.c.bf16 %v3390, %v3390
    %v3519 = vpack.c.bf16 %v3391, %v3391
    %v3520 = vpack.c.bf16 %v3392, %v3392
    %v3521 = vpack.c.bf16 %v3393, %v3393
    %v3522 = vpack.c.bf16 %v3394, %v3394
    %v3523 = vpack.c.bf16 %v3395, %v3395
    %v3524 = vpack.c.bf16 %v3396, %v3396
    %v3525 = vpack.c.bf16 %v3397, %v3397
    %v3526 = vpack.c.bf16 %v3398, %v3398
    %v3527 = vpack.c.bf16 %v3399, %v3399
    %v3528 = vpack.c.bf16 %v3400, %v3400
    %v3529 = vpack.c.bf16 %v3401, %v3401
    %v3530 = vpack.c.bf16 %v3402, %v3402
    %v3531 = vpack.c.bf16 %v3403, %v3403
    %v3532 = vpack.c.bf16 %v3404, %v3404
    %v3533 = vpack.c.bf16 %v3405, %v3405
    %v3534 = vpack.c.bf16 %v3406, %v3406
    %v3535 = vpack.c.bf16 %v3407, %v3407
    %v3536 = vpack.c.bf16 %v3408, %v3408
    %v3537 = vpack.c.bf16 %v3409, %v3409
    %v3538 = vpack.c.bf16 %v3410, %v3410
    %v3539 = vpack.c.bf16 %v3411, %v3411
    %v3540 = vpack.c.bf16 %v3412, %v3412
    %v3541 = vpack.c.bf16 %v3413, %v3413
    %v3542 = vpack.c.bf16 %v3414, %v3414
    %v3543 = vpack.c.bf16 %v3415, %v3415
    %v3544 = vpack.c.bf16 %v3416, %v3416
    %v3545 = vpack.c.bf16 %v3417, %v3417
    %v3546 = vpack.c.bf16 %v3418, %v3418
    %v3547 = vpack.c.bf16 %v3419, %v3419
    %v3548 = vpack.c.bf16 %v3420, %v3420
    %v3549 = vpack.c.bf16 %v3421, %v3421
    %v3550 = vpack.c.bf16 %v3422, %v3422
    %v3551 = vpack.c.bf16 %v3423, %v3423
    %v3552 = vpack.c.bf16 %v3424, %v3424
    %v3553 = vpack.c.bf16 %v3425, %v3425
    %v3554 = vpack.c.bf16 %v3426, %v3426
    %v3555 = vpack.c.bf16 %v3427, %v3427
    %v3556 = vpack.c.bf16 %v3428, %v3428
    %v3557 = vpack.c.bf16 %v3429, %v3429
    %v3558 = vpack.c.bf16 %v3430, %v3430
    %v3559 = vpack.c.bf16 %v3431, %v3431
    %v3560 = vpack.c.bf16 %v3432, %v3432
    %v3561 = vpack.c.bf16 %v3433, %v3433
    %v3562 = vpack.c.bf16 %v3434, %v3434
    %v3563 = vpack.c.bf16 %v3435, %v3435
    %v3564 = vpack.c.bf16 %v3436, %v3436
    %v3565 = vpack.c.bf16 %v3437, %v3437
    %v3566 = vpack.c.bf16 %v3438, %v3438
    %v3567 = vpack.c.bf16 %v3439, %v3439
    %v3568 = vpack.c.bf16 %v3440, %v3440
    %v3569 = vpack.c.bf16 %v3441, %v3441
    %v3570 = vpack.c.bf16 %v3442, %v3442
    %v3571 = vpack.c.bf16 %v3443, %v3443
    %v3572 = vpack.c.bf16 %v3444, %v3444
    %v3573 = vpack.c.bf16 %v3445, %v3445
    %v3574 = vpack.c.bf16 %v3446, %v3446
    %v3575 = vpack.c.bf16 %v3447, %v3447
    %v3576 = vpack.c.bf16 %v3448, %v3448
    %v3577 = vpack.c.bf16 %v3449, %v3449
    %v3578 = vpack.c.bf16 %v3450, %v3450
    %v3579 = vpack.c.bf16 %v3451, %v3451
    %v3580 = vpack.c.bf16 %v3452, %v3452
    %v3581 = vpack.c.bf16 %v3453, %v3453
    %v3582 = vpack.c.bf16 %v3454, %v3454
    %v3583 = vpack.c.bf16 %v3455, %v3455
    %v3584 = vpack.c.bf16 %v3456, %v3456
    %v3585 = vpack.c.bf16 %v3457, %v3457
    %v3586 = vpack.c.bf16 %v3458, %v3458
    %v3587 = vpack.c.bf16 %v3459, %v3459
    %v3588 = vpack.c.bf16 %v3460, %v3460
    %v3589 = vpack.c.bf16 %v3461, %v3461
    %v3590 = vpack.c.bf16 %v3462, %v3462
    %v3591 = vpack.c.bf16 %v3463, %v3463
    %v3592 = vpack.c.bf16 %v3464, %v3464
    %v3593 = vpack.c.bf16 %v3465, %v3465
    %v3594 = vpack.c.bf16 %v3466, %v3466
    %v3595 = vpack.c.bf16 %v3467, %v3467
    %v3596 = vpack.c.bf16 %v3468, %v3468
    %v3597 = vpack.c.bf16 %v3469, %v3469
    %v3598 = vpack.c.bf16 %v3470, %v3470
    %v3599 = vpack.c.bf16 %v3471, %v3471
    %v3600 = vpack.c.bf16 %v3472, %v3472
    %v3729 = vunpack.c.l.b16 %v3473
    %v3730 = vunpack.c.l.b16 %v3474
    %v3731 = vunpack.c.l.b16 %v3475
    %v3732 = vunpack.c.l.b16 %v3476
    %v3733 = vunpack.c.l.b16 %v3477
    %v3734 = vunpack.c.l.b16 %v3478
    %v3735 = vunpack.c.l.b16 %v3479
    %v3736 = vunpack.c.l.b16 %v3480
    %v3737 = vunpack.c.l.b16 %v3481
    %v3738 = vunpack.c.l.b16 %v3482
    %v3739 = vunpack.c.l.b16 %v3483
    %v3740 = vunpack.c.l.b16 %v3484
    %v3741 = vunpack.c.l.b16 %v3485
    %v3742 = vunpack.c.l.b16 %v3486
    %v3743 = vunpack.c.l.b16 %v3487
    %v3744 = vunpack.c.l.b16 %v3488
    %v3745 = vunpack.c.l.b16 %v3489
    %v3746 = vunpack.c.l.b16 %v3490
    %v3747 = vunpack.c.l.b16 %v3491
    %v3748 = vunpack.c.l.b16 %v3492
    %v3749 = vunpack.c.l.b16 %v3493
    %v3750 = vunpack.c.l.b16 %v3494
    %v3751 = vunpack.c.l.b16 %v3495
    %v3752 = vunpack.c.l.b16 %v3496
    %v3753 = vunpack.c.l.b16 %v3497
    %v3754 = vunpack.c.l.b16 %v3498
    %v3755 = vunpack.c.l.b16 %v3499
    %v3756 = vunpack.c.l.b16 %v3500
    %v3757 = vunpack.c.l.b16 %v3501
    %v3758 = vunpack.c.l.b16 %v3502
    %v3759 = vunpack.c.l.b16 %v3503
    %v3760 = vunpack.c.l.b16 %v3504
    %v3761 = vunpack.c.l.b16 %v3505
    %v3762 = vunpack.c.l.b16 %v3506
    %v3763 = vunpack.c.l.b16 %v3507
    %v3764 = vunpack.c.l.b16 %v3508
    %v3765 = vunpack.c.l.b16 %v3509
    %v3766 = vunpack.c.l.b16 %v3510
    %v3767 = vunpack.c.l.b16 %v3511
    %v3768 = vunpack.c.l.b16 %v3512
    %v3769 = vunpack.c.l.b16 %v3513
    %v3770 = vunpack.c.l.b16 %v3514
    %v3771 = vunpack.c.l.b16 %v3515
    %v3772 = vunpack.c.l.b16 %v3516
    %v3773 = vunpack.c.l.b16 %v3517
    %v3774 = vunpack.c.l.b16 %v3518
    %v3775 = vunpack.c.l.b16 %v3519
    %v3776 = vunpack.c.l.b16 %v3520
    %v3777 = vunpack.c.l.b16 %v3521
    %v3778 = vunpack.c.l.b16 %v3522
    %v3779 = vunpack.c.l.b16 %v3523
    %v3780 = vunpack.c.l.b16 %v3524
    %v3781 = vunpack.c.l.b16 %v3525
    %v3782 = vunpack.c.l.b16 %v3526
    %v3783 = vunpack.c.l.b16 %v3527
    %v3784 = vunpack.c.l.b16 %v3528
    %v3785 = vunpack.c.l.b16 %v3529
    %v3786 = vunpack.c.l.b16 %v3530
    %v3787 = vunpack.c.l.b16 %v3531
    %v3788 = vunpack.c.l.b16 %v3532
    %v3789 = vunpack.c.l.b16 %v3533
    %v3790 = vunpack.c.l.b16 %v3534
    %v3791 = vunpack.c.l.b16 %v3535
    %v3792 = vunpack.c.l.b16 %v3536
    %v3793 = vunpack.c.l.b16 %v3537
    %v3794 = vunpack.c.l.b16 %v3538
    %v3795 = vunpack.c.l.b16 %v3539
    %v3796 = vunpack.c.l.b16 %v3540
    %v3797 = vunpack.c.l.b16 %v3541
    %v3798 = vunpack.c.l.b16 %v3542
    %v3799 = vunpack.c.l.b16 %v3543
    %v3800 = vunpack.c.l.b16 %v3544
    %v3801 = vunpack.c.l.b16 %v3545
    %v3802 = vunpack.c.l.b16 %v3546
    %v3803 = vunpack.c.l.b16 %v3547
    %v3804 = vunpack.c.l.b16 %v3548
    %v3805 = vunpack.c.l.b16 %v3549
    %v3806 = vunpack.c.l.b16 %v3550
    %v3807 = vunpack.c.l.b16 %v3551
    %v3808 = vunpack.c.l.b16 %v3552
    %v3809 = vunpack.c.l.b16 %v3553
    %v3810 = vunpack.c.l.b16 %v3554
    %v3811 = vunpack.c.l.b16 %v3555
    %v3812 = vunpack.c.l.b16 %v3556
    %v3813 = vunpack.c.l.b16 %v3557
    %v3814 = vunpack.c.l.b16 %v3558
    %v3815 = vunpack.c.l.b16 %v3559
    %v3816 = vunpack.c.l.b16 %v3560
    %v3817 = vunpack.c.l.b16 %v3561
    %v3818 = vunpack.c.l.b16 %v3562
    %v3819 = vunpack.c.l.b16 %v3563
    %v3820 = vunpack.c.l.b16 %v3564
    %v3821 = vunpack.c.l.b16 %v3565
    %v3822 = vunpack.c.l.b16 %v3566
    %v3823 = vunpack.c.l.b16 %v3567
    %v3824 = vunpack.c.l.b16 %v3568
    %v3825 = vunpack.c.l.b16 %v3569
    %v3826 = vunpack.c.l.b16 %v3570
    %v3827 = vunpack.c.l.b16 %v3571
    %v3828 = vunpack.c.l.b16 %v3572
    %v3829 = vunpack.c.l.b16 %v3573
    %v3830 = vunpack.c.l.b16 %v3574
    %v3831 = vunpack.c.l.b16 %v3575
    %v3832 = vunpack.c.l.b16 %v3576
    %v3833 = vunpack.c.l.b16 %v3577
    %v3834 = vunpack.c.l.b16 %v3578
    %v3835 = vunpack.c.l.b16 %v3579
    %v3836 = vunpack.c.l.b16 %v3580
    %v3837 = vunpack.c.l.b16 %v3581
    %v3838 = vunpack.c.l.b16 %v3582
    %v3839 = vunpack.c.l.b16 %v3583
    %v3840 = vunpack.c.l.b16 %v3584
    %v3841 = vunpack.c.l.b16 %v3585
    %v3842 = vunpack.c.l.b16 %v3586
    %v3843 = vunpack.c.l.b16 %v3587
    %v3844 = vunpack.c.l.b16 %v3588
    %v3845 = vunpack.c.l.b16 %v3589
    %v3846 = vunpack.c.l.b16 %v3590
    %v3847 = vunpack.c.l.b16 %v3591
    %v3848 = vunpack.c.l.b16 %v3592
    %v3849 = vunpack.c.l.b16 %v3593
    %v3850 = vunpack.c.l.b16 %v3594
    %v3851 = vunpack.c.l.b16 %v3595
    %v3852 = vunpack.c.l.b16 %v3596
    %v3853 = vunpack.c.l.b16 %v3597
    %v3854 = vunpack.c.l.b16 %v3598
    %v3855 = vunpack.c.l.b16 %v3599
    %v3856 = vunpack.c.l.b16 %v3600
    %v3857 = vpack.c.b16 %v3729, %v3729
    %v3858 = vpack.c.b16 %v3730, %v3730
    %v3859 = vpack.c.b16 %v3731, %v3731
    %v3860 = vpack.c.b16 %v3732, %v3732
    %v3861 = vpack.c.b16 %v3733, %v3733
    %v3862 = vpack.c.b16 %v3734, %v3734
    %v3863 = vpack.c.b16 %v3735, %v3735
    %v3864 = vpack.c.b16 %v3736, %v3736
    %v3865 = vpack.c.b16 %v3737, %v3737
    %v3866 = vpack.c.b16 %v3738, %v3738
    %v3867 = vpack.c.b16 %v3739, %v3739
    %v3868 = vpack.c.b16 %v3740, %v3740
    %v3869 = vpack.c.b16 %v3741, %v3741
    %v3870 = vpack.c.b16 %v3742, %v3742
    %v3871 = vpack.c.b16 %v3743, %v3743
    %v3872 = vpack.c.b16 %v3744, %v3744
    %v3873 = vpack.c.b16 %v3745, %v3745
    %v3874 = vpack.c.b16 %v3746, %v3746
    %v3875 = vpack.c.b16 %v3747, %v3747
    %v3876 = vpack.c.b16 %v3748, %v3748
    %v3877 = vpack.c.b16 %v3749, %v3749
    %v3878 = vpack.c.b16 %v3750, %v3750
    %v3879 = vpack.c.b16 %v3751, %v3751
    %v3880 = vpack.c.b16 %v3752, %v3752
    %v3881 = vpack.c.b16 %v3753, %v3753
    %v3882 = vpack.c.b16 %v3754, %v3754
    %v3883 = vpack.c.b16 %v3755, %v3755
    %v3884 = vpack.c.b16 %v3756, %v3756
    %v3885 = vpack.c.b16 %v3757, %v3757
    %v3886 = vpack.c.b16 %v3758, %v3758
    %v3887 = vpack.c.b16 %v3759, %v3759
    %v3888 = vpack.c.b16 %v3760, %v3760
    %v3889 = vpack.c.b16 %v3761, %v3761
    %v3890 = vpack.c.b16 %v3762, %v3762
    %v3891 = vpack.c.b16 %v3763, %v3763
    %v3892 = vpack.c.b16 %v3764, %v3764
    %v3893 = vpack.c.b16 %v3765, %v3765
    %v3894 = vpack.c.b16 %v3766, %v3766
    %v3895 = vpack.c.b16 %v3767, %v3767
    %v3896 = vpack.c.b16 %v3768, %v3768
    %v3897 = vpack.c.b16 %v3769, %v3769
    %v3898 = vpack.c.b16 %v3770, %v3770
    %v3899 = vpack.c.b16 %v3771, %v3771
    %v3900 = vpack.c.b16 %v3772, %v3772
    %v3901 = vpack.c.b16 %v3773, %v3773
    %v3902 = vpack.c.b16 %v3774, %v3774
    %v3903 = vpack.c.b16 %v3775, %v3775
    %v3904 = vpack.c.b16 %v3776, %v3776
    %v3905 = vpack.c.b16 %v3777, %v3777
    %v3906 = vpack.c.b16 %v3778, %v3778
    %v3907 = vpack.c.b16 %v3779, %v3779
    %v3908 = vpack.c.b16 %v3780, %v3780
    %v3909 = vpack.c.b16 %v3781, %v3781
    %v3910 = vpack.c.b16 %v3782, %v3782
    %v3911 = vpack.c.b16 %v3783, %v3783
    %v3912 = vpack.c.b16 %v3784, %v3784
    %v3913 = vpack.c.b16 %v3785, %v3785
    %v3914 = vpack.c.b16 %v3786, %v3786
    %v3915 = vpack.c.b16 %v3787, %v3787
    %v3916 = vpack.c.b16 %v3788, %v3788
    %v3917 = vpack.c.b16 %v3789, %v3789
    %v3918 = vpack.c.b16 %v3790, %v3790
    %v3919 = vpack.c.b16 %v3791, %v3791
    %v3920 = vpack.c.b16 %v3792, %v3792
    %v3921 = vpack.c.b16 %v3793, %v3793
    %v3922 = vpack.c.b16 %v3794, %v3794
    %v3923 = vpack.c.b16 %v3795, %v3795
    %v3924 = vpack.c.b16 %v3796, %v3796
    %v3925 = vpack.c.b16 %v3797, %v3797
    %v3926 = vpack.c.b16 %v3798, %v3798
    %v3927 = vpack.c.b16 %v3799, %v3799
    %v3928 = vpack.c.b16 %v3800, %v3800
    %v3929 = vpack.c.b16 %v3801, %v3801
    %v3930 = vpack.c.b16 %v3802, %v3802
    %v3931 = vpack.c.b16 %v3803, %v3803
    %v3932 = vpack.c.b16 %v3804, %v3804
    %v3933 = vpack.c.b16 %v3805, %v3805
    %v3934 = vpack.c.b16 %v3806, %v3806
    %v3935 = vpack.c.b16 %v3807, %v3807
    %v3936 = vpack.c.b16 %v3808, %v3808
    %v3937 = vpack.c.b16 %v3809, %v3809
    %v3938 = vpack.c.b16 %v3810, %v3810
    %v3939 = vpack.c.b16 %v3811, %v3811
    %v3940 = vpack.c.b16 %v3812, %v3812
    %v3941 = vpack.c.b16 %v3813, %v3813
    %v3942 = vpack.c.b16 %v3814, %v3814
    %v3943 = vpack.c.b16 %v3815, %v3815
    %v3944 = vpack.c.b16 %v3816, %v3816
    %v3945 = vpack.c.b16 %v3817, %v3817
    %v3946 = vpack.c.b16 %v3818, %v3818
    %v3947 = vpack.c.b16 %v3819, %v3819
    %v3948 = vpack.c.b16 %v3820, %v3820
    %v3949 = vpack.c.b16 %v3821, %v3821
    %v3950 = vpack.c.b16 %v3822, %v3822
    %v3951 = vpack.c.b16 %v3823, %v3823
    %v3952 = vpack.c.b16 %v3824, %v3824
    %v3953 = vpack.c.b16 %v3825, %v3825
    %v3954 = vpack.c.b16 %v3826, %v3826
    %v3955 = vpack.c.b16 %v3827, %v3827
    %v3956 = vpack.c.b16 %v3828, %v3828
    %v3957 = vpack.c.b16 %v3829, %v3829
    %v3958 = vpack.c.b16 %v3830, %v3830
    %v3959 = vpack.c.b16 %v3831, %v3831
    %v3960 = vpack.c.b16 %v3832, %v3832
    %v3961 = vpack.c.b16 %v3833, %v3833
    %v3962 = vpack.c.b16 %v3834, %v3834
    %v3963 = vpack.c.b16 %v3835, %v3835
    %v3964 = vpack.c.b16 %v3836, %v3836
    %v3965 = vpack.c.b16 %v3837, %v3837
    %v3966 = vpack.c.b16 %v3838, %v3838
    %v3967 = vpack.c.b16 %v3839, %v3839
    %v3968 = vpack.c.b16 %v3840, %v3840
    %v3969 = vpack.c.b16 %v3841, %v3841
    %v3970 = vpack.c.b16 %v3842, %v3842
    %v3971 = vpack.c.b16 %v3843, %v3843
    %v3972 = vpack.c.b16 %v3844, %v3844
    %v3973 = vpack.c.b16 %v3845, %v3845
    %v3974 = vpack.c.b16 %v3846, %v3846
    %v3975 = vpack.c.b16 %v3847, %v3847
    %v3976 = vpack.c.b16 %v3848, %v3848
    %v3977 = vpack.c.b16 %v3849, %v3849
    %v3978 = vpack.c.b16 %v3850, %v3850
    %v3979 = vpack.c.b16 %v3851, %v3851
    %v3980 = vpack.c.b16 %v3852, %v3852
    %v3981 = vpack.c.b16 %v3853, %v3853
    %v3982 = vpack.c.b16 %v3854, %v3854
    %v3983 = vpack.c.b16 %v3855, %v3855
    %v3984 = vpack.c.b16 %v3856, %v3856
    %v3985 = vunpack.c.l.b16 %v3857
    %v3986 = vunpack.c.l.b16 %v3858
    %v3987 = vunpack.c.l.b16 %v3859
    %v3988 = vunpack.c.l.b16 %v3860
    %v3989 = vunpack.c.l.b16 %v3861
    %v3990 = vunpack.c.l.b16 %v3862
    %v3991 = vunpack.c.l.b16 %v3863
    %v3992 = vunpack.c.l.b16 %v3864
    %v3993 = vunpack.c.l.b16 %v3865
    %v3994 = vunpack.c.l.b16 %v3866
    %v3995 = vunpack.c.l.b16 %v3867
    %v3996 = vunpack.c.l.b16 %v3868
    %v3997 = vunpack.c.l.b16 %v3869
    %v3998 = vunpack.c.l.b16 %v3870
    %v3999 = vunpack.c.l.b16 %v3871
    %v4000 = vunpack.c.l.b16 %v3872
    %v4001 = vunpack.c.l.b16 %v3873
    %v4002 = vunpack.c.l.b16 %v3874
    %v4003 = vunpack.c.l.b16 %v3875
    %v4004 = vunpack.c.l.b16 %v3876
    %v4005 = vunpack.c.l.b16 %v3877
    %v4006 = vunpack.c.l.b16 %v3878
    %v4007 = vunpack.c.l.b16 %v3879
    %v4008 = vunpack.c.l.b16 %v3880
    %v4009 = vunpack.c.l.b16 %v3881
    %v4010 = vunpack.c.l.b16 %v3882
    %v4011 = vunpack.c.l.b16 %v3883
    %v4012 = vunpack.c.l.b16 %v3884
    %v4013 = vunpack.c.l.b16 %v3885
    %v4014 = vunpack.c.l.b16 %v3886
    %v4015 = vunpack.c.l.b16 %v3887
    %v4016 = vunpack.c.l.b16 %v3888
    %v4017 = vunpack.c.l.b16 %v3889
    %v4018 = vunpack.c.l.b16 %v3890
    %v4019 = vunpack.c.l.b16 %v3891
    %v4020 = vunpack.c.l.b16 %v3892
    %v4021 = vunpack.c.l.b16 %v3893
    %v4022 = vunpack.c.l.b16 %v3894
    %v4023 = vunpack.c.l.b16 %v3895
    %v4024 = vunpack.c.l.b16 %v3896
    %v4025 = vunpack.c.l.b16 %v3897
    %v4026 = vunpack.c.l.b16 %v3898
    %v4027 = vunpack.c.l.b16 %v3899
    %v4028 = vunpack.c.l.b16 %v3900
    %v4029 = vunpack.c.l.b16 %v3901
    %v4030 = vunpack.c.l.b16 %v3902
    %v4031 = vunpack.c.l.b16 %v3903
    %v4032 = vunpack.c.l.b16 %v3904
    %v4033 = vunpack.c.l.b16 %v3905
    %v4034 = vunpack.c.l.b16 %v3906
    %v4035 = vunpack.c.l.b16 %v3907
    %v4036 = vunpack.c.l.b16 %v3908
    %v4037 = vunpack.c.l.b16 %v3909
    %v4038 = vunpack.c.l.b16 %v3910
    %v4039 = vunpack.c.l.b16 %v3911
    %v4040 = vunpack.c.l.b16 %v3912
    %v4041 = vunpack.c.l.b16 %v3913
    %v4042 = vunpack.c.l.b16 %v3914
    %v4043 = vunpack.c.l.b16 %v3915
    %v4044 = vunpack.c.l.b16 %v3916
    %v4045 = vunpack.c.l.b16 %v3917
    %v4046 = vunpack.c.l.b16 %v3918
    %v4047 = vunpack.c.l.b16 %v3919
    %v4048 = vunpack.c.l.b16 %v3920
    %v4049 = vunpack.c.l.b16 %v3921
    %v4050 = vunpack.c.l.b16 %v3922
    %v4051 = vunpack.c.l.b16 %v3923
    %v4052 = vunpack.c.l.b16 %v3924
    %v4053 = vunpack.c.l.b16 %v3925
    %v4054 = vunpack.c.l.b16 %v3926
    %v4055 = vunpack.c.l.b16 %v3927
    %v4056 = vunpack.c.l.b16 %v3928
    %v4057 = vunpack.c.l.b16 %v3929
    %v4058 = vunpack.c.l.b16 %v3930
    %v4059 = vunpack.c.l.b16 %v3931
    %v4060 = vunpack.c.l.b16 %v3932
    %v4061 = vunpack.c.l.b16 %v3933
    %v4062 = vunpack.c.l.b16 %v3934
    %v4063 = vunpack.c.l.b16 %v3935
    %v4064 = vunpack.c.l.b16 %v3936
    %v4065 = vunpack.c.l.b16 %v3937
    %v4066 = vunpack.c.l.b16 %v3938
    %v4067 = vunpack.c.l.b16 %v3939
    %v4068 = vunpack.c.l.b16 %v3940
    %v4069 = vunpack.c.l.b16 %v3941
    %v4070 = vunpack.c.l.b16 %v3942
    %v4071 = vunpack.c.l.b16 %v3943
    %v4072 = vunpack.c.l.b16 %v3944
    %v4073 = vunpack.c.l.b16 %v3945
    %v4074 = vunpack.c.l.b16 %v3946
    %v4075 = vunpack.c.l.b16 %v3947
    %v4076 = vunpack.c.l.b16 %v3948
    %v4077 = vunpack.c.l.b16 %v3949
    %v4078 = vunpack.c.l.b16 %v3950
    %v4079 = vunpack.c.l.b16 %v3951
    %v4080 = vunpack.c.l.b16 %v3952
    %v4081 = vunpack.c.l.b16 %v3953
    %v4082 = vunpack.c.l.b16 %v3954
    %v4083 = vunpack.c.l.b16 %v3955
    %v4084 = vunpack.c.l.b16 %v3956
    %v4085 = vunpack.c.l.b16 %v3957
    %v4086 = vunpack.c.l.b16 %v3958
    %v4087 = vunpack.c.l.b16 %v3959
    %v4088 = vunpack.c.l.b16 %v3960
    %v4089 = vunpack.c.l.b16 %v3961
    %v4090 = vunpack.c.l.b16 %v3962
    %v4091 = vunpack.c.l.b16 %v3963
    %v4092 = vunpack.c.l.b16 %v3964
    %v4093 = vunpack.c.l.b16 %v3965
    %v4094 = vunpack.c.l.b16 %v3966
    %v4095 = vunpack.c.l.b16 %v3967
    %v4096 = vunpack.c.l.b16 %v3968
    %v4097 = vunpack.c.l.b16 %v3969
    %v4098 = vunpack.c.l.b16 %v3970
    %v4099 = vunpack.c.l.b16 %v3971
    %v4100 = vunpack.c.l.b16 %v3972
    %v4101 = vunpack.c.l.b16 %v3973
    %v4102 = vunpack.c.l.b16 %v3974
    %v4103 = vunpack.c.l.b16 %v3975
    %v4104 = vunpack.c.l.b16 %v3976
    %v4105 = vunpack.c.l.b16 %v3977
    %v4106 = vunpack.c.l.b16 %v3978
    %v4107 = vunpack.c.l.b16 %v3979
    %v4108 = vunpack.c.l.b16 %v3980
    %v4109 = vunpack.c.l.b16 %v3981
    %v4110 = vunpack.c.l.b16 %v3982
    %v4111 = vunpack.c.l.b16 %v3983
    %v4112 = vunpack.c.l.b16 %v3984
    %v4113 = vrot.slane %v3985, 7
    %v4114 = vrot.slane %v3986, 6
    %vm4115 = vcmask 1042434
    %v4116 = vsel %vm4115, %v4114, %v4113
    %v4117 = vrot.slane %v3987, 5
    %vm4118 = vcmask 1043459
    %v4119 = vsel %vm4118, %v4117, %v4116
    %v4120 = vrot.slane %v3988, 4
    %vm4121 = vcmask 1044484
    %v4122 = vsel %vm4121, %v4120, %v4119
    %v4123 = vrot.slane %v3989, 3
    %vm4124 = vcmask 1045509
    %v4125 = vsel %vm4124, %v4123, %v4122
    %v4126 = vrot.slane %v3990, 2
    %vm4127 = vcmask 1046534
    %v4128 = vsel %vm4127, %v4126, %v4125
    %v4129 = vrot.slane %v3991, 1
    %vm4130 = vcmask 1047559
    %v4131 = vsel %vm4130, %v4129, %v4128
    %v4132 = vrot.slane %v3993, 7
    %v4133 = vrot.slane %v3994, 6
    %v4134 = vsel %vm4115, %v4133, %v4132
    %v4135 = vrot.slane %v3995, 5
    %v4136 = vsel %vm4118, %v4135, %v4134
    %v4137 = vrot.slane %v3996, 4
    %v4138 = vsel %vm4121, %v4137, %v4136
    %v4139 = vrot.slane %v3997, 3
    %v4140 = vsel %vm4124, %v4139, %v4138
    %v4141 = vrot.slane %v3998, 2
    %v4142 = vsel %vm4127, %v4141, %v4140
    %v4143 = vrot.slane %v3999, 1
    %v4144 = vsel %vm4130, %v4143, %v4142
    %v4145 = vrot.slane %v4001, 7
    %v4146 = vrot.slane %v4002, 6
    %v4147 = vsel %vm4115, %v4146, %v4145
    %v4148 = vrot.slane %v4003, 5
    %v4149 = vsel %vm4118, %v4148, %v4147
    %v4150 = vrot.slane %v4004, 4
    %v4151 = vsel %vm4121, %v4150, %v4149
    %v4152 = vrot.slane %v4005, 3
    %v4153 = vsel %vm4124, %v4152, %v4151
    %v4154 = vrot.slane %v4006, 2
    %v4155 = vsel %vm4127, %v4154, %v4153
    %v4156 = vrot.slane %v4007, 1
    %v4157 = vsel %vm4130, %v4156, %v4155
    %v4158 = vrot.slane %v4009, 7
    %v4159 = vrot.slane %v4010, 6
    %v4160 = vsel %vm4115, %v4159, %v4158
    %v4161 = vrot.slane %v4011, 5
    %v4162 = vsel %vm4118, %v4161, %v4160
    %v4163 = vrot.slane %v4012, 4
    %v4164 = vsel %vm4121, %v4163, %v4162
    %v4165 = vrot.slane %v4013, 3
    %v4166 = vsel %vm4124, %v4165, %v4164
    %v4167 = vrot.slane %v4014, 2
    %v4168 = vsel %vm4127, %v4167, %v4166
    %v4169 = vrot.slane %v4015, 1
    %v4170 = vsel %vm4130, %v4169, %v4168
    %v4171 = vrot.slane %v4017, 7
    %v4172 = vrot.slane %v4018, 6
    %v4173 = vsel %vm4115, %v4172, %v4171
    %v4174 = vrot.slane %v4019, 5
    %v4175 = vsel %vm4118, %v4174, %v4173
    %v4176 = vrot.slane %v4020, 4
    %v4177 = vsel %vm4121, %v4176, %v4175
    %v4178 = vrot.slane %v4021, 3
    %v4179 = vsel %vm4124, %v4178, %v4177
    %v4180 = vrot.slane %v4022, 2
    %v4181 = vsel %vm4127, %v4180, %v4179
    %v4182 = vrot.slane %v4023, 1
    %v4183 = vsel %vm4130, %v4182, %v4181
    %v4184 = vrot.slane %v4025, 7
    %v4185 = vrot.slane %v4026, 6
    %v4186 = vsel %vm4115, %v4185, %v4184
    %v4187 = vrot.slane %v4027, 5
    %v4188 = vsel %vm4118, %v4187, %v4186
    %v4189 = vrot.slane %v4028, 4
    %v4190 = vsel %vm4121, %v4189, %v4188
    %v4191 = vrot.slane %v4029, 3
    %v4192 = vsel %vm4124, %v4191, %v4190
    %v4193 = vrot.slane %v4030, 2
    %v4194 = vsel %vm4127, %v4193, %v4192
    %v4195 = vrot.slane %v4031, 1
    %v4196 = vsel %vm4130, %v4195, %v4194
    %v4197 = vrot.slane %v4033, 7
    %v4198 = vrot.slane %v4034, 6
    %v4199 = vsel %vm4115, %v4198, %v4197
    %v4200 = vrot.slane %v4035, 5
    %v4201 = vsel %vm4118, %v4200, %v4199
    %v4202 = vrot.slane %v4036, 4
    %v4203 = vsel %vm4121, %v4202, %v4201
    %v4204 = vrot.slane %v4037, 3
    %v4205 = vsel %vm4124, %v4204, %v4203
    %v4206 = vrot.slane %v4038, 2
    %v4207 = vsel %vm4127, %v4206, %v4205
    %v4208 = vrot.slane %v4039, 1
    %v4209 = vsel %vm4130, %v4208, %v4207
    %v4210 = vrot.slane %v4041, 7
    %v4211 = vrot.slane %v4042, 6
    %v4212 = vsel %vm4115, %v4211, %v4210
    %v4213 = vrot.slane %v4043, 5
    %v4214 = vsel %vm4118, %v4213, %v4212
    %v4215 = vrot.slane %v4044, 4
    %v4216 = vsel %vm4121, %v4215, %v4214
    %v4217 = vrot.slane %v4045, 3
    %v4218 = vsel %vm4124, %v4217, %v4216
    %v4219 = vrot.slane %v4046, 2
    %v4220 = vsel %vm4127, %v4219, %v4218
    %v4221 = vrot.slane %v4047, 1
    %v4222 = vsel %vm4130, %v4221, %v4220
    %v4223 = vrot.slane %v4049, 7
    %v4224 = vrot.slane %v4050, 6
    %v4225 = vsel %vm4115, %v4224, %v4223
    %v4226 = vrot.slane %v4051, 5
    %v4227 = vsel %vm4118, %v4226, %v4225
    %v4228 = vrot.slane %v4052, 4
    %v4229 = vsel %vm4121, %v4228, %v4227
    %v4230 = vrot.slane %v4053, 3
    %v4231 = vsel %vm4124, %v4230, %v4229
    %v4232 = vrot.slane %v4054, 2
    %v4233 = vsel %vm4127, %v4232, %v4231
    %v4234 = vrot.slane %v4055, 1
    %v4235 = vsel %vm4130, %v4234, %v4233
    %v4236 = vrot.slane %v4057, 7
    %v4237 = vrot.slane %v4058, 6
    %v4238 = vsel %vm4115, %v4237, %v4236
    %v4239 = vrot.slane %v4059, 5
    %v4240 = vsel %vm4118, %v4239, %v4238
    %v4241 = vrot.slane %v4060, 4
    %v4242 = vsel %vm4121, %v4241, %v4240
    %v4243 = vrot.slane %v4061, 3
    %v4244 = vsel %vm4124, %v4243, %v4242
    %v4245 = vrot.slane %v4062, 2
    %v4246 = vsel %vm4127, %v4245, %v4244
    %v4247 = vrot.slane %v4063, 1
    %v4248 = vsel %vm4130, %v4247, %v4246
    %v4249 = vrot.slane %v4065, 7
    %v4250 = vrot.slane %v4066, 6
    %v4251 = vsel %vm4115, %v4250, %v4249
    %v4252 = vrot.slane %v4067, 5
    %v4253 = vsel %vm4118, %v4252, %v4251
    %v4254 = vrot.slane %v4068, 4
    %v4255 = vsel %vm4121, %v4254, %v4253
    %v4256 = vrot.slane %v4069, 3
    %v4257 = vsel %vm4124, %v4256, %v4255
    %v4258 = vrot.slane %v4070, 2
    %v4259 = vsel %vm4127, %v4258, %v4257
    %v4260 = vrot.slane %v4071, 1
    %v4261 = vsel %vm4130, %v4260, %v4259
    %v4262 = vrot.slane %v4073, 7
    %v4263 = vrot.slane %v4074, 6
    %v4264 = vsel %vm4115, %v4263, %v4262
    %v4265 = vrot.slane %v4075, 5
    %v4266 = vsel %vm4118, %v4265, %v4264
    %v4267 = vrot.slane %v4076, 4
    %v4268 = vsel %vm4121, %v4267, %v4266
    %v4269 = vrot.slane %v4077, 3
    %v4270 = vsel %vm4124, %v4269, %v4268
    %v4271 = vrot.slane %v4078, 2
    %v4272 = vsel %vm4127, %v4271, %v4270
    %v4273 = vrot.slane %v4079, 1
    %v4274 = vsel %vm4130, %v4273, %v4272
    %v4275 = vrot.slane %v4081, 7
    %v4276 = vrot.slane %v4082, 6
    %v4277 = vsel %vm4115, %v4276, %v4275
    %v4278 = vrot.slane %v4083, 5
    %v4279 = vsel %vm4118, %v4278, %v4277
    %v4280 = vrot.slane %v4084, 4
    %v4281 = vsel %vm4121, %v4280, %v4279
    %v4282 = vrot.slane %v4085, 3
    %v4283 = vsel %vm4124, %v4282, %v4281
    %v4284 = vrot.slane %v4086, 2
    %v4285 = vsel %vm4127, %v4284, %v4283
    %v4286 = vrot.slane %v4087, 1
    %v4287 = vsel %vm4130, %v4286, %v4285
    %v4288 = vrot.slane %v4089, 7
    %v4289 = vrot.slane %v4090, 6
    %v4290 = vsel %vm4115, %v4289, %v4288
    %v4291 = vrot.slane %v4091, 5
    %v4292 = vsel %vm4118, %v4291, %v4290
    %v4293 = vrot.slane %v4092, 4
    %v4294 = vsel %vm4121, %v4293, %v4292
    %v4295 = vrot.slane %v4093, 3
    %v4296 = vsel %vm4124, %v4295, %v4294
    %v4297 = vrot.slane %v4094, 2
    %v4298 = vsel %vm4127, %v4297, %v4296
    %v4299 = vrot.slane %v4095, 1
    %v4300 = vsel %vm4130, %v4299, %v4298
    %v4301 = vrot.slane %v4097, 7
    %v4302 = vrot.slane %v4098, 6
    %v4303 = vsel %vm4115, %v4302, %v4301
    %v4304 = vrot.slane %v4099, 5
    %v4305 = vsel %vm4118, %v4304, %v4303
    %v4306 = vrot.slane %v4100, 4
    %v4307 = vsel %vm4121, %v4306, %v4305
    %v4308 = vrot.slane %v4101, 3
    %v4309 = vsel %vm4124, %v4308, %v4307
    %v4310 = vrot.slane %v4102, 2
    %v4311 = vsel %vm4127, %v4310, %v4309
    %v4312 = vrot.slane %v4103, 1
    %v4313 = vsel %vm4130, %v4312, %v4311
    %v4314 = vrot.slane %v4105, 7
    %v4315 = vrot.slane %v4106, 6
    %v4316 = vsel %vm4115, %v4315, %v4314
    %v4317 = vrot.slane %v4107, 5
    %v4318 = vsel %vm4118, %v4317, %v4316
    %v4319 = vrot.slane %v4108, 4
    %v4320 = vsel %vm4121, %v4319, %v4318
    %v4321 = vrot.slane %v4109, 3
    %v4322 = vsel %vm4124, %v4321, %v4320
    %v4323 = vrot.slane %v4110, 2
    %v4324 = vsel %vm4127, %v4323, %v4322
    %v4325 = vrot.slane %v4111, 1
    %v4326 = vsel %vm4130, %v4325, %v4324
    %v4327 = vpack.c.b16 %v4131, %v4131
    %v4328 = vpack.c.b16 %v3992, %v3992
    %v4329 = vpack.c.b16 %v4144, %v4144
    %v4330 = vpack.c.b16 %v4000, %v4000
    %v4331 = vpack.c.b16 %v4157, %v4157
    %v4332 = vpack.c.b16 %v4008, %v4008
    %v4333 = vpack.c.b16 %v4170, %v4170
    %v4334 = vpack.c.b16 %v4016, %v4016
    %v4335 = vpack.c.b16 %v4183, %v4183
    %v4336 = vpack.c.b16 %v4024, %v4024
    %v4337 = vpack.c.b16 %v4196, %v4196
    %v4338 = vpack.c.b16 %v4032, %v4032
    %v4339 = vpack.c.b16 %v4209, %v4209
    %v4340 = vpack.c.b16 %v4040, %v4040
    %v4341 = vpack.c.b16 %v4222, %v4222
    %v4342 = vpack.c.b16 %v4048, %v4048
    %v4343 = vpack.c.b16 %v4235, %v4235
    %v4344 = vpack.c.b16 %v4056, %v4056
    %v4345 = vpack.c.b16 %v4248, %v4248
    %v4346 = vpack.c.b16 %v4064, %v4064
    %v4347 = vpack.c.b16 %v4261, %v4261
    %v4348 = vpack.c.b16 %v4072, %v4072
    %v4349 = vpack.c.b16 %v4274, %v4274
    %v4350 = vpack.c.b16 %v4080, %v4080
    %v4351 = vpack.c.b16 %v4287, %v4287
    %v4352 = vpack.c.b16 %v4088, %v4088
    %v4353 = vpack.c.b16 %v4300, %v4300
    %v4354 = vpack.c.b16 %v4096, %v4096
    %v4355 = vpack.c.b16 %v4313, %v4313
    %v4356 = vpack.c.b16 %v4104, %v4104
    %v4357 = vpack.c.b16 %v4326, %v4326
    %v4358 = vpack.c.b16 %v4112, %v4112
    %s4391 = scalar_lea.vmem [#allocation2], 8
    %vm4392 = vcmask 1043456
    %vm4393 = vsmask.f32 7938
    %vm4394 = vmand %vm4392, %vm4393
    %v4395 = vld [vmem:[%s4391] sm:$0xf]
    %v4396 = vsel %vm4394, %v4327, %v4395
    %4397 = vst [vmem:[%s4391] sm:$0xf] %v4396
    %vm4398 = vcmask 1040384
    %vm4399 = vsmask.f32 256
    %vm4400 = vmand %vm4398, %vm4399
    %v4401 = vld [vmem:[%s4391 + $0x4] sm:$0x1]
    %v4402 = vsel %vm4400, %v4328, %v4401
    %4403 = vst [vmem:[%s4391 + $0x4] sm:$0x1] %v4402
    %v4404 = vld [vmem:[%s4391 + $0x8] sm:$0xf]
    %v4405 = vsel %vm4394, %v4329, %v4404
    %4406 = vst [vmem:[%s4391 + $0x8] sm:$0xf] %v4405
    %v4407 = vld [vmem:[%s4391 + $0xc] sm:$0x1]
    %v4408 = vsel %vm4400, %v4330, %v4407
    %4409 = vst [vmem:[%s4391 + $0xc] sm:$0x1] %v4408
    %v4410 = vld [vmem:[%s4391 + $0x10] sm:$0xf]
    %v4411 = vsel %vm4394, %v4331, %v4410
    %4412 = vst [vmem:[%s4391 + $0x10] sm:$0xf] %v4411
    %v4413 = vld [vmem:[%s4391 + $0x14] sm:$0x1]
    %v4414 = vsel %vm4400, %v4332, %v4413
    %4415 = vst [vmem:[%s4391 + $0x14] sm:$0x1] %v4414
    %v4416 = vld [vmem:[%s4391 + $0x18] sm:$0xf]
    %v4417 = vsel %vm4394, %v4333, %v4416
    %4418 = vst [vmem:[%s4391 + $0x18] sm:$0xf] %v4417
    %v4419 = vld [vmem:[%s4391 + $0x1c] sm:$0x1]
    %v4420 = vsel %vm4400, %v4334, %v4419
    %4421 = vst [vmem:[%s4391 + $0x1c] sm:$0x1] %v4420
    %v4422 = vld [vmem:[%s4391 + $0x20] sm:$0xf]
    %v4423 = vsel %vm4394, %v4335, %v4422
    %4424 = vst [vmem:[%s4391 + $0x20] sm:$0xf] %v4423
    %v4425 = vld [vmem:[%s4391 + $0x24] sm:$0x1]
    %v4426 = vsel %vm4400, %v4336, %v4425
    %4427 = vst [vmem:[%s4391 + $0x24] sm:$0x1] %v4426
    %v4428 = vld [vmem:[%s4391 + $0x28] sm:$0xf]
    %v4429 = vsel %vm4394, %v4337, %v4428
    %4430 = vst [vmem:[%s4391 + $0x28] sm:$0xf] %v4429
    %v4431 = vld [vmem:[%s4391 + $0x2c] sm:$0x1]
    %v4432 = vsel %vm4400, %v4338, %v4431
    %4433 = vst [vmem:[%s4391 + $0x2c] sm:$0x1] %v4432
    %v4434 = vld [vmem:[%s4391 + $0x30] sm:$0xf]
    %v4435 = vsel %vm4394, %v4339, %v4434
    %4436 = vst [vmem:[%s4391 + $0x30] sm:$0xf] %v4435
    %v4437 = vld [vmem:[%s4391 + $0x34] sm:$0x1]
    %v4438 = vsel %vm4400, %v4340, %v4437
    %4439 = vst [vmem:[%s4391 + $0x34] sm:$0x1] %v4438
    %v4440 = vld [vmem:[%s4391 + $0x38] sm:$0xf]
    %v4441 = vsel %vm4394, %v4341, %v4440
    %4442 = vst [vmem:[%s4391 + $0x38] sm:$0xf] %v4441
    %v4443 = vld [vmem:[%s4391 + $0x3c] sm:$0x1]
    %v4444 = vsel %vm4400, %v4342, %v4443
    %4445 = vst [vmem:[%s4391 + $0x3c] sm:$0x1] %v4444
    %v4446 = vld [vmem:[%s4391 + $0x50] sm:$0xf]
    %v4447 = vsel %vm4394, %v4343, %v4446
    %4448 = vst [vmem:[%s4391 + $0x50] sm:$0xf] %v4447
    %v4449 = vld [vmem:[%s4391 + $0x54] sm:$0x1]
    %v4450 = vsel %vm4400, %v4344, %v4449
    %4451 = vst [vmem:[%s4391 + $0x54] sm:$0x1] %v4450
    %v4452 = vld [vmem:[%s4391 + $0x58] sm:$0xf]
    %v4453 = vsel %vm4394, %v4345, %v4452
    %4454 = vst [vmem:[%s4391 + $0x58] sm:$0xf] %v4453
    %v4455 = vld [vmem:[%s4391 + $0x5c] sm:$0x1]
    %v4456 = vsel %vm4400, %v4346, %v4455
    %4457 = vst [vmem:[%s4391 + $0x5c] sm:$0x1] %v4456
    %v4458 = vld [vmem:[%s4391 + $0x60] sm:$0xf]
    %v4459 = vsel %vm4394, %v4347, %v4458
    %4460 = vst [vmem:[%s4391 + $0x60] sm:$0xf] %v4459
    %v4461 = vld [vmem:[%s4391 + $0x64] sm:$0x1]
    %v4462 = vsel %vm4400, %v4348, %v4461
    %4463 = vst [vmem:[%s4391 + $0x64] sm:$0x1] %v4462
    %v4464 = vld [vmem:[%s4391 + $0x68] sm:$0xf]
    %v4465 = vsel %vm4394, %v4349, %v4464
    %4466 = vst [vmem:[%s4391 + $0x68] sm:$0xf] %v4465
    %v4467 = vld [vmem:[%s4391 + $0x6c] sm:$0x1]
    %v4468 = vsel %vm4400, %v4350, %v4467
    %4469 = vst [vmem:[%s4391 + $0x6c] sm:$0x1] %v4468
    %v4470 = vld [vmem:[%s4391 + $0x70] sm:$0xf]
    %v4471 = vsel %vm4394, %v4351, %v4470
    %4472 = vst [vmem:[%s4391 + $0x70] sm:$0xf] %v4471
    %v4473 = vld [vmem:[%s4391 + $0x74] sm:$0x1]
    %v4474 = vsel %vm4400, %v4352, %v4473
    %4475 = vst [vmem:[%s4391 + $0x74] sm:$0x1] %v4474
    %v4476 = vld [vmem:[%s4391 + $0x78] sm:$0xf]
    %v4477 = vsel %vm4394, %v4353, %v4476
    %4478 = vst [vmem:[%s4391 + $0x78] sm:$0xf] %v4477
    %v4479 = vld [vmem:[%s4391 + $0x7c] sm:$0x1]
    %v4480 = vsel %vm4400, %v4354, %v4479
    %4481 = vst [vmem:[%s4391 + $0x7c] sm:$0x1] %v4480
    %v4482 = vld [vmem:[%s4391 + $0x80] sm:$0xf]
    %v4483 = vsel %vm4394, %v4355, %v4482
    %4484 = vst [vmem:[%s4391 + $0x80] sm:$0xf] %v4483
    %v4485 = vld [vmem:[%s4391 + $0x84] sm:$0x1]
    %v4486 = vsel %vm4400, %v4356, %v4485
    %4487 = vst [vmem:[%s4391 + $0x84] sm:$0x1] %v4486
    %v4488 = vld [vmem:[%s4391 + $0x88] sm:$0xf]
    %v4489 = vsel %vm4394, %v4357, %v4488
    %4490 = vst [vmem:[%s4391 + $0x88] sm:$0xf] %v4489
    %v4491 = vld [vmem:[%s4391 + $0x8c] sm:$0x1]
    %v4492 = vsel %vm4400, %v4358, %v4491
    %4493 = vst [vmem:[%s4391 + $0x8c] sm:$0x1] %v4492
    %v4494 = vld [vmem:[#allocation2] sm:$0xf]
    %v4495 = vld [vmem:[#allocation2 + $0x8] sm:$0xf]
    %v4496 = vld [vmem:[#allocation2 + $0x10] sm:$0xf]
    %v4497 = vld [vmem:[#allocation2 + $0x18] sm:$0xf]
    %v4498 = vld [vmem:[#allocation2 + $0x20] sm:$0xf]
    %v4499 = vld [vmem:[#allocation2 + $0x28] sm:$0xf]
    %v4500 = vld [vmem:[#allocation2 + $0x30] sm:$0xf]
    %v4501 = vld [vmem:[#allocation2 + $0x38] sm:$0xf]
    %v4502 = vld [vmem:[#allocation2 + $0x40] sm:$0xf]
    %v4503 = vld [vmem:[#allocation2 + $0x48] sm:$0xf]
    %v4504 = vld [vmem:[#allocation2 + $0x50] sm:$0xf]
    %v4505 = vld [vmem:[#allocation2 + $0x58] sm:$0xf]
    %v4506 = vld [vmem:[#allocation2 + $0x60] sm:$0xf]
    %v4507 = vld [vmem:[#allocation2 + $0x68] sm:$0xf]
    %v4508 = vld [vmem:[#allocation2 + $0x70] sm:$0xf]
    %v4509 = vld [vmem:[#allocation2 + $0x78] sm:$0xf]
    %v4510 = vld [vmem:[#allocation2 + $0x80] sm:$0xf]
    %v4511 = vld [vmem:[#allocation2 + $0x88] sm:$0xf]
    %v4512 = vld [vmem:[#allocation2 + $0x90] sm:$0xf]
    %v4513 = vld [vmem:[#allocation2 + $0x98] sm:$0xf]
    %v4514 = vld [vmem:[%s2] sm:$0xf]
    %v4515 = vld [vmem:[%s2 + $0x4] sm:$0xf]
    %v4516 = vld [vmem:[%s2 + $0x8] sm:$0xf]
    %v4517 = vld [vmem:[%s2 + $0xc] sm:$0xf]
    %v4518 = vld [vmem:[%s2 + $0x10] sm:$0xf]
    %v4519 = vld [vmem:[%s2 + $0x14] sm:$0xf]
    %v4520 = vld [vmem:[%s2 + $0x18] sm:$0xf]
    %v4521 = vld [vmem:[%s2 + $0x1c] sm:$0xf]
    %v4522 = vld [vmem:[%s2 + $0x20] sm:$0xf]
    %v4523 = vld [vmem:[%s2 + $0x24] sm:$0xf]
    %v4524 = vld [vmem:[%s2 + $0x28] sm:$0xf]
    %v4525 = vld [vmem:[%s2 + $0x2c] sm:$0xf]
    %v4526 = vld [vmem:[%s2 + $0x30] sm:$0xf]
    %v4527 = vld [vmem:[%s2 + $0x34] sm:$0xf]
    %v4528 = vld [vmem:[%s2 + $0x38] sm:$0xf]
    %v4529 = vld [vmem:[%s2 + $0x3c] sm:$0xf]
    %s4530 = scalar_lea.vmem %s2, 192
    %v4531 = vld [vmem:[%s4530] sm:$0xf]
    %v4532 = vld [vmem:[%s4530 + $0x4] sm:$0xf]
    %v4533 = vld [vmem:[%s4530 + $0x8] sm:$0xf]
    %v4534 = vld [vmem:[%s4530 + $0xc] sm:$0xf]
    %v4535 = vld [vmem:[%s4530 + $0x10] sm:$0xf]
    %v4536 = vld [vmem:[%s4530 + $0x14] sm:$0xf]
    %v4537 = vld [vmem:[%s4530 + $0x18] sm:$0xf]
    %v4538 = vld [vmem:[%s4530 + $0x1c] sm:$0xf]
    %v4539 = vld [vmem:[%s4530 + $0x20] sm:$0xf]
    %v4540 = vld [vmem:[%s4530 + $0x24] sm:$0xf]
    %v4541 = vld [vmem:[%s4530 + $0x28] sm:$0xf]
    %v4542 = vld [vmem:[%s4530 + $0x2c] sm:$0xf]
    %v4543 = vld [vmem:[%s4530 + $0x30] sm:$0xf]
    %v4544 = vld [vmem:[%s4530 + $0x34] sm:$0xf]
    %v4545 = vld [vmem:[%s4530 + $0x38] sm:$0xf]
    %v4546 = vld [vmem:[%s4530 + $0x3c] sm:$0xf]
    %v4563 = vunpack.c.l.b16 %v4495
    %v4564 = vunpack.c.l.b16 %v4496
    %v4565 = vunpack.c.l.b16 %v4497
    %v4566 = vunpack.c.l.b16 %v4498
    %v4567 = vunpack.c.l.b16 %v4499
    %v4568 = vunpack.c.l.b16 %v4500
    %v4569 = vunpack.c.l.b16 %v4501
    %v4570 = vunpack.c.l.b16 %v4502
    %v4571 = vunpack.c.l.b16 %v4505
    %v4572 = vunpack.c.l.b16 %v4506
    %v4573 = vunpack.c.l.b16 %v4507
    %v4574 = vunpack.c.l.b16 %v4508
    %v4575 = vunpack.c.l.b16 %v4509
    %v4576 = vunpack.c.l.b16 %v4510
    %v4577 = vunpack.c.l.b16 %v4511
    %v4578 = vunpack.c.l.b16 %v4512
    %v4579 = vpack.c.b16 %v4564, %v4563
    %v4580 = vpack.c.b16 %v4566, %v4565
    %v4581 = vpack.c.b16 %v4568, %v4567
    %v4582 = vpack.c.b16 %v4570, %v4569
    %v4583 = vpack.c.b16 %v4572, %v4571
    %v4584 = vpack.c.b16 %v4574, %v4573
    %v4585 = vpack.c.b16 %v4576, %v4575
    %v4586 = vpack.c.b16 %v4578, %v4577
    %v4611 = vunpack.c.l.b16 %v4531
    %v4612 = vunpack.c.l.b16 %v4532
    %v4613 = vunpack.c.l.b16 %v4533
    %v4614 = vunpack.c.l.b16 %v4534
    %v4615 = vunpack.c.l.b16 %v4535
    %v4616 = vunpack.c.l.b16 %v4536
    %v4617 = vunpack.c.l.b16 %v4537
    %v4618 = vunpack.c.l.b16 %v4538
    %v4619 = vunpack.c.l.b16 %v4539
    %v4620 = vunpack.c.l.b16 %v4540
    %v4621 = vunpack.c.l.b16 %v4541
    %v4622 = vunpack.c.l.b16 %v4542
    %v4623 = vunpack.c.l.b16 %v4543
    %v4624 = vunpack.c.l.b16 %v4544
    %v4625 = vunpack.c.l.b16 %v4545
    %v4626 = vunpack.c.l.b16 %v4546
    %v4627 = vpack.c.b16 %v4612, %v4611
    %v4628 = vpack.c.b16 %v4614, %v4613
    %v4629 = vpack.c.b16 %v4616, %v4615
    %v4630 = vpack.c.b16 %v4618, %v4617
    %v4631 = vpack.c.b16 %v4620, %v4619
    %v4632 = vpack.c.b16 %v4622, %v4621
    %v4633 = vpack.c.b16 %v4624, %v4623
    %v4634 = vpack.c.b16 %v4626, %v4625
    %4643 = vmatprep.subr.bf16.mxu0 0
    %4644 = vmatpush1.bf16.msra.mxu0 %v4634
    %4645 = vmatprep.subr.bf16.mxu0 0
    %4646 = vmatpush1.bf16.msra.mxu0 %v4633
    %4647 = vmatprep.subr.bf16.mxu0 0
    %4648 = vmatpush1.bf16.msra.mxu0 %v4632
    %4649 = vmatprep.subr.bf16.mxu0 0
    %4650 = vmatpush1.bf16.msra.mxu0 %v4631
    %4651 = vmatprep.subr.bf16.mxu0 0
    %4652 = vmatpush1.bf16.msra.mxu0 %v4630
    %4653 = vmatprep.subr.bf16.mxu0 0
    %4654 = vmatpush1.bf16.msra.mxu0 %v4629
    %4655 = vmatprep.subr.bf16.mxu0 0
    %4656 = vmatpush1.bf16.msra.mxu0 %v4628
    %4657 = vmatprep.subr.bf16.mxu0 0
    %4658 = vmatpush1.bf16.msra.mxu0 %v4627
    %4659 = vmatprep.subr.bf16.mxu0 0
    %4660 = vmatpush2.bf16.msra.mxu0 0
    %4661 = vmatprep.subr.bf16.mxu0 0
    %4662 = vmatpush2.bf16.msra.mxu0 0
    %4663 = vmatprep.subr.bf16.mxu0 0
    %4664 = vmatpush2.bf16.msra.mxu0 0
    %4665 = vmatprep.subr.bf16.mxu0 0
    %4666 = vmatpush2.bf16.msra.mxu0 0
    %4667 = vmatprep.subr.bf16.mxu0 0
    %4668 = vmatpush2.bf16.msra.mxu0 0
    %4669 = vmatprep.subr.bf16.mxu0 0
    %4670 = vmatpush2.bf16.msra.mxu0 0
    %4671 = vmatprep.subr.bf16.mxu0 0
    %4672 = vmatpush2.bf16.msra.mxu0 0
    %4673 = vmatprep.subr.bf16.mxu0 0
    %4674 = vmatpush2.bf16.msra.mxu0 0
    %4675 = vmatprep.mubr.bf16.mxu0 0
    %4676 = vmatmul.mubr.bf16.gmra.mxu0 %v4579
    %v4677 = vpop.f32.mrf.mxu0
    %v4678 = vadd.f32 0.0, %v4677
    %v4679 = vpop.f32.mrf.mxu0
    %v4680 = vpop.f32.mrf.mxu0
    %v4681 = vadd.f32 0.0, %v4680
    %v4682 = vpop.f32.mrf.mxu0
    %4683 = vmatprep.mubr.bf16.mxu0 0
    %4684 = vmatmul.mubr.bf16.gmra.mxu0 %v4580
    %v4685 = vpop.f32.mrf.mxu0
    %v4686 = vadd.f32 0.0, %v4685
    %v4687 = vpop.f32.mrf.mxu0
    %v4688 = vpop.f32.mrf.mxu0
    %v4689 = vadd.f32 0.0, %v4688
    %v4690 = vpop.f32.mrf.mxu0
    %4691 = vmatprep.mubr.bf16.mxu0 0
    %4692 = vmatmul.mubr.bf16.gmra.mxu0 %v4581
    %v4693 = vpop.f32.mrf.mxu0
    %v4694 = vadd.f32 0.0, %v4693
    %v4695 = vpop.f32.mrf.mxu0
    %v4696 = vpop.f32.mrf.mxu0
    %v4697 = vadd.f32 0.0, %v4696
    %v4698 = vpop.f32.mrf.mxu0
    %4699 = vmatprep.mubr.bf16.mxu0 0
    %4700 = vmatmul.mubr.bf16.gmra.mxu0 %v4582
    %v4701 = vpop.f32.mrf.mxu0
    %v4702 = vadd.f32 0.0, %v4701
    %v4703 = vpop.f32.mrf.mxu0
    %v4704 = vpop.f32.mrf.mxu0
    %v4705 = vadd.f32 0.0, %v4704
    %v4706 = vpop.f32.mrf.mxu0
    %4707 = vmatprep.mubr.bf16.mxu0 0
    %4708 = vmatmul.mubr.bf16.gmra.mxu0 %v4583
    %v4709 = vpop.f32.mrf.mxu0
    %v4710 = vadd.f32 0.0, %v4709
    %v4711 = vpop.f32.mrf.mxu0
    %v4712 = vpop.f32.mrf.mxu0
    %v4713 = vadd.f32 0.0, %v4712
    %v4714 = vpop.f32.mrf.mxu0
    %4715 = vmatprep.mubr.bf16.mxu0 0
    %4716 = vmatmul.mubr.bf16.gmra.mxu0 %v4584
    %v4717 = vpop.f32.mrf.mxu0
    %v4718 = vadd.f32 0.0, %v4717
    %v4719 = vpop.f32.mrf.mxu0
    %v4720 = vpop.f32.mrf.mxu0
    %v4721 = vadd.f32 0.0, %v4720
    %v4722 = vpop.f32.mrf.mxu0
    %4723 = vmatprep.mubr.bf16.mxu0 0
    %4724 = vmatmul.mubr.bf16.gmra.mxu0 %v4585
    %v4725 = vpop.f32.mrf.mxu0
    %v4726 = vadd.f32 0.0, %v4725
    %v4727 = vpop.f32.mrf.mxu0
    %v4728 = vpop.f32.mrf.mxu0
    %v4729 = vadd.f32 0.0, %v4728
    %v4730 = vpop.f32.mrf.mxu0
    %4731 = vmatprep.mubr.bf16.mxu0 0
    %4732 = vmatmul.mubr.bf16.gmra.mxu0 %v4586
    %v4733 = vpop.f32.mrf.mxu0
    %v4734 = vadd.f32 0.0, %v4733
    %v4735 = vpop.f32.mrf.mxu0
    %v4736 = vpop.f32.mrf.mxu0
    %v4737 = vadd.f32 0.0, %v4736
    %v4738 = vpop.f32.mrf.mxu0
    %4739 = vdwg.mxu0
    %v4742 = vunpack.c.l.b16 %v4494
    %v4743 = vunpack.c.l.b16 %v4504
    %v4744 = vpack.c.b16 %v4563, %v4742
    %v4745 = vpack.c.b16 %v4565, %v4564
    %v4746 = vpack.c.b16 %v4567, %v4566
    %v4747 = vpack.c.b16 %v4569, %v4568
    %v4748 = vpack.c.b16 %v4571, %v4743
    %v4749 = vpack.c.b16 %v4573, %v4572
    %v4750 = vpack.c.b16 %v4575, %v4574
    %v4751 = vpack.c.b16 %v4577, %v4576
    %v4776 = vunpack.c.l.b16 %v4514
    %v4777 = vunpack.c.l.b16 %v4515
    %v4778 = vunpack.c.l.b16 %v4516
    %v4779 = vunpack.c.l.b16 %v4517
    %v4780 = vunpack.c.l.b16 %v4518
    %v4781 = vunpack.c.l.b16 %v4519
    %v4782 = vunpack.c.l.b16 %v4520
    %v4783 = vunpack.c.l.b16 %v4521
    %v4784 = vunpack.c.l.b16 %v4522
    %v4785 = vunpack.c.l.b16 %v4523
    %v4786 = vunpack.c.l.b16 %v4524
    %v4787 = vunpack.c.l.b16 %v4525
    %v4788 = vunpack.c.l.b16 %v4526
    %v4789 = vunpack.c.l.b16 %v4527
    %v4790 = vunpack.c.l.b16 %v4528
    %v4791 = vunpack.c.l.b16 %v4529
    %v4792 = vpack.c.b16 %v4777, %v4776
    %v4793 = vpack.c.b16 %v4779, %v4778
    %v4794 = vpack.c.b16 %v4781, %v4780
    %v4795 = vpack.c.b16 %v4783, %v4782
    %v4796 = vpack.c.b16 %v4785, %v4784
    %v4797 = vpack.c.b16 %v4787, %v4786
    %v4798 = vpack.c.b16 %v4789, %v4788
    %v4799 = vpack.c.b16 %v4791, %v4790
    %4808 = vmatprep.subr.bf16.mxu0 0
    %4809 = vmatpush1.bf16.msra.mxu0 %v4799
    %4810 = vmatprep.subr.bf16.mxu0 0
    %4811 = vmatpush1.bf16.msra.mxu0 %v4798
    %4812 = vmatprep.subr.bf16.mxu0 0
    %4813 = vmatpush1.bf16.msra.mxu0 %v4797
    %4814 = vmatprep.subr.bf16.mxu0 0
    %4815 = vmatpush1.bf16.msra.mxu0 %v4796
    %4816 = vmatprep.subr.bf16.mxu0 0
    %4817 = vmatpush1.bf16.msra.mxu0 %v4795
    %4818 = vmatprep.subr.bf16.mxu0 0
    %4819 = vmatpush1.bf16.msra.mxu0 %v4794
    %4820 = vmatprep.subr.bf16.mxu0 0
    %4821 = vmatpush1.bf16.msra.mxu0 %v4793
    %4822 = vmatprep.subr.bf16.mxu0 0
    %4823 = vmatpush1.bf16.msra.mxu0 %v4792
    %4824 = vmatprep.subr.bf16.mxu0 0
    %4825 = vmatpush2.bf16.msra.mxu0 0
    %4826 = vmatprep.subr.bf16.mxu0 0
    %4827 = vmatpush2.bf16.msra.mxu0 0
    %4828 = vmatprep.subr.bf16.mxu0 0
    %4829 = vmatpush2.bf16.msra.mxu0 0
    %4830 = vmatprep.subr.bf16.mxu0 0
    %4831 = vmatpush2.bf16.msra.mxu0 0
    %4832 = vmatprep.subr.bf16.mxu0 0
    %4833 = vmatpush2.bf16.msra.mxu0 0
    %4834 = vmatprep.subr.bf16.mxu0 0
    %4835 = vmatpush2.bf16.msra.mxu0 0
    %4836 = vmatprep.subr.bf16.mxu0 0
    %4837 = vmatpush2.bf16.msra.mxu0 0
    %4838 = vmatprep.subr.bf16.mxu0 0
    %4839 = vmatpush2.bf16.msra.mxu0 0
    %4840 = vmatprep.mubr.bf16.mxu0 0
    %4841 = vmatmul.mubr.bf16.gmra.mxu0 %v4744
    %v4842 = vpop.f32.mrf.mxu0
    %v4843 = vadd.f32 %v4678, %v4842
    %v4844 = vpop.f32.mrf.mxu0
    %v4845 = vpop.f32.mrf.mxu0
    %v4846 = vadd.f32 %v4681, %v4845
    %v4847 = vpop.f32.mrf.mxu0
    %4848 = vmatprep.mubr.bf16.mxu0 0
    %4849 = vmatmul.mubr.bf16.gmra.mxu0 %v4745
    %v4850 = vpop.f32.mrf.mxu0
    %v4851 = vadd.f32 %v4686, %v4850
    %v4852 = vpop.f32.mrf.mxu0
    %v4853 = vpop.f32.mrf.mxu0
    %v4854 = vadd.f32 %v4689, %v4853
    %v4855 = vpop.f32.mrf.mxu0
    %4856 = vmatprep.mubr.bf16.mxu0 0
    %4857 = vmatmul.mubr.bf16.gmra.mxu0 %v4746
    %v4858 = vpop.f32.mrf.mxu0
    %v4859 = vadd.f32 %v4694, %v4858
    %v4860 = vpop.f32.mrf.mxu0
    %v4861 = vpop.f32.mrf.mxu0
    %v4862 = vadd.f32 %v4697, %v4861
    %v4863 = vpop.f32.mrf.mxu0
    %4864 = vmatprep.mubr.bf16.mxu0 0
    %4865 = vmatmul.mubr.bf16.gmra.mxu0 %v4747
    %v4866 = vpop.f32.mrf.mxu0
    %v4867 = vadd.f32 %v4702, %v4866
    %v4868 = vpop.f32.mrf.mxu0
    %v4869 = vpop.f32.mrf.mxu0
    %v4870 = vadd.f32 %v4705, %v4869
    %v4871 = vpop.f32.mrf.mxu0
    %4872 = vmatprep.mubr.bf16.mxu0 0
    %4873 = vmatmul.mubr.bf16.gmra.mxu0 %v4748
    %v4874 = vpop.f32.mrf.mxu0
    %v4875 = vadd.f32 %v4710, %v4874
    %v4876 = vpop.f32.mrf.mxu0
    %v4877 = vpop.f32.mrf.mxu0
    %v4878 = vadd.f32 %v4713, %v4877
    %v4879 = vpop.f32.mrf.mxu0
    %4880 = vmatprep.mubr.bf16.mxu0 0
    %4881 = vmatmul.mubr.bf16.gmra.mxu0 %v4749
    %v4882 = vpop.f32.mrf.mxu0
    %v4883 = vadd.f32 %v4718, %v4882
    %v4884 = vpop.f32.mrf.mxu0
    %v4885 = vpop.f32.mrf.mxu0
    %v4886 = vadd.f32 %v4721, %v4885
    %v4887 = vpop.f32.mrf.mxu0
    %4888 = vmatprep.mubr.bf16.mxu0 0
    %4889 = vmatmul.mubr.bf16.gmra.mxu0 %v4750
    %v4890 = vpop.f32.mrf.mxu0
    %v4891 = vadd.f32 %v4726, %v4890
    %v4892 = vpop.f32.mrf.mxu0
    %v4893 = vpop.f32.mrf.mxu0
    %v4894 = vadd.f32 %v4729, %v4893
    %v4895 = vpop.f32.mrf.mxu0
    %4896 = vmatprep.mubr.bf16.mxu0 0
    %4897 = vmatmul.mubr.bf16.gmra.mxu0 %v4751
    %v4898 = vpop.f32.mrf.mxu0
    %v4899 = vadd.f32 %v4734, %v4898
    %v4900 = vpop.f32.mrf.mxu0
    %v4901 = vpop.f32.mrf.mxu0
    %v4902 = vadd.f32 %v4737, %v4901
    %v4903 = vpop.f32.mrf.mxu0
    %4904 = vdwg.mxu0
    %s4905 = scalar_lea.vmem %s2, 384
    %v4906 = vld [vmem:[%s4905] sm:$0xf]
    %v4907 = vld [vmem:[%s4905 + $0x4] sm:$0xf]
    %v4908 = vld [vmem:[%s4905 + $0x8] sm:$0xf]
    %v4909 = vld [vmem:[%s4905 + $0xc] sm:$0xf]
    %v4910 = vld [vmem:[%s4905 + $0x10] sm:$0xf]
    %v4911 = vld [vmem:[%s4905 + $0x14] sm:$0xf]
    %v4912 = vld [vmem:[%s4905 + $0x18] sm:$0xf]
    %v4913 = vld [vmem:[%s4905 + $0x1c] sm:$0xf]
    %v4914 = vld [vmem:[%s4905 + $0x20] sm:$0xf]
    %v4915 = vld [vmem:[%s4905 + $0x24] sm:$0xf]
    %v4916 = vld [vmem:[%s4905 + $0x28] sm:$0xf]
    %v4917 = vld [vmem:[%s4905 + $0x2c] sm:$0xf]
    %v4918 = vld [vmem:[%s4905 + $0x30] sm:$0xf]
    %v4919 = vld [vmem:[%s4905 + $0x34] sm:$0xf]
    %v4920 = vld [vmem:[%s4905 + $0x38] sm:$0xf]
    %v4921 = vld [vmem:[%s4905 + $0x3c] sm:$0xf]
    %v4924 = vunpack.c.l.b16 %v4503
    %v4925 = vunpack.c.l.b16 %v4513
    %v4926 = vpack.c.b16 %v4924, %v4570
    %v4927 = vpack.c.b16 %v4925, %v4578
    %v4946 = vunpack.c.l.b16 %v4906
    %v4947 = vunpack.c.l.b16 %v4907
    %v4948 = vunpack.c.l.b16 %v4908
    %v4949 = vunpack.c.l.b16 %v4909
    %v4950 = vunpack.c.l.b16 %v4910
    %v4951 = vunpack.c.l.b16 %v4911
    %v4952 = vunpack.c.l.b16 %v4912
    %v4953 = vunpack.c.l.b16 %v4913
    %v4954 = vunpack.c.l.b16 %v4914
    %v4955 = vunpack.c.l.b16 %v4915
    %v4956 = vunpack.c.l.b16 %v4916
    %v4957 = vunpack.c.l.b16 %v4917
    %v4958 = vunpack.c.l.b16 %v4918
    %v4959 = vunpack.c.l.b16 %v4919
    %v4960 = vunpack.c.l.b16 %v4920
    %v4961 = vunpack.c.l.b16 %v4921
    %v4962 = vpack.c.b16 %v4947, %v4946
    %v4963 = vpack.c.b16 %v4949, %v4948
    %v4964 = vpack.c.b16 %v4951, %v4950
    %v4965 = vpack.c.b16 %v4953, %v4952
    %v4966 = vpack.c.b16 %v4955, %v4954
    %v4967 = vpack.c.b16 %v4957, %v4956
    %v4968 = vpack.c.b16 %v4959, %v4958
    %v4969 = vpack.c.b16 %v4961, %v4960
    %4978 = vmatprep.subr.bf16.mxu0 0
    %4979 = vmatpush1.bf16.msra.mxu0 %v4969
    %4980 = vmatprep.subr.bf16.mxu0 0
    %4981 = vmatpush1.bf16.msra.mxu0 %v4968
    %4982 = vmatprep.subr.bf16.mxu0 0
    %4983 = vmatpush1.bf16.msra.mxu0 %v4967
    %4984 = vmatprep.subr.bf16.mxu0 0
    %4985 = vmatpush1.bf16.msra.mxu0 %v4966
    %4986 = vmatprep.subr.bf16.mxu0 0
    %4987 = vmatpush1.bf16.msra.mxu0 %v4965
    %4988 = vmatprep.subr.bf16.mxu0 0
    %4989 = vmatpush1.bf16.msra.mxu0 %v4964
    %4990 = vmatprep.subr.bf16.mxu0 0
    %4991 = vmatpush1.bf16.msra.mxu0 %v4963
    %4992 = vmatprep.subr.bf16.mxu0 0
    %4993 = vmatpush1.bf16.msra.mxu0 %v4962
    %4994 = vmatprep.subr.bf16.mxu0 0
    %4995 = vmatpush2.bf16.msra.mxu0 0
    %4996 = vmatprep.subr.bf16.mxu0 0
    %4997 = vmatpush2.bf16.msra.mxu0 0
    %4998 = vmatprep.subr.bf16.mxu0 0
    %4999 = vmatpush2.bf16.msra.mxu0 0
    %5000 = vmatprep.subr.bf16.mxu0 0
    %5001 = vmatpush2.bf16.msra.mxu0 0
    %5002 = vmatprep.subr.bf16.mxu0 0
    %5003 = vmatpush2.bf16.msra.mxu0 0
    %5004 = vmatprep.subr.bf16.mxu0 0
    %5005 = vmatpush2.bf16.msra.mxu0 0
    %5006 = vmatprep.subr.bf16.mxu0 0
    %5007 = vmatpush2.bf16.msra.mxu0 0
    %5008 = vmatprep.subr.bf16.mxu0 0
    %5009 = vmatpush2.bf16.msra.mxu0 0
    %5010 = vmatprep.mubr.bf16.mxu0 0
    %5011 = vmatmul.mubr.bf16.gmra.mxu0 %v4745
    %v5012 = vpop.f32.mrf.mxu0
    %v5013 = vadd.f32 0.0, %v5012
    %v5014 = vpop.f32.mrf.mxu0
    %v5015 = vpop.f32.mrf.mxu0
    %v5016 = vadd.f32 0.0, %v5015
    %v5017 = vpop.f32.mrf.mxu0
    %5018 = vmatprep.mubr.bf16.mxu0 0
    %5019 = vmatmul.mubr.bf16.gmra.mxu0 %v4746
    %v5020 = vpop.f32.mrf.mxu0
    %v5021 = vadd.f32 0.0, %v5020
    %v5022 = vpop.f32.mrf.mxu0
    %v5023 = vpop.f32.mrf.mxu0
    %v5024 = vadd.f32 0.0, %v5023
    %v5025 = vpop.f32.mrf.mxu0
    %5026 = vmatprep.mubr.bf16.mxu0 0
    %5027 = vmatmul.mubr.bf16.gmra.mxu0 %v4747
    %v5028 = vpop.f32.mrf.mxu0
    %v5029 = vadd.f32 0.0, %v5028
    %v5030 = vpop.f32.mrf.mxu0
    %v5031 = vpop.f32.mrf.mxu0
    %v5032 = vadd.f32 0.0, %v5031
    %v5033 = vpop.f32.mrf.mxu0
    %5034 = vmatprep.mubr.bf16.mxu0 0
    %5035 = vmatmul.mubr.bf16.gmra.mxu0 %v4926
    %v5036 = vpop.f32.mrf.mxu0
    %v5037 = vadd.f32 0.0, %v5036
    %v5038 = vpop.f32.mrf.mxu0
    %v5039 = vpop.f32.mrf.mxu0
    %v5040 = vadd.f32 0.0, %v5039
    %v5041 = vpop.f32.mrf.mxu0
    %5042 = vmatprep.mubr.bf16.mxu0 0
    %5043 = vmatmul.mubr.bf16.gmra.mxu0 %v4749
    %v5044 = vpop.f32.mrf.mxu0
    %v5045 = vadd.f32 0.0, %v5044
    %v5046 = vpop.f32.mrf.mxu0
    %v5047 = vpop.f32.mrf.mxu0
    %v5048 = vadd.f32 0.0, %v5047
    %v5049 = vpop.f32.mrf.mxu0
    %5050 = vmatprep.mubr.bf16.mxu0 0
    %5051 = vmatmul.mubr.bf16.gmra.mxu0 %v4750
    %v5052 = vpop.f32.mrf.mxu0
    %v5053 = vadd.f32 0.0, %v5052
    %v5054 = vpop.f32.mrf.mxu0
    %v5055 = vpop.f32.mrf.mxu0
    %v5056 = vadd.f32 0.0, %v5055
    %v5057 = vpop.f32.mrf.mxu0
    %5058 = vmatprep.mubr.bf16.mxu0 0
    %5059 = vmatmul.mubr.bf16.gmra.mxu0 %v4751
    %v5060 = vpop.f32.mrf.mxu0
    %v5061 = vadd.f32 0.0, %v5060
    %v5062 = vpop.f32.mrf.mxu0
    %v5063 = vpop.f32.mrf.mxu0
    %v5064 = vadd.f32 0.0, %v5063
    %v5065 = vpop.f32.mrf.mxu0
    %5066 = vmatprep.mubr.bf16.mxu0 0
    %5067 = vmatmul.mubr.bf16.gmra.mxu0 %v4927
    %v5068 = vpop.f32.mrf.mxu0
    %v5069 = vadd.f32 0.0, %v5068
    %v5070 = vpop.f32.mrf.mxu0
    %v5071 = vpop.f32.mrf.mxu0
    %v5072 = vadd.f32 0.0, %v5071
    %v5073 = vpop.f32.mrf.mxu0
    %5074 = vdwg.mxu0
    %v5075 = vadd.f32 %v4843, %v5013
    %v5076 = vadd.f32 %v4846, %v5016
    %v5077 = vadd.f32 %v4851, %v5021
    %v5078 = vadd.f32 %v4854, %v5024
    %v5079 = vadd.f32 %v4859, %v5029
    %v5080 = vadd.f32 %v4862, %v5032
    %v5081 = vadd.f32 %v4867, %v5037
    %v5082 = vadd.f32 %v4870, %v5040
    %v5083 = vadd.f32 %v4875, %v5045
    %v5084 = vadd.f32 %v4878, %v5048
    %v5085 = vadd.f32 %v4883, %v5053
    %v5086 = vadd.f32 %v4886, %v5056
    %v5087 = vadd.f32 %v4891, %v5061
    %v5088 = vadd.f32 %v4894, %v5064
    %v5089 = vadd.f32 %v4899, %v5069
    %v5090 = vadd.f32 %v4902, %v5072
    %v5091 = vld [vmem:[#allocation2] sm:$0xf]
    %v5092 = vld [vmem:[#allocation2 + $0x4] sm:$0x1]
    %v5093 = vld [vmem:[#allocation2 + $0x8] sm:$0xf]
    %v5094 = vld [vmem:[#allocation2 + $0xc] sm:$0x1]
    %v5095 = vld [vmem:[#allocation2 + $0x10] sm:$0xf]
    %v5096 = vld [vmem:[#allocation2 + $0x14] sm:$0x1]
    %v5097 = vld [vmem:[#allocation2 + $0x18] sm:$0xf]
    %v5098 = vld [vmem:[#allocation2 + $0x1c] sm:$0x1]
    %v5099 = vld [vmem:[#allocation2 + $0x20] sm:$0xf]
    %v5100 = vld [vmem:[#allocation2 + $0x24] sm:$0x1]
    %v5101 = vld [vmem:[#allocation2 + $0x28] sm:$0xf]
    %v5102 = vld [vmem:[#allocation2 + $0x2c] sm:$0x1]
    %v5103 = vld [vmem:[#allocation2 + $0x30] sm:$0xf]
    %v5104 = vld [vmem:[#allocation2 + $0x34] sm:$0x1]
    %v5105 = vld [vmem:[#allocation2 + $0x38] sm:$0xf]
    %v5106 = vld [vmem:[#allocation2 + $0x3c] sm:$0x1]
    %v5107 = vld [vmem:[#allocation2 + $0x40] sm:$0xf]
    %v5108 = vld [vmem:[#allocation2 + $0x44] sm:$0x1]
    %v5109 = vld [vmem:[#allocation2 + $0x48] sm:$0xf]
    %v5110 = vld [vmem:[#allocation2 + $0x4c] sm:$0x1]
    %v5111 = vld [vmem:[#allocation2 + $0x50] sm:$0xf]
    %v5112 = vld [vmem:[#allocation2 + $0x54] sm:$0x1]
    %v5113 = vld [vmem:[#allocation2 + $0x58] sm:$0xf]
    %v5114 = vld [vmem:[#allocation2 + $0x5c] sm:$0x1]
    %v5115 = vld [vmem:[#allocation2 + $0x60] sm:$0xf]
    %v5116 = vld [vmem:[#allocation2 + $0x64] sm:$0x1]
    %v5117 = vld [vmem:[#allocation2 + $0x68] sm:$0xf]
    %v5118 = vld [vmem:[#allocation2 + $0x6c] sm:$0x1]
    %v5119 = vld [vmem:[#allocation2 + $0x70] sm:$0xf]
    %v5120 = vld [vmem:[#allocation2 + $0x74] sm:$0x1]
    %v5121 = vld [vmem:[#allocation2 + $0x78] sm:$0xf]
    %v5122 = vld [vmem:[#allocation2 + $0x7c] sm:$0x1]
    %v5123 = vld [vmem:[#allocation2 + $0x80] sm:$0xf]
    %v5124 = vld [vmem:[#allocation2 + $0x84] sm:$0x1]
    %v5125 = vld [vmem:[#allocation2 + $0x88] sm:$0xf]
    %v5126 = vld [vmem:[#allocation2 + $0x8c] sm:$0x1]
    %v5127 = vld [vmem:[#allocation2 + $0x90] sm:$0xf]
    %v5128 = vld [vmem:[#allocation2 + $0x94] sm:$0x1]
    %v5129 = vld [vmem:[#allocation2 + $0x98] sm:$0xf]
    %v5130 = vld [vmem:[#allocation2 + $0x9c] sm:$0x1]
    %vm5131 = vsmask.f32 3328
    %vm5132 = vsmask.f32 7440
    %vm5133 = vmor %vm5131, %vm5132
    %v5135 = vshrl.u32 %v5091, 16
    %v5137 = vrot.slane %v5135, 4
    %v5138 = vshll.u32 %v5091, 16
    %v5140 = vrot.slane %v5138, 5
    %v5141 = vor.u32 %v5137, %v5140
    %v5142 = vrot.slane %v5141, 4
    %v5144 = vshll.u32 %v5092, 16
    %v5146 = vrot.slane %v5144, 5
    %v5147 = vsel %vm5133, %v5142, %v5146
    %v5149 = vshrl.u32 %v5093, 16
    %v5151 = vrot.slane %v5149, 4
    %v5152 = vshll.u32 %v5093, 16
    %v5154 = vrot.slane %v5152, 5
    %v5155 = vor.u32 %v5151, %v5154
    %v5156 = vrot.slane %v5155, 4
    %v5158 = vshll.u32 %v5094, 16
    %v5160 = vrot.slane %v5158, 5
    %v5161 = vsel %vm5133, %v5156, %v5160
    %v5163 = vshrl.u32 %v5095, 16
    %v5165 = vrot.slane %v5163, 4
    %v5166 = vshll.u32 %v5095, 16
    %v5168 = vrot.slane %v5166, 5
    %v5169 = vor.u32 %v5165, %v5168
    %v5170 = vrot.slane %v5169, 4
    %v5172 = vshll.u32 %v5096, 16
    %v5174 = vrot.slane %v5172, 5
    %v5175 = vsel %vm5133, %v5170, %v5174
    %v5177 = vshrl.u32 %v5097, 16
    %v5179 = vrot.slane %v5177, 4
    %v5180 = vshll.u32 %v5097, 16
    %v5182 = vrot.slane %v5180, 5
    %v5183 = vor.u32 %v5179, %v5182
    %v5184 = vrot.slane %v5183, 4
    %v5186 = vshll.u32 %v5098, 16
    %v5188 = vrot.slane %v5186, 5
    %v5189 = vsel %vm5133, %v5184, %v5188
    %v5191 = vshrl.u32 %v5099, 16
    %v5193 = vrot.slane %v5191, 4
    %v5194 = vshll.u32 %v5099, 16
    %v5196 = vrot.slane %v5194, 5
    %v5197 = vor.u32 %v5193, %v5196
    %v5198 = vrot.slane %v5197, 4
    %v5200 = vshll.u32 %v5100, 16
    %v5202 = vrot.slane %v5200, 5
    %v5203 = vsel %vm5133, %v5198, %v5202
    %v5205 = vshrl.u32 %v5101, 16
    %v5207 = vrot.slane %v5205, 4
    %v5208 = vshll.u32 %v5101, 16
    %v5210 = vrot.slane %v5208, 5
    %v5211 = vor.u32 %v5207, %v5210
    %v5212 = vrot.slane %v5211, 4
    %v5214 = vshll.u32 %v5102, 16
    %v5216 = vrot.slane %v5214, 5
    %v5217 = vsel %vm5133, %v5212, %v5216
    %v5219 = vshrl.u32 %v5103, 16
    %v5221 = vrot.slane %v5219, 4
    %v5222 = vshll.u32 %v5103, 16
    %v5224 = vrot.slane %v5222, 5
    %v5225 = vor.u32 %v5221, %v5224
    %v5226 = vrot.slane %v5225, 4
    %v5228 = vshll.u32 %v5104, 16
    %v5230 = vrot.slane %v5228, 5
    %v5231 = vsel %vm5133, %v5226, %v5230
    %v5233 = vshrl.u32 %v5105, 16
    %v5235 = vrot.slane %v5233, 4
    %v5236 = vshll.u32 %v5105, 16
    %v5238 = vrot.slane %v5236, 5
    %v5239 = vor.u32 %v5235, %v5238
    %v5240 = vrot.slane %v5239, 4
    %v5242 = vshll.u32 %v5106, 16
    %v5244 = vrot.slane %v5242, 5
    %v5245 = vsel %vm5133, %v5240, %v5244
    %v5247 = vshrl.u32 %v5107, 16
    %v5249 = vrot.slane %v5247, 4
    %v5250 = vshll.u32 %v5107, 16
    %v5252 = vrot.slane %v5250, 5
    %v5253 = vor.u32 %v5249, %v5252
    %v5254 = vrot.slane %v5253, 4
    %v5256 = vshll.u32 %v5108, 16
    %v5258 = vrot.slane %v5256, 5
    %v5259 = vsel %vm5133, %v5254, %v5258
    %v5261 = vshrl.u32 %v5109, 16
    %v5263 = vrot.slane %v5261, 4
    %v5264 = vshll.u32 %v5109, 16
    %v5266 = vrot.slane %v5264, 5
    %v5267 = vor.u32 %v5263, %v5266
    %v5268 = vrot.slane %v5267, 4
    %v5270 = vshll.u32 %v5110, 16
    %v5272 = vrot.slane %v5270, 5
    %v5273 = vsel %vm5133, %v5268, %v5272
    %v5275 = vshrl.u32 %v5111, 16
    %v5277 = vrot.slane %v5275, 4
    %v5278 = vshll.u32 %v5111, 16
    %v5280 = vrot.slane %v5278, 5
    %v5281 = vor.u32 %v5277, %v5280
    %v5282 = vrot.slane %v5281, 4
    %v5284 = vshll.u32 %v5112, 16
    %v5286 = vrot.slane %v5284, 5
    %v5287 = vsel %vm5133, %v5282, %v5286
    %v5289 = vshrl.u32 %v5113, 16
    %v5291 = vrot.slane %v5289, 4
    %v5292 = vshll.u32 %v5113, 16
    %v5294 = vrot.slane %v5292, 5
    %v5295 = vor.u32 %v5291, %v5294
    %v5296 = vrot.slane %v5295, 4
    %v5298 = vshll.u32 %v5114, 16
    %v5300 = vrot.slane %v5298, 5
    %v5301 = vsel %vm5133, %v5296, %v5300
    %v5303 = vshrl.u32 %v5115, 16
    %v5305 = vrot.slane %v5303, 4
    %v5306 = vshll.u32 %v5115, 16
    %v5308 = vrot.slane %v5306, 5
    %v5309 = vor.u32 %v5305, %v5308
    %v5310 = vrot.slane %v5309, 4
    %v5312 = vshll.u32 %v5116, 16
    %v5314 = vrot.slane %v5312, 5
    %v5315 = vsel %vm5133, %v5310, %v5314
    %v5317 = vshrl.u32 %v5117, 16
    %v5319 = vrot.slane %v5317, 4
    %v5320 = vshll.u32 %v5117, 16
    %v5322 = vrot.slane %v5320, 5
    %v5323 = vor.u32 %v5319, %v5322
    %v5324 = vrot.slane %v5323, 4
    %v5326 = vshll.u32 %v5118, 16
    %v5328 = vrot.slane %v5326, 5
    %v5329 = vsel %vm5133, %v5324, %v5328
    %v5331 = vshrl.u32 %v5119, 16
    %v5333 = vrot.slane %v5331, 4
    %v5334 = vshll.u32 %v5119, 16
    %v5336 = vrot.slane %v5334, 5
    %v5337 = vor.u32 %v5333, %v5336
    %v5338 = vrot.slane %v5337, 4
    %v5340 = vshll.u32 %v5120, 16
    %v5342 = vrot.slane %v5340, 5
    %v5343 = vsel %vm5133, %v5338, %v5342
    %v5345 = vshrl.u32 %v5121, 16
    %v5347 = vrot.slane %v5345, 4
    %v5348 = vshll.u32 %v5121, 16
    %v5350 = vrot.slane %v5348, 5
    %v5351 = vor.u32 %v5347, %v5350
    %v5352 = vrot.slane %v5351, 4
    %v5354 = vshll.u32 %v5122, 16
    %v5356 = vrot.slane %v5354, 5
    %v5357 = vsel %vm5133, %v5352, %v5356
    %v5359 = vshrl.u32 %v5123, 16
    %v5361 = vrot.slane %v5359, 4
    %v5362 = vshll.u32 %v5123, 16
    %v5364 = vrot.slane %v5362, 5
    %v5365 = vor.u32 %v5361, %v5364
    %v5366 = vrot.slane %v5365, 4
    %v5368 = vshll.u32 %v5124, 16
    %v5370 = vrot.slane %v5368, 5
    %v5371 = vsel %vm5133, %v5366, %v5370
    %v5373 = vshrl.u32 %v5125, 16
    %v5375 = vrot.slane %v5373, 4
    %v5376 = vshll.u32 %v5125, 16
    %v5378 = vrot.slane %v5376, 5
    %v5379 = vor.u32 %v5375, %v5378
    %v5380 = vrot.slane %v5379, 4
    %v5382 = vshll.u32 %v5126, 16
    %v5384 = vrot.slane %v5382, 5
    %v5385 = vsel %vm5133, %v5380, %v5384
    %v5387 = vshrl.u32 %v5127, 16
    %v5389 = vrot.slane %v5387, 4
    %v5390 = vshll.u32 %v5127, 16
    %v5392 = vrot.slane %v5390, 5
    %v5393 = vor.u32 %v5389, %v5392
    %v5394 = vrot.slane %v5393, 4
    %v5396 = vshll.u32 %v5128, 16
    %v5398 = vrot.slane %v5396, 5
    %v5399 = vsel %vm5133, %v5394, %v5398
    %v5401 = vshrl.u32 %v5129, 16
    %v5403 = vrot.slane %v5401, 4
    %v5404 = vshll.u32 %v5129, 16
    %v5406 = vrot.slane %v5404, 5
    %v5407 = vor.u32 %v5403, %v5406
    %v5408 = vrot.slane %v5407, 4
    %v5410 = vshll.u32 %v5130, 16
    %v5412 = vrot.slane %v5410, 5
    %v5413 = vsel %vm5133, %v5408, %v5412
    %s5414 = scalar_lea.vmem %s2, 64
    %v5415 = vld [vmem:[%s5414] sm:$0xf]
    %v5416 = vld [vmem:[%s5414 + $0x4] sm:$0xf]
    %v5417 = vld [vmem:[%s5414 + $0x8] sm:$0xf]
    %v5418 = vld [vmem:[%s5414 + $0xc] sm:$0xf]
    %v5419 = vld [vmem:[%s5414 + $0x10] sm:$0xf]
    %v5420 = vld [vmem:[%s5414 + $0x14] sm:$0xf]
    %v5421 = vld [vmem:[%s5414 + $0x18] sm:$0xf]
    %v5422 = vld [vmem:[%s5414 + $0x1c] sm:$0xf]
    %v5423 = vld [vmem:[%s5414 + $0x20] sm:$0xf]
    %v5424 = vld [vmem:[%s5414 + $0x24] sm:$0xf]
    %v5425 = vld [vmem:[%s5414 + $0x28] sm:$0xf]
    %v5426 = vld [vmem:[%s5414 + $0x2c] sm:$0xf]
    %v5427 = vld [vmem:[%s5414 + $0x30] sm:$0xf]
    %v5428 = vld [vmem:[%s5414 + $0x34] sm:$0xf]
    %v5429 = vld [vmem:[%s5414 + $0x38] sm:$0xf]
    %v5430 = vld [vmem:[%s5414 + $0x3c] sm:$0xf]
    %v5431 = vunpack.c.l.b16 %v5147
    %v5432 = vunpack.c.l.b16 %v5161
    %v5433 = vunpack.c.l.b16 %v5175
    %v5434 = vunpack.c.l.b16 %v5189
    %v5435 = vunpack.c.l.b16 %v5203
    %v5436 = vunpack.c.l.b16 %v5217
    %v5437 = vunpack.c.l.b16 %v5231
    %v5438 = vunpack.c.l.b16 %v5245
    %v5439 = vunpack.c.l.b16 %v5287
    %v5440 = vunpack.c.l.b16 %v5301
    %v5441 = vunpack.c.l.b16 %v5315
    %v5442 = vunpack.c.l.b16 %v5329
    %v5443 = vunpack.c.l.b16 %v5343
    %v5444 = vunpack.c.l.b16 %v5357
    %v5445 = vunpack.c.l.b16 %v5371
    %v5446 = vunpack.c.l.b16 %v5385
    %v5447 = vpack.c.b16 %v5432, %v5431
    %v5448 = vpack.c.b16 %v5434, %v5433
    %v5449 = vpack.c.b16 %v5436, %v5435
    %v5450 = vpack.c.b16 %v5438, %v5437
    %v5451 = vpack.c.b16 %v5440, %v5439
    %v5452 = vpack.c.b16 %v5442, %v5441
    %v5453 = vpack.c.b16 %v5444, %v5443
    %v5454 = vpack.c.b16 %v5446, %v5445
    %v5479 = vunpack.c.l.b16 %v5415
    %v5480 = vunpack.c.l.b16 %v5416
    %v5481 = vunpack.c.l.b16 %v5417
    %v5482 = vunpack.c.l.b16 %v5418
    %v5483 = vunpack.c.l.b16 %v5419
    %v5484 = vunpack.c.l.b16 %v5420
    %v5485 = vunpack.c.l.b16 %v5421
    %v5486 = vunpack.c.l.b16 %v5422
    %v5487 = vunpack.c.l.b16 %v5423
    %v5488 = vunpack.c.l.b16 %v5424
    %v5489 = vunpack.c.l.b16 %v5425
    %v5490 = vunpack.c.l.b16 %v5426
    %v5491 = vunpack.c.l.b16 %v5427
    %v5492 = vunpack.c.l.b16 %v5428
    %v5493 = vunpack.c.l.b16 %v5429
    %v5494 = vunpack.c.l.b16 %v5430
    %v5495 = vpack.c.b16 %v5480, %v5479
    %v5496 = vpack.c.b16 %v5482, %v5481
    %v5497 = vpack.c.b16 %v5484, %v5483
    %v5498 = vpack.c.b16 %v5486, %v5485
    %v5499 = vpack.c.b16 %v5488, %v5487
    %v5500 = vpack.c.b16 %v5490, %v5489
    %v5501 = vpack.c.b16 %v5492, %v5491
    %v5502 = vpack.c.b16 %v5494, %v5493
    %5511 = vmatprep.subr.bf16.mxu0 0
    %5512 = vmatpush1.bf16.msra.mxu0 %v5502
    %5513 = vmatprep.subr.bf16.mxu0 0
    %5514 = vmatpush1.bf16.msra.mxu0 %v5501
    %5515 = vmatprep.subr.bf16.mxu0 0
    %5516 = vmatpush1.bf16.msra.mxu0 %v5500
    %5517 = vmatprep.subr.bf16.mxu0 0
    %5518 = vmatpush1.bf16.msra.mxu0 %v5499
    %5519 = vmatprep.subr.bf16.mxu0 0
    %5520 = vmatpush1.bf16.msra.mxu0 %v5498
    %5521 = vmatprep.subr.bf16.mxu0 0
    %5522 = vmatpush1.bf16.msra.mxu0 %v5497
    %5523 = vmatprep.subr.bf16.mxu0 0
    %5524 = vmatpush1.bf16.msra.mxu0 %v5496
    %5525 = vmatprep.subr.bf16.mxu0 0
    %5526 = vmatpush1.bf16.msra.mxu0 %v5495
    %5527 = vmatprep.subr.bf16.mxu0 0
    %5528 = vmatpush2.bf16.msra.mxu0 0
    %5529 = vmatprep.subr.bf16.mxu0 0
    %5530 = vmatpush2.bf16.msra.mxu0 0
    %5531 = vmatprep.subr.bf16.mxu0 0
    %5532 = vmatpush2.bf16.msra.mxu0 0
    %5533 = vmatprep.subr.bf16.mxu0 0
    %5534 = vmatpush2.bf16.msra.mxu0 0
    %5535 = vmatprep.subr.bf16.mxu0 0
    %5536 = vmatpush2.bf16.msra.mxu0 0
    %5537 = vmatprep.subr.bf16.mxu0 0
    %5538 = vmatpush2.bf16.msra.mxu0 0
    %5539 = vmatprep.subr.bf16.mxu0 0
    %5540 = vmatpush2.bf16.msra.mxu0 0
    %5541 = vmatprep.subr.bf16.mxu0 0
    %5542 = vmatpush2.bf16.msra.mxu0 0
    %5543 = vmatprep.mubr.bf16.mxu0 0
    %5544 = vmatmul.mubr.bf16.gmra.mxu0 %v5447
    %v5545 = vpop.f32.mrf.mxu0
    %v5546 = vadd.f32 0.0, %v5545
    %v5547 = vpop.f32.mrf.mxu0
    %v5548 = vpop.f32.mrf.mxu0
    %v5549 = vadd.f32 0.0, %v5548
    %v5550 = vpop.f32.mrf.mxu0
    %5551 = vmatprep.mubr.bf16.mxu0 0
    %5552 = vmatmul.mubr.bf16.gmra.mxu0 %v5448
    %v5553 = vpop.f32.mrf.mxu0
    %v5554 = vadd.f32 0.0, %v5553
    %v5555 = vpop.f32.mrf.mxu0
    %v5556 = vpop.f32.mrf.mxu0
    %v5557 = vadd.f32 0.0, %v5556
    %v5558 = vpop.f32.mrf.mxu0
    %5559 = vmatprep.mubr.bf16.mxu0 0
    %5560 = vmatmul.mubr.bf16.gmra.mxu0 %v5449
    %v5561 = vpop.f32.mrf.mxu0
    %v5562 = vadd.f32 0.0, %v5561
    %v5563 = vpop.f32.mrf.mxu0
    %v5564 = vpop.f32.mrf.mxu0
    %v5565 = vadd.f32 0.0, %v5564
    %v5566 = vpop.f32.mrf.mxu0
    %5567 = vmatprep.mubr.bf16.mxu0 0
    %5568 = vmatmul.mubr.bf16.gmra.mxu0 %v5450
    %v5569 = vpop.f32.mrf.mxu0
    %v5570 = vadd.f32 0.0, %v5569
    %v5571 = vpop.f32.mrf.mxu0
    %v5572 = vpop.f32.mrf.mxu0
    %v5573 = vadd.f32 0.0, %v5572
    %v5574 = vpop.f32.mrf.mxu0
    %5575 = vmatprep.mubr.bf16.mxu0 0
    %5576 = vmatmul.mubr.bf16.gmra.mxu0 %v5451
    %v5577 = vpop.f32.mrf.mxu0
    %v5578 = vadd.f32 0.0, %v5577
    %v5579 = vpop.f32.mrf.mxu0
    %v5580 = vpop.f32.mrf.mxu0
    %v5581 = vadd.f32 0.0, %v5580
    %v5582 = vpop.f32.mrf.mxu0
    %5583 = vmatprep.mubr.bf16.mxu0 0
    %5584 = vmatmul.mubr.bf16.gmra.mxu0 %v5452
    %v5585 = vpop.f32.mrf.mxu0
    %v5586 = vadd.f32 0.0, %v5585
    %v5587 = vpop.f32.mrf.mxu0
    %v5588 = vpop.f32.mrf.mxu0
    %v5589 = vadd.f32 0.0, %v5588
    %v5590 = vpop.f32.mrf.mxu0
    %5591 = vmatprep.mubr.bf16.mxu0 0
    %5592 = vmatmul.mubr.bf16.gmra.mxu0 %v5453
    %v5593 = vpop.f32.mrf.mxu0
    %v5594 = vadd.f32 0.0, %v5593
    %v5595 = vpop.f32.mrf.mxu0
    %v5596 = vpop.f32.mrf.mxu0
    %v5597 = vadd.f32 0.0, %v5596
    %v5598 = vpop.f32.mrf.mxu0
    %5599 = vmatprep.mubr.bf16.mxu0 0
    %5600 = vmatmul.mubr.bf16.gmra.mxu0 %v5454
    %v5601 = vpop.f32.mrf.mxu0
    %v5602 = vadd.f32 0.0, %v5601
    %v5603 = vpop.f32.mrf.mxu0
    %v5604 = vpop.f32.mrf.mxu0
    %v5605 = vadd.f32 0.0, %v5604
    %v5606 = vpop.f32.mrf.mxu0
    %5607 = vdwg.mxu0
    %v5608 = vadd.f32 %v5075, %v5546
    %v5609 = vadd.f32 %v5076, %v5549
    %v5610 = vadd.f32 %v5077, %v5554
    %v5611 = vadd.f32 %v5078, %v5557
    %v5612 = vadd.f32 %v5079, %v5562
    %v5613 = vadd.f32 %v5080, %v5565
    %v5614 = vadd.f32 %v5081, %v5570
    %v5615 = vadd.f32 %v5082, %v5573
    %v5616 = vadd.f32 %v5083, %v5578
    %v5617 = vadd.f32 %v5084, %v5581
    %v5618 = vadd.f32 %v5085, %v5586
    %v5619 = vadd.f32 %v5086, %v5589
    %v5620 = vadd.f32 %v5087, %v5594
    %v5621 = vadd.f32 %v5088, %v5597
    %v5622 = vadd.f32 %v5089, %v5602
    %v5623 = vadd.f32 %v5090, %v5605
    %s5624 = scalar_lea.vmem %s2, 256
    %v5625 = vld [vmem:[%s5624] sm:$0xf]
    %v5626 = vld [vmem:[%s5624 + $0x4] sm:$0xf]
    %v5627 = vld [vmem:[%s5624 + $0x8] sm:$0xf]
    %v5628 = vld [vmem:[%s5624 + $0xc] sm:$0xf]
    %v5629 = vld [vmem:[%s5624 + $0x10] sm:$0xf]
    %v5630 = vld [vmem:[%s5624 + $0x14] sm:$0xf]
    %v5631 = vld [vmem:[%s5624 + $0x18] sm:$0xf]
    %v5632 = vld [vmem:[%s5624 + $0x1c] sm:$0xf]
    %v5633 = vld [vmem:[%s5624 + $0x20] sm:$0xf]
    %v5634 = vld [vmem:[%s5624 + $0x24] sm:$0xf]
    %v5635 = vld [vmem:[%s5624 + $0x28] sm:$0xf]
    %v5636 = vld [vmem:[%s5624 + $0x2c] sm:$0xf]
    %v5637 = vld [vmem:[%s5624 + $0x30] sm:$0xf]
    %v5638 = vld [vmem:[%s5624 + $0x34] sm:$0xf]
    %v5639 = vld [vmem:[%s5624 + $0x38] sm:$0xf]
    %v5640 = vld [vmem:[%s5624 + $0x3c] sm:$0xf]
    %v5641 = vunpack.c.l.b16 %v5259
    %v5642 = vunpack.c.l.b16 %v5399
    %v5643 = vpack.c.b16 %v5433, %v5432
    %v5644 = vpack.c.b16 %v5435, %v5434
    %v5645 = vpack.c.b16 %v5437, %v5436
    %v5646 = vpack.c.b16 %v5641, %v5438
    %v5647 = vpack.c.b16 %v5441, %v5440
    %v5648 = vpack.c.b16 %v5443, %v5442
    %v5649 = vpack.c.b16 %v5445, %v5444
    %v5650 = vpack.c.b16 %v5642, %v5446
    %v5675 = vunpack.c.l.b16 %v5625
    %v5676 = vunpack.c.l.b16 %v5626
    %v5677 = vunpack.c.l.b16 %v5627
    %v5678 = vunpack.c.l.b16 %v5628
    %v5679 = vunpack.c.l.b16 %v5629
    %v5680 = vunpack.c.l.b16 %v5630
    %v5681 = vunpack.c.l.b16 %v5631
    %v5682 = vunpack.c.l.b16 %v5632
    %v5683 = vunpack.c.l.b16 %v5633
    %v5684 = vunpack.c.l.b16 %v5634
    %v5685 = vunpack.c.l.b16 %v5635
    %v5686 = vunpack.c.l.b16 %v5636
    %v5687 = vunpack.c.l.b16 %v5637
    %v5688 = vunpack.c.l.b16 %v5638
    %v5689 = vunpack.c.l.b16 %v5639
    %v5690 = vunpack.c.l.b16 %v5640
    %v5691 = vpack.c.b16 %v5676, %v5675
    %v5692 = vpack.c.b16 %v5678, %v5677
    %v5693 = vpack.c.b16 %v5680, %v5679
    %v5694 = vpack.c.b16 %v5682, %v5681
    %v5695 = vpack.c.b16 %v5684, %v5683
    %v5696 = vpack.c.b16 %v5686, %v5685
    %v5697 = vpack.c.b16 %v5688, %v5687
    %v5698 = vpack.c.b16 %v5690, %v5689
    %5707 = vmatprep.subr.bf16.mxu0 0
    %5708 = vmatpush1.bf16.msra.mxu0 %v5698
    %5709 = vmatprep.subr.bf16.mxu0 0
    %5710 = vmatpush1.bf16.msra.mxu0 %v5697
    %5711 = vmatprep.subr.bf16.mxu0 0
    %5712 = vmatpush1.bf16.msra.mxu0 %v5696
    %5713 = vmatprep.subr.bf16.mxu0 0
    %5714 = vmatpush1.bf16.msra.mxu0 %v5695
    %5715 = vmatprep.subr.bf16.mxu0 0
    %5716 = vmatpush1.bf16.msra.mxu0 %v5694
    %5717 = vmatprep.subr.bf16.mxu0 0
    %5718 = vmatpush1.bf16.msra.mxu0 %v5693
    %5719 = vmatprep.subr.bf16.mxu0 0
    %5720 = vmatpush1.bf16.msra.mxu0 %v5692
    %5721 = vmatprep.subr.bf16.mxu0 0
    %5722 = vmatpush1.bf16.msra.mxu0 %v5691
    %5723 = vmatprep.subr.bf16.mxu0 0
    %5724 = vmatpush2.bf16.msra.mxu0 0
    %5725 = vmatprep.subr.bf16.mxu0 0
    %5726 = vmatpush2.bf16.msra.mxu0 0
    %5727 = vmatprep.subr.bf16.mxu0 0
    %5728 = vmatpush2.bf16.msra.mxu0 0
    %5729 = vmatprep.subr.bf16.mxu0 0
    %5730 = vmatpush2.bf16.msra.mxu0 0
    %5731 = vmatprep.subr.bf16.mxu0 0
    %5732 = vmatpush2.bf16.msra.mxu0 0
    %5733 = vmatprep.subr.bf16.mxu0 0
    %5734 = vmatpush2.bf16.msra.mxu0 0
    %5735 = vmatprep.subr.bf16.mxu0 0
    %5736 = vmatpush2.bf16.msra.mxu0 0
    %5737 = vmatprep.subr.bf16.mxu0 0
    %5738 = vmatpush2.bf16.msra.mxu0 0
    %5739 = vmatprep.mubr.bf16.mxu0 0
    %5740 = vmatmul.mubr.bf16.gmra.mxu0 %v5643
    %v5741 = vpop.f32.mrf.mxu0
    %v5742 = vadd.f32 0.0, %v5741
    %v5743 = vpop.f32.mrf.mxu0
    %v5744 = vpop.f32.mrf.mxu0
    %v5745 = vadd.f32 0.0, %v5744
    %v5746 = vpop.f32.mrf.mxu0
    %5747 = vmatprep.mubr.bf16.mxu0 0
    %5748 = vmatmul.mubr.bf16.gmra.mxu0 %v5644
    %v5749 = vpop.f32.mrf.mxu0
    %v5750 = vadd.f32 0.0, %v5749
    %v5751 = vpop.f32.mrf.mxu0
    %v5752 = vpop.f32.mrf.mxu0
    %v5753 = vadd.f32 0.0, %v5752
    %v5754 = vpop.f32.mrf.mxu0
    %5755 = vmatprep.mubr.bf16.mxu0 0
    %5756 = vmatmul.mubr.bf16.gmra.mxu0 %v5645
    %v5757 = vpop.f32.mrf.mxu0
    %v5758 = vadd.f32 0.0, %v5757
    %v5759 = vpop.f32.mrf.mxu0
    %v5760 = vpop.f32.mrf.mxu0
    %v5761 = vadd.f32 0.0, %v5760
    %v5762 = vpop.f32.mrf.mxu0
    %5763 = vmatprep.mubr.bf16.mxu0 0
    %5764 = vmatmul.mubr.bf16.gmra.mxu0 %v5646
    %v5765 = vpop.f32.mrf.mxu0
    %v5766 = vadd.f32 0.0, %v5765
    %v5767 = vpop.f32.mrf.mxu0
    %v5768 = vpop.f32.mrf.mxu0
    %v5769 = vadd.f32 0.0, %v5768
    %v5770 = vpop.f32.mrf.mxu0
    %5771 = vmatprep.mubr.bf16.mxu0 0
    %5772 = vmatmul.mubr.bf16.gmra.mxu0 %v5647
    %v5773 = vpop.f32.mrf.mxu0
    %v5774 = vadd.f32 0.0, %v5773
    %v5775 = vpop.f32.mrf.mxu0
    %v5776 = vpop.f32.mrf.mxu0
    %v5777 = vadd.f32 0.0, %v5776
    %v5778 = vpop.f32.mrf.mxu0
    %5779 = vmatprep.mubr.bf16.mxu0 0
    %5780 = vmatmul.mubr.bf16.gmra.mxu0 %v5648
    %v5781 = vpop.f32.mrf.mxu0
    %v5782 = vadd.f32 0.0, %v5781
    %v5783 = vpop.f32.mrf.mxu0
    %v5784 = vpop.f32.mrf.mxu0
    %v5785 = vadd.f32 0.0, %v5784
    %v5786 = vpop.f32.mrf.mxu0
    %5787 = vmatprep.mubr.bf16.mxu0 0
    %5788 = vmatmul.mubr.bf16.gmra.mxu0 %v5649
    %v5789 = vpop.f32.mrf.mxu0
    %v5790 = vadd.f32 0.0, %v5789
    %v5791 = vpop.f32.mrf.mxu0
    %v5792 = vpop.f32.mrf.mxu0
    %v5793 = vadd.f32 0.0, %v5792
    %v5794 = vpop.f32.mrf.mxu0
    %5795 = vmatprep.mubr.bf16.mxu0 0
    %5796 = vmatmul.mubr.bf16.gmra.mxu0 %v5650
    %v5797 = vpop.f32.mrf.mxu0
    %v5798 = vadd.f32 0.0, %v5797
    %v5799 = vpop.f32.mrf.mxu0
    %v5800 = vpop.f32.mrf.mxu0
    %v5801 = vadd.f32 0.0, %v5800
    %v5802 = vpop.f32.mrf.mxu0
    %5803 = vdwg.mxu0
    %v5804 = vadd.f32 %v5608, %v5742
    %v5805 = vadd.f32 %v5609, %v5745
    %v5806 = vadd.f32 %v5610, %v5750
    %v5807 = vadd.f32 %v5611, %v5753
    %v5808 = vadd.f32 %v5612, %v5758
    %v5809 = vadd.f32 %v5613, %v5761
    %v5810 = vadd.f32 %v5614, %v5766
    %v5811 = vadd.f32 %v5615, %v5769
    %v5812 = vadd.f32 %v5616, %v5774
    %v5813 = vadd.f32 %v5617, %v5777
    %v5814 = vadd.f32 %v5618, %v5782
    %v5815 = vadd.f32 %v5619, %v5785
    %v5816 = vadd.f32 %v5620, %v5790
    %v5817 = vadd.f32 %v5621, %v5793
    %v5818 = vadd.f32 %v5622, %v5798
    %v5819 = vadd.f32 %v5623, %v5801
    %s5820 = scalar_lea.vmem %s2, 448
    %v5821 = vld [vmem:[%s5820] sm:$0xf]
    %v5822 = vld [vmem:[%s5820 + $0x4] sm:$0xf]
    %v5823 = vld [vmem:[%s5820 + $0x8] sm:$0xf]
    %v5824 = vld [vmem:[%s5820 + $0xc] sm:$0xf]
    %v5825 = vld [vmem:[%s5820 + $0x10] sm:$0xf]
    %v5826 = vld [vmem:[%s5820 + $0x14] sm:$0xf]
    %v5827 = vld [vmem:[%s5820 + $0x18] sm:$0xf]
    %v5828 = vld [vmem:[%s5820 + $0x1c] sm:$0xf]
    %v5829 = vld [vmem:[%s5820 + $0x20] sm:$0xf]
    %v5830 = vld [vmem:[%s5820 + $0x24] sm:$0xf]
    %v5831 = vld [vmem:[%s5820 + $0x28] sm:$0xf]
    %v5832 = vld [vmem:[%s5820 + $0x2c] sm:$0xf]
    %v5833 = vld [vmem:[%s5820 + $0x30] sm:$0xf]
    %v5834 = vld [vmem:[%s5820 + $0x34] sm:$0xf]
    %v5835 = vld [vmem:[%s5820 + $0x38] sm:$0xf]
    %v5836 = vld [vmem:[%s5820 + $0x3c] sm:$0xf]
    %v5837 = vunpack.c.l.b16 %v5273
    %v5838 = vunpack.c.l.b16 %v5413
    %v5839 = vpack.c.b16 %v5837, %v5641
    %v5840 = vpack.c.b16 %v5838, %v5642
    %v5859 = vunpack.c.l.b16 %v5821
    %v5860 = vunpack.c.l.b16 %v5822
    %v5861 = vunpack.c.l.b16 %v5823
    %v5862 = vunpack.c.l.b16 %v5824
    %v5863 = vunpack.c.l.b16 %v5825
    %v5864 = vunpack.c.l.b16 %v5826
    %v5865 = vunpack.c.l.b16 %v5827
    %v5866 = vunpack.c.l.b16 %v5828
    %v5867 = vunpack.c.l.b16 %v5829
    %v5868 = vunpack.c.l.b16 %v5830
    %v5869 = vunpack.c.l.b16 %v5831
    %v5870 = vunpack.c.l.b16 %v5832
    %v5871 = vunpack.c.l.b16 %v5833
    %v5872 = vunpack.c.l.b16 %v5834
    %v5873 = vunpack.c.l.b16 %v5835
    %v5874 = vunpack.c.l.b16 %v5836
    %v5875 = vpack.c.b16 %v5860, %v5859
    %v5876 = vpack.c.b16 %v5862, %v5861
    %v5877 = vpack.c.b16 %v5864, %v5863
    %v5878 = vpack.c.b16 %v5866, %v5865
    %v5879 = vpack.c.b16 %v5868, %v5867
    %v5880 = vpack.c.b16 %v5870, %v5869
    %v5881 = vpack.c.b16 %v5872, %v5871
    %v5882 = vpack.c.b16 %v5874, %v5873
    %5891 = vmatprep.subr.bf16.mxu0 0
    %5892 = vmatpush1.bf16.msra.mxu0 %v5882
    %5893 = vmatprep.subr.bf16.mxu0 0
    %5894 = vmatpush1.bf16.msra.mxu0 %v5881
    %5895 = vmatprep.subr.bf16.mxu0 0
    %5896 = vmatpush1.bf16.msra.mxu0 %v5880
    %5897 = vmatprep.subr.bf16.mxu0 0
    %5898 = vmatpush1.bf16.msra.mxu0 %v5879
    %5899 = vmatprep.subr.bf16.mxu0 0
    %5900 = vmatpush1.bf16.msra.mxu0 %v5878
    %5901 = vmatprep.subr.bf16.mxu0 0
    %5902 = vmatpush1.bf16.msra.mxu0 %v5877
    %5903 = vmatprep.subr.bf16.mxu0 0
    %5904 = vmatpush1.bf16.msra.mxu0 %v5876
    %5905 = vmatprep.subr.bf16.mxu0 0
    %5906 = vmatpush1.bf16.msra.mxu0 %v5875
    %5907 = vmatprep.subr.bf16.mxu0 0
    %5908 = vmatpush2.bf16.msra.mxu0 0
    %5909 = vmatprep.subr.bf16.mxu0 0
    %5910 = vmatpush2.bf16.msra.mxu0 0
    %5911 = vmatprep.subr.bf16.mxu0 0
    %5912 = vmatpush2.bf16.msra.mxu0 0
    %5913 = vmatprep.subr.bf16.mxu0 0
    %5914 = vmatpush2.bf16.msra.mxu0 0
    %5915 = vmatprep.subr.bf16.mxu0 0
    %5916 = vmatpush2.bf16.msra.mxu0 0
    %5917 = vmatprep.subr.bf16.mxu0 0
    %5918 = vmatpush2.bf16.msra.mxu0 0
    %5919 = vmatprep.subr.bf16.mxu0 0
    %5920 = vmatpush2.bf16.msra.mxu0 0
    %5921 = vmatprep.subr.bf16.mxu0 0
    %5922 = vmatpush2.bf16.msra.mxu0 0
    %5923 = vmatprep.mubr.bf16.mxu0 0
    %5924 = vmatmul.mubr.bf16.gmra.mxu0 %v5448
    %v5925 = vpop.f32.mrf.mxu0
    %v5926 = vadd.f32 0.0, %v5925
    %v5927 = vpop.f32.mrf.mxu0
    %v5928 = vpop.f32.mrf.mxu0
    %v5929 = vadd.f32 0.0, %v5928
    %v5930 = vpop.f32.mrf.mxu0
    %5931 = vmatprep.mubr.bf16.mxu0 0
    %5932 = vmatmul.mubr.bf16.gmra.mxu0 %v5449
    %v5933 = vpop.f32.mrf.mxu0
    %v5934 = vadd.f32 0.0, %v5933
    %v5935 = vpop.f32.mrf.mxu0
    %v5936 = vpop.f32.mrf.mxu0
    %v5937 = vadd.f32 0.0, %v5936
    %v5938 = vpop.f32.mrf.mxu0
    %5939 = vmatprep.mubr.bf16.mxu0 0
    %5940 = vmatmul.mubr.bf16.gmra.mxu0 %v5450
    %v5941 = vpop.f32.mrf.mxu0
    %v5942 = vadd.f32 0.0, %v5941
    %v5943 = vpop.f32.mrf.mxu0
    %v5944 = vpop.f32.mrf.mxu0
    %v5945 = vadd.f32 0.0, %v5944
    %v5946 = vpop.f32.mrf.mxu0
    %5947 = vmatprep.mubr.bf16.mxu0 0
    %5948 = vmatmul.mubr.bf16.gmra.mxu0 %v5839
    %v5949 = vpop.f32.mrf.mxu0
    %v5950 = vadd.f32 0.0, %v5949
    %v5951 = vpop.f32.mrf.mxu0
    %v5952 = vpop.f32.mrf.mxu0
    %v5953 = vadd.f32 0.0, %v5952
    %v5954 = vpop.f32.mrf.mxu0
    %5955 = vmatprep.mubr.bf16.mxu0 0
    %5956 = vmatmul.mubr.bf16.gmra.mxu0 %v5452
    %v5957 = vpop.f32.mrf.mxu0
    %v5958 = vadd.f32 0.0, %v5957
    %v5959 = vpop.f32.mrf.mxu0
    %v5960 = vpop.f32.mrf.mxu0
    %v5961 = vadd.f32 0.0, %v5960
    %v5962 = vpop.f32.mrf.mxu0
    %5963 = vmatprep.mubr.bf16.mxu0 0
    %5964 = vmatmul.mubr.bf16.gmra.mxu0 %v5453
    %v5965 = vpop.f32.mrf.mxu0
    %v5966 = vadd.f32 0.0, %v5965
    %v5967 = vpop.f32.mrf.mxu0
    %v5968 = vpop.f32.mrf.mxu0
    %v5969 = vadd.f32 0.0, %v5968
    %v5970 = vpop.f32.mrf.mxu0
    %5971 = vmatprep.mubr.bf16.mxu0 0
    %5972 = vmatmul.mubr.bf16.gmra.mxu0 %v5454
    %v5973 = vpop.f32.mrf.mxu0
    %v5974 = vadd.f32 0.0, %v5973
    %v5975 = vpop.f32.mrf.mxu0
    %v5976 = vpop.f32.mrf.mxu0
    %v5977 = vadd.f32 0.0, %v5976
    %v5978 = vpop.f32.mrf.mxu0
    %5979 = vmatprep.mubr.bf16.mxu0 0
    %5980 = vmatmul.mubr.bf16.gmra.mxu0 %v5840
    %v5981 = vpop.f32.mrf.mxu0
    %v5982 = vadd.f32 0.0, %v5981
    %v5983 = vpop.f32.mrf.mxu0
    %v5984 = vpop.f32.mrf.mxu0
    %v5985 = vadd.f32 0.0, %v5984
    %v5986 = vpop.f32.mrf.mxu0
    %5987 = vdwg.mxu0
    %v5988 = vadd.f32 %v5804, %v5926
    %v5989 = vadd.f32 %v5805, %v5929
    %v5990 = vadd.f32 %v5806, %v5934
    %v5991 = vadd.f32 %v5807, %v5937
    %v5992 = vadd.f32 %v5808, %v5942
    %v5993 = vadd.f32 %v5809, %v5945
    %v5994 = vadd.f32 %v5810, %v5950
    %v5995 = vadd.f32 %v5811, %v5953
    %v5996 = vadd.f32 %v5812, %v5958
    %v5997 = vadd.f32 %v5813, %v5961
    %v5998 = vadd.f32 %v5814, %v5966
    %v5999 = vadd.f32 %v5815, %v5969
    %v6000 = vadd.f32 %v5816, %v5974
    %v6001 = vadd.f32 %v5817, %v5977
    %v6002 = vadd.f32 %v5818, %v5982
    %v6003 = vadd.f32 %v5819, %v5985
    %v6004 = vld [vmem:[#allocation2] sm:$0xe]
    %v6005 = vld [vmem:[#allocation2 + $0x8] sm:$0xe]
    %v6006 = vld [vmem:[#allocation2 + $0x10] sm:$0xe]
    %v6007 = vld [vmem:[#allocation2 + $0x18] sm:$0xe]
    %v6008 = vld [vmem:[#allocation2 + $0x20] sm:$0xe]
    %v6009 = vld [vmem:[#allocation2 + $0x28] sm:$0xe]
    %v6010 = vld [vmem:[#allocation2 + $0x30] sm:$0xe]
    %v6011 = vld [vmem:[#allocation2 + $0x38] sm:$0xe]
    %v6012 = vld [vmem:[#allocation2 + $0x40] sm:$0xe]
    %v6013 = vld [vmem:[#allocation2 + $0x48] sm:$0xe]
    %v6014 = vld [vmem:[#allocation2 + $0x50] sm:$0xe]
    %v6015 = vld [vmem:[#allocation2 + $0x58] sm:$0xe]
    %v6016 = vld [vmem:[#allocation2 + $0x60] sm:$0xe]
    %v6017 = vld [vmem:[#allocation2 + $0x68] sm:$0xe]
    %v6018 = vld [vmem:[#allocation2 + $0x70] sm:$0xe]
    %v6019 = vld [vmem:[#allocation2 + $0x78] sm:$0xe]
    %v6020 = vld [vmem:[#allocation2 + $0x80] sm:$0xe]
    %v6021 = vld [vmem:[#allocation2 + $0x88] sm:$0xe]
    %v6022 = vld [vmem:[#allocation2 + $0x90] sm:$0xe]
    %v6023 = vld [vmem:[#allocation2 + $0x98] sm:$0xe]
    %vm6064 = vcmask 1042432
    %vm6065 = vcmask 1046532
    %vm6066 = vmor %vm6064, %vm6065
    %v6067 = vrot.slane %v6004, 5
    %v6068 = vrot.slane %v6067, 4
    %v6069 = vrot.slane %v5092, 5
    %v6070 = vsel %vm6066, %v6068, %v6069
    %v6071 = vrot.slane %v6005, 5
    %v6072 = vrot.slane %v6071, 4
    %v6073 = vrot.slane %v5094, 5
    %v6074 = vsel %vm6066, %v6072, %v6073
    %v6075 = vrot.slane %v6006, 5
    %v6076 = vrot.slane %v6075, 4
    %v6077 = vrot.slane %v5096, 5
    %v6078 = vsel %vm6066, %v6076, %v6077
    %v6079 = vrot.slane %v6007, 5
    %v6080 = vrot.slane %v6079, 4
    %v6081 = vrot.slane %v5098, 5
    %v6082 = vsel %vm6066, %v6080, %v6081
    %v6083 = vrot.slane %v6008, 5
    %v6084 = vrot.slane %v6083, 4
    %v6085 = vrot.slane %v5100, 5
    %v6086 = vsel %vm6066, %v6084, %v6085
    %v6087 = vrot.slane %v6009, 5
    %v6088 = vrot.slane %v6087, 4
    %v6089 = vrot.slane %v5102, 5
    %v6090 = vsel %vm6066, %v6088, %v6089
    %v6091 = vrot.slane %v6010, 5
    %v6092 = vrot.slane %v6091, 4
    %v6093 = vrot.slane %v5104, 5
    %v6094 = vsel %vm6066, %v6092, %v6093
    %v6095 = vrot.slane %v6011, 5
    %v6096 = vrot.slane %v6095, 4
    %v6097 = vrot.slane %v5106, 5
    %v6098 = vsel %vm6066, %v6096, %v6097
    %v6099 = vrot.slane %v6012, 5
    %v6100 = vrot.slane %v6099, 4
    %v6101 = vrot.slane %v5108, 5
    %v6102 = vsel %vm6066, %v6100, %v6101
    %v6103 = vrot.slane %v6013, 5
    %v6104 = vrot.slane %v6103, 4
    %v6105 = vrot.slane %v5110, 5
    %v6106 = vsel %vm6066, %v6104, %v6105
    %v6107 = vrot.slane %v6014, 5
    %v6108 = vrot.slane %v6107, 4
    %v6109 = vrot.slane %v5112, 5
    %v6110 = vsel %vm6066, %v6108, %v6109
    %v6111 = vrot.slane %v6015, 5
    %v6112 = vrot.slane %v6111, 4
    %v6113 = vrot.slane %v5114, 5
    %v6114 = vsel %vm6066, %v6112, %v6113
    %v6115 = vrot.slane %v6016, 5
    %v6116 = vrot.slane %v6115, 4
    %v6117 = vrot.slane %v5116, 5
    %v6118 = vsel %vm6066, %v6116, %v6117
    %v6119 = vrot.slane %v6017, 5
    %v6120 = vrot.slane %v6119, 4
    %v6121 = vrot.slane %v5118, 5
    %v6122 = vsel %vm6066, %v6120, %v6121
    %v6123 = vrot.slane %v6018, 5
    %v6124 = vrot.slane %v6123, 4
    %v6125 = vrot.slane %v5120, 5
    %v6126 = vsel %vm6066, %v6124, %v6125
    %v6127 = vrot.slane %v6019, 5
    %v6128 = vrot.slane %v6127, 4
    %v6129 = vrot.slane %v5122, 5
    %v6130 = vsel %vm6066, %v6128, %v6129
    %v6131 = vrot.slane %v6020, 5
    %v6132 = vrot.slane %v6131, 4
    %v6133 = vrot.slane %v5124, 5
    %v6134 = vsel %vm6066, %v6132, %v6133
    %v6135 = vrot.slane %v6021, 5
    %v6136 = vrot.slane %v6135, 4
    %v6137 = vrot.slane %v5126, 5
    %v6138 = vsel %vm6066, %v6136, %v6137
    %v6139 = vrot.slane %v6022, 5
    %v6140 = vrot.slane %v6139, 4
    %v6141 = vrot.slane %v5128, 5
    %v6142 = vsel %vm6066, %v6140, %v6141
    %v6143 = vrot.slane %v6023, 5
    %v6144 = vrot.slane %v6143, 4
    %v6145 = vrot.slane %v5130, 5
    %v6146 = vsel %vm6066, %v6144, %v6145
    %s6147 = scalar_lea.vmem %s2, 128
    %v6148 = vld [vmem:[%s6147] sm:$0xf]
    %v6149 = vld [vmem:[%s6147 + $0x4] sm:$0xf]
    %v6150 = vld [vmem:[%s6147 + $0x8] sm:$0xf]
    %v6151 = vld [vmem:[%s6147 + $0xc] sm:$0xf]
    %v6152 = vld [vmem:[%s6147 + $0x10] sm:$0xf]
    %v6153 = vld [vmem:[%s6147 + $0x14] sm:$0xf]
    %v6154 = vld [vmem:[%s6147 + $0x18] sm:$0xf]
    %v6155 = vld [vmem:[%s6147 + $0x1c] sm:$0xf]
    %v6156 = vld [vmem:[%s6147 + $0x20] sm:$0xf]
    %v6157 = vld [vmem:[%s6147 + $0x24] sm:$0xf]
    %v6158 = vld [vmem:[%s6147 + $0x28] sm:$0xf]
    %v6159 = vld [vmem:[%s6147 + $0x2c] sm:$0xf]
    %v6160 = vld [vmem:[%s6147 + $0x30] sm:$0xf]
    %v6161 = vld [vmem:[%s6147 + $0x34] sm:$0xf]
    %v6162 = vld [vmem:[%s6147 + $0x38] sm:$0xf]
    %v6163 = vld [vmem:[%s6147 + $0x3c] sm:$0xf]
    %v6164 = vunpack.c.l.b16 %v6070
    %v6165 = vunpack.c.l.b16 %v6074
    %v6166 = vunpack.c.l.b16 %v6078
    %v6167 = vunpack.c.l.b16 %v6082
    %v6168 = vunpack.c.l.b16 %v6086
    %v6169 = vunpack.c.l.b16 %v6090
    %v6170 = vunpack.c.l.b16 %v6094
    %v6171 = vunpack.c.l.b16 %v6098
    %v6172 = vunpack.c.l.b16 %v6110
    %v6173 = vunpack.c.l.b16 %v6114
    %v6174 = vunpack.c.l.b16 %v6118
    %v6175 = vunpack.c.l.b16 %v6122
    %v6176 = vunpack.c.l.b16 %v6126
    %v6177 = vunpack.c.l.b16 %v6130
    %v6178 = vunpack.c.l.b16 %v6134
    %v6179 = vunpack.c.l.b16 %v6138
    %v6180 = vpack.c.b16 %v6165, %v6164
    %v6181 = vpack.c.b16 %v6167, %v6166
    %v6182 = vpack.c.b16 %v6169, %v6168
    %v6183 = vpack.c.b16 %v6171, %v6170
    %v6184 = vpack.c.b16 %v6173, %v6172
    %v6185 = vpack.c.b16 %v6175, %v6174
    %v6186 = vpack.c.b16 %v6177, %v6176
    %v6187 = vpack.c.b16 %v6179, %v6178
    %v6212 = vunpack.c.l.b16 %v6148
    %v6213 = vunpack.c.l.b16 %v6149
    %v6214 = vunpack.c.l.b16 %v6150
    %v6215 = vunpack.c.l.b16 %v6151
    %v6216 = vunpack.c.l.b16 %v6152
    %v6217 = vunpack.c.l.b16 %v6153
    %v6218 = vunpack.c.l.b16 %v6154
    %v6219 = vunpack.c.l.b16 %v6155
    %v6220 = vunpack.c.l.b16 %v6156
    %v6221 = vunpack.c.l.b16 %v6157
    %v6222 = vunpack.c.l.b16 %v6158
    %v6223 = vunpack.c.l.b16 %v6159
    %v6224 = vunpack.c.l.b16 %v6160
    %v6225 = vunpack.c.l.b16 %v6161
    %v6226 = vunpack.c.l.b16 %v6162
    %v6227 = vunpack.c.l.b16 %v6163
    %v6228 = vpack.c.b16 %v6213, %v6212
    %v6229 = vpack.c.b16 %v6215, %v6214
    %v6230 = vpack.c.b16 %v6217, %v6216
    %v6231 = vpack.c.b16 %v6219, %v6218
    %v6232 = vpack.c.b16 %v6221, %v6220
    %v6233 = vpack.c.b16 %v6223, %v6222
    %v6234 = vpack.c.b16 %v6225, %v6224
    %v6235 = vpack.c.b16 %v6227, %v6226
    %6244 = vmatprep.subr.bf16.mxu0 0
    %6245 = vmatpush1.bf16.msra.mxu0 %v6235
    %6246 = vmatprep.subr.bf16.mxu0 0
    %6247 = vmatpush1.bf16.msra.mxu0 %v6234
    %6248 = vmatprep.subr.bf16.mxu0 0
    %6249 = vmatpush1.bf16.msra.mxu0 %v6233
    %6250 = vmatprep.subr.bf16.mxu0 0
    %6251 = vmatpush1.bf16.msra.mxu0 %v6232
    %6252 = vmatprep.subr.bf16.mxu0 0
    %6253 = vmatpush1.bf16.msra.mxu0 %v6231
    %6254 = vmatprep.subr.bf16.mxu0 0
    %6255 = vmatpush1.bf16.msra.mxu0 %v6230
    %6256 = vmatprep.subr.bf16.mxu0 0
    %6257 = vmatpush1.bf16.msra.mxu0 %v6229
    %6258 = vmatprep.subr.bf16.mxu0 0
    %6259 = vmatpush1.bf16.msra.mxu0 %v6228
    %6260 = vmatprep.subr.bf16.mxu0 0
    %6261 = vmatpush2.bf16.msra.mxu0 0
    %6262 = vmatprep.subr.bf16.mxu0 0
    %6263 = vmatpush2.bf16.msra.mxu0 0
    %6264 = vmatprep.subr.bf16.mxu0 0
    %6265 = vmatpush2.bf16.msra.mxu0 0
    %6266 = vmatprep.subr.bf16.mxu0 0
    %6267 = vmatpush2.bf16.msra.mxu0 0
    %6268 = vmatprep.subr.bf16.mxu0 0
    %6269 = vmatpush2.bf16.msra.mxu0 0
    %6270 = vmatprep.subr.bf16.mxu0 0
    %6271 = vmatpush2.bf16.msra.mxu0 0
    %6272 = vmatprep.subr.bf16.mxu0 0
    %6273 = vmatpush2.bf16.msra.mxu0 0
    %6274 = vmatprep.subr.bf16.mxu0 0
    %6275 = vmatpush2.bf16.msra.mxu0 0
    %6276 = vmatprep.mubr.bf16.mxu0 0
    %6277 = vmatmul.mubr.bf16.gmra.mxu0 %v6180
    %v6278 = vpop.f32.mrf.mxu0
    %v6279 = vadd.f32 0.0, %v6278
    %v6280 = vpop.f32.mrf.mxu0
    %v6281 = vpop.f32.mrf.mxu0
    %v6282 = vadd.f32 0.0, %v6281
    %v6283 = vpop.f32.mrf.mxu0
    %6284 = vmatprep.mubr.bf16.mxu0 0
    %6285 = vmatmul.mubr.bf16.gmra.mxu0 %v6181
    %v6286 = vpop.f32.mrf.mxu0
    %v6287 = vadd.f32 0.0, %v6286
    %v6288 = vpop.f32.mrf.mxu0
    %v6289 = vpop.f32.mrf.mxu0
    %v6290 = vadd.f32 0.0, %v6289
    %v6291 = vpop.f32.mrf.mxu0
    %6292 = vmatprep.mubr.bf16.mxu0 0
    %6293 = vmatmul.mubr.bf16.gmra.mxu0 %v6182
    %v6294 = vpop.f32.mrf.mxu0
    %v6295 = vadd.f32 0.0, %v6294
    %v6296 = vpop.f32.mrf.mxu0
    %v6297 = vpop.f32.mrf.mxu0
    %v6298 = vadd.f32 0.0, %v6297
    %v6299 = vpop.f32.mrf.mxu0
    %6300 = vmatprep.mubr.bf16.mxu0 0
    %6301 = vmatmul.mubr.bf16.gmra.mxu0 %v6183
    %v6302 = vpop.f32.mrf.mxu0
    %v6303 = vadd.f32 0.0, %v6302
    %v6304 = vpop.f32.mrf.mxu0
    %v6305 = vpop.f32.mrf.mxu0
    %v6306 = vadd.f32 0.0, %v6305
    %v6307 = vpop.f32.mrf.mxu0
    %6308 = vmatprep.mubr.bf16.mxu0 0
    %6309 = vmatmul.mubr.bf16.gmra.mxu0 %v6184
    %v6310 = vpop.f32.mrf.mxu0
    %v6311 = vadd.f32 0.0, %v6310
    %v6312 = vpop.f32.mrf.mxu0
    %v6313 = vpop.f32.mrf.mxu0
    %v6314 = vadd.f32 0.0, %v6313
    %v6315 = vpop.f32.mrf.mxu0
    %6316 = vmatprep.mubr.bf16.mxu0 0
    %6317 = vmatmul.mubr.bf16.gmra.mxu0 %v6185
    %v6318 = vpop.f32.mrf.mxu0
    %v6319 = vadd.f32 0.0, %v6318
    %v6320 = vpop.f32.mrf.mxu0
    %v6321 = vpop.f32.mrf.mxu0
    %v6322 = vadd.f32 0.0, %v6321
    %v6323 = vpop.f32.mrf.mxu0
    %6324 = vmatprep.mubr.bf16.mxu0 0
    %6325 = vmatmul.mubr.bf16.gmra.mxu0 %v6186
    %v6326 = vpop.f32.mrf.mxu0
    %v6327 = vadd.f32 0.0, %v6326
    %v6328 = vpop.f32.mrf.mxu0
    %v6329 = vpop.f32.mrf.mxu0
    %v6330 = vadd.f32 0.0, %v6329
    %v6331 = vpop.f32.mrf.mxu0
    %6332 = vmatprep.mubr.bf16.mxu0 0
    %6333 = vmatmul.mubr.bf16.gmra.mxu0 %v6187
    %v6334 = vpop.f32.mrf.mxu0
    %v6335 = vadd.f32 0.0, %v6334
    %v6336 = vpop.f32.mrf.mxu0
    %v6337 = vpop.f32.mrf.mxu0
    %v6338 = vadd.f32 0.0, %v6337
    %v6339 = vpop.f32.mrf.mxu0
    %6340 = vdwg.mxu0
    %v6341 = vadd.f32 %v5988, %v6279
    %v6342 = vadd.f32 %v5989, %v6282
    %v6343 = vadd.f32 %v5990, %v6287
    %v6344 = vadd.f32 %v5991, %v6290
    %v6345 = vadd.f32 %v5992, %v6295
    %v6346 = vadd.f32 %v5993, %v6298
    %v6347 = vadd.f32 %v5994, %v6303
    %v6348 = vadd.f32 %v5995, %v6306
    %v6349 = vadd.f32 %v5996, %v6311
    %v6350 = vadd.f32 %v5997, %v6314
    %v6351 = vadd.f32 %v5998, %v6319
    %v6352 = vadd.f32 %v5999, %v6322
    %v6353 = vadd.f32 %v6000, %v6327
    %v6354 = vadd.f32 %v6001, %v6330
    %v6355 = vadd.f32 %v6002, %v6335
    %v6356 = vadd.f32 %v6003, %v6338
    %s6357 = scalar_lea.vmem %s2, 320
    %v6358 = vld [vmem:[%s6357] sm:$0xf]
    %v6359 = vld [vmem:[%s6357 + $0x4] sm:$0xf]
    %v6360 = vld [vmem:[%s6357 + $0x8] sm:$0xf]
    %v6361 = vld [vmem:[%s6357 + $0xc] sm:$0xf]
    %v6362 = vld [vmem:[%s6357 + $0x10] sm:$0xf]
    %v6363 = vld [vmem:[%s6357 + $0x14] sm:$0xf]
    %v6364 = vld [vmem:[%s6357 + $0x18] sm:$0xf]
    %v6365 = vld [vmem:[%s6357 + $0x1c] sm:$0xf]
    %v6366 = vld [vmem:[%s6357 + $0x20] sm:$0xf]
    %v6367 = vld [vmem:[%s6357 + $0x24] sm:$0xf]
    %v6368 = vld [vmem:[%s6357 + $0x28] sm:$0xf]
    %v6369 = vld [vmem:[%s6357 + $0x2c] sm:$0xf]
    %v6370 = vld [vmem:[%s6357 + $0x30] sm:$0xf]
    %v6371 = vld [vmem:[%s6357 + $0x34] sm:$0xf]
    %v6372 = vld [vmem:[%s6357 + $0x38] sm:$0xf]
    %v6373 = vld [vmem:[%s6357 + $0x3c] sm:$0xf]
    %v6374 = vunpack.c.l.b16 %v6102
    %v6375 = vunpack.c.l.b16 %v6142
    %v6376 = vpack.c.b16 %v6166, %v6165
    %v6377 = vpack.c.b16 %v6168, %v6167
    %v6378 = vpack.c.b16 %v6170, %v6169
    %v6379 = vpack.c.b16 %v6374, %v6171
    %v6380 = vpack.c.b16 %v6174, %v6173
    %v6381 = vpack.c.b16 %v6176, %v6175
    %v6382 = vpack.c.b16 %v6178, %v6177
    %v6383 = vpack.c.b16 %v6375, %v6179
    %v6408 = vunpack.c.l.b16 %v6358
    %v6409 = vunpack.c.l.b16 %v6359
    %v6410 = vunpack.c.l.b16 %v6360
    %v6411 = vunpack.c.l.b16 %v6361
    %v6412 = vunpack.c.l.b16 %v6362
    %v6413 = vunpack.c.l.b16 %v6363
    %v6414 = vunpack.c.l.b16 %v6364
    %v6415 = vunpack.c.l.b16 %v6365
    %v6416 = vunpack.c.l.b16 %v6366
    %v6417 = vunpack.c.l.b16 %v6367
    %v6418 = vunpack.c.l.b16 %v6368
    %v6419 = vunpack.c.l.b16 %v6369
    %v6420 = vunpack.c.l.b16 %v6370
    %v6421 = vunpack.c.l.b16 %v6371
    %v6422 = vunpack.c.l.b16 %v6372
    %v6423 = vunpack.c.l.b16 %v6373
    %v6424 = vpack.c.b16 %v6409, %v6408
    %v6425 = vpack.c.b16 %v6411, %v6410
    %v6426 = vpack.c.b16 %v6413, %v6412
    %v6427 = vpack.c.b16 %v6415, %v6414
    %v6428 = vpack.c.b16 %v6417, %v6416
    %v6429 = vpack.c.b16 %v6419, %v6418
    %v6430 = vpack.c.b16 %v6421, %v6420
    %v6431 = vpack.c.b16 %v6423, %v6422
    %6440 = vmatprep.subr.bf16.mxu0 0
    %6441 = vmatpush1.bf16.msra.mxu0 %v6431
    %6442 = vmatprep.subr.bf16.mxu0 0
    %6443 = vmatpush1.bf16.msra.mxu0 %v6430
    %6444 = vmatprep.subr.bf16.mxu0 0
    %6445 = vmatpush1.bf16.msra.mxu0 %v6429
    %6446 = vmatprep.subr.bf16.mxu0 0
    %6447 = vmatpush1.bf16.msra.mxu0 %v6428
    %6448 = vmatprep.subr.bf16.mxu0 0
    %6449 = vmatpush1.bf16.msra.mxu0 %v6427
    %6450 = vmatprep.subr.bf16.mxu0 0
    %6451 = vmatpush1.bf16.msra.mxu0 %v6426
    %6452 = vmatprep.subr.bf16.mxu0 0
    %6453 = vmatpush1.bf16.msra.mxu0 %v6425
    %6454 = vmatprep.subr.bf16.mxu0 0
    %6455 = vmatpush1.bf16.msra.mxu0 %v6424
    %6456 = vmatprep.subr.bf16.mxu0 0
    %6457 = vmatpush2.bf16.msra.mxu0 0
    %6458 = vmatprep.subr.bf16.mxu0 0
    %6459 = vmatpush2.bf16.msra.mxu0 0
    %6460 = vmatprep.subr.bf16.mxu0 0
    %6461 = vmatpush2.bf16.msra.mxu0 0
    %6462 = vmatprep.subr.bf16.mxu0 0
    %6463 = vmatpush2.bf16.msra.mxu0 0
    %6464 = vmatprep.subr.bf16.mxu0 0
    %6465 = vmatpush2.bf16.msra.mxu0 0
    %6466 = vmatprep.subr.bf16.mxu0 0
    %6467 = vmatpush2.bf16.msra.mxu0 0
    %6468 = vmatprep.subr.bf16.mxu0 0
    %6469 = vmatpush2.bf16.msra.mxu0 0
    %6470 = vmatprep.subr.bf16.mxu0 0
    %6471 = vmatpush2.bf16.msra.mxu0 0
    %6472 = vmatprep.mubr.bf16.mxu0 0
    %6473 = vmatmul.mubr.bf16.gmra.mxu0 %v6376
    %v6474 = vpop.f32.mrf.mxu0
    %v6475 = vadd.f32 0.0, %v6474
    %v6476 = vpop.f32.mrf.mxu0
    %v6477 = vpop.f32.mrf.mxu0
    %v6478 = vadd.f32 0.0, %v6477
    %v6479 = vpop.f32.mrf.mxu0
    %6480 = vmatprep.mubr.bf16.mxu0 0
    %6481 = vmatmul.mubr.bf16.gmra.mxu0 %v6377
    %v6482 = vpop.f32.mrf.mxu0
    %v6483 = vadd.f32 0.0, %v6482
    %v6484 = vpop.f32.mrf.mxu0
    %v6485 = vpop.f32.mrf.mxu0
    %v6486 = vadd.f32 0.0, %v6485
    %v6487 = vpop.f32.mrf.mxu0
    %6488 = vmatprep.mubr.bf16.mxu0 0
    %6489 = vmatmul.mubr.bf16.gmra.mxu0 %v6378
    %v6490 = vpop.f32.mrf.mxu0
    %v6491 = vadd.f32 0.0, %v6490
    %v6492 = vpop.f32.mrf.mxu0
    %v6493 = vpop.f32.mrf.mxu0
    %v6494 = vadd.f32 0.0, %v6493
    %v6495 = vpop.f32.mrf.mxu0
    %6496 = vmatprep.mubr.bf16.mxu0 0
    %6497 = vmatmul.mubr.bf16.gmra.mxu0 %v6379
    %v6498 = vpop.f32.mrf.mxu0
    %v6499 = vadd.f32 0.0, %v6498
    %v6500 = vpop.f32.mrf.mxu0
    %v6501 = vpop.f32.mrf.mxu0
    %v6502 = vadd.f32 0.0, %v6501
    %v6503 = vpop.f32.mrf.mxu0
    %6504 = vmatprep.mubr.bf16.mxu0 0
    %6505 = vmatmul.mubr.bf16.gmra.mxu0 %v6380
    %v6506 = vpop.f32.mrf.mxu0
    %v6507 = vadd.f32 0.0, %v6506
    %v6508 = vpop.f32.mrf.mxu0
    %v6509 = vpop.f32.mrf.mxu0
    %v6510 = vadd.f32 0.0, %v6509
    %v6511 = vpop.f32.mrf.mxu0
    %6512 = vmatprep.mubr.bf16.mxu0 0
    %6513 = vmatmul.mubr.bf16.gmra.mxu0 %v6381
    %v6514 = vpop.f32.mrf.mxu0
    %v6515 = vadd.f32 0.0, %v6514
    %v6516 = vpop.f32.mrf.mxu0
    %v6517 = vpop.f32.mrf.mxu0
    %v6518 = vadd.f32 0.0, %v6517
    %v6519 = vpop.f32.mrf.mxu0
    %6520 = vmatprep.mubr.bf16.mxu0 0
    %6521 = vmatmul.mubr.bf16.gmra.mxu0 %v6382
    %v6522 = vpop.f32.mrf.mxu0
    %v6523 = vadd.f32 0.0, %v6522
    %v6524 = vpop.f32.mrf.mxu0
    %v6525 = vpop.f32.mrf.mxu0
    %v6526 = vadd.f32 0.0, %v6525
    %v6527 = vpop.f32.mrf.mxu0
    %6528 = vmatprep.mubr.bf16.mxu0 0
    %6529 = vmatmul.mubr.bf16.gmra.mxu0 %v6383
    %v6530 = vpop.f32.mrf.mxu0
    %v6531 = vadd.f32 0.0, %v6530
    %v6532 = vpop.f32.mrf.mxu0
    %v6533 = vpop.f32.mrf.mxu0
    %v6534 = vadd.f32 0.0, %v6533
    %v6535 = vpop.f32.mrf.mxu0
    %6536 = vdwg.mxu0
    %v6537 = vadd.f32 %v6341, %v6475
    %v6538 = vadd.f32 %v6342, %v6478
    %v6539 = vadd.f32 %v6343, %v6483
    %v6540 = vadd.f32 %v6344, %v6486
    %v6541 = vadd.f32 %v6345, %v6491
    %v6542 = vadd.f32 %v6346, %v6494
    %v6543 = vadd.f32 %v6347, %v6499
    %v6544 = vadd.f32 %v6348, %v6502
    %v6545 = vadd.f32 %v6349, %v6507
    %v6546 = vadd.f32 %v6350, %v6510
    %v6547 = vadd.f32 %v6351, %v6515
    %v6548 = vadd.f32 %v6352, %v6518
    %v6549 = vadd.f32 %v6353, %v6523
    %v6550 = vadd.f32 %v6354, %v6526
    %v6551 = vadd.f32 %v6355, %v6531
    %v6552 = vadd.f32 %v6356, %v6534
    %s6553 = scalar_lea.vmem %s2, 512
    %v6554 = vld [vmem:[%s6553] sm:$0xf]
    %v6555 = vld [vmem:[%s6553 + $0x4] sm:$0xf]
    %v6556 = vld [vmem:[%s6553 + $0x8] sm:$0xf]
    %v6557 = vld [vmem:[%s6553 + $0xc] sm:$0xf]
    %v6558 = vld [vmem:[%s6553 + $0x10] sm:$0xf]
    %v6559 = vld [vmem:[%s6553 + $0x14] sm:$0xf]
    %v6560 = vld [vmem:[%s6553 + $0x18] sm:$0xf]
    %v6561 = vld [vmem:[%s6553 + $0x1c] sm:$0xf]
    %v6562 = vld [vmem:[%s6553 + $0x20] sm:$0xf]
    %v6563 = vld [vmem:[%s6553 + $0x24] sm:$0xf]
    %v6564 = vld [vmem:[%s6553 + $0x28] sm:$0xf]
    %v6565 = vld [vmem:[%s6553 + $0x2c] sm:$0xf]
    %v6566 = vld [vmem:[%s6553 + $0x30] sm:$0xf]
    %v6567 = vld [vmem:[%s6553 + $0x34] sm:$0xf]
    %v6568 = vld [vmem:[%s6553 + $0x38] sm:$0xf]
    %v6569 = vld [vmem:[%s6553 + $0x3c] sm:$0xf]
    %v6570 = vunpack.c.l.b16 %v6106
    %v6571 = vunpack.c.l.b16 %v6146
    %v6572 = vpack.c.b16 %v6570, %v6374
    %v6573 = vpack.c.b16 %v6571, %v6375
    %v6592 = vunpack.c.l.b16 %v6554
    %v6593 = vunpack.c.l.b16 %v6555
    %v6594 = vunpack.c.l.b16 %v6556
    %v6595 = vunpack.c.l.b16 %v6557
    %v6596 = vunpack.c.l.b16 %v6558
    %v6597 = vunpack.c.l.b16 %v6559
    %v6598 = vunpack.c.l.b16 %v6560
    %v6599 = vunpack.c.l.b16 %v6561
    %v6600 = vunpack.c.l.b16 %v6562
    %v6601 = vunpack.c.l.b16 %v6563
    %v6602 = vunpack.c.l.b16 %v6564
    %v6603 = vunpack.c.l.b16 %v6565
    %v6604 = vunpack.c.l.b16 %v6566
    %v6605 = vunpack.c.l.b16 %v6567
    %v6606 = vunpack.c.l.b16 %v6568
    %v6607 = vunpack.c.l.b16 %v6569
    %v6608 = vpack.c.b16 %v6593, %v6592
    %v6609 = vpack.c.b16 %v6595, %v6594
    %v6610 = vpack.c.b16 %v6597, %v6596
    %v6611 = vpack.c.b16 %v6599, %v6598
    %v6612 = vpack.c.b16 %v6601, %v6600
    %v6613 = vpack.c.b16 %v6603, %v6602
    %v6614 = vpack.c.b16 %v6605, %v6604
    %v6615 = vpack.c.b16 %v6607, %v6606
    %6624 = vmatprep.subr.bf16.mxu0 0
    %6625 = vmatpush1.bf16.msra.mxu0 %v6615
    %6626 = vmatprep.subr.bf16.mxu0 0
    %6627 = vmatpush1.bf16.msra.mxu0 %v6614
    %6628 = vmatprep.subr.bf16.mxu0 0
    %6629 = vmatpush1.bf16.msra.mxu0 %v6613
    %6630 = vmatprep.subr.bf16.mxu0 0
    %6631 = vmatpush1.bf16.msra.mxu0 %v6612
    %6632 = vmatprep.subr.bf16.mxu0 0
    %6633 = vmatpush1.bf16.msra.mxu0 %v6611
    %6634 = vmatprep.subr.bf16.mxu0 0
    %6635 = vmatpush1.bf16.msra.mxu0 %v6610
    %6636 = vmatprep.subr.bf16.mxu0 0
    %6637 = vmatpush1.bf16.msra.mxu0 %v6609
    %6638 = vmatprep.subr.bf16.mxu0 0
    %6639 = vmatpush1.bf16.msra.mxu0 %v6608
    %6640 = vmatprep.subr.bf16.mxu0 0
    %6641 = vmatpush2.bf16.msra.mxu0 0
    %6642 = vmatprep.subr.bf16.mxu0 0
    %6643 = vmatpush2.bf16.msra.mxu0 0
    %6644 = vmatprep.subr.bf16.mxu0 0
    %6645 = vmatpush2.bf16.msra.mxu0 0
    %6646 = vmatprep.subr.bf16.mxu0 0
    %6647 = vmatpush2.bf16.msra.mxu0 0
    %6648 = vmatprep.subr.bf16.mxu0 0
    %6649 = vmatpush2.bf16.msra.mxu0 0
    %6650 = vmatprep.subr.bf16.mxu0 0
    %6651 = vmatpush2.bf16.msra.mxu0 0
    %6652 = vmatprep.subr.bf16.mxu0 0
    %6653 = vmatpush2.bf16.msra.mxu0 0
    %6654 = vmatprep.subr.bf16.mxu0 0
    %6655 = vmatpush2.bf16.msra.mxu0 0
    %6656 = vmatprep.mubr.bf16.mxu0 0
    %6657 = vmatmul.mubr.bf16.gmra.mxu0 %v6181
    %v6658 = vpop.f32.mrf.mxu0
    %v6659 = vadd.f32 0.0, %v6658
    %v6660 = vpop.f32.mrf.mxu0
    %v6661 = vpop.f32.mrf.mxu0
    %v6662 = vadd.f32 0.0, %v6661
    %v6663 = vpop.f32.mrf.mxu0
    %6664 = vmatprep.mubr.bf16.mxu0 0
    %6665 = vmatmul.mubr.bf16.gmra.mxu0 %v6182
    %v6666 = vpop.f32.mrf.mxu0
    %v6667 = vadd.f32 0.0, %v6666
    %v6668 = vpop.f32.mrf.mxu0
    %v6669 = vpop.f32.mrf.mxu0
    %v6670 = vadd.f32 0.0, %v6669
    %v6671 = vpop.f32.mrf.mxu0
    %6672 = vmatprep.mubr.bf16.mxu0 0
    %6673 = vmatmul.mubr.bf16.gmra.mxu0 %v6183
    %v6674 = vpop.f32.mrf.mxu0
    %v6675 = vadd.f32 0.0, %v6674
    %v6676 = vpop.f32.mrf.mxu0
    %v6677 = vpop.f32.mrf.mxu0
    %v6678 = vadd.f32 0.0, %v6677
    %v6679 = vpop.f32.mrf.mxu0
    %6680 = vmatprep.mubr.bf16.mxu0 0
    %6681 = vmatmul.mubr.bf16.gmra.mxu0 %v6572
    %v6682 = vpop.f32.mrf.mxu0
    %v6683 = vadd.f32 0.0, %v6682
    %v6684 = vpop.f32.mrf.mxu0
    %v6685 = vpop.f32.mrf.mxu0
    %v6686 = vadd.f32 0.0, %v6685
    %v6687 = vpop.f32.mrf.mxu0
    %6688 = vmatprep.mubr.bf16.mxu0 0
    %6689 = vmatmul.mubr.bf16.gmra.mxu0 %v6185
    %v6690 = vpop.f32.mrf.mxu0
    %v6691 = vadd.f32 0.0, %v6690
    %v6692 = vpop.f32.mrf.mxu0
    %v6693 = vpop.f32.mrf.mxu0
    %v6694 = vadd.f32 0.0, %v6693
    %v6695 = vpop.f32.mrf.mxu0
    %6696 = vmatprep.mubr.bf16.mxu0 0
    %6697 = vmatmul.mubr.bf16.gmra.mxu0 %v6186
    %v6698 = vpop.f32.mrf.mxu0
    %v6699 = vadd.f32 0.0, %v6698
    %v6700 = vpop.f32.mrf.mxu0
    %v6701 = vpop.f32.mrf.mxu0
    %v6702 = vadd.f32 0.0, %v6701
    %v6703 = vpop.f32.mrf.mxu0
    %6704 = vmatprep.mubr.bf16.mxu0 0
    %6705 = vmatmul.mubr.bf16.gmra.mxu0 %v6187
    %v6706 = vpop.f32.mrf.mxu0
    %v6707 = vadd.f32 0.0, %v6706
    %v6708 = vpop.f32.mrf.mxu0
    %v6709 = vpop.f32.mrf.mxu0
    %v6710 = vadd.f32 0.0, %v6709
    %v6711 = vpop.f32.mrf.mxu0
    %6712 = vmatprep.mubr.bf16.mxu0 0
    %6713 = vmatmul.mubr.bf16.gmra.mxu0 %v6573
    %v6714 = vpop.f32.mrf.mxu0
    %v6715 = vadd.f32 0.0, %v6714
    %v6716 = vpop.f32.mrf.mxu0
    %v6717 = vpop.f32.mrf.mxu0
    %v6718 = vadd.f32 0.0, %v6717
    %v6719 = vpop.f32.mrf.mxu0
    %6720 = vdwg.mxu0
    %v6721 = vadd.f32 %v6537, %v6659
    %v6722 = vadd.f32 %v6538, %v6662
    %v6723 = vadd.f32 %v6539, %v6667
    %v6724 = vadd.f32 %v6540, %v6670
    %v6725 = vadd.f32 %v6541, %v6675
    %v6726 = vadd.f32 %v6542, %v6678
    %v6727 = vadd.f32 %v6543, %v6683
    %v6728 = vadd.f32 %v6544, %v6686
    %v6729 = vadd.f32 %v6545, %v6691
    %v6730 = vadd.f32 %v6546, %v6694
    %v6731 = vadd.f32 %v6547, %v6699
    %v6732 = vadd.f32 %v6548, %v6702
    %v6733 = vadd.f32 %v6549, %v6707
    %v6734 = vadd.f32 %v6550, %v6710
    %v6735 = vadd.f32 %v6551, %v6715
    %v6736 = vadd.f32 %v6552, %v6718
    %s6737 = scalar_lea.vmem %s3, 2
    %v6738 = vld [vmem:[%s6737] sm:$0x1]
    %v6739 = vlaneseq
    %v6740 = vshrl.u32 %v6739, 7
    %v6741 = vsub.s32 0, %v6740
    %v6742 = vrot.slane %v6738, %v6741
    %v6743 = vmul.f32 %v6721, %v6742
    %v6744 = vmul.f32 %v6722, %v6742
    %v6745 = vmul.f32 %v6723, %v6742
    %v6746 = vmul.f32 %v6724, %v6742
    %v6747 = vmul.f32 %v6725, %v6742
    %v6748 = vmul.f32 %v6726, %v6742
    %v6749 = vmul.f32 %v6727, %v6742
    %v6750 = vmul.f32 %v6728, %v6742
    %v6751 = vmul.f32 %v6729, %v6742
    %v6752 = vmul.f32 %v6730, %v6742
    %v6753 = vmul.f32 %v6731, %v6742
    %v6754 = vmul.f32 %v6732, %v6742
    %v6755 = vmul.f32 %v6733, %v6742
    %v6756 = vmul.f32 %v6734, %v6742
    %v6757 = vmul.f32 %v6735, %v6742
    %v6758 = vmul.f32 %v6736, %v6742
    %v6759 = vld [vmem:[%s6737 + $0x1] sm:$0x1]
    %v6760 = vlaneseq
    %v6761 = vshrl.u32 %v6760, 7
    %v6762 = vsub.s32 0, %v6761
    %v6763 = vrot.slane %v6759, %v6762
    %v6764 = vadd.f32 %v6743, %v6763
    %v6765 = vadd.f32 %v6744, %v6763
    %v6766 = vadd.f32 %v6745, %v6763
    %v6767 = vadd.f32 %v6746, %v6763
    %v6768 = vadd.f32 %v6747, %v6763
    %v6769 = vadd.f32 %v6748, %v6763
    %v6770 = vadd.f32 %v6749, %v6763
    %v6771 = vadd.f32 %v6750, %v6763
    %v6772 = vadd.f32 %v6751, %v6763
    %v6773 = vadd.f32 %v6752, %v6763
    %v6774 = vadd.f32 %v6753, %v6763
    %v6775 = vadd.f32 %v6754, %v6763
    %v6776 = vadd.f32 %v6755, %v6763
    %v6777 = vadd.f32 %v6756, %v6763
    %v6778 = vadd.f32 %v6757, %v6763
    %v6779 = vadd.f32 %v6758, %v6763
    %v6780 = vmax.f32 %v6764, 0.0
    %v6781 = vmax.f32 %v6765, 0.0
    %v6782 = vmax.f32 %v6766, 0.0
    %v6783 = vmax.f32 %v6767, 0.0
    %v6784 = vmax.f32 %v6768, 0.0
    %v6785 = vmax.f32 %v6769, 0.0
    %v6786 = vmax.f32 %v6770, 0.0
    %v6787 = vmax.f32 %v6771, 0.0
    %v6788 = vmax.f32 %v6772, 0.0
    %v6789 = vmax.f32 %v6773, 0.0
    %v6790 = vmax.f32 %v6774, 0.0
    %v6791 = vmax.f32 %v6775, 0.0
    %v6792 = vmax.f32 %v6776, 0.0
    %v6793 = vmax.f32 %v6777, 0.0
    %v6794 = vmax.f32 %v6778, 0.0
    %v6795 = vmax.f32 %v6779, 0.0
    %v6812 = vcombine.high %v6780, %v6780
    %v6814 = vunpack.c.l.s4 1983009808
    %v6815 = vunpack.c.0.s8 %v6814
    %v6816 = vlaneseq
    %v6817 = vshrl.u32 %v6816, 7
    %v6818 = vsub.s32 %v6815, %v6817
    %v6819 = vrot.slane %v6780, %v6818
    %v6821 = vunpack.c.l.s4 1983009808
    %v6822 = vunpack.c.0.s8 %v6821
    %v6823 = vlaneseq
    %v6824 = vshrl.u32 %v6823, 7
    %v6825 = vsub.s32 %v6822, %v6824
    %v6826 = vrot.slane %v6812, %v6825
    %v6827 = vcombine.high %v6819, %v6819
    %v6828 = vcombine.high %v6826, %v6826
    %v6829 = vcombine.high %v6781, %v6781
    %v6831 = vunpack.c.l.s4 1983009808
    %v6832 = vunpack.c.0.s8 %v6831
    %v6833 = vlaneseq
    %v6834 = vshrl.u32 %v6833, 7
    %v6835 = vsub.s32 %v6832, %v6834
    %v6836 = vrot.slane %v6781, %v6835
    %v6838 = vunpack.c.l.s4 1983009808
    %v6839 = vunpack.c.0.s8 %v6838
    %v6840 = vlaneseq
    %v6841 = vshrl.u32 %v6840, 7
    %v6842 = vsub.s32 %v6839, %v6841
    %v6843 = vrot.slane %v6829, %v6842
    %v6844 = vcombine.high %v6836, %v6836
    %v6845 = vcombine.high %v6843, %v6843
    %v6846 = vcombine.high %v6782, %v6782
    %v6848 = vunpack.c.l.s4 1983009808
    %v6849 = vunpack.c.0.s8 %v6848
    %v6850 = vlaneseq
    %v6851 = vshrl.u32 %v6850, 7
    %v6852 = vsub.s32 %v6849, %v6851
    %v6853 = vrot.slane %v6782, %v6852
    %v6855 = vunpack.c.l.s4 1983009808
    %v6856 = vunpack.c.0.s8 %v6855
    %v6857 = vlaneseq
    %v6858 = vshrl.u32 %v6857, 7
    %v6859 = vsub.s32 %v6856, %v6858
    %v6860 = vrot.slane %v6846, %v6859
    %v6861 = vcombine.high %v6853, %v6853
    %v6862 = vcombine.high %v6860, %v6860
    %v6863 = vcombine.high %v6783, %v6783
    %v6865 = vunpack.c.l.s4 1983009808
    %v6866 = vunpack.c.0.s8 %v6865
    %v6867 = vlaneseq
    %v6868 = vshrl.u32 %v6867, 7
    %v6869 = vsub.s32 %v6866, %v6868
    %v6870 = vrot.slane %v6783, %v6869
    %v6872 = vunpack.c.l.s4 1983009808
    %v6873 = vunpack.c.0.s8 %v6872
    %v6874 = vlaneseq
    %v6875 = vshrl.u32 %v6874, 7
    %v6876 = vsub.s32 %v6873, %v6875
    %v6877 = vrot.slane %v6863, %v6876
    %v6878 = vcombine.high %v6870, %v6870
    %v6879 = vcombine.high %v6877, %v6877
    %v6880 = vcombine.high %v6784, %v6784
    %v6882 = vunpack.c.l.s4 1983009808
    %v6883 = vunpack.c.0.s8 %v6882
    %v6884 = vlaneseq
    %v6885 = vshrl.u32 %v6884, 7
    %v6886 = vsub.s32 %v6883, %v6885
    %v6887 = vrot.slane %v6784, %v6886
    %v6889 = vunpack.c.l.s4 1983009808
    %v6890 = vunpack.c.0.s8 %v6889
    %v6891 = vlaneseq
    %v6892 = vshrl.u32 %v6891, 7
    %v6893 = vsub.s32 %v6890, %v6892
    %v6894 = vrot.slane %v6880, %v6893
    %v6895 = vcombine.high %v6887, %v6887
    %v6896 = vcombine.high %v6894, %v6894
    %v6897 = vcombine.high %v6785, %v6785
    %v6899 = vunpack.c.l.s4 1983009808
    %v6900 = vunpack.c.0.s8 %v6899
    %v6901 = vlaneseq
    %v6902 = vshrl.u32 %v6901, 7
    %v6903 = vsub.s32 %v6900, %v6902
    %v6904 = vrot.slane %v6785, %v6903
    %v6906 = vunpack.c.l.s4 1983009808
    %v6907 = vunpack.c.0.s8 %v6906
    %v6908 = vlaneseq
    %v6909 = vshrl.u32 %v6908, 7
    %v6910 = vsub.s32 %v6907, %v6909
    %v6911 = vrot.slane %v6897, %v6910
    %v6912 = vcombine.high %v6904, %v6904
    %v6913 = vcombine.high %v6911, %v6911
    %v6914 = vcombine.high %v6786, %v6786
    %v6916 = vunpack.c.l.s4 1983009808
    %v6917 = vunpack.c.0.s8 %v6916
    %v6918 = vlaneseq
    %v6919 = vshrl.u32 %v6918, 7
    %v6920 = vsub.s32 %v6917, %v6919
    %v6921 = vrot.slane %v6786, %v6920
    %v6923 = vunpack.c.l.s4 1983009808
    %v6924 = vunpack.c.0.s8 %v6923
    %v6925 = vlaneseq
    %v6926 = vshrl.u32 %v6925, 7
    %v6927 = vsub.s32 %v6924, %v6926
    %v6928 = vrot.slane %v6914, %v6927
    %v6929 = vcombine.high %v6921, %v6921
    %v6930 = vcombine.high %v6928, %v6928
    %v6931 = vcombine.high %v6787, %v6787
    %v6933 = vunpack.c.l.s4 1983009808
    %v6934 = vunpack.c.0.s8 %v6933
    %v6935 = vlaneseq
    %v6936 = vshrl.u32 %v6935, 7
    %v6937 = vsub.s32 %v6934, %v6936
    %v6938 = vrot.slane %v6787, %v6937
    %v6940 = vunpack.c.l.s4 1983009808
    %v6941 = vunpack.c.0.s8 %v6940
    %v6942 = vlaneseq
    %v6943 = vshrl.u32 %v6942, 7
    %v6944 = vsub.s32 %v6941, %v6943
    %v6945 = vrot.slane %v6931, %v6944
    %v6946 = vcombine.high %v6938, %v6938
    %v6947 = vcombine.high %v6945, %v6945
    %v6948 = vcombine.high %v6788, %v6788
    %v6950 = vunpack.c.l.s4 1983009808
    %v6951 = vunpack.c.0.s8 %v6950
    %v6952 = vlaneseq
    %v6953 = vshrl.u32 %v6952, 7
    %v6954 = vsub.s32 %v6951, %v6953
    %v6955 = vrot.slane %v6788, %v6954
    %v6957 = vunpack.c.l.s4 1983009808
    %v6958 = vunpack.c.0.s8 %v6957
    %v6959 = vlaneseq
    %v6960 = vshrl.u32 %v6959, 7
    %v6961 = vsub.s32 %v6958, %v6960
    %v6962 = vrot.slane %v6948, %v6961
    %v6963 = vcombine.high %v6955, %v6955
    %v6964 = vcombine.high %v6962, %v6962
    %v6965 = vcombine.high %v6789, %v6789
    %v6967 = vunpack.c.l.s4 1983009808
    %v6968 = vunpack.c.0.s8 %v6967
    %v6969 = vlaneseq
    %v6970 = vshrl.u32 %v6969, 7
    %v6971 = vsub.s32 %v6968, %v6970
    %v6972 = vrot.slane %v6789, %v6971
    %v6974 = vunpack.c.l.s4 1983009808
    %v6975 = vunpack.c.0.s8 %v6974
    %v6976 = vlaneseq
    %v6977 = vshrl.u32 %v6976, 7
    %v6978 = vsub.s32 %v6975, %v6977
    %v6979 = vrot.slane %v6965, %v6978
    %v6980 = vcombine.high %v6972, %v6972
    %v6981 = vcombine.high %v6979, %v6979
    %v6982 = vcombine.high %v6790, %v6790
    %v6984 = vunpack.c.l.s4 1983009808
    %v6985 = vunpack.c.0.s8 %v6984
    %v6986 = vlaneseq
    %v6987 = vshrl.u32 %v6986, 7
    %v6988 = vsub.s32 %v6985, %v6987
    %v6989 = vrot.slane %v6790, %v6988
    %v6991 = vunpack.c.l.s4 1983009808
    %v6992 = vunpack.c.0.s8 %v6991
    %v6993 = vlaneseq
    %v6994 = vshrl.u32 %v6993, 7
    %v6995 = vsub.s32 %v6992, %v6994
    %v6996 = vrot.slane %v6982, %v6995
    %v6997 = vcombine.high %v6989, %v6989
    %v6998 = vcombine.high %v6996, %v6996
    %v6999 = vcombine.high %v6791, %v6791
    %v7001 = vunpack.c.l.s4 1983009808
    %v7002 = vunpack.c.0.s8 %v7001
    %v7003 = vlaneseq
    %v7004 = vshrl.u32 %v7003, 7
    %v7005 = vsub.s32 %v7002, %v7004
    %v7006 = vrot.slane %v6791, %v7005
    %v7008 = vunpack.c.l.s4 1983009808
    %v7009 = vunpack.c.0.s8 %v7008
    %v7010 = vlaneseq
    %v7011 = vshrl.u32 %v7010, 7
    %v7012 = vsub.s32 %v7009, %v7011
    %v7013 = vrot.slane %v6999, %v7012
    %v7014 = vcombine.high %v7006, %v7006
    %v7015 = vcombine.high %v7013, %v7013
    %v7016 = vcombine.high %v6792, %v6792
    %v7018 = vunpack.c.l.s4 1983009808
    %v7019 = vunpack.c.0.s8 %v7018
    %v7020 = vlaneseq
    %v7021 = vshrl.u32 %v7020, 7
    %v7022 = vsub.s32 %v7019, %v7021
    %v7023 = vrot.slane %v6792, %v7022
    %v7025 = vunpack.c.l.s4 1983009808
    %v7026 = vunpack.c.0.s8 %v7025
    %v7027 = vlaneseq
    %v7028 = vshrl.u32 %v7027, 7
    %v7029 = vsub.s32 %v7026, %v7028
    %v7030 = vrot.slane %v7016, %v7029
    %v7031 = vcombine.high %v7023, %v7023
    %v7032 = vcombine.high %v7030, %v7030
    %v7033 = vcombine.high %v6793, %v6793
    %v7035 = vunpack.c.l.s4 1983009808
    %v7036 = vunpack.c.0.s8 %v7035
    %v7037 = vlaneseq
    %v7038 = vshrl.u32 %v7037, 7
    %v7039 = vsub.s32 %v7036, %v7038
    %v7040 = vrot.slane %v6793, %v7039
    %v7042 = vunpack.c.l.s4 1983009808
    %v7043 = vunpack.c.0.s8 %v7042
    %v7044 = vlaneseq
    %v7045 = vshrl.u32 %v7044, 7
    %v7046 = vsub.s32 %v7043, %v7045
    %v7047 = vrot.slane %v7033, %v7046
    %v7048 = vcombine.high %v7040, %v7040
    %v7049 = vcombine.high %v7047, %v7047
    %v7050 = vcombine.high %v6794, %v6794
    %v7052 = vunpack.c.l.s4 1983009808
    %v7053 = vunpack.c.0.s8 %v7052
    %v7054 = vlaneseq
    %v7055 = vshrl.u32 %v7054, 7
    %v7056 = vsub.s32 %v7053, %v7055
    %v7057 = vrot.slane %v6794, %v7056
    %v7059 = vunpack.c.l.s4 1983009808
    %v7060 = vunpack.c.0.s8 %v7059
    %v7061 = vlaneseq
    %v7062 = vshrl.u32 %v7061, 7
    %v7063 = vsub.s32 %v7060, %v7062
    %v7064 = vrot.slane %v7050, %v7063
    %v7065 = vcombine.high %v7057, %v7057
    %v7066 = vcombine.high %v7064, %v7064
    %v7067 = vcombine.high %v6795, %v6795
    %v7069 = vunpack.c.l.s4 1983009808
    %v7070 = vunpack.c.0.s8 %v7069
    %v7071 = vlaneseq
    %v7072 = vshrl.u32 %v7071, 7
    %v7073 = vsub.s32 %v7070, %v7072
    %v7074 = vrot.slane %v6795, %v7073
    %v7076 = vunpack.c.l.s4 1983009808
    %v7077 = vunpack.c.0.s8 %v7076
    %v7078 = vlaneseq
    %v7079 = vshrl.u32 %v7078, 7
    %v7080 = vsub.s32 %v7077, %v7079
    %v7081 = vrot.slane %v7067, %v7080
    %v7082 = vcombine.high %v7074, %v7074
    %v7083 = vcombine.high %v7081, %v7081
    %v7148 = vrot.slane %v6819, 7
    %v7149 = vrot.slane %v7148, 2
    %v7150 = vrot.slane %v6827, 7
    %v7151 = vrot.slane %v7150, 2
    %v7152 = vrot.slane %v6826, 7
    %v7153 = vrot.slane %v7152, 2
    %v7154 = vrot.slane %v6828, 7
    %v7155 = vrot.slane %v7154, 2
    %v7156 = vrot.slane %v6836, 7
    %v7157 = vrot.slane %v7156, 2
    %v7158 = vrot.slane %v6844, 7
    %v7159 = vrot.slane %v7158, 2
    %v7160 = vrot.slane %v6843, 7
    %v7161 = vrot.slane %v7160, 2
    %v7162 = vrot.slane %v6845, 7
    %v7163 = vrot.slane %v7162, 2
    %v7164 = vrot.slane %v6853, 7
    %v7165 = vrot.slane %v7164, 2
    %v7166 = vrot.slane %v6861, 7
    %v7167 = vrot.slane %v7166, 2
    %v7168 = vrot.slane %v6860, 7
    %v7169 = vrot.slane %v7168, 2
    %v7170 = vrot.slane %v6862, 7
    %v7171 = vrot.slane %v7170, 2
    %v7172 = vrot.slane %v6870, 7
    %v7173 = vrot.slane %v7172, 2
    %v7174 = vrot.slane %v6878, 7
    %v7175 = vrot.slane %v7174, 2
    %v7176 = vrot.slane %v6877, 7
    %v7177 = vrot.slane %v7176, 2
    %v7178 = vrot.slane %v6879, 7
    %v7179 = vrot.slane %v7178, 2
    %v7180 = vrot.slane %v6887, 7
    %v7181 = vrot.slane %v7180, 2
    %v7182 = vrot.slane %v6895, 7
    %v7183 = vrot.slane %v7182, 2
    %v7184 = vrot.slane %v6894, 7
    %v7185 = vrot.slane %v7184, 2
    %v7186 = vrot.slane %v6896, 7
    %v7187 = vrot.slane %v7186, 2
    %v7188 = vrot.slane %v6904, 7
    %v7189 = vrot.slane %v7188, 2
    %v7190 = vrot.slane %v6912, 7
    %v7191 = vrot.slane %v7190, 2
    %v7192 = vrot.slane %v6911, 7
    %v7193 = vrot.slane %v7192, 2
    %v7194 = vrot.slane %v6913, 7
    %v7195 = vrot.slane %v7194, 2
    %v7196 = vrot.slane %v6921, 7
    %v7197 = vrot.slane %v7196, 2
    %v7198 = vrot.slane %v6929, 7
    %v7199 = vrot.slane %v7198, 2
    %v7200 = vrot.slane %v6928, 7
    %v7201 = vrot.slane %v7200, 2
    %v7202 = vrot.slane %v6930, 7
    %v7203 = vrot.slane %v7202, 2
    %v7204 = vrot.slane %v6938, 7
    %v7205 = vrot.slane %v7204, 2
    %v7206 = vrot.slane %v6946, 7
    %v7207 = vrot.slane %v7206, 2
    %v7208 = vrot.slane %v6945, 7
    %v7209 = vrot.slane %v7208, 2
    %v7210 = vrot.slane %v6947, 7
    %v7211 = vrot.slane %v7210, 2
    %v7212 = vrot.slane %v6955, 7
    %v7213 = vrot.slane %v7212, 2
    %v7214 = vrot.slane %v6963, 7
    %v7215 = vrot.slane %v7214, 2
    %v7216 = vrot.slane %v6962, 7
    %v7217 = vrot.slane %v7216, 2
    %v7218 = vrot.slane %v6964, 7
    %v7219 = vrot.slane %v7218, 2
    %v7220 = vrot.slane %v6972, 7
    %v7221 = vrot.slane %v7220, 2
    %v7222 = vrot.slane %v6980, 7
    %v7223 = vrot.slane %v7222, 2
    %v7224 = vrot.slane %v6979, 7
    %v7225 = vrot.slane %v7224, 2
    %v7226 = vrot.slane %v6981, 7
    %v7227 = vrot.slane %v7226, 2
    %v7228 = vrot.slane %v6989, 7
    %v7229 = vrot.slane %v7228, 2
    %v7230 = vrot.slane %v6997, 7
    %v7231 = vrot.slane %v7230, 2
    %v7232 = vrot.slane %v6996, 7
    %v7233 = vrot.slane %v7232, 2
    %v7234 = vrot.slane %v6998, 7
    %v7235 = vrot.slane %v7234, 2
    %v7236 = vrot.slane %v7006, 7
    %v7237 = vrot.slane %v7236, 2
    %v7238 = vrot.slane %v7014, 7
    %v7239 = vrot.slane %v7238, 2
    %v7240 = vrot.slane %v7013, 7
    %v7241 = vrot.slane %v7240, 2
    %v7242 = vrot.slane %v7015, 7
    %v7243 = vrot.slane %v7242, 2
    %v7244 = vrot.slane %v7023, 7
    %v7245 = vrot.slane %v7244, 2
    %v7246 = vrot.slane %v7031, 7
    %v7247 = vrot.slane %v7246, 2
    %v7248 = vrot.slane %v7030, 7
    %v7249 = vrot.slane %v7248, 2
    %v7250 = vrot.slane %v7032, 7
    %v7251 = vrot.slane %v7250, 2
    %v7252 = vrot.slane %v7040, 7
    %v7253 = vrot.slane %v7252, 2
    %v7254 = vrot.slane %v7048, 7
    %v7255 = vrot.slane %v7254, 2
    %v7256 = vrot.slane %v7047, 7
    %v7257 = vrot.slane %v7256, 2
    %v7258 = vrot.slane %v7049, 7
    %v7259 = vrot.slane %v7258, 2
    %v7260 = vrot.slane %v7057, 7
    %v7261 = vrot.slane %v7260, 2
    %v7262 = vrot.slane %v7065, 7
    %v7263 = vrot.slane %v7262, 2
    %v7264 = vrot.slane %v7064, 7
    %v7265 = vrot.slane %v7264, 2
    %v7266 = vrot.slane %v7066, 7
    %v7267 = vrot.slane %v7266, 2
    %v7268 = vrot.slane %v7074, 7
    %v7269 = vrot.slane %v7268, 2
    %v7270 = vrot.slane %v7082, 7
    %v7271 = vrot.slane %v7270, 2
    %v7272 = vrot.slane %v7081, 7
    %v7273 = vrot.slane %v7272, 2
    %v7274 = vrot.slane %v7083, 7
    %v7275 = vrot.slane %v7274, 2
    %v7340 = vmax.f32 %v6819, %v7149
    %v7341 = vmax.f32 %v6827, %v7151
    %v7342 = vmax.f32 %v6826, %v7153
    %v7343 = vmax.f32 %v6828, %v7155
    %v7344 = vmax.f32 %v6836, %v7157
    %v7345 = vmax.f32 %v6844, %v7159
    %v7346 = vmax.f32 %v6843, %v7161
    %v7347 = vmax.f32 %v6845, %v7163
    %v7348 = vmax.f32 %v6853, %v7165
    %v7349 = vmax.f32 %v6861, %v7167
    %v7350 = vmax.f32 %v6860, %v7169
    %v7351 = vmax.f32 %v6862, %v7171
    %v7352 = vmax.f32 %v6870, %v7173
    %v7353 = vmax.f32 %v6878, %v7175
    %v7354 = vmax.f32 %v6877, %v7177
    %v7355 = vmax.f32 %v6879, %v7179
    %v7356 = vmax.f32 %v6887, %v7181
    %v7357 = vmax.f32 %v6895, %v7183
    %v7358 = vmax.f32 %v6894, %v7185
    %v7359 = vmax.f32 %v6896, %v7187
    %v7360 = vmax.f32 %v6904, %v7189
    %v7361 = vmax.f32 %v6912, %v7191
    %v7362 = vmax.f32 %v6911, %v7193
    %v7363 = vmax.f32 %v6913, %v7195
    %v7364 = vmax.f32 %v6921, %v7197
    %v7365 = vmax.f32 %v6929, %v7199
    %v7366 = vmax.f32 %v6928, %v7201
    %v7367 = vmax.f32 %v6930, %v7203
    %v7368 = vmax.f32 %v6938, %v7205
    %v7369 = vmax.f32 %v6946, %v7207
    %v7370 = vmax.f32 %v6945, %v7209
    %v7371 = vmax.f32 %v6947, %v7211
    %v7372 = vmax.f32 %v6955, %v7213
    %v7373 = vmax.f32 %v6963, %v7215
    %v7374 = vmax.f32 %v6962, %v7217
    %v7375 = vmax.f32 %v6964, %v7219
    %v7376 = vmax.f32 %v6972, %v7221
    %v7377 = vmax.f32 %v6980, %v7223
    %v7378 = vmax.f32 %v6979, %v7225
    %v7379 = vmax.f32 %v6981, %v7227
    %v7380 = vmax.f32 %v6989, %v7229
    %v7381 = vmax.f32 %v6997, %v7231
    %v7382 = vmax.f32 %v6996, %v7233
    %v7383 = vmax.f32 %v6998, %v7235
    %v7384 = vmax.f32 %v7006, %v7237
    %v7385 = vmax.f32 %v7014, %v7239
    %v7386 = vmax.f32 %v7013, %v7241
    %v7387 = vmax.f32 %v7015, %v7243
    %v7388 = vmax.f32 %v7023, %v7245
    %v7389 = vmax.f32 %v7031, %v7247
    %v7390 = vmax.f32 %v7030, %v7249
    %v7391 = vmax.f32 %v7032, %v7251
    %v7392 = vmax.f32 %v7040, %v7253
    %v7393 = vmax.f32 %v7048, %v7255
    %v7394 = vmax.f32 %v7047, %v7257
    %v7395 = vmax.f32 %v7049, %v7259
    %v7396 = vmax.f32 %v7057, %v7261
    %v7397 = vmax.f32 %v7065, %v7263
    %v7398 = vmax.f32 %v7064, %v7265
    %v7399 = vmax.f32 %v7066, %v7267
    %v7400 = vmax.f32 %v7074, %v7269
    %v7401 = vmax.f32 %v7082, %v7271
    %v7402 = vmax.f32 %v7081, %v7273
    %v7403 = vmax.f32 %v7083, %v7275
    %v7404 = vmax.f32 %v7340, %v7344
    %v7405 = vmax.f32 %v7341, %v7345
    %v7406 = vmax.f32 %v7342, %v7346
    %v7407 = vmax.f32 %v7343, %v7347
    %v7408 = vmax.f32 %v7348, %v7352
    %v7409 = vmax.f32 %v7349, %v7353
    %v7410 = vmax.f32 %v7350, %v7354
    %v7411 = vmax.f32 %v7351, %v7355
    %v7412 = vmax.f32 %v7356, %v7360
    %v7413 = vmax.f32 %v7357, %v7361
    %v7414 = vmax.f32 %v7358, %v7362
    %v7415 = vmax.f32 %v7359, %v7363
    %v7416 = vmax.f32 %v7364, %v7368
    %v7417 = vmax.f32 %v7365, %v7369
    %v7418 = vmax.f32 %v7366, %v7370
    %v7419 = vmax.f32 %v7367, %v7371
    %v7420 = vmax.f32 %v7372, %v7376
    %v7421 = vmax.f32 %v7373, %v7377
    %v7422 = vmax.f32 %v7374, %v7378
    %v7423 = vmax.f32 %v7375, %v7379
    %v7424 = vmax.f32 %v7380, %v7384
    %v7425 = vmax.f32 %v7381, %v7385
    %v7426 = vmax.f32 %v7382, %v7386
    %v7427 = vmax.f32 %v7383, %v7387
    %v7428 = vmax.f32 %v7388, %v7392
    %v7429 = vmax.f32 %v7389, %v7393
    %v7430 = vmax.f32 %v7390, %v7394
    %v7431 = vmax.f32 %v7391, %v7395
    %v7432 = vmax.f32 %v7396, %v7400
    %v7433 = vmax.f32 %v7397, %v7401
    %v7434 = vmax.f32 %v7398, %v7402
    %v7435 = vmax.f32 %v7399, %v7403
    %v7436 = vpack.c.bf16 %v7404, %v7404
    %v7437 = vpack.c.bf16 %v7405, %v7405
    %v7438 = vpack.c.bf16 %v7406, %v7406
    %v7439 = vpack.c.bf16 %v7407, %v7407
    %v7440 = vpack.c.bf16 %v7408, %v7408
    %v7441 = vpack.c.bf16 %v7409, %v7409
    %v7442 = vpack.c.bf16 %v7410, %v7410
    %v7443 = vpack.c.bf16 %v7411, %v7411
    %v7444 = vpack.c.bf16 %v7412, %v7412
    %v7445 = vpack.c.bf16 %v7413, %v7413
    %v7446 = vpack.c.bf16 %v7414, %v7414
    %v7447 = vpack.c.bf16 %v7415, %v7415
    %v7448 = vpack.c.bf16 %v7416, %v7416
    %v7449 = vpack.c.bf16 %v7417, %v7417
    %v7450 = vpack.c.bf16 %v7418, %v7418
    %v7451 = vpack.c.bf16 %v7419, %v7419
    %v7452 = vpack.c.bf16 %v7420, %v7420
    %v7453 = vpack.c.bf16 %v7421, %v7421
    %v7454 = vpack.c.bf16 %v7422, %v7422
    %v7455 = vpack.c.bf16 %v7423, %v7423
    %v7456 = vpack.c.bf16 %v7424, %v7424
    %v7457 = vpack.c.bf16 %v7425, %v7425
    %v7458 = vpack.c.bf16 %v7426, %v7426
    %v7459 = vpack.c.bf16 %v7427, %v7427
    %v7460 = vpack.c.bf16 %v7428, %v7428
    %v7461 = vpack.c.bf16 %v7429, %v7429
    %v7462 = vpack.c.bf16 %v7430, %v7430
    %v7463 = vpack.c.bf16 %v7431, %v7431
    %v7464 = vpack.c.bf16 %v7432, %v7432
    %v7465 = vpack.c.bf16 %v7433, %v7433
    %v7466 = vpack.c.bf16 %v7434, %v7434
    %v7467 = vpack.c.bf16 %v7435, %v7435
    %v7500 = vunpack.c.l.b16 %v7436
    %v7501 = vunpack.c.l.b16 %v7437
    %v7502 = vunpack.c.l.b16 %v7438
    %v7503 = vunpack.c.l.b16 %v7439
    %v7504 = vunpack.c.l.b16 %v7440
    %v7505 = vunpack.c.l.b16 %v7441
    %v7506 = vunpack.c.l.b16 %v7442
    %v7507 = vunpack.c.l.b16 %v7443
    %v7508 = vunpack.c.l.b16 %v7444
    %v7509 = vunpack.c.l.b16 %v7445
    %v7510 = vunpack.c.l.b16 %v7446
    %v7511 = vunpack.c.l.b16 %v7447
    %v7512 = vunpack.c.l.b16 %v7448
    %v7513 = vunpack.c.l.b16 %v7449
    %v7514 = vunpack.c.l.b16 %v7450
    %v7515 = vunpack.c.l.b16 %v7451
    %v7516 = vunpack.c.l.b16 %v7452
    %v7517 = vunpack.c.l.b16 %v7453
    %v7518 = vunpack.c.l.b16 %v7454
    %v7519 = vunpack.c.l.b16 %v7455
    %v7520 = vunpack.c.l.b16 %v7456
    %v7521 = vunpack.c.l.b16 %v7457
    %v7522 = vunpack.c.l.b16 %v7458
    %v7523 = vunpack.c.l.b16 %v7459
    %v7524 = vunpack.c.l.b16 %v7460
    %v7525 = vunpack.c.l.b16 %v7461
    %v7526 = vunpack.c.l.b16 %v7462
    %v7527 = vunpack.c.l.b16 %v7463
    %v7528 = vunpack.c.l.b16 %v7464
    %v7529 = vunpack.c.l.b16 %v7465
    %v7530 = vunpack.c.l.b16 %v7466
    %v7531 = vunpack.c.l.b16 %v7467
    %v7532 = vpack.c.b16 %v7500, %v7500
    %v7533 = vpack.c.b16 %v7501, %v7501
    %v7534 = vpack.c.b16 %v7502, %v7502
    %v7535 = vpack.c.b16 %v7503, %v7503
    %v7536 = vpack.c.b16 %v7504, %v7504
    %v7537 = vpack.c.b16 %v7505, %v7505
    %v7538 = vpack.c.b16 %v7506, %v7506
    %v7539 = vpack.c.b16 %v7507, %v7507
    %v7540 = vpack.c.b16 %v7508, %v7508
    %v7541 = vpack.c.b16 %v7509, %v7509
    %v7542 = vpack.c.b16 %v7510, %v7510
    %v7543 = vpack.c.b16 %v7511, %v7511
    %v7544 = vpack.c.b16 %v7512, %v7512
    %v7545 = vpack.c.b16 %v7513, %v7513
    %v7546 = vpack.c.b16 %v7514, %v7514
    %v7547 = vpack.c.b16 %v7515, %v7515
    %v7548 = vpack.c.b16 %v7516, %v7516
    %v7549 = vpack.c.b16 %v7517, %v7517
    %v7550 = vpack.c.b16 %v7518, %v7518
    %v7551 = vpack.c.b16 %v7519, %v7519
    %v7552 = vpack.c.b16 %v7520, %v7520
    %v7553 = vpack.c.b16 %v7521, %v7521
    %v7554 = vpack.c.b16 %v7522, %v7522
    %v7555 = vpack.c.b16 %v7523, %v7523
    %v7556 = vpack.c.b16 %v7524, %v7524
    %v7557 = vpack.c.b16 %v7525, %v7525
    %v7558 = vpack.c.b16 %v7526, %v7526
    %v7559 = vpack.c.b16 %v7527, %v7527
    %v7560 = vpack.c.b16 %v7528, %v7528
    %v7561 = vpack.c.b16 %v7529, %v7529
    %v7562 = vpack.c.b16 %v7530, %v7530
    %v7563 = vpack.c.b16 %v7531, %v7531
    %v7564 = vunpack.c.l.b16 %v7532
    %v7565 = vunpack.c.l.b16 %v7533
    %v7566 = vunpack.c.l.b16 %v7534
    %v7567 = vunpack.c.l.b16 %v7535
    %v7568 = vunpack.c.l.b16 %v7536
    %v7569 = vunpack.c.l.b16 %v7537
    %v7570 = vunpack.c.l.b16 %v7538
    %v7571 = vunpack.c.l.b16 %v7539
    %v7572 = vunpack.c.l.b16 %v7540
    %v7573 = vunpack.c.l.b16 %v7541
    %v7574 = vunpack.c.l.b16 %v7542
    %v7575 = vunpack.c.l.b16 %v7543
    %v7576 = vunpack.c.l.b16 %v7544
    %v7577 = vunpack.c.l.b16 %v7545
    %v7578 = vunpack.c.l.b16 %v7546
    %v7579 = vunpack.c.l.b16 %v7547
    %v7580 = vunpack.c.l.b16 %v7548
    %v7581 = vunpack.c.l.b16 %v7549
    %v7582 = vunpack.c.l.b16 %v7550
    %v7583 = vunpack.c.l.b16 %v7551
    %v7584 = vunpack.c.l.b16 %v7552
    %v7585 = vunpack.c.l.b16 %v7553
    %v7586 = vunpack.c.l.b16 %v7554
    %v7587 = vunpack.c.l.b16 %v7555
    %v7588 = vunpack.c.l.b16 %v7556
    %v7589 = vunpack.c.l.b16 %v7557
    %v7590 = vunpack.c.l.b16 %v7558
    %v7591 = vunpack.c.l.b16 %v7559
    %v7592 = vunpack.c.l.b16 %v7560
    %v7593 = vunpack.c.l.b16 %v7561
    %v7594 = vunpack.c.l.b16 %v7562
    %v7595 = vunpack.c.l.b16 %v7563
    %v7596 = vrot.slane %v7564, 7
    %v7597 = vrot.slane %v7565, 6
    %v7598 = vsel %vm4115, %v7597, %v7596
    %v7599 = vrot.slane %v7566, 5
    %v7600 = vsel %vm4118, %v7599, %v7598
    %v7601 = vrot.slane %v7567, 4
    %v7602 = vsel %vm4121, %v7601, %v7600
    %v7603 = vrot.slane %v7568, 7
    %v7604 = vrot.slane %v7569, 6
    %v7605 = vsel %vm4115, %v7604, %v7603
    %v7606 = vrot.slane %v7570, 5
    %v7607 = vsel %vm4118, %v7606, %v7605
    %v7608 = vrot.slane %v7571, 4
    %v7609 = vsel %vm4121, %v7608, %v7607
    %v7610 = vrot.slane %v7572, 7
    %v7611 = vrot.slane %v7573, 6
    %v7612 = vsel %vm4115, %v7611, %v7610
    %v7613 = vrot.slane %v7574, 5
    %v7614 = vsel %vm4118, %v7613, %v7612
    %v7615 = vrot.slane %v7575, 4
    %v7616 = vsel %vm4121, %v7615, %v7614
    %v7617 = vrot.slane %v7576, 7
    %v7618 = vrot.slane %v7577, 6
    %v7619 = vsel %vm4115, %v7618, %v7617
    %v7620 = vrot.slane %v7578, 5
    %v7621 = vsel %vm4118, %v7620, %v7619
    %v7622 = vrot.slane %v7579, 4
    %v7623 = vsel %vm4121, %v7622, %v7621
    %v7624 = vrot.slane %v7580, 7
    %v7625 = vrot.slane %v7581, 6
    %v7626 = vsel %vm4115, %v7625, %v7624
    %v7627 = vrot.slane %v7582, 5
    %v7628 = vsel %vm4118, %v7627, %v7626
    %v7629 = vrot.slane %v7583, 4
    %v7630 = vsel %vm4121, %v7629, %v7628
    %v7631 = vrot.slane %v7584, 7
    %v7632 = vrot.slane %v7585, 6
    %v7633 = vsel %vm4115, %v7632, %v7631
    %v7634 = vrot.slane %v7586, 5
    %v7635 = vsel %vm4118, %v7634, %v7633
    %v7636 = vrot.slane %v7587, 4
    %v7637 = vsel %vm4121, %v7636, %v7635
    %v7638 = vrot.slane %v7588, 7
    %v7639 = vrot.slane %v7589, 6
    %v7640 = vsel %vm4115, %v7639, %v7638
    %v7641 = vrot.slane %v7590, 5
    %v7642 = vsel %vm4118, %v7641, %v7640
    %v7643 = vrot.slane %v7591, 4
    %v7644 = vsel %vm4121, %v7643, %v7642
    %v7645 = vrot.slane %v7592, 7
    %v7646 = vrot.slane %v7593, 6
    %v7647 = vsel %vm4115, %v7646, %v7645
    %v7648 = vrot.slane %v7594, 5
    %v7649 = vsel %vm4118, %v7648, %v7647
    %v7650 = vrot.slane %v7595, 4
    %v7651 = vsel %vm4121, %v7650, %v7649
    %v7652 = vpack.c.b16 %v7602, %v7602
    %v7653 = vpack.c.b16 %v7609, %v7609
    %v7654 = vpack.c.b16 %v7616, %v7616
    %v7655 = vpack.c.b16 %v7623, %v7623
    %v7656 = vpack.c.b16 %v7630, %v7630
    %v7657 = vpack.c.b16 %v7637, %v7637
    %v7658 = vpack.c.b16 %v7644, %v7644
    %v7659 = vpack.c.b16 %v7651, %v7651
    %s7668 = scalar_lea.vmem [#allocation3], 4
    %vm7669 = vsmask.f32 2306
    %vm7670 = vmand %vm6064, %vm7669
    %v7671 = vld [vmem:[%s7668] sm:$0x7]
    %v7672 = vsel %vm7670, %v7652, %v7671
    %7673 = vst [vmem:[%s7668] sm:$0x7] %v7672
    %v7674 = vld [vmem:[%s7668 + $0x4] sm:$0x7]
    %v7675 = vsel %vm7670, %v7653, %v7674
    %7676 = vst [vmem:[%s7668 + $0x4] sm:$0x7] %v7675
    %v7677 = vld [vmem:[%s7668 + $0x8] sm:$0x7]
    %v7678 = vsel %vm7670, %v7654, %v7677
    %7679 = vst [vmem:[%s7668 + $0x8] sm:$0x7] %v7678
    %v7680 = vld [vmem:[%s7668 + $0xc] sm:$0x7]
    %v7681 = vsel %vm7670, %v7655, %v7680
    %7682 = vst [vmem:[%s7668 + $0xc] sm:$0x7] %v7681
    %v7683 = vld [vmem:[%s7668 + $0x18] sm:$0x7]
    %v7684 = vsel %vm7670, %v7656, %v7683
    %7685 = vst [vmem:[%s7668 + $0x18] sm:$0x7] %v7684
    %v7686 = vld [vmem:[%s7668 + $0x1c] sm:$0x7]
    %v7687 = vsel %vm7670, %v7657, %v7686
    %7688 = vst [vmem:[%s7668 + $0x1c] sm:$0x7] %v7687
    %v7689 = vld [vmem:[%s7668 + $0x20] sm:$0x7]
    %v7690 = vsel %vm7670, %v7658, %v7689
    %7691 = vst [vmem:[%s7668 + $0x20] sm:$0x7] %v7690
    %v7692 = vld [vmem:[%s7668 + $0x24] sm:$0x7]
    %v7693 = vsel %vm7670, %v7659, %v7692
    %7694 = vst [vmem:[%s7668 + $0x24] sm:$0x7] %v7693
    %v7695 = vld [vmem:[#allocation3] sm:$0x3]
    %v7696 = vld [vmem:[#allocation3 + $0x4] sm:$0x3]
    %v7697 = vld [vmem:[#allocation3 + $0x8] sm:$0x3]
    %v7698 = vld [vmem:[#allocation3 + $0xc] sm:$0x3]
    %v7699 = vld [vmem:[#allocation3 + $0x10] sm:$0x3]
    %v7700 = vld [vmem:[#allocation3 + $0x14] sm:$0x3]
    %v7701 = vld [vmem:[#allocation3 + $0x18] sm:$0x3]
    %v7702 = vld [vmem:[#allocation3 + $0x1c] sm:$0x3]
    %v7703 = vld [vmem:[#allocation3 + $0x20] sm:$0x3]
    %v7704 = vld [vmem:[#allocation3 + $0x24] sm:$0x3]
    %v7705 = vld [vmem:[#allocation3 + $0x28] sm:$0x3]
    %v7706 = vld [vmem:[#allocation3 + $0x2c] sm:$0x3]
    %s7707 = scalar_lea.vmem %s2, 576
    %v7708 = vld [vmem:[%s7707] sm:$0xf]
    %v7709 = vld [vmem:[%s7707 + $0x4] sm:$0xf]
    %v7710 = vld [vmem:[%s7707 + $0x8] sm:$0xf]
    %v7711 = vld [vmem:[%s7707 + $0xc] sm:$0xf]
    %v7712 = vld [vmem:[%s7707 + $0x10] sm:$0xf]
    %v7713 = vld [vmem:[%s7707 + $0x14] sm:$0xf]
    %v7714 = vld [vmem:[%s7707 + $0x18] sm:$0xf]
    %v7715 = vld [vmem:[%s7707 + $0x1c] sm:$0xf]
    %v7716 = vld [vmem:[%s7707 + $0x20] sm:$0xf]
    %v7717 = vld [vmem:[%s7707 + $0x24] sm:$0xf]
    %v7718 = vld [vmem:[%s7707 + $0x28] sm:$0xf]
    %v7719 = vld [vmem:[%s7707 + $0x2c] sm:$0xf]
    %v7720 = vld [vmem:[%s7707 + $0x30] sm:$0xf]
    %v7721 = vld [vmem:[%s7707 + $0x34] sm:$0xf]
    %v7722 = vld [vmem:[%s7707 + $0x38] sm:$0xf]
    %v7723 = vld [vmem:[%s7707 + $0x3c] sm:$0xf]
    %s7724 = scalar_lea.vmem %s2, 768
    %v7725 = vld [vmem:[%s7724] sm:$0xf]
    %v7726 = vld [vmem:[%s7724 + $0x4] sm:$0xf]
    %v7727 = vld [vmem:[%s7724 + $0x8] sm:$0xf]
    %v7728 = vld [vmem:[%s7724 + $0xc] sm:$0xf]
    %v7729 = vld [vmem:[%s7724 + $0x10] sm:$0xf]
    %v7730 = vld [vmem:[%s7724 + $0x14] sm:$0xf]
    %v7731 = vld [vmem:[%s7724 + $0x18] sm:$0xf]
    %v7732 = vld [vmem:[%s7724 + $0x1c] sm:$0xf]
    %v7733 = vld [vmem:[%s7724 + $0x20] sm:$0xf]
    %v7734 = vld [vmem:[%s7724 + $0x24] sm:$0xf]
    %v7735 = vld [vmem:[%s7724 + $0x28] sm:$0xf]
    %v7736 = vld [vmem:[%s7724 + $0x2c] sm:$0xf]
    %v7737 = vld [vmem:[%s7724 + $0x30] sm:$0xf]
    %v7738 = vld [vmem:[%s7724 + $0x34] sm:$0xf]
    %v7739 = vld [vmem:[%s7724 + $0x38] sm:$0xf]
    %v7740 = vld [vmem:[%s7724 + $0x3c] sm:$0xf]
    %v7749 = vcombine.low %v7696, %v7697
    %v7750 = vcombine.low %v7698, %v7699
    %v7752 = vunpack.c.l.s4 1983009808
    %v7753 = vunpack.c.0.s8 %v7752
    %v7754 = vlaneseq
    %v7755 = vshrl.u32 %v7754, 7
    %v7756 = vsub.s32 %v7753, %v7755
    %v7757 = vrot.slane %v7749, %v7756
    %v7759 = vunpack.c.l.s4 1983009808
    %v7760 = vunpack.c.0.s8 %v7759
    %v7761 = vlaneseq
    %v7762 = vshrl.u32 %v7761, 7
    %v7763 = vsub.s32 %v7760, %v7762
    %v7764 = vrot.slane %v7750, %v7763
    %v7765 = vcombine.low %v7757, %v7764
    %v7766 = vcombine.low %v7702, %v7703
    %v7767 = vcombine.low %v7704, %v7705
    %v7769 = vunpack.c.l.s4 1983009808
    %v7770 = vunpack.c.0.s8 %v7769
    %v7771 = vlaneseq
    %v7772 = vshrl.u32 %v7771, 7
    %v7773 = vsub.s32 %v7770, %v7772
    %v7774 = vrot.slane %v7766, %v7773
    %v7776 = vunpack.c.l.s4 1983009808
    %v7777 = vunpack.c.0.s8 %v7776
    %v7778 = vlaneseq
    %v7779 = vshrl.u32 %v7778, 7
    %v7780 = vsub.s32 %v7777, %v7779
    %v7781 = vrot.slane %v7767, %v7780
    %v7782 = vcombine.low %v7774, %v7781
    %v7801 = vunpack.c.l.b16 %v7725
    %v7802 = vunpack.c.l.b16 %v7726
    %v7803 = vunpack.c.l.b16 %v7727
    %v7804 = vunpack.c.l.b16 %v7728
    %v7805 = vunpack.c.l.b16 %v7729
    %v7806 = vunpack.c.l.b16 %v7730
    %v7807 = vunpack.c.l.b16 %v7731
    %v7808 = vunpack.c.l.b16 %v7732
    %v7809 = vunpack.c.l.b16 %v7733
    %v7810 = vunpack.c.l.b16 %v7734
    %v7811 = vunpack.c.l.b16 %v7735
    %v7812 = vunpack.c.l.b16 %v7736
    %v7813 = vunpack.c.l.b16 %v7737
    %v7814 = vunpack.c.l.b16 %v7738
    %v7815 = vunpack.c.l.b16 %v7739
    %v7816 = vunpack.c.l.b16 %v7740
    %v7817 = vpack.c.b16 %v7802, %v7801
    %v7818 = vpack.c.b16 %v7804, %v7803
    %v7819 = vpack.c.b16 %v7806, %v7805
    %v7820 = vpack.c.b16 %v7808, %v7807
    %v7821 = vpack.c.b16 %v7810, %v7809
    %v7822 = vpack.c.b16 %v7812, %v7811
    %v7823 = vpack.c.b16 %v7814, %v7813
    %v7824 = vpack.c.b16 %v7816, %v7815
    %7833 = vmatprep.subr.bf16.mxu0 0
    %7834 = vmatpush1.bf16.msra.mxu0 %v7824
    %7835 = vmatprep.subr.bf16.mxu0 0
    %7836 = vmatpush1.bf16.msra.mxu0 %v7823
    %7837 = vmatprep.subr.bf16.mxu0 0
    %7838 = vmatpush1.bf16.msra.mxu0 %v7822
    %7839 = vmatprep.subr.bf16.mxu0 0
    %7840 = vmatpush1.bf16.msra.mxu0 %v7821
    %7841 = vmatprep.subr.bf16.mxu0 0
    %7842 = vmatpush1.bf16.msra.mxu0 %v7820
    %7843 = vmatprep.subr.bf16.mxu0 0
    %7844 = vmatpush1.bf16.msra.mxu0 %v7819
    %7845 = vmatprep.subr.bf16.mxu0 0
    %7846 = vmatpush1.bf16.msra.mxu0 %v7818
    %7847 = vmatprep.subr.bf16.mxu0 0
    %7848 = vmatpush1.bf16.msra.mxu0 %v7817
    %7849 = vmatprep.subr.bf16.mxu0 0
    %7850 = vmatpush2.bf16.msra.mxu0 0
    %7851 = vmatprep.subr.bf16.mxu0 0
    %7852 = vmatpush2.bf16.msra.mxu0 0
    %7853 = vmatprep.subr.bf16.mxu0 0
    %7854 = vmatpush2.bf16.msra.mxu0 0
    %7855 = vmatprep.subr.bf16.mxu0 0
    %7856 = vmatpush2.bf16.msra.mxu0 0
    %7857 = vmatprep.subr.bf16.mxu0 0
    %7858 = vmatpush2.bf16.msra.mxu0 0
    %7859 = vmatprep.subr.bf16.mxu0 0
    %7860 = vmatpush2.bf16.msra.mxu0 0
    %7861 = vmatprep.subr.bf16.mxu0 0
    %7862 = vmatpush2.bf16.msra.mxu0 0
    %7863 = vmatprep.subr.bf16.mxu0 0
    %7864 = vmatpush2.bf16.msra.mxu0 0
    %7865 = vmatprep.mubr.bf16.mxu0 0
    %7866 = vmatmul.mubr.bf16.gmra.mxu0 %v7765
    %v7867 = vpop.f32.mrf.mxu0
    %v7868 = vadd.f32 0.0, %v7867
    %v7869 = vpop.f32.mrf.mxu0
    %v7870 = vpop.f32.mrf.mxu0
    %v7871 = vadd.f32 0.0, %v7870
    %v7872 = vpop.f32.mrf.mxu0
    %7873 = vmatprep.mubr.bf16.mxu0 0
    %7874 = vmatmul.mubr.bf16.gmra.mxu0 %v7782
    %v7875 = vpop.f32.mrf.mxu0
    %v7876 = vadd.f32 0.0, %v7875
    %v7877 = vpop.f32.mrf.mxu0
    %v7878 = vpop.f32.mrf.mxu0
    %v7879 = vadd.f32 0.0, %v7878
    %v7880 = vpop.f32.mrf.mxu0
    %7881 = vdwg.mxu0
    %v7884 = vcombine.low %v7695, %v7696
    %v7885 = vcombine.low %v7697, %v7698
    %v7887 = vunpack.c.l.s4 1983009808
    %v7888 = vunpack.c.0.s8 %v7887
    %v7889 = vlaneseq
    %v7890 = vshrl.u32 %v7889, 7
    %v7891 = vsub.s32 %v7888, %v7890
    %v7892 = vrot.slane %v7884, %v7891
    %v7894 = vunpack.c.l.s4 1983009808
    %v7895 = vunpack.c.0.s8 %v7894
    %v7896 = vlaneseq
    %v7897 = vshrl.u32 %v7896, 7
    %v7898 = vsub.s32 %v7895, %v7897
    %v7899 = vrot.slane %v7885, %v7898
    %v7900 = vcombine.low %v7892, %v7899
    %v7901 = vcombine.low %v7701, %v7702
    %v7902 = vcombine.low %v7703, %v7704
    %v7904 = vunpack.c.l.s4 1983009808
    %v7905 = vunpack.c.0.s8 %v7904
    %v7906 = vlaneseq
    %v7907 = vshrl.u32 %v7906, 7
    %v7908 = vsub.s32 %v7905, %v7907
    %v7909 = vrot.slane %v7901, %v7908
    %v7911 = vunpack.c.l.s4 1983009808
    %v7912 = vunpack.c.0.s8 %v7911
    %v7913 = vlaneseq
    %v7914 = vshrl.u32 %v7913, 7
    %v7915 = vsub.s32 %v7912, %v7914
    %v7916 = vrot.slane %v7902, %v7915
    %v7917 = vcombine.low %v7909, %v7916
    %v7936 = vunpack.c.l.b16 %v7708
    %v7937 = vunpack.c.l.b16 %v7709
    %v7938 = vunpack.c.l.b16 %v7710
    %v7939 = vunpack.c.l.b16 %v7711
    %v7940 = vunpack.c.l.b16 %v7712
    %v7941 = vunpack.c.l.b16 %v7713
    %v7942 = vunpack.c.l.b16 %v7714
    %v7943 = vunpack.c.l.b16 %v7715
    %v7944 = vunpack.c.l.b16 %v7716
    %v7945 = vunpack.c.l.b16 %v7717
    %v7946 = vunpack.c.l.b16 %v7718
    %v7947 = vunpack.c.l.b16 %v7719
    %v7948 = vunpack.c.l.b16 %v7720
    %v7949 = vunpack.c.l.b16 %v7721
    %v7950 = vunpack.c.l.b16 %v7722
    %v7951 = vunpack.c.l.b16 %v7723
    %v7952 = vpack.c.b16 %v7937, %v7936
    %v7953 = vpack.c.b16 %v7939, %v7938
    %v7954 = vpack.c.b16 %v7941, %v7940
    %v7955 = vpack.c.b16 %v7943, %v7942
    %v7956 = vpack.c.b16 %v7945, %v7944
    %v7957 = vpack.c.b16 %v7947, %v7946
    %v7958 = vpack.c.b16 %v7949, %v7948
    %v7959 = vpack.c.b16 %v7951, %v7950
    %7968 = vmatprep.subr.bf16.mxu0 0
    %7969 = vmatpush1.bf16.msra.mxu0 %v7959
    %7970 = vmatprep.subr.bf16.mxu0 0
    %7971 = vmatpush1.bf16.msra.mxu0 %v7958
    %7972 = vmatprep.subr.bf16.mxu0 0
    %7973 = vmatpush1.bf16.msra.mxu0 %v7957
    %7974 = vmatprep.subr.bf16.mxu0 0
    %7975 = vmatpush1.bf16.msra.mxu0 %v7956
    %7976 = vmatprep.subr.bf16.mxu0 0
    %7977 = vmatpush1.bf16.msra.mxu0 %v7955
    %7978 = vmatprep.subr.bf16.mxu0 0
    %7979 = vmatpush1.bf16.msra.mxu0 %v7954
    %7980 = vmatprep.subr.bf16.mxu0 0
    %7981 = vmatpush1.bf16.msra.mxu0 %v7953
    %7982 = vmatprep.subr.bf16.mxu0 0
    %7983 = vmatpush1.bf16.msra.mxu0 %v7952
    %7984 = vmatprep.subr.bf16.mxu0 0
    %7985 = vmatpush2.bf16.msra.mxu0 0
    %7986 = vmatprep.subr.bf16.mxu0 0
    %7987 = vmatpush2.bf16.msra.mxu0 0
    %7988 = vmatprep.subr.bf16.mxu0 0
    %7989 = vmatpush2.bf16.msra.mxu0 0
    %7990 = vmatprep.subr.bf16.mxu0 0
    %7991 = vmatpush2.bf16.msra.mxu0 0
    %7992 = vmatprep.subr.bf16.mxu0 0
    %7993 = vmatpush2.bf16.msra.mxu0 0
    %7994 = vmatprep.subr.bf16.mxu0 0
    %7995 = vmatpush2.bf16.msra.mxu0 0
    %7996 = vmatprep.subr.bf16.mxu0 0
    %7997 = vmatpush2.bf16.msra.mxu0 0
    %7998 = vmatprep.subr.bf16.mxu0 0
    %7999 = vmatpush2.bf16.msra.mxu0 0
    %8000 = vmatprep.mubr.bf16.mxu0 0
    %8001 = vmatmul.mubr.bf16.gmra.mxu0 %v7900
    %v8002 = vpop.f32.mrf.mxu0
    %v8003 = vadd.f32 %v7868, %v8002
    %v8004 = vpop.f32.mrf.mxu0
    %v8005 = vpop.f32.mrf.mxu0
    %v8006 = vadd.f32 %v7871, %v8005
    %v8007 = vpop.f32.mrf.mxu0
    %8008 = vmatprep.mubr.bf16.mxu0 0
    %8009 = vmatmul.mubr.bf16.gmra.mxu0 %v7917
    %v8010 = vpop.f32.mrf.mxu0
    %v8011 = vadd.f32 %v7876, %v8010
    %v8012 = vpop.f32.mrf.mxu0
    %v8013 = vpop.f32.mrf.mxu0
    %v8014 = vadd.f32 %v7879, %v8013
    %v8015 = vpop.f32.mrf.mxu0
    %8016 = vdwg.mxu0
    %s8017 = scalar_lea.vmem %s2, 960
    %v8018 = vld [vmem:[%s8017] sm:$0xf]
    %v8019 = vld [vmem:[%s8017 + $0x4] sm:$0xf]
    %v8020 = vld [vmem:[%s8017 + $0x8] sm:$0xf]
    %v8021 = vld [vmem:[%s8017 + $0xc] sm:$0xf]
    %v8022 = vld [vmem:[%s8017 + $0x10] sm:$0xf]
    %v8023 = vld [vmem:[%s8017 + $0x14] sm:$0xf]
    %v8024 = vld [vmem:[%s8017 + $0x18] sm:$0xf]
    %v8025 = vld [vmem:[%s8017 + $0x1c] sm:$0xf]
    %v8026 = vld [vmem:[%s8017 + $0x20] sm:$0xf]
    %v8027 = vld [vmem:[%s8017 + $0x24] sm:$0xf]
    %v8028 = vld [vmem:[%s8017 + $0x28] sm:$0xf]
    %v8029 = vld [vmem:[%s8017 + $0x2c] sm:$0xf]
    %v8030 = vld [vmem:[%s8017 + $0x30] sm:$0xf]
    %v8031 = vld [vmem:[%s8017 + $0x34] sm:$0xf]
    %v8032 = vld [vmem:[%s8017 + $0x38] sm:$0xf]
    %v8033 = vld [vmem:[%s8017 + $0x3c] sm:$0xf]
    %v8036 = vcombine.low %v7699, %v7700
    %v8038 = vunpack.c.l.s4 1983009808
    %v8039 = vunpack.c.0.s8 %v8038
    %v8040 = vlaneseq
    %v8041 = vshrl.u32 %v8040, 7
    %v8042 = vsub.s32 %v8039, %v8041
    %v8043 = vrot.slane %v8036, %v8042
    %v8044 = vcombine.low %v7899, %v8043
    %v8045 = vcombine.low %v7705, %v7706
    %v8047 = vunpack.c.l.s4 1983009808
    %v8048 = vunpack.c.0.s8 %v8047
    %v8049 = vlaneseq
    %v8050 = vshrl.u32 %v8049, 7
    %v8051 = vsub.s32 %v8048, %v8050
    %v8052 = vrot.slane %v8045, %v8051
    %v8053 = vcombine.low %v7916, %v8052
    %v8072 = vunpack.c.l.b16 %v8018
    %v8073 = vunpack.c.l.b16 %v8019
    %v8074 = vunpack.c.l.b16 %v8020
    %v8075 = vunpack.c.l.b16 %v8021
    %v8076 = vunpack.c.l.b16 %v8022
    %v8077 = vunpack.c.l.b16 %v8023
    %v8078 = vunpack.c.l.b16 %v8024
    %v8079 = vunpack.c.l.b16 %v8025
    %v8080 = vunpack.c.l.b16 %v8026
    %v8081 = vunpack.c.l.b16 %v8027
    %v8082 = vunpack.c.l.b16 %v8028
    %v8083 = vunpack.c.l.b16 %v8029
    %v8084 = vunpack.c.l.b16 %v8030
    %v8085 = vunpack.c.l.b16 %v8031
    %v8086 = vunpack.c.l.b16 %v8032
    %v8087 = vunpack.c.l.b16 %v8033
    %v8088 = vpack.c.b16 %v8073, %v8072
    %v8089 = vpack.c.b16 %v8075, %v8074
    %v8090 = vpack.c.b16 %v8077, %v8076
    %v8091 = vpack.c.b16 %v8079, %v8078
    %v8092 = vpack.c.b16 %v8081, %v8080
    %v8093 = vpack.c.b16 %v8083, %v8082
    %v8094 = vpack.c.b16 %v8085, %v8084
    %v8095 = vpack.c.b16 %v8087, %v8086
    %8104 = vmatprep.subr.bf16.mxu0 0
    %8105 = vmatpush1.bf16.msra.mxu0 %v8095
    %8106 = vmatprep.subr.bf16.mxu0 0
    %8107 = vmatpush1.bf16.msra.mxu0 %v8094
    %8108 = vmatprep.subr.bf16.mxu0 0
    %8109 = vmatpush1.bf16.msra.mxu0 %v8093
    %8110 = vmatprep.subr.bf16.mxu0 0
    %8111 = vmatpush1.bf16.msra.mxu0 %v8092
    %8112 = vmatprep.subr.bf16.mxu0 0
    %8113 = vmatpush1.bf16.msra.mxu0 %v8091
    %8114 = vmatprep.subr.bf16.mxu0 0
    %8115 = vmatpush1.bf16.msra.mxu0 %v8090
    %8116 = vmatprep.subr.bf16.mxu0 0
    %8117 = vmatpush1.bf16.msra.mxu0 %v8089
    %8118 = vmatprep.subr.bf16.mxu0 0
    %8119 = vmatpush1.bf16.msra.mxu0 %v8088
    %8120 = vmatprep.subr.bf16.mxu0 0
    %8121 = vmatpush2.bf16.msra.mxu0 0
    %8122 = vmatprep.subr.bf16.mxu0 0
    %8123 = vmatpush2.bf16.msra.mxu0 0
    %8124 = vmatprep.subr.bf16.mxu0 0
    %8125 = vmatpush2.bf16.msra.mxu0 0
    %8126 = vmatprep.subr.bf16.mxu0 0
    %8127 = vmatpush2.bf16.msra.mxu0 0
    %8128 = vmatprep.subr.bf16.mxu0 0
    %8129 = vmatpush2.bf16.msra.mxu0 0
    %8130 = vmatprep.subr.bf16.mxu0 0
    %8131 = vmatpush2.bf16.msra.mxu0 0
    %8132 = vmatprep.subr.bf16.mxu0 0
    %8133 = vmatpush2.bf16.msra.mxu0 0
    %8134 = vmatprep.subr.bf16.mxu0 0
    %8135 = vmatpush2.bf16.msra.mxu0 0
    %8136 = vmatprep.mubr.bf16.mxu0 0
    %8137 = vmatmul.mubr.bf16.gmra.mxu0 %v8044
    %v8138 = vpop.f32.mrf.mxu0
    %v8139 = vadd.f32 0.0, %v8138
    %v8140 = vpop.f32.mrf.mxu0
    %v8141 = vpop.f32.mrf.mxu0
    %v8142 = vadd.f32 0.0, %v8141
    %v8143 = vpop.f32.mrf.mxu0
    %8144 = vmatprep.mubr.bf16.mxu0 0
    %8145 = vmatmul.mubr.bf16.gmra.mxu0 %v8053
    %v8146 = vpop.f32.mrf.mxu0
    %v8147 = vadd.f32 0.0, %v8146
    %v8148 = vpop.f32.mrf.mxu0
    %v8149 = vpop.f32.mrf.mxu0
    %v8150 = vadd.f32 0.0, %v8149
    %v8151 = vpop.f32.mrf.mxu0
    %8152 = vdwg.mxu0
    %v8153 = vadd.f32 %v8003, %v8139
    %v8154 = vadd.f32 %v8006, %v8142
    %v8155 = vadd.f32 %v8011, %v8147
    %v8156 = vadd.f32 %v8014, %v8150
    %v8157 = vld [vmem:[#allocation3] sm:$0x7]
    %v8158 = vld [vmem:[#allocation3 + $0x4] sm:$0x7]
    %v8159 = vld [vmem:[#allocation3 + $0x8] sm:$0x7]
    %v8160 = vld [vmem:[#allocation3 + $0xc] sm:$0x7]
    %v8161 = vld [vmem:[#allocation3 + $0x10] sm:$0x7]
    %v8162 = vld [vmem:[#allocation3 + $0x14] sm:$0x7]
    %v8163 = vld [vmem:[#allocation3 + $0x18] sm:$0x7]
    %v8164 = vld [vmem:[#allocation3 + $0x1c] sm:$0x7]
    %v8165 = vld [vmem:[#allocation3 + $0x20] sm:$0x7]
    %v8166 = vld [vmem:[#allocation3 + $0x24] sm:$0x7]
    %v8167 = vld [vmem:[#allocation3 + $0x28] sm:$0x7]
    %v8168 = vld [vmem:[#allocation3 + $0x2c] sm:$0x7]
    %v8182 = vunpack.c.l.s4 1983009808
    %v8183 = vunpack.c.0.s8 %v8182
    %v8184 = vlaneseq
    %v8185 = vshrl.u32 %v8184, 7
    %v8186 = vsub.s32 %v8183, %v8185
    %v8187 = vrot.slane %v8157, %v8186
    %v8188 = vcombine.high %v8187, %v8187
    %v8190 = vunpack.c.l.s4 1983009808
    %v8191 = vunpack.c.0.s8 %v8190
    %v8192 = vlaneseq
    %v8193 = vshrl.u32 %v8192, 7
    %v8194 = vsub.s32 %v8191, %v8193
    %v8195 = vrot.slane %v8158, %v8194
    %v8196 = vcombine.high %v8195, %v8195
    %v8198 = vunpack.c.l.s4 1983009808
    %v8199 = vunpack.c.0.s8 %v8198
    %v8200 = vlaneseq
    %v8201 = vshrl.u32 %v8200, 7
    %v8202 = vsub.s32 %v8199, %v8201
    %v8203 = vrot.slane %v8159, %v8202
    %v8204 = vcombine.high %v8203, %v8203
    %v8206 = vunpack.c.l.s4 1983009808
    %v8207 = vunpack.c.0.s8 %v8206
    %v8208 = vlaneseq
    %v8209 = vshrl.u32 %v8208, 7
    %v8210 = vsub.s32 %v8207, %v8209
    %v8211 = vrot.slane %v8160, %v8210
    %v8212 = vcombine.high %v8211, %v8211
    %v8214 = vunpack.c.l.s4 1983009808
    %v8215 = vunpack.c.0.s8 %v8214
    %v8216 = vlaneseq
    %v8217 = vshrl.u32 %v8216, 7
    %v8218 = vsub.s32 %v8215, %v8217
    %v8219 = vrot.slane %v8161, %v8218
    %v8220 = vcombine.high %v8219, %v8219
    %v8222 = vunpack.c.l.s4 1983009808
    %v8223 = vunpack.c.0.s8 %v8222
    %v8224 = vlaneseq
    %v8225 = vshrl.u32 %v8224, 7
    %v8226 = vsub.s32 %v8223, %v8225
    %v8227 = vrot.slane %v8162, %v8226
    %v8228 = vcombine.high %v8227, %v8227
    %v8230 = vunpack.c.l.s4 1983009808
    %v8231 = vunpack.c.0.s8 %v8230
    %v8232 = vlaneseq
    %v8233 = vshrl.u32 %v8232, 7
    %v8234 = vsub.s32 %v8231, %v8233
    %v8235 = vrot.slane %v8163, %v8234
    %v8236 = vcombine.high %v8235, %v8235
    %v8238 = vunpack.c.l.s4 1983009808
    %v8239 = vunpack.c.0.s8 %v8238
    %v8240 = vlaneseq
    %v8241 = vshrl.u32 %v8240, 7
    %v8242 = vsub.s32 %v8239, %v8241
    %v8243 = vrot.slane %v8164, %v8242
    %v8244 = vcombine.high %v8243, %v8243
    %v8246 = vunpack.c.l.s4 1983009808
    %v8247 = vunpack.c.0.s8 %v8246
    %v8248 = vlaneseq
    %v8249 = vshrl.u32 %v8248, 7
    %v8250 = vsub.s32 %v8247, %v8249
    %v8251 = vrot.slane %v8165, %v8250
    %v8252 = vcombine.high %v8251, %v8251
    %v8254 = vunpack.c.l.s4 1983009808
    %v8255 = vunpack.c.0.s8 %v8254
    %v8256 = vlaneseq
    %v8257 = vshrl.u32 %v8256, 7
    %v8258 = vsub.s32 %v8255, %v8257
    %v8259 = vrot.slane %v8166, %v8258
    %v8260 = vcombine.high %v8259, %v8259
    %v8262 = vunpack.c.l.s4 1983009808
    %v8263 = vunpack.c.0.s8 %v8262
    %v8264 = vlaneseq
    %v8265 = vshrl.u32 %v8264, 7
    %v8266 = vsub.s32 %v8263, %v8265
    %v8267 = vrot.slane %v8167, %v8266
    %v8268 = vcombine.high %v8267, %v8267
    %v8270 = vunpack.c.l.s4 1983009808
    %v8271 = vunpack.c.0.s8 %v8270
    %v8272 = vlaneseq
    %v8273 = vshrl.u32 %v8272, 7
    %v8274 = vsub.s32 %v8271, %v8273
    %v8275 = vrot.slane %v8168, %v8274
    %v8276 = vcombine.high %v8275, %v8275
    %vm8277 = vsmask.f32 1280
    %vm8278 = vsmask.f32 3336
    %vm8279 = vmor %vm8277, %vm8278
    %vm8280 = vsmask.f32 5392
    %vm8281 = vmor %vm8279, %vm8280
    %vm8282 = vsmask.f32 7448
    %vm8283 = vmor %vm8281, %vm8282
    %v8285 = vshrl.u32 %v8187, 16
    %v8287 = vrot.slane %v8285, 6
    %v8288 = vshll.u32 %v8187, 16
    %v8290 = vrot.slane %v8288, 7
    %v8291 = vor.u32 %v8287, %v8290
    %v8292 = vrot.slane %v8291, 2
    %v8294 = vshll.u32 %v8188, 16
    %v8296 = vrot.slane %v8294, 7
    %v8297 = vsel %vm8283, %v8292, %v8296
    %v8299 = vshrl.u32 %v8195, 16
    %v8301 = vrot.slane %v8299, 6
    %v8302 = vshll.u32 %v8195, 16
    %v8304 = vrot.slane %v8302, 7
    %v8305 = vor.u32 %v8301, %v8304
    %v8306 = vrot.slane %v8305, 2
    %v8308 = vshll.u32 %v8196, 16
    %v8310 = vrot.slane %v8308, 7
    %v8311 = vsel %vm8283, %v8306, %v8310
    %v8313 = vshrl.u32 %v8203, 16
    %v8315 = vrot.slane %v8313, 6
    %v8316 = vshll.u32 %v8203, 16
    %v8318 = vrot.slane %v8316, 7
    %v8319 = vor.u32 %v8315, %v8318
    %v8320 = vrot.slane %v8319, 2
    %v8322 = vshll.u32 %v8204, 16
    %v8324 = vrot.slane %v8322, 7
    %v8325 = vsel %vm8283, %v8320, %v8324
    %v8327 = vshrl.u32 %v8211, 16
    %v8329 = vrot.slane %v8327, 6
    %v8330 = vshll.u32 %v8211, 16
    %v8332 = vrot.slane %v8330, 7
    %v8333 = vor.u32 %v8329, %v8332
    %v8334 = vrot.slane %v8333, 2
    %v8336 = vshll.u32 %v8212, 16
    %v8338 = vrot.slane %v8336, 7
    %v8339 = vsel %vm8283, %v8334, %v8338
    %v8341 = vshrl.u32 %v8219, 16
    %v8343 = vrot.slane %v8341, 6
    %v8344 = vshll.u32 %v8219, 16
    %v8346 = vrot.slane %v8344, 7
    %v8347 = vor.u32 %v8343, %v8346
    %v8348 = vrot.slane %v8347, 2
    %v8350 = vshll.u32 %v8220, 16
    %v8352 = vrot.slane %v8350, 7
    %v8353 = vsel %vm8283, %v8348, %v8352
    %v8355 = vshrl.u32 %v8227, 16
    %v8357 = vrot.slane %v8355, 6
    %v8358 = vshll.u32 %v8227, 16
    %v8360 = vrot.slane %v8358, 7
    %v8361 = vor.u32 %v8357, %v8360
    %v8362 = vrot.slane %v8361, 2
    %v8364 = vshll.u32 %v8228, 16
    %v8366 = vrot.slane %v8364, 7
    %v8367 = vsel %vm8283, %v8362, %v8366
    %v8369 = vshrl.u32 %v8235, 16
    %v8371 = vrot.slane %v8369, 6
    %v8372 = vshll.u32 %v8235, 16
    %v8374 = vrot.slane %v8372, 7
    %v8375 = vor.u32 %v8371, %v8374
    %v8376 = vrot.slane %v8375, 2
    %v8378 = vshll.u32 %v8236, 16
    %v8380 = vrot.slane %v8378, 7
    %v8381 = vsel %vm8283, %v8376, %v8380
    %v8383 = vshrl.u32 %v8243, 16
    %v8385 = vrot.slane %v8383, 6
    %v8386 = vshll.u32 %v8243, 16
    %v8388 = vrot.slane %v8386, 7
    %v8389 = vor.u32 %v8385, %v8388
    %v8390 = vrot.slane %v8389, 2
    %v8392 = vshll.u32 %v8244, 16
    %v8394 = vrot.slane %v8392, 7
    %v8395 = vsel %vm8283, %v8390, %v8394
    %v8397 = vshrl.u32 %v8251, 16
    %v8399 = vrot.slane %v8397, 6
    %v8400 = vshll.u32 %v8251, 16
    %v8402 = vrot.slane %v8400, 7
    %v8403 = vor.u32 %v8399, %v8402
    %v8404 = vrot.slane %v8403, 2
    %v8406 = vshll.u32 %v8252, 16
    %v8408 = vrot.slane %v8406, 7
    %v8409 = vsel %vm8283, %v8404, %v8408
    %v8411 = vshrl.u32 %v8259, 16
    %v8413 = vrot.slane %v8411, 6
    %v8414 = vshll.u32 %v8259, 16
    %v8416 = vrot.slane %v8414, 7
    %v8417 = vor.u32 %v8413, %v8416
    %v8418 = vrot.slane %v8417, 2
    %v8420 = vshll.u32 %v8260, 16
    %v8422 = vrot.slane %v8420, 7
    %v8423 = vsel %vm8283, %v8418, %v8422
    %v8425 = vshrl.u32 %v8267, 16
    %v8427 = vrot.slane %v8425, 6
    %v8428 = vshll.u32 %v8267, 16
    %v8430 = vrot.slane %v8428, 7
    %v8431 = vor.u32 %v8427, %v8430
    %v8432 = vrot.slane %v8431, 2
    %v8434 = vshll.u32 %v8268, 16
    %v8436 = vrot.slane %v8434, 7
    %v8437 = vsel %vm8283, %v8432, %v8436
    %v8439 = vshrl.u32 %v8275, 16
    %v8441 = vrot.slane %v8439, 6
    %v8442 = vshll.u32 %v8275, 16
    %v8444 = vrot.slane %v8442, 7
    %v8445 = vor.u32 %v8441, %v8444
    %v8446 = vrot.slane %v8445, 2
    %v8448 = vshll.u32 %v8276, 16
    %v8450 = vrot.slane %v8448, 7
    %v8451 = vsel %vm8283, %v8446, %v8450
    %s8452 = scalar_lea.vmem %s2, 640
    %v8453 = vld [vmem:[%s8452] sm:$0xf]
    %v8454 = vld [vmem:[%s8452 + $0x4] sm:$0xf]
    %v8455 = vld [vmem:[%s8452 + $0x8] sm:$0xf]
    %v8456 = vld [vmem:[%s8452 + $0xc] sm:$0xf]
    %v8457 = vld [vmem:[%s8452 + $0x10] sm:$0xf]
    %v8458 = vld [vmem:[%s8452 + $0x14] sm:$0xf]
    %v8459 = vld [vmem:[%s8452 + $0x18] sm:$0xf]
    %v8460 = vld [vmem:[%s8452 + $0x1c] sm:$0xf]
    %v8461 = vld [vmem:[%s8452 + $0x20] sm:$0xf]
    %v8462 = vld [vmem:[%s8452 + $0x24] sm:$0xf]
    %v8463 = vld [vmem:[%s8452 + $0x28] sm:$0xf]
    %v8464 = vld [vmem:[%s8452 + $0x2c] sm:$0xf]
    %v8465 = vld [vmem:[%s8452 + $0x30] sm:$0xf]
    %v8466 = vld [vmem:[%s8452 + $0x34] sm:$0xf]
    %v8467 = vld [vmem:[%s8452 + $0x38] sm:$0xf]
    %v8468 = vld [vmem:[%s8452 + $0x3c] sm:$0xf]
    %v8469 = vcombine.low %v8297, %v8311
    %v8470 = vcombine.low %v8325, %v8339
    %v8472 = vunpack.c.l.s4 1983009808
    %v8473 = vunpack.c.0.s8 %v8472
    %v8474 = vlaneseq
    %v8475 = vshrl.u32 %v8474, 7
    %v8476 = vsub.s32 %v8473, %v8475
    %v8477 = vrot.slane %v8469, %v8476
    %v8479 = vunpack.c.l.s4 1983009808
    %v8480 = vunpack.c.0.s8 %v8479
    %v8481 = vlaneseq
    %v8482 = vshrl.u32 %v8481, 7
    %v8483 = vsub.s32 %v8480, %v8482
    %v8484 = vrot.slane %v8470, %v8483
    %v8485 = vcombine.low %v8477, %v8484
    %v8486 = vcombine.low %v8381, %v8395
    %v8487 = vcombine.low %v8409, %v8423
    %v8489 = vunpack.c.l.s4 1983009808
    %v8490 = vunpack.c.0.s8 %v8489
    %v8491 = vlaneseq
    %v8492 = vshrl.u32 %v8491, 7
    %v8493 = vsub.s32 %v8490, %v8492
    %v8494 = vrot.slane %v8486, %v8493
    %v8496 = vunpack.c.l.s4 1983009808
    %v8497 = vunpack.c.0.s8 %v8496
    %v8498 = vlaneseq
    %v8499 = vshrl.u32 %v8498, 7
    %v8500 = vsub.s32 %v8497, %v8499
    %v8501 = vrot.slane %v8487, %v8500
    %v8502 = vcombine.low %v8494, %v8501
    %v8521 = vunpack.c.l.b16 %v8453
    %v8522 = vunpack.c.l.b16 %v8454
    %v8523 = vunpack.c.l.b16 %v8455
    %v8524 = vunpack.c.l.b16 %v8456
    %v8525 = vunpack.c.l.b16 %v8457
    %v8526 = vunpack.c.l.b16 %v8458
    %v8527 = vunpack.c.l.b16 %v8459
    %v8528 = vunpack.c.l.b16 %v8460
    %v8529 = vunpack.c.l.b16 %v8461
    %v8530 = vunpack.c.l.b16 %v8462
    %v8531 = vunpack.c.l.b16 %v8463
    %v8532 = vunpack.c.l.b16 %v8464
    %v8533 = vunpack.c.l.b16 %v8465
    %v8534 = vunpack.c.l.b16 %v8466
    %v8535 = vunpack.c.l.b16 %v8467
    %v8536 = vunpack.c.l.b16 %v8468
    %v8537 = vpack.c.b16 %v8522, %v8521
    %v8538 = vpack.c.b16 %v8524, %v8523
    %v8539 = vpack.c.b16 %v8526, %v8525
    %v8540 = vpack.c.b16 %v8528, %v8527
    %v8541 = vpack.c.b16 %v8530, %v8529
    %v8542 = vpack.c.b16 %v8532, %v8531
    %v8543 = vpack.c.b16 %v8534, %v8533
    %v8544 = vpack.c.b16 %v8536, %v8535
    %8553 = vmatprep.subr.bf16.mxu0 0
    %8554 = vmatpush1.bf16.msra.mxu0 %v8544
    %8555 = vmatprep.subr.bf16.mxu0 0
    %8556 = vmatpush1.bf16.msra.mxu0 %v8543
    %8557 = vmatprep.subr.bf16.mxu0 0
    %8558 = vmatpush1.bf16.msra.mxu0 %v8542
    %8559 = vmatprep.subr.bf16.mxu0 0
    %8560 = vmatpush1.bf16.msra.mxu0 %v8541
    %8561 = vmatprep.subr.bf16.mxu0 0
    %8562 = vmatpush1.bf16.msra.mxu0 %v8540
    %8563 = vmatprep.subr.bf16.mxu0 0
    %8564 = vmatpush1.bf16.msra.mxu0 %v8539
    %8565 = vmatprep.subr.bf16.mxu0 0
    %8566 = vmatpush1.bf16.msra.mxu0 %v8538
    %8567 = vmatprep.subr.bf16.mxu0 0
    %8568 = vmatpush1.bf16.msra.mxu0 %v8537
    %8569 = vmatprep.subr.bf16.mxu0 0
    %8570 = vmatpush2.bf16.msra.mxu0 0
    %8571 = vmatprep.subr.bf16.mxu0 0
    %8572 = vmatpush2.bf16.msra.mxu0 0
    %8573 = vmatprep.subr.bf16.mxu0 0
    %8574 = vmatpush2.bf16.msra.mxu0 0
    %8575 = vmatprep.subr.bf16.mxu0 0
    %8576 = vmatpush2.bf16.msra.mxu0 0
    %8577 = vmatprep.subr.bf16.mxu0 0
    %8578 = vmatpush2.bf16.msra.mxu0 0
    %8579 = vmatprep.subr.bf16.mxu0 0
    %8580 = vmatpush2.bf16.msra.mxu0 0
    %8581 = vmatprep.subr.bf16.mxu0 0
    %8582 = vmatpush2.bf16.msra.mxu0 0
    %8583 = vmatprep.subr.bf16.mxu0 0
    %8584 = vmatpush2.bf16.msra.mxu0 0
    %8585 = vmatprep.mubr.bf16.mxu0 0
    %8586 = vmatmul.mubr.bf16.gmra.mxu0 %v8485
    %v8587 = vpop.f32.mrf.mxu0
    %v8588 = vadd.f32 0.0, %v8587
    %v8589 = vpop.f32.mrf.mxu0
    %v8590 = vpop.f32.mrf.mxu0
    %v8591 = vadd.f32 0.0, %v8590
    %v8592 = vpop.f32.mrf.mxu0
    %8593 = vmatprep.mubr.bf16.mxu0 0
    %8594 = vmatmul.mubr.bf16.gmra.mxu0 %v8502
    %v8595 = vpop.f32.mrf.mxu0
    %v8596 = vadd.f32 0.0, %v8595
    %v8597 = vpop.f32.mrf.mxu0
    %v8598 = vpop.f32.mrf.mxu0
    %v8599 = vadd.f32 0.0, %v8598
    %v8600 = vpop.f32.mrf.mxu0
    %8601 = vdwg.mxu0
    %v8602 = vadd.f32 %v8153, %v8588
    %v8603 = vadd.f32 %v8154, %v8591
    %v8604 = vadd.f32 %v8155, %v8596
    %v8605 = vadd.f32 %v8156, %v8599
    %s8606 = scalar_lea.vmem %s2, 832
    %v8607 = vld [vmem:[%s8606] sm:$0xf]
    %v8608 = vld [vmem:[%s8606 + $0x4] sm:$0xf]
    %v8609 = vld [vmem:[%s8606 + $0x8] sm:$0xf]
    %v8610 = vld [vmem:[%s8606 + $0xc] sm:$0xf]
    %v8611 = vld [vmem:[%s8606 + $0x10] sm:$0xf]
    %v8612 = vld [vmem:[%s8606 + $0x14] sm:$0xf]
    %v8613 = vld [vmem:[%s8606 + $0x18] sm:$0xf]
    %v8614 = vld [vmem:[%s8606 + $0x1c] sm:$0xf]
    %v8615 = vld [vmem:[%s8606 + $0x20] sm:$0xf]
    %v8616 = vld [vmem:[%s8606 + $0x24] sm:$0xf]
    %v8617 = vld [vmem:[%s8606 + $0x28] sm:$0xf]
    %v8618 = vld [vmem:[%s8606 + $0x2c] sm:$0xf]
    %v8619 = vld [vmem:[%s8606 + $0x30] sm:$0xf]
    %v8620 = vld [vmem:[%s8606 + $0x34] sm:$0xf]
    %v8621 = vld [vmem:[%s8606 + $0x38] sm:$0xf]
    %v8622 = vld [vmem:[%s8606 + $0x3c] sm:$0xf]
    %v8623 = vcombine.low %v8311, %v8325
    %v8624 = vcombine.low %v8339, %v8353
    %v8626 = vunpack.c.l.s4 1983009808
    %v8627 = vunpack.c.0.s8 %v8626
    %v8628 = vlaneseq
    %v8629 = vshrl.u32 %v8628, 7
    %v8630 = vsub.s32 %v8627, %v8629
    %v8631 = vrot.slane %v8623, %v8630
    %v8633 = vunpack.c.l.s4 1983009808
    %v8634 = vunpack.c.0.s8 %v8633
    %v8635 = vlaneseq
    %v8636 = vshrl.u32 %v8635, 7
    %v8637 = vsub.s32 %v8634, %v8636
    %v8638 = vrot.slane %v8624, %v8637
    %v8639 = vcombine.low %v8631, %v8638
    %v8640 = vcombine.low %v8395, %v8409
    %v8641 = vcombine.low %v8423, %v8437
    %v8643 = vunpack.c.l.s4 1983009808
    %v8644 = vunpack.c.0.s8 %v8643
    %v8645 = vlaneseq
    %v8646 = vshrl.u32 %v8645, 7
    %v8647 = vsub.s32 %v8644, %v8646
    %v8648 = vrot.slane %v8640, %v8647
    %v8650 = vunpack.c.l.s4 1983009808
    %v8651 = vunpack.c.0.s8 %v8650
    %v8652 = vlaneseq
    %v8653 = vshrl.u32 %v8652, 7
    %v8654 = vsub.s32 %v8651, %v8653
    %v8655 = vrot.slane %v8641, %v8654
    %v8656 = vcombine.low %v8648, %v8655
    %v8675 = vunpack.c.l.b16 %v8607
    %v8676 = vunpack.c.l.b16 %v8608
    %v8677 = vunpack.c.l.b16 %v8609
    %v8678 = vunpack.c.l.b16 %v8610
    %v8679 = vunpack.c.l.b16 %v8611
    %v8680 = vunpack.c.l.b16 %v8612
    %v8681 = vunpack.c.l.b16 %v8613
    %v8682 = vunpack.c.l.b16 %v8614
    %v8683 = vunpack.c.l.b16 %v8615
    %v8684 = vunpack.c.l.b16 %v8616
    %v8685 = vunpack.c.l.b16 %v8617
    %v8686 = vunpack.c.l.b16 %v8618
    %v8687 = vunpack.c.l.b16 %v8619
    %v8688 = vunpack.c.l.b16 %v8620
    %v8689 = vunpack.c.l.b16 %v8621
    %v8690 = vunpack.c.l.b16 %v8622
    %v8691 = vpack.c.b16 %v8676, %v8675
    %v8692 = vpack.c.b16 %v8678, %v8677
    %v8693 = vpack.c.b16 %v8680, %v8679
    %v8694 = vpack.c.b16 %v8682, %v8681
    %v8695 = vpack.c.b16 %v8684, %v8683
    %v8696 = vpack.c.b16 %v8686, %v8685
    %v8697 = vpack.c.b16 %v8688, %v8687
    %v8698 = vpack.c.b16 %v8690, %v8689
    %8707 = vmatprep.subr.bf16.mxu0 0
    %8708 = vmatpush1.bf16.msra.mxu0 %v8698
    %8709 = vmatprep.subr.bf16.mxu0 0
    %8710 = vmatpush1.bf16.msra.mxu0 %v8697
    %8711 = vmatprep.subr.bf16.mxu0 0
    %8712 = vmatpush1.bf16.msra.mxu0 %v8696
    %8713 = vmatprep.subr.bf16.mxu0 0
    %8714 = vmatpush1.bf16.msra.mxu0 %v8695
    %8715 = vmatprep.subr.bf16.mxu0 0
    %8716 = vmatpush1.bf16.msra.mxu0 %v8694
    %8717 = vmatprep.subr.bf16.mxu0 0
    %8718 = vmatpush1.bf16.msra.mxu0 %v8693
    %8719 = vmatprep.subr.bf16.mxu0 0
    %8720 = vmatpush1.bf16.msra.mxu0 %v8692
    %8721 = vmatprep.subr.bf16.mxu0 0
    %8722 = vmatpush1.bf16.msra.mxu0 %v8691
    %8723 = vmatprep.subr.bf16.mxu0 0
    %8724 = vmatpush2.bf16.msra.mxu0 0
    %8725 = vmatprep.subr.bf16.mxu0 0
    %8726 = vmatpush2.bf16.msra.mxu0 0
    %8727 = vmatprep.subr.bf16.mxu0 0
    %8728 = vmatpush2.bf16.msra.mxu0 0
    %8729 = vmatprep.subr.bf16.mxu0 0
    %8730 = vmatpush2.bf16.msra.mxu0 0
    %8731 = vmatprep.subr.bf16.mxu0 0
    %8732 = vmatpush2.bf16.msra.mxu0 0
    %8733 = vmatprep.subr.bf16.mxu0 0
    %8734 = vmatpush2.bf16.msra.mxu0 0
    %8735 = vmatprep.subr.bf16.mxu0 0
    %8736 = vmatpush2.bf16.msra.mxu0 0
    %8737 = vmatprep.subr.bf16.mxu0 0
    %8738 = vmatpush2.bf16.msra.mxu0 0
    %8739 = vmatprep.mubr.bf16.mxu0 0
    %8740 = vmatmul.mubr.bf16.gmra.mxu0 %v8639
    %v8741 = vpop.f32.mrf.mxu0
    %v8742 = vadd.f32 0.0, %v8741
    %v8743 = vpop.f32.mrf.mxu0
    %v8744 = vpop.f32.mrf.mxu0
    %v8745 = vadd.f32 0.0, %v8744
    %v8746 = vpop.f32.mrf.mxu0
    %8747 = vmatprep.mubr.bf16.mxu0 0
    %8748 = vmatmul.mubr.bf16.gmra.mxu0 %v8656
    %v8749 = vpop.f32.mrf.mxu0
    %v8750 = vadd.f32 0.0, %v8749
    %v8751 = vpop.f32.mrf.mxu0
    %v8752 = vpop.f32.mrf.mxu0
    %v8753 = vadd.f32 0.0, %v8752
    %v8754 = vpop.f32.mrf.mxu0
    %8755 = vdwg.mxu0
    %v8756 = vadd.f32 %v8602, %v8742
    %v8757 = vadd.f32 %v8603, %v8745
    %v8758 = vadd.f32 %v8604, %v8750
    %v8759 = vadd.f32 %v8605, %v8753
    %s8760 = scalar_lea.vmem %s2, 1024
    %v8761 = vld [vmem:[%s8760] sm:$0xf]
    %v8762 = vld [vmem:[%s8760 + $0x4] sm:$0xf]
    %v8763 = vld [vmem:[%s8760 + $0x8] sm:$0xf]
    %v8764 = vld [vmem:[%s8760 + $0xc] sm:$0xf]
    %v8765 = vld [vmem:[%s8760 + $0x10] sm:$0xf]
    %v8766 = vld [vmem:[%s8760 + $0x14] sm:$0xf]
    %v8767 = vld [vmem:[%s8760 + $0x18] sm:$0xf]
    %v8768 = vld [vmem:[%s8760 + $0x1c] sm:$0xf]
    %v8769 = vld [vmem:[%s8760 + $0x20] sm:$0xf]
    %v8770 = vld [vmem:[%s8760 + $0x24] sm:$0xf]
    %v8771 = vld [vmem:[%s8760 + $0x28] sm:$0xf]
    %v8772 = vld [vmem:[%s8760 + $0x2c] sm:$0xf]
    %v8773 = vld [vmem:[%s8760 + $0x30] sm:$0xf]
    %v8774 = vld [vmem:[%s8760 + $0x34] sm:$0xf]
    %v8775 = vld [vmem:[%s8760 + $0x38] sm:$0xf]
    %v8776 = vld [vmem:[%s8760 + $0x3c] sm:$0xf]
    %v8777 = vcombine.low %v8353, %v8367
    %v8779 = vunpack.c.l.s4 1983009808
    %v8780 = vunpack.c.0.s8 %v8779
    %v8781 = vlaneseq
    %v8782 = vshrl.u32 %v8781, 7
    %v8783 = vsub.s32 %v8780, %v8782
    %v8784 = vrot.slane %v8777, %v8783
    %v8785 = vcombine.low %v8484, %v8784
    %v8786 = vcombine.low %v8437, %v8451
    %v8788 = vunpack.c.l.s4 1983009808
    %v8789 = vunpack.c.0.s8 %v8788
    %v8790 = vlaneseq
    %v8791 = vshrl.u32 %v8790, 7
    %v8792 = vsub.s32 %v8789, %v8791
    %v8793 = vrot.slane %v8786, %v8792
    %v8794 = vcombine.low %v8501, %v8793
    %v8813 = vunpack.c.l.b16 %v8761
    %v8814 = vunpack.c.l.b16 %v8762
    %v8815 = vunpack.c.l.b16 %v8763
    %v8816 = vunpack.c.l.b16 %v8764
    %v8817 = vunpack.c.l.b16 %v8765
    %v8818 = vunpack.c.l.b16 %v8766
    %v8819 = vunpack.c.l.b16 %v8767
    %v8820 = vunpack.c.l.b16 %v8768
    %v8821 = vunpack.c.l.b16 %v8769
    %v8822 = vunpack.c.l.b16 %v8770
    %v8823 = vunpack.c.l.b16 %v8771
    %v8824 = vunpack.c.l.b16 %v8772
    %v8825 = vunpack.c.l.b16 %v8773
    %v8826 = vunpack.c.l.b16 %v8774
    %v8827 = vunpack.c.l.b16 %v8775
    %v8828 = vunpack.c.l.b16 %v8776
    %v8829 = vpack.c.b16 %v8814, %v8813
    %v8830 = vpack.c.b16 %v8816, %v8815
    %v8831 = vpack.c.b16 %v8818, %v8817
    %v8832 = vpack.c.b16 %v8820, %v8819
    %v8833 = vpack.c.b16 %v8822, %v8821
    %v8834 = vpack.c.b16 %v8824, %v8823
    %v8835 = vpack.c.b16 %v8826, %v8825
    %v8836 = vpack.c.b16 %v8828, %v8827
    %8845 = vmatprep.subr.bf16.mxu0 0
    %8846 = vmatpush1.bf16.msra.mxu0 %v8836
    %8847 = vmatprep.subr.bf16.mxu0 0
    %8848 = vmatpush1.bf16.msra.mxu0 %v8835
    %8849 = vmatprep.subr.bf16.mxu0 0
    %8850 = vmatpush1.bf16.msra.mxu0 %v8834
    %8851 = vmatprep.subr.bf16.mxu0 0
    %8852 = vmatpush1.bf16.msra.mxu0 %v8833
    %8853 = vmatprep.subr.bf16.mxu0 0
    %8854 = vmatpush1.bf16.msra.mxu0 %v8832
    %8855 = vmatprep.subr.bf16.mxu0 0
    %8856 = vmatpush1.bf16.msra.mxu0 %v8831
    %8857 = vmatprep.subr.bf16.mxu0 0
    %8858 = vmatpush1.bf16.msra.mxu0 %v8830
    %8859 = vmatprep.subr.bf16.mxu0 0
    %8860 = vmatpush1.bf16.msra.mxu0 %v8829
    %8861 = vmatprep.subr.bf16.mxu0 0
    %8862 = vmatpush2.bf16.msra.mxu0 0
    %8863 = vmatprep.subr.bf16.mxu0 0
    %8864 = vmatpush2.bf16.msra.mxu0 0
    %8865 = vmatprep.subr.bf16.mxu0 0
    %8866 = vmatpush2.bf16.msra.mxu0 0
    %8867 = vmatprep.subr.bf16.mxu0 0
    %8868 = vmatpush2.bf16.msra.mxu0 0
    %8869 = vmatprep.subr.bf16.mxu0 0
    %8870 = vmatpush2.bf16.msra.mxu0 0
    %8871 = vmatprep.subr.bf16.mxu0 0
    %8872 = vmatpush2.bf16.msra.mxu0 0
    %8873 = vmatprep.subr.bf16.mxu0 0
    %8874 = vmatpush2.bf16.msra.mxu0 0
    %8875 = vmatprep.subr.bf16.mxu0 0
    %8876 = vmatpush2.bf16.msra.mxu0 0
    %8877 = vmatprep.mubr.bf16.mxu0 0
    %8878 = vmatmul.mubr.bf16.gmra.mxu0 %v8785
    %v8879 = vpop.f32.mrf.mxu0
    %v8880 = vadd.f32 0.0, %v8879
    %v8881 = vpop.f32.mrf.mxu0
    %v8882 = vpop.f32.mrf.mxu0
    %v8883 = vadd.f32 0.0, %v8882
    %v8884 = vpop.f32.mrf.mxu0
    %8885 = vmatprep.mubr.bf16.mxu0 0
    %8886 = vmatmul.mubr.bf16.gmra.mxu0 %v8794
    %v8887 = vpop.f32.mrf.mxu0
    %v8888 = vadd.f32 0.0, %v8887
    %v8889 = vpop.f32.mrf.mxu0
    %v8890 = vpop.f32.mrf.mxu0
    %v8891 = vadd.f32 0.0, %v8890
    %v8892 = vpop.f32.mrf.mxu0
    %8893 = vdwg.mxu0
    %v8894 = vadd.f32 %v8756, %v8880
    %v8895 = vadd.f32 %v8757, %v8883
    %v8896 = vadd.f32 %v8758, %v8888
    %v8897 = vadd.f32 %v8759, %v8891
    %v8898 = vld [vmem:[#allocation3] sm:$0x6]
    %v8899 = vld [vmem:[#allocation3 + $0x4] sm:$0x6]
    %v8900 = vld [vmem:[#allocation3 + $0x8] sm:$0x6]
    %v8901 = vld [vmem:[#allocation3 + $0xc] sm:$0x6]
    %v8902 = vld [vmem:[#allocation3 + $0x10] sm:$0x6]
    %v8903 = vld [vmem:[#allocation3 + $0x14] sm:$0x6]
    %v8904 = vld [vmem:[#allocation3 + $0x18] sm:$0x6]
    %v8905 = vld [vmem:[#allocation3 + $0x1c] sm:$0x6]
    %v8906 = vld [vmem:[#allocation3 + $0x20] sm:$0x6]
    %v8907 = vld [vmem:[#allocation3 + $0x24] sm:$0x6]
    %v8908 = vld [vmem:[#allocation3 + $0x28] sm:$0x6]
    %v8909 = vld [vmem:[#allocation3 + $0x2c] sm:$0x6]
    %v8923 = vunpack.c.l.s4 1983009808
    %v8924 = vunpack.c.0.s8 %v8923
    %v8925 = vlaneseq
    %v8926 = vshrl.u32 %v8925, 7
    %v8927 = vsub.s32 %v8924, %v8926
    %v8928 = vrot.slane %v8898, %v8927
    %v8929 = vcombine.high %v8928, %v8928
    %v8931 = vunpack.c.l.s4 1983009808
    %v8932 = vunpack.c.0.s8 %v8931
    %v8933 = vlaneseq
    %v8934 = vshrl.u32 %v8933, 7
    %v8935 = vsub.s32 %v8932, %v8934
    %v8936 = vrot.slane %v8899, %v8935
    %v8937 = vcombine.high %v8936, %v8936
    %v8939 = vunpack.c.l.s4 1983009808
    %v8940 = vunpack.c.0.s8 %v8939
    %v8941 = vlaneseq
    %v8942 = vshrl.u32 %v8941, 7
    %v8943 = vsub.s32 %v8940, %v8942
    %v8944 = vrot.slane %v8900, %v8943
    %v8945 = vcombine.high %v8944, %v8944
    %v8947 = vunpack.c.l.s4 1983009808
    %v8948 = vunpack.c.0.s8 %v8947
    %v8949 = vlaneseq
    %v8950 = vshrl.u32 %v8949, 7
    %v8951 = vsub.s32 %v8948, %v8950
    %v8952 = vrot.slane %v8901, %v8951
    %v8953 = vcombine.high %v8952, %v8952
    %v8955 = vunpack.c.l.s4 1983009808
    %v8956 = vunpack.c.0.s8 %v8955
    %v8957 = vlaneseq
    %v8958 = vshrl.u32 %v8957, 7
    %v8959 = vsub.s32 %v8956, %v8958
    %v8960 = vrot.slane %v8902, %v8959
    %v8961 = vcombine.high %v8960, %v8960
    %v8963 = vunpack.c.l.s4 1983009808
    %v8964 = vunpack.c.0.s8 %v8963
    %v8965 = vlaneseq
    %v8966 = vshrl.u32 %v8965, 7
    %v8967 = vsub.s32 %v8964, %v8966
    %v8968 = vrot.slane %v8903, %v8967
    %v8969 = vcombine.high %v8968, %v8968
    %v8971 = vunpack.c.l.s4 1983009808
    %v8972 = vunpack.c.0.s8 %v8971
    %v8973 = vlaneseq
    %v8974 = vshrl.u32 %v8973, 7
    %v8975 = vsub.s32 %v8972, %v8974
    %v8976 = vrot.slane %v8904, %v8975
    %v8977 = vcombine.high %v8976, %v8976
    %v8979 = vunpack.c.l.s4 1983009808
    %v8980 = vunpack.c.0.s8 %v8979
    %v8981 = vlaneseq
    %v8982 = vshrl.u32 %v8981, 7
    %v8983 = vsub.s32 %v8980, %v8982
    %v8984 = vrot.slane %v8905, %v8983
    %v8985 = vcombine.high %v8984, %v8984
    %v8987 = vunpack.c.l.s4 1983009808
    %v8988 = vunpack.c.0.s8 %v8987
    %v8989 = vlaneseq
    %v8990 = vshrl.u32 %v8989, 7
    %v8991 = vsub.s32 %v8988, %v8990
    %v8992 = vrot.slane %v8906, %v8991
    %v8993 = vcombine.high %v8992, %v8992
    %v8995 = vunpack.c.l.s4 1983009808
    %v8996 = vunpack.c.0.s8 %v8995
    %v8997 = vlaneseq
    %v8998 = vshrl.u32 %v8997, 7
    %v8999 = vsub.s32 %v8996, %v8998
    %v9000 = vrot.slane %v8907, %v8999
    %v9001 = vcombine.high %v9000, %v9000
    %v9003 = vunpack.c.l.s4 1983009808
    %v9004 = vunpack.c.0.s8 %v9003
    %v9005 = vlaneseq
    %v9006 = vshrl.u32 %v9005, 7
    %v9007 = vsub.s32 %v9004, %v9006
    %v9008 = vrot.slane %v8908, %v9007
    %v9009 = vcombine.high %v9008, %v9008
    %v9011 = vunpack.c.l.s4 1983009808
    %v9012 = vunpack.c.0.s8 %v9011
    %v9013 = vlaneseq
    %v9014 = vshrl.u32 %v9013, 7
    %v9015 = vsub.s32 %v9012, %v9014
    %v9016 = vrot.slane %v8909, %v9015
    %v9017 = vcombine.high %v9016, %v9016
    %vm9018 = vcmask 1042434
    %vm9019 = vmor %vm4398, %vm9018
    %vm9020 = vcmask 1044484
    %vm9021 = vmor %vm9019, %vm9020
    %vm9022 = vcmask 1046534
    %vm9023 = vmor %vm9021, %vm9022
    %v9024 = vrot.slane %v8928, 7
    %v9025 = vrot.slane %v9024, 2
    %v9026 = vrot.slane %v8929, 7
    %v9027 = vsel %vm9023, %v9025, %v9026
    %v9028 = vrot.slane %v8936, 7
    %v9029 = vrot.slane %v9028, 2
    %v9030 = vrot.slane %v8937, 7
    %v9031 = vsel %vm9023, %v9029, %v9030
    %v9032 = vrot.slane %v8944, 7
    %v9033 = vrot.slane %v9032, 2
    %v9034 = vrot.slane %v8945, 7
    %v9035 = vsel %vm9023, %v9033, %v9034
    %v9036 = vrot.slane %v8952, 7
    %v9037 = vrot.slane %v9036, 2
    %v9038 = vrot.slane %v8953, 7
    %v9039 = vsel %vm9023, %v9037, %v9038
    %v9040 = vrot.slane %v8960, 7
    %v9041 = vrot.slane %v9040, 2
    %v9042 = vrot.slane %v8961, 7
    %v9043 = vsel %vm9023, %v9041, %v9042
    %v9044 = vrot.slane %v8968, 7
    %v9045 = vrot.slane %v9044, 2
    %v9046 = vrot.slane %v8969, 7
    %v9047 = vsel %vm9023, %v9045, %v9046
    %v9048 = vrot.slane %v8976, 7
    %v9049 = vrot.slane %v9048, 2
    %v9050 = vrot.slane %v8977, 7
    %v9051 = vsel %vm9023, %v9049, %v9050
    %v9052 = vrot.slane %v8984, 7
    %v9053 = vrot.slane %v9052, 2
    %v9054 = vrot.slane %v8985, 7
    %v9055 = vsel %vm9023, %v9053, %v9054
    %v9056 = vrot.slane %v8992, 7
    %v9057 = vrot.slane %v9056, 2
    %v9058 = vrot.slane %v8993, 7
    %v9059 = vsel %vm9023, %v9057, %v9058
    %v9060 = vrot.slane %v9000, 7
    %v9061 = vrot.slane %v9060, 2
    %v9062 = vrot.slane %v9001, 7
    %v9063 = vsel %vm9023, %v9061, %v9062
    %v9064 = vrot.slane %v9008, 7
    %v9065 = vrot.slane %v9064, 2
    %v9066 = vrot.slane %v9009, 7
    %v9067 = vsel %vm9023, %v9065, %v9066
    %v9068 = vrot.slane %v9016, 7
    %v9069 = vrot.slane %v9068, 2
    %v9070 = vrot.slane %v9017, 7
    %v9071 = vsel %vm9023, %v9069, %v9070
    %s9072 = scalar_lea.vmem %s2, 704
    %v9073 = vld [vmem:[%s9072] sm:$0xf]
    %v9074 = vld [vmem:[%s9072 + $0x4] sm:$0xf]
    %v9075 = vld [vmem:[%s9072 + $0x8] sm:$0xf]
    %v9076 = vld [vmem:[%s9072 + $0xc] sm:$0xf]
    %v9077 = vld [vmem:[%s9072 + $0x10] sm:$0xf]
    %v9078 = vld [vmem:[%s9072 + $0x14] sm:$0xf]
    %v9079 = vld [vmem:[%s9072 + $0x18] sm:$0xf]
    %v9080 = vld [vmem:[%s9072 + $0x1c] sm:$0xf]
    %v9081 = vld [vmem:[%s9072 + $0x20] sm:$0xf]
    %v9082 = vld [vmem:[%s9072 + $0x24] sm:$0xf]
    %v9083 = vld [vmem:[%s9072 + $0x28] sm:$0xf]
    %v9084 = vld [vmem:[%s9072 + $0x2c] sm:$0xf]
    %v9085 = vld [vmem:[%s9072 + $0x30] sm:$0xf]
    %v9086 = vld [vmem:[%s9072 + $0x34] sm:$0xf]
    %v9087 = vld [vmem:[%s9072 + $0x38] sm:$0xf]
    %v9088 = vld [vmem:[%s9072 + $0x3c] sm:$0xf]
    %v9089 = vcombine.low %v9027, %v9031
    %v9090 = vcombine.low %v9035, %v9039
    %v9092 = vunpack.c.l.s4 1983009808
    %v9093 = vunpack.c.0.s8 %v9092
    %v9094 = vlaneseq
    %v9095 = vshrl.u32 %v9094, 7
    %v9096 = vsub.s32 %v9093, %v9095
    %v9097 = vrot.slane %v9089, %v9096
    %v9099 = vunpack.c.l.s4 1983009808
    %v9100 = vunpack.c.0.s8 %v9099
    %v9101 = vlaneseq
    %v9102 = vshrl.u32 %v9101, 7
    %v9103 = vsub.s32 %v9100, %v9102
    %v9104 = vrot.slane %v9090, %v9103
    %v9105 = vcombine.low %v9097, %v9104
    %v9106 = vcombine.low %v9051, %v9055
    %v9107 = vcombine.low %v9059, %v9063
    %v9109 = vunpack.c.l.s4 1983009808
    %v9110 = vunpack.c.0.s8 %v9109
    %v9111 = vlaneseq
    %v9112 = vshrl.u32 %v9111, 7
    %v9113 = vsub.s32 %v9110, %v9112
    %v9114 = vrot.slane %v9106, %v9113
    %v9116 = vunpack.c.l.s4 1983009808
    %v9117 = vunpack.c.0.s8 %v9116
    %v9118 = vlaneseq
    %v9119 = vshrl.u32 %v9118, 7
    %v9120 = vsub.s32 %v9117, %v9119
    %v9121 = vrot.slane %v9107, %v9120
    %v9122 = vcombine.low %v9114, %v9121
    %v9141 = vunpack.c.l.b16 %v9073
    %v9142 = vunpack.c.l.b16 %v9074
    %v9143 = vunpack.c.l.b16 %v9075
    %v9144 = vunpack.c.l.b16 %v9076
    %v9145 = vunpack.c.l.b16 %v9077
    %v9146 = vunpack.c.l.b16 %v9078
    %v9147 = vunpack.c.l.b16 %v9079
    %v9148 = vunpack.c.l.b16 %v9080
    %v9149 = vunpack.c.l.b16 %v9081
    %v9150 = vunpack.c.l.b16 %v9082
    %v9151 = vunpack.c.l.b16 %v9083
    %v9152 = vunpack.c.l.b16 %v9084
    %v9153 = vunpack.c.l.b16 %v9085
    %v9154 = vunpack.c.l.b16 %v9086
    %v9155 = vunpack.c.l.b16 %v9087
    %v9156 = vunpack.c.l.b16 %v9088
    %v9157 = vpack.c.b16 %v9142, %v9141
    %v9158 = vpack.c.b16 %v9144, %v9143
    %v9159 = vpack.c.b16 %v9146, %v9145
    %v9160 = vpack.c.b16 %v9148, %v9147
    %v9161 = vpack.c.b16 %v9150, %v9149
    %v9162 = vpack.c.b16 %v9152, %v9151
    %v9163 = vpack.c.b16 %v9154, %v9153
    %v9164 = vpack.c.b16 %v9156, %v9155
    %9173 = vmatprep.subr.bf16.mxu0 0
    %9174 = vmatpush1.bf16.msra.mxu0 %v9164
    %9175 = vmatprep.subr.bf16.mxu0 0
    %9176 = vmatpush1.bf16.msra.mxu0 %v9163
    %9177 = vmatprep.subr.bf16.mxu0 0
    %9178 = vmatpush1.bf16.msra.mxu0 %v9162
    %9179 = vmatprep.subr.bf16.mxu0 0
    %9180 = vmatpush1.bf16.msra.mxu0 %v9161
    %9181 = vmatprep.subr.bf16.mxu0 0
    %9182 = vmatpush1.bf16.msra.mxu0 %v9160
    %9183 = vmatprep.subr.bf16.mxu0 0
    %9184 = vmatpush1.bf16.msra.mxu0 %v9159
    %9185 = vmatprep.subr.bf16.mxu0 0
    %9186 = vmatpush1.bf16.msra.mxu0 %v9158
    %9187 = vmatprep.subr.bf16.mxu0 0
    %9188 = vmatpush1.bf16.msra.mxu0 %v9157
    %9189 = vmatprep.subr.bf16.mxu0 0
    %9190 = vmatpush2.bf16.msra.mxu0 0
    %9191 = vmatprep.subr.bf16.mxu0 0
    %9192 = vmatpush2.bf16.msra.mxu0 0
    %9193 = vmatprep.subr.bf16.mxu0 0
    %9194 = vmatpush2.bf16.msra.mxu0 0
    %9195 = vmatprep.subr.bf16.mxu0 0
    %9196 = vmatpush2.bf16.msra.mxu0 0
    %9197 = vmatprep.subr.bf16.mxu0 0
    %9198 = vmatpush2.bf16.msra.mxu0 0
    %9199 = vmatprep.subr.bf16.mxu0 0
    %9200 = vmatpush2.bf16.msra.mxu0 0
    %9201 = vmatprep.subr.bf16.mxu0 0
    %9202 = vmatpush2.bf16.msra.mxu0 0
    %9203 = vmatprep.subr.bf16.mxu0 0
    %9204 = vmatpush2.bf16.msra.mxu0 0
    %9205 = vmatprep.mubr.bf16.mxu0 0
    %9206 = vmatmul.mubr.bf16.gmra.mxu0 %v9105
    %v9207 = vpop.f32.mrf.mxu0
    %v9208 = vadd.f32 0.0, %v9207
    %v9209 = vpop.f32.mrf.mxu0
    %v9210 = vpop.f32.mrf.mxu0
    %v9211 = vadd.f32 0.0, %v9210
    %v9212 = vpop.f32.mrf.mxu0
    %9213 = vmatprep.mubr.bf16.mxu0 0
    %9214 = vmatmul.mubr.bf16.gmra.mxu0 %v9122
    %v9215 = vpop.f32.mrf.mxu0
    %v9216 = vadd.f32 0.0, %v9215
    %v9217 = vpop.f32.mrf.mxu0
    %v9218 = vpop.f32.mrf.mxu0
    %v9219 = vadd.f32 0.0, %v9218
    %v9220 = vpop.f32.mrf.mxu0
    %9221 = vdwg.mxu0
    %v9222 = vadd.f32 %v8894, %v9208
    %v9223 = vadd.f32 %v8895, %v9211
    %v9224 = vadd.f32 %v8896, %v9216
    %v9225 = vadd.f32 %v8897, %v9219
    %s9226 = scalar_lea.vmem %s2, 896
    %v9227 = vld [vmem:[%s9226] sm:$0xf]
    %v9228 = vld [vmem:[%s9226 + $0x4] sm:$0xf]
    %v9229 = vld [vmem:[%s9226 + $0x8] sm:$0xf]
    %v9230 = vld [vmem:[%s9226 + $0xc] sm:$0xf]
    %v9231 = vld [vmem:[%s9226 + $0x10] sm:$0xf]
    %v9232 = vld [vmem:[%s9226 + $0x14] sm:$0xf]
    %v9233 = vld [vmem:[%s9226 + $0x18] sm:$0xf]
    %v9234 = vld [vmem:[%s9226 + $0x1c] sm:$0xf]
    %v9235 = vld [vmem:[%s9226 + $0x20] sm:$0xf]
    %v9236 = vld [vmem:[%s9226 + $0x24] sm:$0xf]
    %v9237 = vld [vmem:[%s9226 + $0x28] sm:$0xf]
    %v9238 = vld [vmem:[%s9226 + $0x2c] sm:$0xf]
    %v9239 = vld [vmem:[%s9226 + $0x30] sm:$0xf]
    %v9240 = vld [vmem:[%s9226 + $0x34] sm:$0xf]
    %v9241 = vld [vmem:[%s9226 + $0x38] sm:$0xf]
    %v9242 = vld [vmem:[%s9226 + $0x3c] sm:$0xf]
    %v9243 = vcombine.low %v9031, %v9035
    %v9244 = vcombine.low %v9039, %v9043
    %v9246 = vunpack.c.l.s4 1983009808
    %v9247 = vunpack.c.0.s8 %v9246
    %v9248 = vlaneseq
    %v9249 = vshrl.u32 %v9248, 7
    %v9250 = vsub.s32 %v9247, %v9249
    %v9251 = vrot.slane %v9243, %v9250
    %v9253 = vunpack.c.l.s4 1983009808
    %v9254 = vunpack.c.0.s8 %v9253
    %v9255 = vlaneseq
    %v9256 = vshrl.u32 %v9255, 7
    %v9257 = vsub.s32 %v9254, %v9256
    %v9258 = vrot.slane %v9244, %v9257
    %v9259 = vcombine.low %v9251, %v9258
    %v9260 = vcombine.low %v9055, %v9059
    %v9261 = vcombine.low %v9063, %v9067
    %v9263 = vunpack.c.l.s4 1983009808
    %v9264 = vunpack.c.0.s8 %v9263
    %v9265 = vlaneseq
    %v9266 = vshrl.u32 %v9265, 7
    %v9267 = vsub.s32 %v9264, %v9266
    %v9268 = vrot.slane %v9260, %v9267
    %v9270 = vunpack.c.l.s4 1983009808
    %v9271 = vunpack.c.0.s8 %v9270
    %v9272 = vlaneseq
    %v9273 = vshrl.u32 %v9272, 7
    %v9274 = vsub.s32 %v9271, %v9273
    %v9275 = vrot.slane %v9261, %v9274
    %v9276 = vcombine.low %v9268, %v9275
    %v9295 = vunpack.c.l.b16 %v9227
    %v9296 = vunpack.c.l.b16 %v9228
    %v9297 = vunpack.c.l.b16 %v9229
    %v9298 = vunpack.c.l.b16 %v9230
    %v9299 = vunpack.c.l.b16 %v9231
    %v9300 = vunpack.c.l.b16 %v9232
    %v9301 = vunpack.c.l.b16 %v9233
    %v9302 = vunpack.c.l.b16 %v9234
    %v9303 = vunpack.c.l.b16 %v9235
    %v9304 = vunpack.c.l.b16 %v9236
    %v9305 = vunpack.c.l.b16 %v9237
    %v9306 = vunpack.c.l.b16 %v9238
    %v9307 = vunpack.c.l.b16 %v9239
    %v9308 = vunpack.c.l.b16 %v9240
    %v9309 = vunpack.c.l.b16 %v9241
    %v9310 = vunpack.c.l.b16 %v9242
    %v9311 = vpack.c.b16 %v9296, %v9295
    %v9312 = vpack.c.b16 %v9298, %v9297
    %v9313 = vpack.c.b16 %v9300, %v9299
    %v9314 = vpack.c.b16 %v9302, %v9301
    %v9315 = vpack.c.b16 %v9304, %v9303
    %v9316 = vpack.c.b16 %v9306, %v9305
    %v9317 = vpack.c.b16 %v9308, %v9307
    %v9318 = vpack.c.b16 %v9310, %v9309
    %9327 = vmatprep.subr.bf16.mxu0 0
    %9328 = vmatpush1.bf16.msra.mxu0 %v9318
    %9329 = vmatprep.subr.bf16.mxu0 0
    %9330 = vmatpush1.bf16.msra.mxu0 %v9317
    %9331 = vmatprep.subr.bf16.mxu0 0
    %9332 = vmatpush1.bf16.msra.mxu0 %v9316
    %9333 = vmatprep.subr.bf16.mxu0 0
    %9334 = vmatpush1.bf16.msra.mxu0 %v9315
    %9335 = vmatprep.subr.bf16.mxu0 0
    %9336 = vmatpush1.bf16.msra.mxu0 %v9314
    %9337 = vmatprep.subr.bf16.mxu0 0
    %9338 = vmatpush1.bf16.msra.mxu0 %v9313
    %9339 = vmatprep.subr.bf16.mxu0 0
    %9340 = vmatpush1.bf16.msra.mxu0 %v9312
    %9341 = vmatprep.subr.bf16.mxu0 0
    %9342 = vmatpush1.bf16.msra.mxu0 %v9311
    %9343 = vmatprep.subr.bf16.mxu0 0
    %9344 = vmatpush2.bf16.msra.mxu0 0
    %9345 = vmatprep.subr.bf16.mxu0 0
    %9346 = vmatpush2.bf16.msra.mxu0 0
    %9347 = vmatprep.subr.bf16.mxu0 0
    %9348 = vmatpush2.bf16.msra.mxu0 0
    %9349 = vmatprep.subr.bf16.mxu0 0
    %9350 = vmatpush2.bf16.msra.mxu0 0
    %9351 = vmatprep.subr.bf16.mxu0 0
    %9352 = vmatpush2.bf16.msra.mxu0 0
    %9353 = vmatprep.subr.bf16.mxu0 0
    %9354 = vmatpush2.bf16.msra.mxu0 0
    %9355 = vmatprep.subr.bf16.mxu0 0
    %9356 = vmatpush2.bf16.msra.mxu0 0
    %9357 = vmatprep.subr.bf16.mxu0 0
    %9358 = vmatpush2.bf16.msra.mxu0 0
    %9359 = vmatprep.mubr.bf16.mxu0 0
    %9360 = vmatmul.mubr.bf16.gmra.mxu0 %v9259
    %v9361 = vpop.f32.mrf.mxu0
    %v9362 = vadd.f32 0.0, %v9361
    %v9363 = vpop.f32.mrf.mxu0
    %v9364 = vpop.f32.mrf.mxu0
    %v9365 = vadd.f32 0.0, %v9364
    %v9366 = vpop.f32.mrf.mxu0
    %9367 = vmatprep.mubr.bf16.mxu0 0
    %9368 = vmatmul.mubr.bf16.gmra.mxu0 %v9276
    %v9369 = vpop.f32.mrf.mxu0
    %v9370 = vadd.f32 0.0, %v9369
    %v9371 = vpop.f32.mrf.mxu0
    %v9372 = vpop.f32.mrf.mxu0
    %v9373 = vadd.f32 0.0, %v9372
    %v9374 = vpop.f32.mrf.mxu0
    %9375 = vdwg.mxu0
    %v9376 = vadd.f32 %v9222, %v9362
    %v9377 = vadd.f32 %v9223, %v9365
    %v9378 = vadd.f32 %v9224, %v9370
    %v9379 = vadd.f32 %v9225, %v9373
    %s9380 = scalar_lea.vmem %s2, 1088
    %v9381 = vld [vmem:[%s9380] sm:$0xf]
    %v9382 = vld [vmem:[%s9380 + $0x4] sm:$0xf]
    %v9383 = vld [vmem:[%s9380 + $0x8] sm:$0xf]
    %v9384 = vld [vmem:[%s9380 + $0xc] sm:$0xf]
    %v9385 = vld [vmem:[%s9380 + $0x10] sm:$0xf]
    %v9386 = vld [vmem:[%s9380 + $0x14] sm:$0xf]
    %v9387 = vld [vmem:[%s9380 + $0x18] sm:$0xf]
    %v9388 = vld [vmem:[%s9380 + $0x1c] sm:$0xf]
    %v9389 = vld [vmem:[%s9380 + $0x20] sm:$0xf]
    %v9390 = vld [vmem:[%s9380 + $0x24] sm:$0xf]
    %v9391 = vld [vmem:[%s9380 + $0x28] sm:$0xf]
    %v9392 = vld [vmem:[%s9380 + $0x2c] sm:$0xf]
    %v9393 = vld [vmem:[%s9380 + $0x30] sm:$0xf]
    %v9394 = vld [vmem:[%s9380 + $0x34] sm:$0xf]
    %v9395 = vld [vmem:[%s9380 + $0x38] sm:$0xf]
    %v9396 = vld [vmem:[%s9380 + $0x3c] sm:$0xf]
    %v9397 = vcombine.low %v9043, %v9047
    %v9399 = vunpack.c.l.s4 1983009808
    %v9400 = vunpack.c.0.s8 %v9399
    %v9401 = vlaneseq
    %v9402 = vshrl.u32 %v9401, 7
    %v9403 = vsub.s32 %v9400, %v9402
    %v9404 = vrot.slane %v9397, %v9403
    %v9405 = vcombine.low %v9104, %v9404
    %v9406 = vcombine.low %v9067, %v9071
    %v9408 = vunpack.c.l.s4 1983009808
    %v9409 = vunpack.c.0.s8 %v9408
    %v9410 = vlaneseq
    %v9411 = vshrl.u32 %v9410, 7
    %v9412 = vsub.s32 %v9409, %v9411
    %v9413 = vrot.slane %v9406, %v9412
    %v9414 = vcombine.low %v9121, %v9413
    %v9433 = vunpack.c.l.b16 %v9381
    %v9434 = vunpack.c.l.b16 %v9382
    %v9435 = vunpack.c.l.b16 %v9383
    %v9436 = vunpack.c.l.b16 %v9384
    %v9437 = vunpack.c.l.b16 %v9385
    %v9438 = vunpack.c.l.b16 %v9386
    %v9439 = vunpack.c.l.b16 %v9387
    %v9440 = vunpack.c.l.b16 %v9388
    %v9441 = vunpack.c.l.b16 %v9389
    %v9442 = vunpack.c.l.b16 %v9390
    %v9443 = vunpack.c.l.b16 %v9391
    %v9444 = vunpack.c.l.b16 %v9392
    %v9445 = vunpack.c.l.b16 %v9393
    %v9446 = vunpack.c.l.b16 %v9394
    %v9447 = vunpack.c.l.b16 %v9395
    %v9448 = vunpack.c.l.b16 %v9396
    %v9449 = vpack.c.b16 %v9434, %v9433
    %v9450 = vpack.c.b16 %v9436, %v9435
    %v9451 = vpack.c.b16 %v9438, %v9437
    %v9452 = vpack.c.b16 %v9440, %v9439
    %v9453 = vpack.c.b16 %v9442, %v9441
    %v9454 = vpack.c.b16 %v9444, %v9443
    %v9455 = vpack.c.b16 %v9446, %v9445
    %v9456 = vpack.c.b16 %v9448, %v9447
    %9465 = vmatprep.subr.bf16.mxu0 0
    %9466 = vmatpush1.bf16.msra.mxu0 %v9456
    %9467 = vmatprep.subr.bf16.mxu0 0
    %9468 = vmatpush1.bf16.msra.mxu0 %v9455
    %9469 = vmatprep.subr.bf16.mxu0 0
    %9470 = vmatpush1.bf16.msra.mxu0 %v9454
    %9471 = vmatprep.subr.bf16.mxu0 0
    %9472 = vmatpush1.bf16.msra.mxu0 %v9453
    %9473 = vmatprep.subr.bf16.mxu0 0
    %9474 = vmatpush1.bf16.msra.mxu0 %v9452
    %9475 = vmatprep.subr.bf16.mxu0 0
    %9476 = vmatpush1.bf16.msra.mxu0 %v9451
    %9477 = vmatprep.subr.bf16.mxu0 0
    %9478 = vmatpush1.bf16.msra.mxu0 %v9450
    %9479 = vmatprep.subr.bf16.mxu0 0
    %9480 = vmatpush1.bf16.msra.mxu0 %v9449
    %9481 = vmatprep.subr.bf16.mxu0 0
    %9482 = vmatpush2.bf16.msra.mxu0 0
    %9483 = vmatprep.subr.bf16.mxu0 0
    %9484 = vmatpush2.bf16.msra.mxu0 0
    %9485 = vmatprep.subr.bf16.mxu0 0
    %9486 = vmatpush2.bf16.msra.mxu0 0
    %9487 = vmatprep.subr.bf16.mxu0 0
    %9488 = vmatpush2.bf16.msra.mxu0 0
    %9489 = vmatprep.subr.bf16.mxu0 0
    %9490 = vmatpush2.bf16.msra.mxu0 0
    %9491 = vmatprep.subr.bf16.mxu0 0
    %9492 = vmatpush2.bf16.msra.mxu0 0
    %9493 = vmatprep.subr.bf16.mxu0 0
    %9494 = vmatpush2.bf16.msra.mxu0 0
    %9495 = vmatprep.subr.bf16.mxu0 0
    %9496 = vmatpush2.bf16.msra.mxu0 0
    %9497 = vmatprep.mubr.bf16.mxu0 0
    %9498 = vmatmul.mubr.bf16.gmra.mxu0 %v9405
    %v9499 = vpop.f32.mrf.mxu0
    %v9500 = vadd.f32 0.0, %v9499
    %v9501 = vpop.f32.mrf.mxu0
    %v9502 = vpop.f32.mrf.mxu0
    %v9503 = vadd.f32 0.0, %v9502
    %v9504 = vpop.f32.mrf.mxu0
    %9505 = vmatprep.mubr.bf16.mxu0 0
    %9506 = vmatmul.mubr.bf16.gmra.mxu0 %v9414
    %v9507 = vpop.f32.mrf.mxu0
    %v9508 = vadd.f32 0.0, %v9507
    %v9509 = vpop.f32.mrf.mxu0
    %v9510 = vpop.f32.mrf.mxu0
    %v9511 = vadd.f32 0.0, %v9510
    %v9512 = vpop.f32.mrf.mxu0
    %9513 = vdwg.mxu0
    %v9514 = vadd.f32 %v9376, %v9500
    %v9515 = vadd.f32 %v9377, %v9503
    %v9516 = vadd.f32 %v9378, %v9508
    %v9517 = vadd.f32 %v9379, %v9511
    %s9518 = scalar_lea.vmem %s3, 4
    %v9519 = vld [vmem:[%s9518] sm:$0x1]
    %v9520 = vlaneseq
    %v9521 = vshrl.u32 %v9520, 7
    %v9522 = vsub.s32 0, %v9521
    %v9523 = vrot.slane %v9519, %v9522
    %v9524 = vmul.f32 %v9514, %v9523
    %v9525 = vmul.f32 %v9515, %v9523
    %v9526 = vmul.f32 %v9516, %v9523
    %v9527 = vmul.f32 %v9517, %v9523
    %v9528 = vld [vmem:[%s9518 + $0x1] sm:$0x1]
    %v9529 = vlaneseq
    %v9530 = vshrl.u32 %v9529, 7
    %v9531 = vsub.s32 0, %v9530
    %v9532 = vrot.slane %v9528, %v9531
    %v9533 = vadd.f32 %v9524, %v9532
    %v9534 = vadd.f32 %v9525, %v9532
    %v9535 = vadd.f32 %v9526, %v9532
    %v9536 = vadd.f32 %v9527, %v9532
    %v9537 = vmax.f32 %v9533, 0.0
    %v9538 = vmax.f32 %v9534, 0.0
    %v9539 = vmax.f32 %v9535, 0.0
    %v9540 = vmax.f32 %v9536, 0.0
    %v9545 = vcombine.high %v9537, %v9537
    %v9547 = vunpack.c.l.s4 1983009808
    %v9548 = vunpack.c.0.s8 %v9547
    %v9549 = vlaneseq
    %v9550 = vshrl.u32 %v9549, 7
    %v9551 = vsub.s32 %v9548, %v9550
    %v9552 = vrot.slane %v9537, %v9551
    %v9554 = vunpack.c.l.s4 1983009808
    %v9555 = vunpack.c.0.s8 %v9554
    %v9556 = vlaneseq
    %v9557 = vshrl.u32 %v9556, 7
    %v9558 = vsub.s32 %v9555, %v9557
    %v9559 = vrot.slane %v9545, %v9558
    %v9560 = vcombine.high %v9552, %v9552
    %v9561 = vcombine.high %v9559, %v9559
    %v9562 = vcombine.high %v9538, %v9538
    %v9564 = vunpack.c.l.s4 1983009808
    %v9565 = vunpack.c.0.s8 %v9564
    %v9566 = vlaneseq
    %v9567 = vshrl.u32 %v9566, 7
    %v9568 = vsub.s32 %v9565, %v9567
    %v9569 = vrot.slane %v9538, %v9568
    %v9571 = vunpack.c.l.s4 1983009808
    %v9572 = vunpack.c.0.s8 %v9571
    %v9573 = vlaneseq
    %v9574 = vshrl.u32 %v9573, 7
    %v9575 = vsub.s32 %v9572, %v9574
    %v9576 = vrot.slane %v9562, %v9575
    %v9577 = vcombine.high %v9569, %v9569
    %v9578 = vcombine.high %v9576, %v9576
    %v9579 = vcombine.high %v9539, %v9539
    %v9581 = vunpack.c.l.s4 1983009808
    %v9582 = vunpack.c.0.s8 %v9581
    %v9583 = vlaneseq
    %v9584 = vshrl.u32 %v9583, 7
    %v9585 = vsub.s32 %v9582, %v9584
    %v9586 = vrot.slane %v9539, %v9585
    %v9588 = vunpack.c.l.s4 1983009808
    %v9589 = vunpack.c.0.s8 %v9588
    %v9590 = vlaneseq
    %v9591 = vshrl.u32 %v9590, 7
    %v9592 = vsub.s32 %v9589, %v9591
    %v9593 = vrot.slane %v9579, %v9592
    %v9594 = vcombine.high %v9586, %v9586
    %v9595 = vcombine.high %v9593, %v9593
    %v9596 = vcombine.high %v9540, %v9540
    %v9598 = vunpack.c.l.s4 1983009808
    %v9599 = vunpack.c.0.s8 %v9598
    %v9600 = vlaneseq
    %v9601 = vshrl.u32 %v9600, 7
    %v9602 = vsub.s32 %v9599, %v9601
    %v9603 = vrot.slane %v9540, %v9602
    %v9605 = vunpack.c.l.s4 1983009808
    %v9606 = vunpack.c.0.s8 %v9605
    %v9607 = vlaneseq
    %v9608 = vshrl.u32 %v9607, 7
    %v9609 = vsub.s32 %v9606, %v9608
    %v9610 = vrot.slane %v9596, %v9609
    %v9611 = vcombine.high %v9603, %v9603
    %v9612 = vcombine.high %v9610, %v9610
    %v9629 = vrot.slane %v9552, 7
    %v9630 = vrot.slane %v9629, 2
    %v9631 = vrot.slane %v9560, 7
    %v9632 = vrot.slane %v9631, 2
    %v9633 = vrot.slane %v9559, 7
    %v9634 = vrot.slane %v9633, 2
    %v9635 = vrot.slane %v9561, 7
    %v9636 = vrot.slane %v9635, 2
    %v9637 = vrot.slane %v9569, 7
    %v9638 = vrot.slane %v9637, 2
    %v9639 = vrot.slane %v9577, 7
    %v9640 = vrot.slane %v9639, 2
    %v9641 = vrot.slane %v9576, 7
    %v9642 = vrot.slane %v9641, 2
    %v9643 = vrot.slane %v9578, 7
    %v9644 = vrot.slane %v9643, 2
    %v9645 = vrot.slane %v9586, 7
    %v9646 = vrot.slane %v9645, 2
    %v9647 = vrot.slane %v9594, 7
    %v9648 = vrot.slane %v9647, 2
    %v9649 = vrot.slane %v9593, 7
    %v9650 = vrot.slane %v9649, 2
    %v9651 = vrot.slane %v9595, 7
    %v9652 = vrot.slane %v9651, 2
    %v9653 = vrot.slane %v9603, 7
    %v9654 = vrot.slane %v9653, 2
    %v9655 = vrot.slane %v9611, 7
    %v9656 = vrot.slane %v9655, 2
    %v9657 = vrot.slane %v9610, 7
    %v9658 = vrot.slane %v9657, 2
    %v9659 = vrot.slane %v9612, 7
    %v9660 = vrot.slane %v9659, 2
    %v9677 = vmax.f32 %v9552, %v9630
    %v9678 = vmax.f32 %v9560, %v9632
    %v9679 = vmax.f32 %v9559, %v9634
    %v9680 = vmax.f32 %v9561, %v9636
    %v9681 = vmax.f32 %v9569, %v9638
    %v9682 = vmax.f32 %v9577, %v9640
    %v9683 = vmax.f32 %v9576, %v9642
    %v9684 = vmax.f32 %v9578, %v9644
    %v9685 = vmax.f32 %v9586, %v9646
    %v9686 = vmax.f32 %v9594, %v9648
    %v9687 = vmax.f32 %v9593, %v9650
    %v9688 = vmax.f32 %v9595, %v9652
    %v9689 = vmax.f32 %v9603, %v9654
    %v9690 = vmax.f32 %v9611, %v9656
    %v9691 = vmax.f32 %v9610, %v9658
    %v9692 = vmax.f32 %v9612, %v9660
    %v9693 = vmax.f32 %v9677, %v9679
    %v9694 = vmax.f32 %v9678, %v9680
    %v9695 = vmax.f32 %v9681, %v9683
    %v9696 = vmax.f32 %v9682, %v9684
    %v9697 = vmax.f32 %v9685, %v9687
    %v9698 = vmax.f32 %v9686, %v9688
    %v9699 = vmax.f32 %v9689, %v9691
    %v9700 = vmax.f32 %v9690, %v9692
    %v9701 = vpack.c.bf16 %v9693, %v9693
    %v9702 = vpack.c.bf16 %v9694, %v9694
    %v9703 = vpack.c.bf16 %v9695, %v9695
    %v9704 = vpack.c.bf16 %v9696, %v9696
    %v9705 = vpack.c.bf16 %v9697, %v9697
    %v9706 = vpack.c.bf16 %v9698, %v9698
    %v9707 = vpack.c.bf16 %v9699, %v9699
    %v9708 = vpack.c.bf16 %v9700, %v9700
    %v9718 = vunpack.c.l.s4 1983009808
    %v9719 = vunpack.c.0.s8 %v9718
    %v9720 = vlaneseq
    %v9721 = vshrl.u32 %v9720, 7
    %v9722 = vsub.s32 %v9719, %v9721
    %v9723 = vrot.slane %v9701, %v9722
    %v9725 = vunpack.c.l.s4 1983009808
    %v9726 = vunpack.c.0.s8 %v9725
    %v9727 = vlaneseq
    %v9728 = vshrl.u32 %v9727, 7
    %v9729 = vsub.s32 %v9726, %v9728
    %v9730 = vrot.slane %v9702, %v9729
    %v9732 = vunpack.c.l.s4 1983009808
    %v9733 = vunpack.c.0.s8 %v9732
    %v9734 = vlaneseq
    %v9735 = vshrl.u32 %v9734, 7
    %v9736 = vsub.s32 %v9733, %v9735
    %v9737 = vrot.slane %v9703, %v9736
    %v9739 = vunpack.c.l.s4 1983009808
    %v9740 = vunpack.c.0.s8 %v9739
    %v9741 = vlaneseq
    %v9742 = vshrl.u32 %v9741, 7
    %v9743 = vsub.s32 %v9740, %v9742
    %v9744 = vrot.slane %v9704, %v9743
    %v9746 = vunpack.c.l.s4 1983009808
    %v9747 = vunpack.c.0.s8 %v9746
    %v9748 = vlaneseq
    %v9749 = vshrl.u32 %v9748, 7
    %v9750 = vsub.s32 %v9747, %v9749
    %v9751 = vrot.slane %v9705, %v9750
    %v9753 = vunpack.c.l.s4 1983009808
    %v9754 = vunpack.c.0.s8 %v9753
    %v9755 = vlaneseq
    %v9756 = vshrl.u32 %v9755, 7
    %v9757 = vsub.s32 %v9754, %v9756
    %v9758 = vrot.slane %v9706, %v9757
    %v9760 = vunpack.c.l.s4 1983009808
    %v9761 = vunpack.c.0.s8 %v9760
    %v9762 = vlaneseq
    %v9763 = vshrl.u32 %v9762, 7
    %v9764 = vsub.s32 %v9761, %v9763
    %v9765 = vrot.slane %v9707, %v9764
    %v9767 = vunpack.c.l.s4 1983009808
    %v9768 = vunpack.c.0.s8 %v9767
    %v9769 = vlaneseq
    %v9770 = vshrl.u32 %v9769, 7
    %v9771 = vsub.s32 %v9768, %v9770
    %v9772 = vrot.slane %v9708, %v9771
    %v9774 = vunpack.c.l.s4 1983009808
    %v9775 = vunpack.c.0.s8 %v9774
    %v9776 = vlaneseq
    %v9777 = vshrl.u32 %v9776, 7
    %v9778 = vsub.s32 %v9775, %v9777
    %v9779 = vrot.slane %v9723, %v9778
    %v9781 = vunpack.c.l.s4 1983009808
    %v9782 = vunpack.c.0.s8 %v9781
    %v9783 = vlaneseq
    %v9784 = vshrl.u32 %v9783, 7
    %v9785 = vsub.s32 %v9782, %v9784
    %v9786 = vrot.slane %v9730, %v9785
    %v9788 = vunpack.c.l.s4 1983009808
    %v9789 = vunpack.c.0.s8 %v9788
    %v9790 = vlaneseq
    %v9791 = vshrl.u32 %v9790, 7
    %v9792 = vsub.s32 %v9789, %v9791
    %v9793 = vrot.slane %v9737, %v9792
    %v9795 = vunpack.c.l.s4 1983009808
    %v9796 = vunpack.c.0.s8 %v9795
    %v9797 = vlaneseq
    %v9798 = vshrl.u32 %v9797, 7
    %v9799 = vsub.s32 %v9796, %v9798
    %v9800 = vrot.slane %v9744, %v9799
    %v9802 = vunpack.c.l.s4 1983009808
    %v9803 = vunpack.c.0.s8 %v9802
    %v9804 = vlaneseq
    %v9805 = vshrl.u32 %v9804, 7
    %v9806 = vsub.s32 %v9803, %v9805
    %v9807 = vrot.slane %v9751, %v9806
    %v9809 = vunpack.c.l.s4 1983009808
    %v9810 = vunpack.c.0.s8 %v9809
    %v9811 = vlaneseq
    %v9812 = vshrl.u32 %v9811, 7
    %v9813 = vsub.s32 %v9810, %v9812
    %v9814 = vrot.slane %v9758, %v9813
    %v9816 = vunpack.c.l.s4 1983009808
    %v9817 = vunpack.c.0.s8 %v9816
    %v9818 = vlaneseq
    %v9819 = vshrl.u32 %v9818, 7
    %v9820 = vsub.s32 %v9817, %v9819
    %v9821 = vrot.slane %v9765, %v9820
    %v9823 = vunpack.c.l.s4 1983009808
    %v9824 = vunpack.c.0.s8 %v9823
    %v9825 = vlaneseq
    %v9826 = vshrl.u32 %v9825, 7
    %v9827 = vsub.s32 %v9824, %v9826
    %v9828 = vrot.slane %v9772, %v9827
    %v9829 = vunpack.c.l.b16 %v9779
    %v9830 = vunpack.c.l.b16 %v9786
    %v9831 = vunpack.c.l.b16 %v9793
    %v9832 = vunpack.c.l.b16 %v9800
    %v9833 = vunpack.c.l.b16 %v9807
    %v9834 = vunpack.c.l.b16 %v9814
    %v9835 = vunpack.c.l.b16 %v9821
    %v9836 = vunpack.c.l.b16 %v9828
    %v9837 = vrot.slane %v9829, 7
    %v9838 = vrot.slane %v9830, 6
    %v9839 = vsel %vm4115, %v9838, %v9837
    %v9840 = vrot.slane %v9831, 7
    %v9841 = vrot.slane %v9832, 6
    %v9842 = vsel %vm4115, %v9841, %v9840
    %v9843 = vrot.slane %v9833, 7
    %v9844 = vrot.slane %v9834, 6
    %v9845 = vsel %vm4115, %v9844, %v9843
    %v9846 = vrot.slane %v9835, 7
    %v9847 = vrot.slane %v9836, 6
    %v9848 = vsel %vm4115, %v9847, %v9846
    %v9849 = vpack.c.b16 %v9839, %v9839
    %v9850 = vpack.c.b16 %v9842, %v9842
    %v9851 = vpack.c.b16 %v9845, %v9845
    %v9852 = vpack.c.b16 %v9848, %v9848
    %v9854 = vunpack.c.l.s4 1983009808
    %v9855 = vunpack.c.0.s8 %v9854
    %v9856 = vlaneseq
    %v9857 = vshrl.u32 %v9856, 7
    %v9858 = vsub.s32 %v9855, %v9857
    %v9859 = vrot.slane %v9849, %v9858
    %v9861 = vunpack.c.l.s4 1983009808
    %v9862 = vunpack.c.0.s8 %v9861
    %v9863 = vlaneseq
    %v9864 = vshrl.u32 %v9863, 7
    %v9865 = vsub.s32 %v9862, %v9864
    %v9866 = vrot.slane %v9850, %v9865
    %v9868 = vunpack.c.l.s4 1983009808
    %v9869 = vunpack.c.0.s8 %v9868
    %v9870 = vlaneseq
    %v9871 = vshrl.u32 %v9870, 7
    %v9872 = vsub.s32 %v9869, %v9871
    %v9873 = vrot.slane %v9851, %v9872
    %v9875 = vunpack.c.l.s4 1983009808
    %v9876 = vunpack.c.0.s8 %v9875
    %v9877 = vlaneseq
    %v9878 = vshrl.u32 %v9877, 7
    %v9879 = vsub.s32 %v9876, %v9878
    %v9880 = vrot.slane %v9852, %v9879
    %s9885 = scalar_lea.vmem [#allocation4], 2
    %vm9886 = vcmask 1041408
    %vm9887 = vsmask.f32 1282
    %vm9888 = vmand %vm9886, %vm9887
    %v9889 = vld [vmem:[%s9885] sm:$0x3]
    %v9890 = vsel %vm9888, %v9859, %v9889
    %9891 = vst [vmem:[%s9885] sm:$0x3] %v9890
    %v9892 = vld [vmem:[%s9885 + $0x2] sm:$0x3]
    %v9893 = vsel %vm9888, %v9866, %v9892
    %9894 = vst [vmem:[%s9885 + $0x2] sm:$0x3] %v9893
    %v9895 = vld [vmem:[%s9885 + $0x8] sm:$0x3]
    %v9896 = vsel %vm9888, %v9873, %v9895
    %9897 = vst [vmem:[%s9885 + $0x8] sm:$0x3] %v9896
    %v9898 = vld [vmem:[%s9885 + $0xa] sm:$0x3]
    %v9899 = vsel %vm9888, %v9880, %v9898
    %9900 = vst [vmem:[%s9885 + $0xa] sm:$0x3] %v9899
    %v9901 = vld [vmem:[#allocation4] sm:$0x1]
    %v9902 = vld [vmem:[#allocation4 + $0x2] sm:$0x1]
    %v9903 = vld [vmem:[#allocation4 + $0x4] sm:$0x1]
    %v9904 = vld [vmem:[#allocation4 + $0x6] sm:$0x1]
    %v9905 = vld [vmem:[#allocation4 + $0x8] sm:$0x1]
    %v9906 = vld [vmem:[#allocation4 + $0xa] sm:$0x1]
    %v9907 = vld [vmem:[#allocation4 + $0xc] sm:$0x1]
    %v9908 = vld [vmem:[#allocation4 + $0xe] sm:$0x1]
    %s9909 = scalar_lea.vmem %s2, 1152
    %v9910 = vld [vmem:[%s9909] sm:$0xf]
    %v9911 = vld [vmem:[%s9909 + $0x4] sm:$0xf]
    %v9912 = vld [vmem:[%s9909 + $0x8] sm:$0xf]
    %v9913 = vld [vmem:[%s9909 + $0xc] sm:$0xf]
    %v9914 = vld [vmem:[%s9909 + $0x10] sm:$0xf]
    %v9915 = vld [vmem:[%s9909 + $0x14] sm:$0xf]
    %v9916 = vld [vmem:[%s9909 + $0x18] sm:$0xf]
    %v9917 = vld [vmem:[%s9909 + $0x1c] sm:$0xf]
    %v9918 = vld [vmem:[%s9909 + $0x20] sm:$0xf]
    %v9919 = vld [vmem:[%s9909 + $0x24] sm:$0xf]
    %v9920 = vld [vmem:[%s9909 + $0x28] sm:$0xf]
    %v9921 = vld [vmem:[%s9909 + $0x2c] sm:$0xf]
    %v9922 = vld [vmem:[%s9909 + $0x30] sm:$0xf]
    %v9923 = vld [vmem:[%s9909 + $0x34] sm:$0xf]
    %v9924 = vld [vmem:[%s9909 + $0x38] sm:$0xf]
    %v9925 = vld [vmem:[%s9909 + $0x3c] sm:$0xf]
    %s9926 = scalar_lea.vmem %s2, 1344
    %v9927 = vld [vmem:[%s9926] sm:$0xf]
    %v9928 = vld [vmem:[%s9926 + $0x4] sm:$0xf]
    %v9929 = vld [vmem:[%s9926 + $0x8] sm:$0xf]
    %v9930 = vld [vmem:[%s9926 + $0xc] sm:$0xf]
    %v9931 = vld [vmem:[%s9926 + $0x10] sm:$0xf]
    %v9932 = vld [vmem:[%s9926 + $0x14] sm:$0xf]
    %v9933 = vld [vmem:[%s9926 + $0x18] sm:$0xf]
    %v9934 = vld [vmem:[%s9926 + $0x1c] sm:$0xf]
    %v9935 = vld [vmem:[%s9926 + $0x20] sm:$0xf]
    %v9936 = vld [vmem:[%s9926 + $0x24] sm:$0xf]
    %v9937 = vld [vmem:[%s9926 + $0x28] sm:$0xf]
    %v9938 = vld [vmem:[%s9926 + $0x2c] sm:$0xf]
    %v9939 = vld [vmem:[%s9926 + $0x30] sm:$0xf]
    %v9940 = vld [vmem:[%s9926 + $0x34] sm:$0xf]
    %v9941 = vld [vmem:[%s9926 + $0x38] sm:$0xf]
    %v9942 = vld [vmem:[%s9926 + $0x3c] sm:$0xf]
    %v9947 = vcombine.low %v9902, %v9903
    %v9948 = vcombine.low %v9906, %v9907
    %v9950 = vunpack.c.l.s4 1966171168
    %v9951 = vunpack.c.0.s8 %v9950
    %v9952 = vlaneseq
    %v9953 = vshrl.u32 %v9952, 7
    %v9954 = vsub.s32 %v9951, %v9953
    %v9955 = vrot.slane %v9947, %v9954
    %v9957 = vunpack.c.l.s4 1966171168
    %v9958 = vunpack.c.0.s8 %v9957
    %v9959 = vlaneseq
    %v9960 = vshrl.u32 %v9959, 7
    %v9961 = vsub.s32 %v9958, %v9960
    %v9962 = vrot.slane %v9948, %v9961
    %v9963 = vcombine.low %v9955, %v9962
    %v9965 = vunpack.c.l.s4 1966171168
    %v9966 = vunpack.c.0.s8 %v9965
    %v9967 = vlaneseq
    %v9968 = vshrl.u32 %v9967, 7
    %v9969 = vsub.s32 %v9966, %v9968
    %v9970 = vrot.slane %v9963, %v9969
    %v9988 = vunpack.c.l.b16 %v9927
    %v9989 = vunpack.c.l.b16 %v9928
    %v9990 = vunpack.c.l.b16 %v9929
    %v9991 = vunpack.c.l.b16 %v9930
    %v9992 = vunpack.c.l.b16 %v9931
    %v9993 = vunpack.c.l.b16 %v9932
    %v9994 = vunpack.c.l.b16 %v9933
    %v9995 = vunpack.c.l.b16 %v9934
    %v9996 = vunpack.c.l.b16 %v9935
    %v9997 = vunpack.c.l.b16 %v9936
    %v9998 = vunpack.c.l.b16 %v9937
    %v9999 = vunpack.c.l.b16 %v9938
    %v10000 = vunpack.c.l.b16 %v9939
    %v10001 = vunpack.c.l.b16 %v9940
    %v10002 = vunpack.c.l.b16 %v9941
    %v10003 = vunpack.c.l.b16 %v9942
    %v10004 = vpack.c.b16 %v9989, %v9988
    %v10005 = vpack.c.b16 %v9991, %v9990
    %v10006 = vpack.c.b16 %v9993, %v9992
    %v10007 = vpack.c.b16 %v9995, %v9994
    %v10008 = vpack.c.b16 %v9997, %v9996
    %v10009 = vpack.c.b16 %v9999, %v9998
    %v10010 = vpack.c.b16 %v10001, %v10000
    %v10011 = vpack.c.b16 %v10003, %v10002
    %10020 = vmatprep.subr.bf16.mxu0 0
    %10021 = vmatpush1.bf16.msra.mxu0 %v10011
    %10022 = vmatprep.subr.bf16.mxu0 0
    %10023 = vmatpush1.bf16.msra.mxu0 %v10010
    %10024 = vmatprep.subr.bf16.mxu0 0
    %10025 = vmatpush1.bf16.msra.mxu0 %v10009
    %10026 = vmatprep.subr.bf16.mxu0 0
    %10027 = vmatpush1.bf16.msra.mxu0 %v10008
    %10028 = vmatprep.subr.bf16.mxu0 0
    %10029 = vmatpush1.bf16.msra.mxu0 %v10007
    %10030 = vmatprep.subr.bf16.mxu0 0
    %10031 = vmatpush1.bf16.msra.mxu0 %v10006
    %10032 = vmatprep.subr.bf16.mxu0 0
    %10033 = vmatpush1.bf16.msra.mxu0 %v10005
    %10034 = vmatprep.subr.bf16.mxu0 0
    %10035 = vmatpush1.bf16.msra.mxu0 %v10004
    %10036 = vmatprep.subr.bf16.mxu0 0
    %10037 = vmatpush2.bf16.msra.mxu0 0
    %10038 = vmatprep.subr.bf16.mxu0 0
    %10039 = vmatpush2.bf16.msra.mxu0 0
    %10040 = vmatprep.subr.bf16.mxu0 0
    %10041 = vmatpush2.bf16.msra.mxu0 0
    %10042 = vmatprep.subr.bf16.mxu0 0
    %10043 = vmatpush2.bf16.msra.mxu0 0
    %10044 = vmatprep.subr.bf16.mxu0 0
    %10045 = vmatpush2.bf16.msra.mxu0 0
    %10046 = vmatprep.subr.bf16.mxu0 0
    %10047 = vmatpush2.bf16.msra.mxu0 0
    %10048 = vmatprep.subr.bf16.mxu0 0
    %10049 = vmatpush2.bf16.msra.mxu0 0
    %10050 = vmatprep.subr.bf16.mxu0 0
    %10051 = vmatpush2.bf16.msra.mxu0 0
    %10052 = vmatprep.mubr.bf16.mxu0 0
    %10053 = vmatmul.mubr.bf16.gmra.mxu0 %v9970
    %v10054 = vpop.f32.mrf.mxu0
    %v10055 = vadd.f32 0.0, %v10054
    %v10056 = vpop.f32.mrf.mxu0
    %v10057 = vpop.f32.mrf.mxu0
    %v10058 = vpop.f32.mrf.mxu0
    %10059 = vdwg.mxu0
    %v10062 = vcombine.low %v9901, %v9902
    %v10063 = vcombine.low %v9905, %v9906
    %v10065 = vunpack.c.l.s4 1966171168
    %v10066 = vunpack.c.0.s8 %v10065
    %v10067 = vlaneseq
    %v10068 = vshrl.u32 %v10067, 7
    %v10069 = vsub.s32 %v10066, %v10068
    %v10070 = vrot.slane %v10062, %v10069
    %v10072 = vunpack.c.l.s4 1966171168
    %v10073 = vunpack.c.0.s8 %v10072
    %v10074 = vlaneseq
    %v10075 = vshrl.u32 %v10074, 7
    %v10076 = vsub.s32 %v10073, %v10075
    %v10077 = vrot.slane %v10063, %v10076
    %v10078 = vcombine.low %v10070, %v10077
    %v10080 = vunpack.c.l.s4 1966171168
    %v10081 = vunpack.c.0.s8 %v10080
    %v10082 = vlaneseq
    %v10083 = vshrl.u32 %v10082, 7
    %v10084 = vsub.s32 %v10081, %v10083
    %v10085 = vrot.slane %v10078, %v10084
    %v10103 = vunpack.c.l.b16 %v9910
    %v10104 = vunpack.c.l.b16 %v9911
    %v10105 = vunpack.c.l.b16 %v9912
    %v10106 = vunpack.c.l.b16 %v9913
    %v10107 = vunpack.c.l.b16 %v9914
    %v10108 = vunpack.c.l.b16 %v9915
    %v10109 = vunpack.c.l.b16 %v9916
    %v10110 = vunpack.c.l.b16 %v9917
    %v10111 = vunpack.c.l.b16 %v9918
    %v10112 = vunpack.c.l.b16 %v9919
    %v10113 = vunpack.c.l.b16 %v9920
    %v10114 = vunpack.c.l.b16 %v9921
    %v10115 = vunpack.c.l.b16 %v9922
    %v10116 = vunpack.c.l.b16 %v9923
    %v10117 = vunpack.c.l.b16 %v9924
    %v10118 = vunpack.c.l.b16 %v9925
    %v10119 = vpack.c.b16 %v10104, %v10103
    %v10120 = vpack.c.b16 %v10106, %v10105
    %v10121 = vpack.c.b16 %v10108, %v10107
    %v10122 = vpack.c.b16 %v10110, %v10109
    %v10123 = vpack.c.b16 %v10112, %v10111
    %v10124 = vpack.c.b16 %v10114, %v10113
    %v10125 = vpack.c.b16 %v10116, %v10115
    %v10126 = vpack.c.b16 %v10118, %v10117
    %10135 = vmatprep.subr.bf16.mxu0 0
    %10136 = vmatpush1.bf16.msra.mxu0 %v10126
    %10137 = vmatprep.subr.bf16.mxu0 0
    %10138 = vmatpush1.bf16.msra.mxu0 %v10125
    %10139 = vmatprep.subr.bf16.mxu0 0
    %10140 = vmatpush1.bf16.msra.mxu0 %v10124
    %10141 = vmatprep.subr.bf16.mxu0 0
    %10142 = vmatpush1.bf16.msra.mxu0 %v10123
    %10143 = vmatprep.subr.bf16.mxu0 0
    %10144 = vmatpush1.bf16.msra.mxu0 %v10122
    %10145 = vmatprep.subr.bf16.mxu0 0
    %10146 = vmatpush1.bf16.msra.mxu0 %v10121
    %10147 = vmatprep.subr.bf16.mxu0 0
    %10148 = vmatpush1.bf16.msra.mxu0 %v10120
    %10149 = vmatprep.subr.bf16.mxu0 0
    %10150 = vmatpush1.bf16.msra.mxu0 %v10119
    %10151 = vmatprep.subr.bf16.mxu0 0
    %10152 = vmatpush2.bf16.msra.mxu0 0
    %10153 = vmatprep.subr.bf16.mxu0 0
    %10154 = vmatpush2.bf16.msra.mxu0 0
    %10155 = vmatprep.subr.bf16.mxu0 0
    %10156 = vmatpush2.bf16.msra.mxu0 0
    %10157 = vmatprep.subr.bf16.mxu0 0
    %10158 = vmatpush2.bf16.msra.mxu0 0
    %10159 = vmatprep.subr.bf16.mxu0 0
    %10160 = vmatpush2.bf16.msra.mxu0 0
    %10161 = vmatprep.subr.bf16.mxu0 0
    %10162 = vmatpush2.bf16.msra.mxu0 0
    %10163 = vmatprep.subr.bf16.mxu0 0
    %10164 = vmatpush2.bf16.msra.mxu0 0
    %10165 = vmatprep.subr.bf16.mxu0 0
    %10166 = vmatpush2.bf16.msra.mxu0 0
    %10167 = vmatprep.mubr.bf16.mxu0 0
    %10168 = vmatmul.mubr.bf16.gmra.mxu0 %v10085
    %v10169 = vpop.f32.mrf.mxu0
    %v10170 = vadd.f32 %v10055, %v10169
    %v10171 = vpop.f32.mrf.mxu0
    %v10172 = vpop.f32.mrf.mxu0
    %v10173 = vpop.f32.mrf.mxu0
    %10174 = vdwg.mxu0
    %s10175 = scalar_lea.vmem %s2, 1536
    %v10176 = vld [vmem:[%s10175] sm:$0xf]
    %v10177 = vld [vmem:[%s10175 + $0x4] sm:$0xf]
    %v10178 = vld [vmem:[%s10175 + $0x8] sm:$0xf]
    %v10179 = vld [vmem:[%s10175 + $0xc] sm:$0xf]
    %v10180 = vld [vmem:[%s10175 + $0x10] sm:$0xf]
    %v10181 = vld [vmem:[%s10175 + $0x14] sm:$0xf]
    %v10182 = vld [vmem:[%s10175 + $0x18] sm:$0xf]
    %v10183 = vld [vmem:[%s10175 + $0x1c] sm:$0xf]
    %v10184 = vld [vmem:[%s10175 + $0x20] sm:$0xf]
    %v10185 = vld [vmem:[%s10175 + $0x24] sm:$0xf]
    %v10186 = vld [vmem:[%s10175 + $0x28] sm:$0xf]
    %v10187 = vld [vmem:[%s10175 + $0x2c] sm:$0xf]
    %v10188 = vld [vmem:[%s10175 + $0x30] sm:$0xf]
    %v10189 = vld [vmem:[%s10175 + $0x34] sm:$0xf]
    %v10190 = vld [vmem:[%s10175 + $0x38] sm:$0xf]
    %v10191 = vld [vmem:[%s10175 + $0x3c] sm:$0xf]
    %v10194 = vcombine.low %v9903, %v9904
    %v10195 = vcombine.low %v9907, %v9908
    %v10197 = vunpack.c.l.s4 1966171168
    %v10198 = vunpack.c.0.s8 %v10197
    %v10199 = vlaneseq
    %v10200 = vshrl.u32 %v10199, 7
    %v10201 = vsub.s32 %v10198, %v10200
    %v10202 = vrot.slane %v10194, %v10201
    %v10204 = vunpack.c.l.s4 1966171168
    %v10205 = vunpack.c.0.s8 %v10204
    %v10206 = vlaneseq
    %v10207 = vshrl.u32 %v10206, 7
    %v10208 = vsub.s32 %v10205, %v10207
    %v10209 = vrot.slane %v10195, %v10208
    %v10210 = vcombine.low %v10202, %v10209
    %v10212 = vunpack.c.l.s4 1966171168
    %v10213 = vunpack.c.0.s8 %v10212
    %v10214 = vlaneseq
    %v10215 = vshrl.u32 %v10214, 7
    %v10216 = vsub.s32 %v10213, %v10215
    %v10217 = vrot.slane %v10210, %v10216
    %v10235 = vunpack.c.l.b16 %v10176
    %v10236 = vunpack.c.l.b16 %v10177
    %v10237 = vunpack.c.l.b16 %v10178
    %v10238 = vunpack.c.l.b16 %v10179
    %v10239 = vunpack.c.l.b16 %v10180
    %v10240 = vunpack.c.l.b16 %v10181
    %v10241 = vunpack.c.l.b16 %v10182
    %v10242 = vunpack.c.l.b16 %v10183
    %v10243 = vunpack.c.l.b16 %v10184
    %v10244 = vunpack.c.l.b16 %v10185
    %v10245 = vunpack.c.l.b16 %v10186
    %v10246 = vunpack.c.l.b16 %v10187
    %v10247 = vunpack.c.l.b16 %v10188
    %v10248 = vunpack.c.l.b16 %v10189
    %v10249 = vunpack.c.l.b16 %v10190
    %v10250 = vunpack.c.l.b16 %v10191
    %v10251 = vpack.c.b16 %v10236, %v10235
    %v10252 = vpack.c.b16 %v10238, %v10237
    %v10253 = vpack.c.b16 %v10240, %v10239
    %v10254 = vpack.c.b16 %v10242, %v10241
    %v10255 = vpack.c.b16 %v10244, %v10243
    %v10256 = vpack.c.b16 %v10246, %v10245
    %v10257 = vpack.c.b16 %v10248, %v10247
    %v10258 = vpack.c.b16 %v10250, %v10249
    %10267 = vmatprep.subr.bf16.mxu0 0
    %10268 = vmatpush1.bf16.msra.mxu0 %v10258
    %10269 = vmatprep.subr.bf16.mxu0 0
    %10270 = vmatpush1.bf16.msra.mxu0 %v10257
    %10271 = vmatprep.subr.bf16.mxu0 0
    %10272 = vmatpush1.bf16.msra.mxu0 %v10256
    %10273 = vmatprep.subr.bf16.mxu0 0
    %10274 = vmatpush1.bf16.msra.mxu0 %v10255
    %10275 = vmatprep.subr.bf16.mxu0 0
    %10276 = vmatpush1.bf16.msra.mxu0 %v10254
    %10277 = vmatprep.subr.bf16.mxu0 0
    %10278 = vmatpush1.bf16.msra.mxu0 %v10253
    %10279 = vmatprep.subr.bf16.mxu0 0
    %10280 = vmatpush1.bf16.msra.mxu0 %v10252
    %10281 = vmatprep.subr.bf16.mxu0 0
    %10282 = vmatpush1.bf16.msra.mxu0 %v10251
    %10283 = vmatprep.subr.bf16.mxu0 0
    %10284 = vmatpush2.bf16.msra.mxu0 0
    %10285 = vmatprep.subr.bf16.mxu0 0
    %10286 = vmatpush2.bf16.msra.mxu0 0
    %10287 = vmatprep.subr.bf16.mxu0 0
    %10288 = vmatpush2.bf16.msra.mxu0 0
    %10289 = vmatprep.subr.bf16.mxu0 0
    %10290 = vmatpush2.bf16.msra.mxu0 0
    %10291 = vmatprep.subr.bf16.mxu0 0
    %10292 = vmatpush2.bf16.msra.mxu0 0
    %10293 = vmatprep.subr.bf16.mxu0 0
    %10294 = vmatpush2.bf16.msra.mxu0 0
    %10295 = vmatprep.subr.bf16.mxu0 0
    %10296 = vmatpush2.bf16.msra.mxu0 0
    %10297 = vmatprep.subr.bf16.mxu0 0
    %10298 = vmatpush2.bf16.msra.mxu0 0
    %10299 = vmatprep.mubr.bf16.mxu0 0
    %10300 = vmatmul.mubr.bf16.gmra.mxu0 %v10217
    %v10301 = vpop.f32.mrf.mxu0
    %v10302 = vadd.f32 0.0, %v10301
    %v10303 = vpop.f32.mrf.mxu0
    %v10304 = vpop.f32.mrf.mxu0
    %v10305 = vpop.f32.mrf.mxu0
    %10306 = vdwg.mxu0
    %v10307 = vadd.f32 %v10170, %v10302
    %v10308 = vld [vmem:[#allocation4] sm:$0x3]
    %v10309 = vld [vmem:[#allocation4 + $0x2] sm:$0x3]
    %v10310 = vld [vmem:[#allocation4 + $0x4] sm:$0x3]
    %v10311 = vld [vmem:[#allocation4 + $0x6] sm:$0x3]
    %v10312 = vld [vmem:[#allocation4 + $0x8] sm:$0x3]
    %v10313 = vld [vmem:[#allocation4 + $0xa] sm:$0x3]
    %v10314 = vld [vmem:[#allocation4 + $0xc] sm:$0x3]
    %v10315 = vld [vmem:[#allocation4 + $0xe] sm:$0x3]
    %v10325 = vunpack.c.l.s4 1966171168
    %v10326 = vunpack.c.0.s8 %v10325
    %v10327 = vlaneseq
    %v10328 = vshrl.u32 %v10327, 7
    %v10329 = vsub.s32 %v10326, %v10328
    %v10330 = vrot.slane %v10308, %v10329
    %v10331 = vcombine.high %v10330, %v10330
    %v10333 = vunpack.c.l.s4 1966171168
    %v10334 = vunpack.c.0.s8 %v10333
    %v10335 = vlaneseq
    %v10336 = vshrl.u32 %v10335, 7
    %v10337 = vsub.s32 %v10334, %v10336
    %v10338 = vrot.slane %v10309, %v10337
    %v10339 = vcombine.high %v10338, %v10338
    %v10341 = vunpack.c.l.s4 1966171168
    %v10342 = vunpack.c.0.s8 %v10341
    %v10343 = vlaneseq
    %v10344 = vshrl.u32 %v10343, 7
    %v10345 = vsub.s32 %v10342, %v10344
    %v10346 = vrot.slane %v10310, %v10345
    %v10347 = vcombine.high %v10346, %v10346
    %v10349 = vunpack.c.l.s4 1966171168
    %v10350 = vunpack.c.0.s8 %v10349
    %v10351 = vlaneseq
    %v10352 = vshrl.u32 %v10351, 7
    %v10353 = vsub.s32 %v10350, %v10352
    %v10354 = vrot.slane %v10311, %v10353
    %v10355 = vcombine.high %v10354, %v10354
    %v10357 = vunpack.c.l.s4 1966171168
    %v10358 = vunpack.c.0.s8 %v10357
    %v10359 = vlaneseq
    %v10360 = vshrl.u32 %v10359, 7
    %v10361 = vsub.s32 %v10358, %v10360
    %v10362 = vrot.slane %v10312, %v10361
    %v10363 = vcombine.high %v10362, %v10362
    %v10365 = vunpack.c.l.s4 1966171168
    %v10366 = vunpack.c.0.s8 %v10365
    %v10367 = vlaneseq
    %v10368 = vshrl.u32 %v10367, 7
    %v10369 = vsub.s32 %v10366, %v10368
    %v10370 = vrot.slane %v10313, %v10369
    %v10371 = vcombine.high %v10370, %v10370
    %v10373 = vunpack.c.l.s4 1966171168
    %v10374 = vunpack.c.0.s8 %v10373
    %v10375 = vlaneseq
    %v10376 = vshrl.u32 %v10375, 7
    %v10377 = vsub.s32 %v10374, %v10376
    %v10378 = vrot.slane %v10314, %v10377
    %v10379 = vcombine.high %v10378, %v10378
    %v10381 = vunpack.c.l.s4 1966171168
    %v10382 = vunpack.c.0.s8 %v10381
    %v10383 = vlaneseq
    %v10384 = vshrl.u32 %v10383, 7
    %v10385 = vsub.s32 %v10382, %v10384
    %v10386 = vrot.slane %v10315, %v10385
    %v10387 = vcombine.high %v10386, %v10386
    %vm10388 = vsmask.f32 1284
    %vm10389 = vmor %vm4399, %vm10388
    %vm10390 = vsmask.f32 2312
    %vm10391 = vmor %vm10389, %vm10390
    %vm10392 = vsmask.f32 3340
    %vm10393 = vmor %vm10391, %vm10392
    %vm10394 = vsmask.f32 4368
    %vm10395 = vmor %vm10393, %vm10394
    %vm10396 = vsmask.f32 5396
    %vm10397 = vmor %vm10395, %vm10396
    %vm10398 = vsmask.f32 6424
    %vm10399 = vmor %vm10397, %vm10398
    %vm10400 = vsmask.f32 7452
    %vm10401 = vmor %vm10399, %vm10400
    %v10403 = vshrl.u32 %v10330, 16
    %v10405 = vrot.slane %v10403, 7
    %v10406 = vrot.slane %v10405, 1
    %v10408 = vshll.u32 %v10331, 16
    %v10410 = vsel %vm10401, %v10406, %v10408
    %v10412 = vshrl.u32 %v10338, 16
    %v10414 = vrot.slane %v10412, 7
    %v10415 = vrot.slane %v10414, 1
    %v10417 = vshll.u32 %v10339, 16
    %v10419 = vsel %vm10401, %v10415, %v10417
    %v10421 = vshrl.u32 %v10346, 16
    %v10423 = vrot.slane %v10421, 7
    %v10424 = vrot.slane %v10423, 1
    %v10426 = vshll.u32 %v10347, 16
    %v10428 = vsel %vm10401, %v10424, %v10426
    %v10430 = vshrl.u32 %v10354, 16
    %v10432 = vrot.slane %v10430, 7
    %v10433 = vrot.slane %v10432, 1
    %v10435 = vshll.u32 %v10355, 16
    %v10437 = vsel %vm10401, %v10433, %v10435
    %v10439 = vshrl.u32 %v10362, 16
    %v10441 = vrot.slane %v10439, 7
    %v10442 = vrot.slane %v10441, 1
    %v10444 = vshll.u32 %v10363, 16
    %v10446 = vsel %vm10401, %v10442, %v10444
    %v10448 = vshrl.u32 %v10370, 16
    %v10450 = vrot.slane %v10448, 7
    %v10451 = vrot.slane %v10450, 1
    %v10453 = vshll.u32 %v10371, 16
    %v10455 = vsel %vm10401, %v10451, %v10453
    %v10457 = vshrl.u32 %v10378, 16
    %v10459 = vrot.slane %v10457, 7
    %v10460 = vrot.slane %v10459, 1
    %v10462 = vshll.u32 %v10379, 16
    %v10464 = vsel %vm10401, %v10460, %v10462
    %v10466 = vshrl.u32 %v10386, 16
    %v10468 = vrot.slane %v10466, 7
    %v10469 = vrot.slane %v10468, 1
    %v10471 = vshll.u32 %v10387, 16
    %v10473 = vsel %vm10401, %v10469, %v10471
    %s10474 = scalar_lea.vmem %s2, 1216
    %v10475 = vld [vmem:[%s10474] sm:$0xf]
    %v10476 = vld [vmem:[%s10474 + $0x4] sm:$0xf]
    %v10477 = vld [vmem:[%s10474 + $0x8] sm:$0xf]
    %v10478 = vld [vmem:[%s10474 + $0xc] sm:$0xf]
    %v10479 = vld [vmem:[%s10474 + $0x10] sm:$0xf]
    %v10480 = vld [vmem:[%s10474 + $0x14] sm:$0xf]
    %v10481 = vld [vmem:[%s10474 + $0x18] sm:$0xf]
    %v10482 = vld [vmem:[%s10474 + $0x1c] sm:$0xf]
    %v10483 = vld [vmem:[%s10474 + $0x20] sm:$0xf]
    %v10484 = vld [vmem:[%s10474 + $0x24] sm:$0xf]
    %v10485 = vld [vmem:[%s10474 + $0x28] sm:$0xf]
    %v10486 = vld [vmem:[%s10474 + $0x2c] sm:$0xf]
    %v10487 = vld [vmem:[%s10474 + $0x30] sm:$0xf]
    %v10488 = vld [vmem:[%s10474 + $0x34] sm:$0xf]
    %v10489 = vld [vmem:[%s10474 + $0x38] sm:$0xf]
    %v10490 = vld [vmem:[%s10474 + $0x3c] sm:$0xf]
    %v10491 = vcombine.low %v10410, %v10419
    %v10492 = vcombine.low %v10446, %v10455
    %v10494 = vunpack.c.l.s4 1966171168
    %v10495 = vunpack.c.0.s8 %v10494
    %v10496 = vlaneseq
    %v10497 = vshrl.u32 %v10496, 7
    %v10498 = vsub.s32 %v10495, %v10497
    %v10499 = vrot.slane %v10491, %v10498
    %v10501 = vunpack.c.l.s4 1966171168
    %v10502 = vunpack.c.0.s8 %v10501
    %v10503 = vlaneseq
    %v10504 = vshrl.u32 %v10503, 7
    %v10505 = vsub.s32 %v10502, %v10504
    %v10506 = vrot.slane %v10492, %v10505
    %v10507 = vcombine.low %v10499, %v10506
    %v10509 = vunpack.c.l.s4 1966171168
    %v10510 = vunpack.c.0.s8 %v10509
    %v10511 = vlaneseq
    %v10512 = vshrl.u32 %v10511, 7
    %v10513 = vsub.s32 %v10510, %v10512
    %v10514 = vrot.slane %v10507, %v10513
    %v10532 = vunpack.c.l.b16 %v10475
    %v10533 = vunpack.c.l.b16 %v10476
    %v10534 = vunpack.c.l.b16 %v10477
    %v10535 = vunpack.c.l.b16 %v10478
    %v10536 = vunpack.c.l.b16 %v10479
    %v10537 = vunpack.c.l.b16 %v10480
    %v10538 = vunpack.c.l.b16 %v10481
    %v10539 = vunpack.c.l.b16 %v10482
    %v10540 = vunpack.c.l.b16 %v10483
    %v10541 = vunpack.c.l.b16 %v10484
    %v10542 = vunpack.c.l.b16 %v10485
    %v10543 = vunpack.c.l.b16 %v10486
    %v10544 = vunpack.c.l.b16 %v10487
    %v10545 = vunpack.c.l.b16 %v10488
    %v10546 = vunpack.c.l.b16 %v10489
    %v10547 = vunpack.c.l.b16 %v10490
    %v10548 = vpack.c.b16 %v10533, %v10532
    %v10549 = vpack.c.b16 %v10535, %v10534
    %v10550 = vpack.c.b16 %v10537, %v10536
    %v10551 = vpack.c.b16 %v10539, %v10538
    %v10552 = vpack.c.b16 %v10541, %v10540
    %v10553 = vpack.c.b16 %v10543, %v10542
    %v10554 = vpack.c.b16 %v10545, %v10544
    %v10555 = vpack.c.b16 %v10547, %v10546
    %10564 = vmatprep.subr.bf16.mxu0 0
    %10565 = vmatpush1.bf16.msra.mxu0 %v10555
    %10566 = vmatprep.subr.bf16.mxu0 0
    %10567 = vmatpush1.bf16.msra.mxu0 %v10554
    %10568 = vmatprep.subr.bf16.mxu0 0
    %10569 = vmatpush1.bf16.msra.mxu0 %v10553
    %10570 = vmatprep.subr.bf16.mxu0 0
    %10571 = vmatpush1.bf16.msra.mxu0 %v10552
    %10572 = vmatprep.subr.bf16.mxu0 0
    %10573 = vmatpush1.bf16.msra.mxu0 %v10551
    %10574 = vmatprep.subr.bf16.mxu0 0
    %10575 = vmatpush1.bf16.msra.mxu0 %v10550
    %10576 = vmatprep.subr.bf16.mxu0 0
    %10577 = vmatpush1.bf16.msra.mxu0 %v10549
    %10578 = vmatprep.subr.bf16.mxu0 0
    %10579 = vmatpush1.bf16.msra.mxu0 %v10548
    %10580 = vmatprep.subr.bf16.mxu0 0
    %10581 = vmatpush2.bf16.msra.mxu0 0
    %10582 = vmatprep.subr.bf16.mxu0 0
    %10583 = vmatpush2.bf16.msra.mxu0 0
    %10584 = vmatprep.subr.bf16.mxu0 0
    %10585 = vmatpush2.bf16.msra.mxu0 0
    %10586 = vmatprep.subr.bf16.mxu0 0
    %10587 = vmatpush2.bf16.msra.mxu0 0
    %10588 = vmatprep.subr.bf16.mxu0 0
    %10589 = vmatpush2.bf16.msra.mxu0 0
    %10590 = vmatprep.subr.bf16.mxu0 0
    %10591 = vmatpush2.bf16.msra.mxu0 0
    %10592 = vmatprep.subr.bf16.mxu0 0
    %10593 = vmatpush2.bf16.msra.mxu0 0
    %10594 = vmatprep.subr.bf16.mxu0 0
    %10595 = vmatpush2.bf16.msra.mxu0 0
    %10596 = vmatprep.mubr.bf16.mxu0 0
    %10597 = vmatmul.mubr.bf16.gmra.mxu0 %v10514
    %v10598 = vpop.f32.mrf.mxu0
    %v10599 = vadd.f32 0.0, %v10598
    %v10600 = vpop.f32.mrf.mxu0
    %v10601 = vpop.f32.mrf.mxu0
    %v10602 = vpop.f32.mrf.mxu0
    %10603 = vdwg.mxu0
    %v10604 = vadd.f32 %v10307, %v10599
    %s10605 = scalar_lea.vmem %s2, 1408
    %v10606 = vld [vmem:[%s10605] sm:$0xf]
    %v10607 = vld [vmem:[%s10605 + $0x4] sm:$0xf]
    %v10608 = vld [vmem:[%s10605 + $0x8] sm:$0xf]
    %v10609 = vld [vmem:[%s10605 + $0xc] sm:$0xf]
    %v10610 = vld [vmem:[%s10605 + $0x10] sm:$0xf]
    %v10611 = vld [vmem:[%s10605 + $0x14] sm:$0xf]
    %v10612 = vld [vmem:[%s10605 + $0x18] sm:$0xf]
    %v10613 = vld [vmem:[%s10605 + $0x1c] sm:$0xf]
    %v10614 = vld [vmem:[%s10605 + $0x20] sm:$0xf]
    %v10615 = vld [vmem:[%s10605 + $0x24] sm:$0xf]
    %v10616 = vld [vmem:[%s10605 + $0x28] sm:$0xf]
    %v10617 = vld [vmem:[%s10605 + $0x2c] sm:$0xf]
    %v10618 = vld [vmem:[%s10605 + $0x30] sm:$0xf]
    %v10619 = vld [vmem:[%s10605 + $0x34] sm:$0xf]
    %v10620 = vld [vmem:[%s10605 + $0x38] sm:$0xf]
    %v10621 = vld [vmem:[%s10605 + $0x3c] sm:$0xf]
    %v10622 = vcombine.low %v10419, %v10428
    %v10623 = vcombine.low %v10455, %v10464
    %v10625 = vunpack.c.l.s4 1966171168
    %v10626 = vunpack.c.0.s8 %v10625
    %v10627 = vlaneseq
    %v10628 = vshrl.u32 %v10627, 7
    %v10629 = vsub.s32 %v10626, %v10628
    %v10630 = vrot.slane %v10622, %v10629
    %v10632 = vunpack.c.l.s4 1966171168
    %v10633 = vunpack.c.0.s8 %v10632
    %v10634 = vlaneseq
    %v10635 = vshrl.u32 %v10634, 7
    %v10636 = vsub.s32 %v10633, %v10635
    %v10637 = vrot.slane %v10623, %v10636
    %v10638 = vcombine.low %v10630, %v10637
    %v10640 = vunpack.c.l.s4 1966171168
    %v10641 = vunpack.c.0.s8 %v10640
    %v10642 = vlaneseq
    %v10643 = vshrl.u32 %v10642, 7
    %v10644 = vsub.s32 %v10641, %v10643
    %v10645 = vrot.slane %v10638, %v10644
    %v10663 = vunpack.c.l.b16 %v10606
    %v10664 = vunpack.c.l.b16 %v10607
    %v10665 = vunpack.c.l.b16 %v10608
    %v10666 = vunpack.c.l.b16 %v10609
    %v10667 = vunpack.c.l.b16 %v10610
    %v10668 = vunpack.c.l.b16 %v10611
    %v10669 = vunpack.c.l.b16 %v10612
    %v10670 = vunpack.c.l.b16 %v10613
    %v10671 = vunpack.c.l.b16 %v10614
    %v10672 = vunpack.c.l.b16 %v10615
    %v10673 = vunpack.c.l.b16 %v10616
    %v10674 = vunpack.c.l.b16 %v10617
    %v10675 = vunpack.c.l.b16 %v10618
    %v10676 = vunpack.c.l.b16 %v10619
    %v10677 = vunpack.c.l.b16 %v10620
    %v10678 = vunpack.c.l.b16 %v10621
    %v10679 = vpack.c.b16 %v10664, %v10663
    %v10680 = vpack.c.b16 %v10666, %v10665
    %v10681 = vpack.c.b16 %v10668, %v10667
    %v10682 = vpack.c.b16 %v10670, %v10669
    %v10683 = vpack.c.b16 %v10672, %v10671
    %v10684 = vpack.c.b16 %v10674, %v10673
    %v10685 = vpack.c.b16 %v10676, %v10675
    %v10686 = vpack.c.b16 %v10678, %v10677
    %10695 = vmatprep.subr.bf16.mxu0 0
    %10696 = vmatpush1.bf16.msra.mxu0 %v10686
    %10697 = vmatprep.subr.bf16.mxu0 0
    %10698 = vmatpush1.bf16.msra.mxu0 %v10685
    %10699 = vmatprep.subr.bf16.mxu0 0
    %10700 = vmatpush1.bf16.msra.mxu0 %v10684
    %10701 = vmatprep.subr.bf16.mxu0 0
    %10702 = vmatpush1.bf16.msra.mxu0 %v10683
    %10703 = vmatprep.subr.bf16.mxu0 0
    %10704 = vmatpush1.bf16.msra.mxu0 %v10682
    %10705 = vmatprep.subr.bf16.mxu0 0
    %10706 = vmatpush1.bf16.msra.mxu0 %v10681
    %10707 = vmatprep.subr.bf16.mxu0 0
    %10708 = vmatpush1.bf16.msra.mxu0 %v10680
    %10709 = vmatprep.subr.bf16.mxu0 0
    %10710 = vmatpush1.bf16.msra.mxu0 %v10679
    %10711 = vmatprep.subr.bf16.mxu0 0
    %10712 = vmatpush2.bf16.msra.mxu0 0
    %10713 = vmatprep.subr.bf16.mxu0 0
    %10714 = vmatpush2.bf16.msra.mxu0 0
    %10715 = vmatprep.subr.bf16.mxu0 0
    %10716 = vmatpush2.bf16.msra.mxu0 0
    %10717 = vmatprep.subr.bf16.mxu0 0
    %10718 = vmatpush2.bf16.msra.mxu0 0
    %10719 = vmatprep.subr.bf16.mxu0 0
    %10720 = vmatpush2.bf16.msra.mxu0 0
    %10721 = vmatprep.subr.bf16.mxu0 0
    %10722 = vmatpush2.bf16.msra.mxu0 0
    %10723 = vmatprep.subr.bf16.mxu0 0
    %10724 = vmatpush2.bf16.msra.mxu0 0
    %10725 = vmatprep.subr.bf16.mxu0 0
    %10726 = vmatpush2.bf16.msra.mxu0 0
    %10727 = vmatprep.mubr.bf16.mxu0 0
    %10728 = vmatmul.mubr.bf16.gmra.mxu0 %v10645
    %v10729 = vpop.f32.mrf.mxu0
    %v10730 = vadd.f32 0.0, %v10729
    %v10731 = vpop.f32.mrf.mxu0
    %v10732 = vpop.f32.mrf.mxu0
    %v10733 = vpop.f32.mrf.mxu0
    %10734 = vdwg.mxu0
    %v10735 = vadd.f32 %v10604, %v10730
    %s10736 = scalar_lea.vmem %s2, 1600
    %v10737 = vld [vmem:[%s10736] sm:$0xf]
    %v10738 = vld [vmem:[%s10736 + $0x4] sm:$0xf]
    %v10739 = vld [vmem:[%s10736 + $0x8] sm:$0xf]
    %v10740 = vld [vmem:[%s10736 + $0xc] sm:$0xf]
    %v10741 = vld [vmem:[%s10736 + $0x10] sm:$0xf]
    %v10742 = vld [vmem:[%s10736 + $0x14] sm:$0xf]
    %v10743 = vld [vmem:[%s10736 + $0x18] sm:$0xf]
    %v10744 = vld [vmem:[%s10736 + $0x1c] sm:$0xf]
    %v10745 = vld [vmem:[%s10736 + $0x20] sm:$0xf]
    %v10746 = vld [vmem:[%s10736 + $0x24] sm:$0xf]
    %v10747 = vld [vmem:[%s10736 + $0x28] sm:$0xf]
    %v10748 = vld [vmem:[%s10736 + $0x2c] sm:$0xf]
    %v10749 = vld [vmem:[%s10736 + $0x30] sm:$0xf]
    %v10750 = vld [vmem:[%s10736 + $0x34] sm:$0xf]
    %v10751 = vld [vmem:[%s10736 + $0x38] sm:$0xf]
    %v10752 = vld [vmem:[%s10736 + $0x3c] sm:$0xf]
    %v10753 = vcombine.low %v10428, %v10437
    %v10754 = vcombine.low %v10464, %v10473
    %v10756 = vunpack.c.l.s4 1966171168
    %v10757 = vunpack.c.0.s8 %v10756
    %v10758 = vlaneseq
    %v10759 = vshrl.u32 %v10758, 7
    %v10760 = vsub.s32 %v10757, %v10759
    %v10761 = vrot.slane %v10753, %v10760
    %v10763 = vunpack.c.l.s4 1966171168
    %v10764 = vunpack.c.0.s8 %v10763
    %v10765 = vlaneseq
    %v10766 = vshrl.u32 %v10765, 7
    %v10767 = vsub.s32 %v10764, %v10766
    %v10768 = vrot.slane %v10754, %v10767
    %v10769 = vcombine.low %v10761, %v10768
    %v10771 = vunpack.c.l.s4 1966171168
    %v10772 = vunpack.c.0.s8 %v10771
    %v10773 = vlaneseq
    %v10774 = vshrl.u32 %v10773, 7
    %v10775 = vsub.s32 %v10772, %v10774
    %v10776 = vrot.slane %v10769, %v10775
    %v10794 = vunpack.c.l.b16 %v10737
    %v10795 = vunpack.c.l.b16 %v10738
    %v10796 = vunpack.c.l.b16 %v10739
    %v10797 = vunpack.c.l.b16 %v10740
    %v10798 = vunpack.c.l.b16 %v10741
    %v10799 = vunpack.c.l.b16 %v10742
    %v10800 = vunpack.c.l.b16 %v10743
    %v10801 = vunpack.c.l.b16 %v10744
    %v10802 = vunpack.c.l.b16 %v10745
    %v10803 = vunpack.c.l.b16 %v10746
    %v10804 = vunpack.c.l.b16 %v10747
    %v10805 = vunpack.c.l.b16 %v10748
    %v10806 = vunpack.c.l.b16 %v10749
    %v10807 = vunpack.c.l.b16 %v10750
    %v10808 = vunpack.c.l.b16 %v10751
    %v10809 = vunpack.c.l.b16 %v10752
    %v10810 = vpack.c.b16 %v10795, %v10794
    %v10811 = vpack.c.b16 %v10797, %v10796
    %v10812 = vpack.c.b16 %v10799, %v10798
    %v10813 = vpack.c.b16 %v10801, %v10800
    %v10814 = vpack.c.b16 %v10803, %v10802
    %v10815 = vpack.c.b16 %v10805, %v10804
    %v10816 = vpack.c.b16 %v10807, %v10806
    %v10817 = vpack.c.b16 %v10809, %v10808
    %10826 = vmatprep.subr.bf16.mxu0 0
    %10827 = vmatpush1.bf16.msra.mxu0 %v10817
    %10828 = vmatprep.subr.bf16.mxu0 0
    %10829 = vmatpush1.bf16.msra.mxu0 %v10816
    %10830 = vmatprep.subr.bf16.mxu0 0
    %10831 = vmatpush1.bf16.msra.mxu0 %v10815
    %10832 = vmatprep.subr.bf16.mxu0 0
    %10833 = vmatpush1.bf16.msra.mxu0 %v10814
    %10834 = vmatprep.subr.bf16.mxu0 0
    %10835 = vmatpush1.bf16.msra.mxu0 %v10813
    %10836 = vmatprep.subr.bf16.mxu0 0
    %10837 = vmatpush1.bf16.msra.mxu0 %v10812
    %10838 = vmatprep.subr.bf16.mxu0 0
    %10839 = vmatpush1.bf16.msra.mxu0 %v10811
    %10840 = vmatprep.subr.bf16.mxu0 0
    %10841 = vmatpush1.bf16.msra.mxu0 %v10810
    %10842 = vmatprep.subr.bf16.mxu0 0
    %10843 = vmatpush2.bf16.msra.mxu0 0
    %10844 = vmatprep.subr.bf16.mxu0 0
    %10845 = vmatpush2.bf16.msra.mxu0 0
    %10846 = vmatprep.subr.bf16.mxu0 0
    %10847 = vmatpush2.bf16.msra.mxu0 0
    %10848 = vmatprep.subr.bf16.mxu0 0
    %10849 = vmatpush2.bf16.msra.mxu0 0
    %10850 = vmatprep.subr.bf16.mxu0 0
    %10851 = vmatpush2.bf16.msra.mxu0 0
    %10852 = vmatprep.subr.bf16.mxu0 0
    %10853 = vmatpush2.bf16.msra.mxu0 0
    %10854 = vmatprep.subr.bf16.mxu0 0
    %10855 = vmatpush2.bf16.msra.mxu0 0
    %10856 = vmatprep.subr.bf16.mxu0 0
    %10857 = vmatpush2.bf16.msra.mxu0 0
    %10858 = vmatprep.mubr.bf16.mxu0 0
    %10859 = vmatmul.mubr.bf16.gmra.mxu0 %v10776
    %v10860 = vpop.f32.mrf.mxu0
    %v10861 = vadd.f32 0.0, %v10860
    %v10862 = vpop.f32.mrf.mxu0
    %v10863 = vpop.f32.mrf.mxu0
    %v10864 = vpop.f32.mrf.mxu0
    %10865 = vdwg.mxu0
    %v10866 = vadd.f32 %v10735, %v10861
    %v10867 = vld [vmem:[#allocation4] sm:$0x2]
    %v10868 = vld [vmem:[#allocation4 + $0x2] sm:$0x2]
    %v10869 = vld [vmem:[#allocation4 + $0x4] sm:$0x2]
    %v10870 = vld [vmem:[#allocation4 + $0x6] sm:$0x2]
    %v10871 = vld [vmem:[#allocation4 + $0x8] sm:$0x2]
    %v10872 = vld [vmem:[#allocation4 + $0xa] sm:$0x2]
    %v10873 = vld [vmem:[#allocation4 + $0xc] sm:$0x2]
    %v10874 = vld [vmem:[#allocation4 + $0xe] sm:$0x2]
    %v10884 = vunpack.c.l.s4 1966171168
    %v10885 = vunpack.c.0.s8 %v10884
    %v10886 = vlaneseq
    %v10887 = vshrl.u32 %v10886, 7
    %v10888 = vsub.s32 %v10885, %v10887
    %v10889 = vrot.slane %v10867, %v10888
    %v10890 = vcombine.high %v10889, %v10889
    %v10892 = vunpack.c.l.s4 1966171168
    %v10893 = vunpack.c.0.s8 %v10892
    %v10894 = vlaneseq
    %v10895 = vshrl.u32 %v10894, 7
    %v10896 = vsub.s32 %v10893, %v10895
    %v10897 = vrot.slane %v10868, %v10896
    %v10898 = vcombine.high %v10897, %v10897
    %v10900 = vunpack.c.l.s4 1966171168
    %v10901 = vunpack.c.0.s8 %v10900
    %v10902 = vlaneseq
    %v10903 = vshrl.u32 %v10902, 7
    %v10904 = vsub.s32 %v10901, %v10903
    %v10905 = vrot.slane %v10869, %v10904
    %v10906 = vcombine.high %v10905, %v10905
    %v10908 = vunpack.c.l.s4 1966171168
    %v10909 = vunpack.c.0.s8 %v10908
    %v10910 = vlaneseq
    %v10911 = vshrl.u32 %v10910, 7
    %v10912 = vsub.s32 %v10909, %v10911
    %v10913 = vrot.slane %v10870, %v10912
    %v10914 = vcombine.high %v10913, %v10913
    %v10916 = vunpack.c.l.s4 1966171168
    %v10917 = vunpack.c.0.s8 %v10916
    %v10918 = vlaneseq
    %v10919 = vshrl.u32 %v10918, 7
    %v10920 = vsub.s32 %v10917, %v10919
    %v10921 = vrot.slane %v10871, %v10920
    %v10922 = vcombine.high %v10921, %v10921
    %v10924 = vunpack.c.l.s4 1966171168
    %v10925 = vunpack.c.0.s8 %v10924
    %v10926 = vlaneseq
    %v10927 = vshrl.u32 %v10926, 7
    %v10928 = vsub.s32 %v10925, %v10927
    %v10929 = vrot.slane %v10872, %v10928
    %v10930 = vcombine.high %v10929, %v10929
    %v10932 = vunpack.c.l.s4 1966171168
    %v10933 = vunpack.c.0.s8 %v10932
    %v10934 = vlaneseq
    %v10935 = vshrl.u32 %v10934, 7
    %v10936 = vsub.s32 %v10933, %v10935
    %v10937 = vrot.slane %v10873, %v10936
    %v10938 = vcombine.high %v10937, %v10937
    %v10940 = vunpack.c.l.s4 1966171168
    %v10941 = vunpack.c.0.s8 %v10940
    %v10942 = vlaneseq
    %v10943 = vshrl.u32 %v10942, 7
    %v10944 = vsub.s32 %v10941, %v10943
    %v10945 = vrot.slane %v10874, %v10944
    %v10946 = vcombine.high %v10945, %v10945
    %s10947 = scalar_lea.vmem %s2, 1280
    %v10948 = vld [vmem:[%s10947] sm:$0xf]
    %v10949 = vld [vmem:[%s10947 + $0x4] sm:$0xf]
    %v10950 = vld [vmem:[%s10947 + $0x8] sm:$0xf]
    %v10951 = vld [vmem:[%s10947 + $0xc] sm:$0xf]
    %v10952 = vld [vmem:[%s10947 + $0x10] sm:$0xf]
    %v10953 = vld [vmem:[%s10947 + $0x14] sm:$0xf]
    %v10954 = vld [vmem:[%s10947 + $0x18] sm:$0xf]
    %v10955 = vld [vmem:[%s10947 + $0x1c] sm:$0xf]
    %v10956 = vld [vmem:[%s10947 + $0x20] sm:$0xf]
    %v10957 = vld [vmem:[%s10947 + $0x24] sm:$0xf]
    %v10958 = vld [vmem:[%s10947 + $0x28] sm:$0xf]
    %v10959 = vld [vmem:[%s10947 + $0x2c] sm:$0xf]
    %v10960 = vld [vmem:[%s10947 + $0x30] sm:$0xf]
    %v10961 = vld [vmem:[%s10947 + $0x34] sm:$0xf]
    %v10962 = vld [vmem:[%s10947 + $0x38] sm:$0xf]
    %v10963 = vld [vmem:[%s10947 + $0x3c] sm:$0xf]
    %v10964 = vcombine.low %v10890, %v10898
    %v10965 = vcombine.low %v10922, %v10930
    %v10967 = vunpack.c.l.s4 1966171168
    %v10968 = vunpack.c.0.s8 %v10967
    %v10969 = vlaneseq
    %v10970 = vshrl.u32 %v10969, 7
    %v10971 = vsub.s32 %v10968, %v10970
    %v10972 = vrot.slane %v10964, %v10971
    %v10974 = vunpack.c.l.s4 1966171168
    %v10975 = vunpack.c.0.s8 %v10974
    %v10976 = vlaneseq
    %v10977 = vshrl.u32 %v10976, 7
    %v10978 = vsub.s32 %v10975, %v10977
    %v10979 = vrot.slane %v10965, %v10978
    %v10980 = vcombine.low %v10972, %v10979
    %v10982 = vunpack.c.l.s4 1966171168
    %v10983 = vunpack.c.0.s8 %v10982
    %v10984 = vlaneseq
    %v10985 = vshrl.u32 %v10984, 7
    %v10986 = vsub.s32 %v10983, %v10985
    %v10987 = vrot.slane %v10980, %v10986
    %v11005 = vunpack.c.l.b16 %v10948
    %v11006 = vunpack.c.l.b16 %v10949
    %v11007 = vunpack.c.l.b16 %v10950
    %v11008 = vunpack.c.l.b16 %v10951
    %v11009 = vunpack.c.l.b16 %v10952
    %v11010 = vunpack.c.l.b16 %v10953
    %v11011 = vunpack.c.l.b16 %v10954
    %v11012 = vunpack.c.l.b16 %v10955
    %v11013 = vunpack.c.l.b16 %v10956
    %v11014 = vunpack.c.l.b16 %v10957
    %v11015 = vunpack.c.l.b16 %v10958
    %v11016 = vunpack.c.l.b16 %v10959
    %v11017 = vunpack.c.l.b16 %v10960
    %v11018 = vunpack.c.l.b16 %v10961
    %v11019 = vunpack.c.l.b16 %v10962
    %v11020 = vunpack.c.l.b16 %v10963
    %v11021 = vpack.c.b16 %v11006, %v11005
    %v11022 = vpack.c.b16 %v11008, %v11007
    %v11023 = vpack.c.b16 %v11010, %v11009
    %v11024 = vpack.c.b16 %v11012, %v11011
    %v11025 = vpack.c.b16 %v11014, %v11013
    %v11026 = vpack.c.b16 %v11016, %v11015
    %v11027 = vpack.c.b16 %v11018, %v11017
    %v11028 = vpack.c.b16 %v11020, %v11019
    %11037 = vmatprep.subr.bf16.mxu0 0
    %11038 = vmatpush1.bf16.msra.mxu0 %v11028
    %11039 = vmatprep.subr.bf16.mxu0 0
    %11040 = vmatpush1.bf16.msra.mxu0 %v11027
    %11041 = vmatprep.subr.bf16.mxu0 0
    %11042 = vmatpush1.bf16.msra.mxu0 %v11026
    %11043 = vmatprep.subr.bf16.mxu0 0
    %11044 = vmatpush1.bf16.msra.mxu0 %v11025
    %11045 = vmatprep.subr.bf16.mxu0 0
    %11046 = vmatpush1.bf16.msra.mxu0 %v11024
    %11047 = vmatprep.subr.bf16.mxu0 0
    %11048 = vmatpush1.bf16.msra.mxu0 %v11023
    %11049 = vmatprep.subr.bf16.mxu0 0
    %11050 = vmatpush1.bf16.msra.mxu0 %v11022
    %11051 = vmatprep.subr.bf16.mxu0 0
    %11052 = vmatpush1.bf16.msra.mxu0 %v11021
    %11053 = vmatprep.subr.bf16.mxu0 0
    %11054 = vmatpush2.bf16.msra.mxu0 0
    %11055 = vmatprep.subr.bf16.mxu0 0
    %11056 = vmatpush2.bf16.msra.mxu0 0
    %11057 = vmatprep.subr.bf16.mxu0 0
    %11058 = vmatpush2.bf16.msra.mxu0 0
    %11059 = vmatprep.subr.bf16.mxu0 0
    %11060 = vmatpush2.bf16.msra.mxu0 0
    %11061 = vmatprep.subr.bf16.mxu0 0
    %11062 = vmatpush2.bf16.msra.mxu0 0
    %11063 = vmatprep.subr.bf16.mxu0 0
    %11064 = vmatpush2.bf16.msra.mxu0 0
    %11065 = vmatprep.subr.bf16.mxu0 0
    %11066 = vmatpush2.bf16.msra.mxu0 0
    %11067 = vmatprep.subr.bf16.mxu0 0
    %11068 = vmatpush2.bf16.msra.mxu0 0
    %11069 = vmatprep.mubr.bf16.mxu0 0
    %11070 = vmatmul.mubr.bf16.gmra.mxu0 %v10987
    %v11071 = vpop.f32.mrf.mxu0
    %v11072 = vadd.f32 0.0, %v11071
    %v11073 = vpop.f32.mrf.mxu0
    %v11074 = vpop.f32.mrf.mxu0
    %v11075 = vpop.f32.mrf.mxu0
    %11076 = vdwg.mxu0
    %v11077 = vadd.f32 %v10866, %v11072
    %s11078 = scalar_lea.vmem %s2, 1472
    %v11079 = vld [vmem:[%s11078] sm:$0xf]
    %v11080 = vld [vmem:[%s11078 + $0x4] sm:$0xf]
    %v11081 = vld [vmem:[%s11078 + $0x8] sm:$0xf]
    %v11082 = vld [vmem:[%s11078 + $0xc] sm:$0xf]
    %v11083 = vld [vmem:[%s11078 + $0x10] sm:$0xf]
    %v11084 = vld [vmem:[%s11078 + $0x14] sm:$0xf]
    %v11085 = vld [vmem:[%s11078 + $0x18] sm:$0xf]
    %v11086 = vld [vmem:[%s11078 + $0x1c] sm:$0xf]
    %v11087 = vld [vmem:[%s11078 + $0x20] sm:$0xf]
    %v11088 = vld [vmem:[%s11078 + $0x24] sm:$0xf]
    %v11089 = vld [vmem:[%s11078 + $0x28] sm:$0xf]
    %v11090 = vld [vmem:[%s11078 + $0x2c] sm:$0xf]
    %v11091 = vld [vmem:[%s11078 + $0x30] sm:$0xf]
    %v11092 = vld [vmem:[%s11078 + $0x34] sm:$0xf]
    %v11093 = vld [vmem:[%s11078 + $0x38] sm:$0xf]
    %v11094 = vld [vmem:[%s11078 + $0x3c] sm:$0xf]
    %v11095 = vcombine.low %v10898, %v10906
    %v11096 = vcombine.low %v10930, %v10938
    %v11098 = vunpack.c.l.s4 1966171168
    %v11099 = vunpack.c.0.s8 %v11098
    %v11100 = vlaneseq
    %v11101 = vshrl.u32 %v11100, 7
    %v11102 = vsub.s32 %v11099, %v11101
    %v11103 = vrot.slane %v11095, %v11102
    %v11105 = vunpack.c.l.s4 1966171168
    %v11106 = vunpack.c.0.s8 %v11105
    %v11107 = vlaneseq
    %v11108 = vshrl.u32 %v11107, 7
    %v11109 = vsub.s32 %v11106, %v11108
    %v11110 = vrot.slane %v11096, %v11109
    %v11111 = vcombine.low %v11103, %v11110
    %v11113 = vunpack.c.l.s4 1966171168
    %v11114 = vunpack.c.0.s8 %v11113
    %v11115 = vlaneseq
    %v11116 = vshrl.u32 %v11115, 7
    %v11117 = vsub.s32 %v11114, %v11116
    %v11118 = vrot.slane %v11111, %v11117
    %v11136 = vunpack.c.l.b16 %v11079
    %v11137 = vunpack.c.l.b16 %v11080
    %v11138 = vunpack.c.l.b16 %v11081
    %v11139 = vunpack.c.l.b16 %v11082
    %v11140 = vunpack.c.l.b16 %v11083
    %v11141 = vunpack.c.l.b16 %v11084
    %v11142 = vunpack.c.l.b16 %v11085
    %v11143 = vunpack.c.l.b16 %v11086
    %v11144 = vunpack.c.l.b16 %v11087
    %v11145 = vunpack.c.l.b16 %v11088
    %v11146 = vunpack.c.l.b16 %v11089
    %v11147 = vunpack.c.l.b16 %v11090
    %v11148 = vunpack.c.l.b16 %v11091
    %v11149 = vunpack.c.l.b16 %v11092
    %v11150 = vunpack.c.l.b16 %v11093
    %v11151 = vunpack.c.l.b16 %v11094
    %v11152 = vpack.c.b16 %v11137, %v11136
    %v11153 = vpack.c.b16 %v11139, %v11138
    %v11154 = vpack.c.b16 %v11141, %v11140
    %v11155 = vpack.c.b16 %v11143, %v11142
    %v11156 = vpack.c.b16 %v11145, %v11144
    %v11157 = vpack.c.b16 %v11147, %v11146
    %v11158 = vpack.c.b16 %v11149, %v11148
    %v11159 = vpack.c.b16 %v11151, %v11150
    %11168 = vmatprep.subr.bf16.mxu0 0
    %11169 = vmatpush1.bf16.msra.mxu0 %v11159
    %11170 = vmatprep.subr.bf16.mxu0 0
    %11171 = vmatpush1.bf16.msra.mxu0 %v11158
    %11172 = vmatprep.subr.bf16.mxu0 0
    %11173 = vmatpush1.bf16.msra.mxu0 %v11157
    %11174 = vmatprep.subr.bf16.mxu0 0
    %11175 = vmatpush1.bf16.msra.mxu0 %v11156
    %11176 = vmatprep.subr.bf16.mxu0 0
    %11177 = vmatpush1.bf16.msra.mxu0 %v11155
    %11178 = vmatprep.subr.bf16.mxu0 0
    %11179 = vmatpush1.bf16.msra.mxu0 %v11154
    %11180 = vmatprep.subr.bf16.mxu0 0
    %11181 = vmatpush1.bf16.msra.mxu0 %v11153
    %11182 = vmatprep.subr.bf16.mxu0 0
    %11183 = vmatpush1.bf16.msra.mxu0 %v11152
    %11184 = vmatprep.subr.bf16.mxu0 0
    %11185 = vmatpush2.bf16.msra.mxu0 0
    %11186 = vmatprep.subr.bf16.mxu0 0
    %11187 = vmatpush2.bf16.msra.mxu0 0
    %11188 = vmatprep.subr.bf16.mxu0 0
    %11189 = vmatpush2.bf16.msra.mxu0 0
    %11190 = vmatprep.subr.bf16.mxu0 0
    %11191 = vmatpush2.bf16.msra.mxu0 0
    %11192 = vmatprep.subr.bf16.mxu0 0
    %11193 = vmatpush2.bf16.msra.mxu0 0
    %11194 = vmatprep.subr.bf16.mxu0 0
    %11195 = vmatpush2.bf16.msra.mxu0 0
    %11196 = vmatprep.subr.bf16.mxu0 0
    %11197 = vmatpush2.bf16.msra.mxu0 0
    %11198 = vmatprep.subr.bf16.mxu0 0
    %11199 = vmatpush2.bf16.msra.mxu0 0
    %11200 = vmatprep.mubr.bf16.mxu0 0
    %11201 = vmatmul.mubr.bf16.gmra.mxu0 %v11118
    %v11202 = vpop.f32.mrf.mxu0
    %v11203 = vadd.f32 0.0, %v11202
    %v11204 = vpop.f32.mrf.mxu0
    %v11205 = vpop.f32.mrf.mxu0
    %v11206 = vpop.f32.mrf.mxu0
    %11207 = vdwg.mxu0
    %v11208 = vadd.f32 %v11077, %v11203
    %s11209 = scalar_lea.vmem %s2, 1664
    %v11210 = vld [vmem:[%s11209] sm:$0xf]
    %v11211 = vld [vmem:[%s11209 + $0x4] sm:$0xf]
    %v11212 = vld [vmem:[%s11209 + $0x8] sm:$0xf]
    %v11213 = vld [vmem:[%s11209 + $0xc] sm:$0xf]
    %v11214 = vld [vmem:[%s11209 + $0x10] sm:$0xf]
    %v11215 = vld [vmem:[%s11209 + $0x14] sm:$0xf]
    %v11216 = vld [vmem:[%s11209 + $0x18] sm:$0xf]
    %v11217 = vld [vmem:[%s11209 + $0x1c] sm:$0xf]
    %v11218 = vld [vmem:[%s11209 + $0x20] sm:$0xf]
    %v11219 = vld [vmem:[%s11209 + $0x24] sm:$0xf]
    %v11220 = vld [vmem:[%s11209 + $0x28] sm:$0xf]
    %v11221 = vld [vmem:[%s11209 + $0x2c] sm:$0xf]
    %v11222 = vld [vmem:[%s11209 + $0x30] sm:$0xf]
    %v11223 = vld [vmem:[%s11209 + $0x34] sm:$0xf]
    %v11224 = vld [vmem:[%s11209 + $0x38] sm:$0xf]
    %v11225 = vld [vmem:[%s11209 + $0x3c] sm:$0xf]
    %v11226 = vcombine.low %v10906, %v10914
    %v11227 = vcombine.low %v10938, %v10946
    %v11229 = vunpack.c.l.s4 1966171168
    %v11230 = vunpack.c.0.s8 %v11229
    %v11231 = vlaneseq
    %v11232 = vshrl.u32 %v11231, 7
    %v11233 = vsub.s32 %v11230, %v11232
    %v11234 = vrot.slane %v11226, %v11233
    %v11236 = vunpack.c.l.s4 1966171168
    %v11237 = vunpack.c.0.s8 %v11236
    %v11238 = vlaneseq
    %v11239 = vshrl.u32 %v11238, 7
    %v11240 = vsub.s32 %v11237, %v11239
    %v11241 = vrot.slane %v11227, %v11240
    %v11242 = vcombine.low %v11234, %v11241
    %v11244 = vunpack.c.l.s4 1966171168
    %v11245 = vunpack.c.0.s8 %v11244
    %v11246 = vlaneseq
    %v11247 = vshrl.u32 %v11246, 7
    %v11248 = vsub.s32 %v11245, %v11247
    %v11249 = vrot.slane %v11242, %v11248
    %v11267 = vunpack.c.l.b16 %v11210
    %v11268 = vunpack.c.l.b16 %v11211
    %v11269 = vunpack.c.l.b16 %v11212
    %v11270 = vunpack.c.l.b16 %v11213
    %v11271 = vunpack.c.l.b16 %v11214
    %v11272 = vunpack.c.l.b16 %v11215
    %v11273 = vunpack.c.l.b16 %v11216
    %v11274 = vunpack.c.l.b16 %v11217
    %v11275 = vunpack.c.l.b16 %v11218
    %v11276 = vunpack.c.l.b16 %v11219
    %v11277 = vunpack.c.l.b16 %v11220
    %v11278 = vunpack.c.l.b16 %v11221
    %v11279 = vunpack.c.l.b16 %v11222
    %v11280 = vunpack.c.l.b16 %v11223
    %v11281 = vunpack.c.l.b16 %v11224
    %v11282 = vunpack.c.l.b16 %v11225
    %v11283 = vpack.c.b16 %v11268, %v11267
    %v11284 = vpack.c.b16 %v11270, %v11269
    %v11285 = vpack.c.b16 %v11272, %v11271
    %v11286 = vpack.c.b16 %v11274, %v11273
    %v11287 = vpack.c.b16 %v11276, %v11275
    %v11288 = vpack.c.b16 %v11278, %v11277
    %v11289 = vpack.c.b16 %v11280, %v11279
    %v11290 = vpack.c.b16 %v11282, %v11281
    %11299 = vmatprep.subr.bf16.mxu0 0
    %11300 = vmatpush1.bf16.msra.mxu0 %v11290
    %11301 = vmatprep.subr.bf16.mxu0 0
    %11302 = vmatpush1.bf16.msra.mxu0 %v11289
    %11303 = vmatprep.subr.bf16.mxu0 0
    %11304 = vmatpush1.bf16.msra.mxu0 %v11288
    %11305 = vmatprep.subr.bf16.mxu0 0
    %11306 = vmatpush1.bf16.msra.mxu0 %v11287
    %11307 = vmatprep.subr.bf16.mxu0 0
    %11308 = vmatpush1.bf16.msra.mxu0 %v11286
    %11309 = vmatprep.subr.bf16.mxu0 0
    %11310 = vmatpush1.bf16.msra.mxu0 %v11285
    %11311 = vmatprep.subr.bf16.mxu0 0
    %11312 = vmatpush1.bf16.msra.mxu0 %v11284
    %11313 = vmatprep.subr.bf16.mxu0 0
    %11314 = vmatpush1.bf16.msra.mxu0 %v11283
    %11315 = vmatprep.subr.bf16.mxu0 0
    %11316 = vmatpush2.bf16.msra.mxu0 0
    %11317 = vmatprep.subr.bf16.mxu0 0
    %11318 = vmatpush2.bf16.msra.mxu0 0
    %11319 = vmatprep.subr.bf16.mxu0 0
    %11320 = vmatpush2.bf16.msra.mxu0 0
    %11321 = vmatprep.subr.bf16.mxu0 0
    %11322 = vmatpush2.bf16.msra.mxu0 0
    %11323 = vmatprep.subr.bf16.mxu0 0
    %11324 = vmatpush2.bf16.msra.mxu0 0
    %11325 = vmatprep.subr.bf16.mxu0 0
    %11326 = vmatpush2.bf16.msra.mxu0 0
    %11327 = vmatprep.subr.bf16.mxu0 0
    %11328 = vmatpush2.bf16.msra.mxu0 0
    %11329 = vmatprep.subr.bf16.mxu0 0
    %11330 = vmatpush2.bf16.msra.mxu0 0
    %11331 = vmatprep.mubr.bf16.mxu0 0
    %11332 = vmatmul.mubr.bf16.gmra.mxu0 %v11249
    %v11333 = vpop.f32.mrf.mxu0
    %v11334 = vadd.f32 0.0, %v11333
    %v11335 = vpop.f32.mrf.mxu0
    %v11336 = vpop.f32.mrf.mxu0
    %v11337 = vpop.f32.mrf.mxu0
    %11338 = vdwg.mxu0
    %v11339 = vadd.f32 %v11208, %v11334
    %s11340 = scalar_lea.vmem %s3, 6
    %v11341 = vld [vmem:[%s11340] sm:$0x1]
    %v11342 = vlaneseq
    %v11343 = vshrl.u32 %v11342, 7
    %v11344 = vsub.s32 0, %v11343
    %v11345 = vrot.slane %v11341, %v11344
    %v11346 = vmul.f32 %v11339, %v11345
    %v11347 = vld [vmem:[%s11340 + $0x1] sm:$0x1]
    %v11348 = vlaneseq
    %v11349 = vshrl.u32 %v11348, 7
    %v11350 = vsub.s32 0, %v11349
    %v11351 = vrot.slane %v11347, %v11350
    %v11352 = vadd.f32 %v11346, %v11351
    %v11353 = vmax.f32 %v11352, 0.0
    %v11355 = vcombine.high %v11353, %v11353
    %v11357 = vunpack.c.l.s4 1983009808
    %v11358 = vunpack.c.0.s8 %v11357
    %v11359 = vlaneseq
    %v11360 = vshrl.u32 %v11359, 7
    %v11361 = vsub.s32 %v11358, %v11360
    %v11362 = vrot.slane %v11353, %v11361
    %v11364 = vunpack.c.l.s4 1983009808
    %v11365 = vunpack.c.0.s8 %v11364
    %v11366 = vlaneseq
    %v11367 = vshrl.u32 %v11366, 7
    %v11368 = vsub.s32 %v11365, %v11367
    %v11369 = vrot.slane %v11355, %v11368
    %v11370 = vcombine.high %v11362, %v11362
    %v11371 = vcombine.high %v11369, %v11369
    %v11376 = vrot.slane %v11362, 7
    %v11377 = vrot.slane %v11376, 2
    %v11378 = vrot.slane %v11370, 7
    %v11379 = vrot.slane %v11378, 2
    %v11380 = vrot.slane %v11369, 7
    %v11381 = vrot.slane %v11380, 2
    %v11382 = vrot.slane %v11371, 7
    %v11383 = vrot.slane %v11382, 2
    %v11388 = vmax.f32 %v11362, %v11377
    %v11389 = vmax.f32 %v11370, %v11379
    %v11390 = vmax.f32 %v11369, %v11381
    %v11391 = vmax.f32 %v11371, %v11383
    %v11392 = vmax.f32 %v11388, %v11389
    %v11393 = vmax.f32 %v11390, %v11391
    %v11394 = vadd.f32 %v11392, 0.0
    %v11395 = vadd.f32 %v11393, 0.0
    %v11396 = vld [vmem:[%s4] sm:$0xff]
    %v11397 = vld [vmem:[%s4 + $0x8] sm:$0xff]
    %v11398 = vld [vmem:[%s4 + $0x10] sm:$0xff]
    %v11399 = vld [vmem:[%s4 + $0x18] sm:$0xff]
    %v11400 = vld [vmem:[%s4 + $0x20] sm:$0xff]
    %v11401 = vld [vmem:[%s4 + $0x28] sm:$0xff]
    %v11402 = vld [vmem:[%s4 + $0x30] sm:$0xff]
    %v11403 = vld [vmem:[%s4 + $0x38] sm:$0xff]
    %v11404 = vld [vmem:[%s4 + $0x40] sm:$0xff]
    %v11405 = vld [vmem:[%s4 + $0x48] sm:$0xff]
    %v11406 = vld [vmem:[%s4 + $0x50] sm:$0xff]
    %v11407 = vld [vmem:[%s4 + $0x58] sm:$0xff]
    %v11408 = vld [vmem:[%s4 + $0x60] sm:$0xff]
    %v11409 = vld [vmem:[%s4 + $0x68] sm:$0xff]
    %v11410 = vld [vmem:[%s4 + $0x70] sm:$0xff]
    %v11411 = vld [vmem:[%s4 + $0x78] sm:$0xff]
    %v11412 = vld [vmem:[%s5] sm:$0x1]
    %v11414 = vlaneseq
    %v11415 = vshrl.u32 %v11414, 7
    %v11416 = vsub.s32 0, %v11415
    %v11417 = vrot.slane %v11412, %v11416
    %v11421 = vlaneseq
    %v11422 = vshrl.u32 %v11421, 7
    %v11423 = vsub.s32 0, %v11422
    %v11424 = vrot.slane %v11394, %v11423
    %v11425 = vlaneseq
    %v11426 = vshrl.u32 %v11425, 7
    %v11427 = vsub.s32 0, %v11426
    %v11428 = vrot.slane %v11395, %v11427
    %vm11429 = vcmask 1041409
    %v11430 = vsel %vm11429, %v11428, %v11424
    %11432 = vmatprep.subr.mxu0 0.0
    %11433 = vmatpush1.msra.mxu0 %v11411
    %11434 = vmatprep.subr.mxu0 0.0
    %11435 = vmatpush1.msra.mxu0 %v11410
    %11436 = vmatprep.subr.mxu0 0.0
    %11437 = vmatpush1.msra.mxu0 %v11409
    %11438 = vmatprep.subr.mxu0 0.0
    %11439 = vmatpush1.msra.mxu0 %v11408
    %11440 = vmatprep.subr.mxu0 0.0
    %11441 = vmatpush1.msra.mxu0 %v11407
    %11442 = vmatprep.subr.mxu0 0.0
    %11443 = vmatpush1.msra.mxu0 %v11406
    %11444 = vmatprep.subr.mxu0 0.0
    %11445 = vmatpush1.msra.mxu0 %v11405
    %11446 = vmatprep.subr.mxu0 0.0
    %11447 = vmatpush1.msra.mxu0 %v11404
    %11448 = vmatprep.subr.mxu0 0.0
    %11449 = vmatpush1.msra.mxu0 %v11403
    %11450 = vmatprep.subr.mxu0 0.0
    %11451 = vmatpush1.msra.mxu0 %v11402
    %11452 = vmatprep.subr.mxu0 0.0
    %11453 = vmatpush1.msra.mxu0 %v11401
    %11454 = vmatprep.subr.mxu0 0.0
    %11455 = vmatpush1.msra.mxu0 %v11400
    %11456 = vmatprep.subr.mxu0 0.0
    %11457 = vmatpush1.msra.mxu0 %v11399
    %11458 = vmatprep.subr.mxu0 0.0
    %11459 = vmatpush1.msra.mxu0 %v11398
    %11460 = vmatprep.subr.mxu0 0.0
    %11461 = vmatpush1.msra.mxu0 %v11397
    %11462 = vmatprep.subr.mxu0 0.0
    %11463 = vmatpush1.msra.mxu0 %v11396
    %11464 = vmatprep.subr.mxu0 0.0
    %11465 = vmatpush2.msra.mxu0 0.0
    %11466 = vmatprep.subr.mxu0 0.0
    %11467 = vmatpush2.msra.mxu0 0.0
    %11468 = vmatprep.subr.mxu0 0.0
    %11469 = vmatpush2.msra.mxu0 0.0
    %11470 = vmatprep.subr.mxu0 0.0
    %11471 = vmatpush2.msra.mxu0 0.0
    %11472 = vmatprep.subr.mxu0 0.0
    %11473 = vmatpush2.msra.mxu0 0.0
    %11474 = vmatprep.subr.mxu0 0.0
    %11475 = vmatpush2.msra.mxu0 0.0
    %11476 = vmatprep.subr.mxu0 0.0
    %11477 = vmatpush2.msra.mxu0 0.0
    %11478 = vmatprep.subr.mxu0 0.0
    %11479 = vmatpush2.msra.mxu0 0.0
    %11480 = vmatprep.subr.mxu0 0.0
    %11481 = vmatpush2.msra.mxu0 0.0
    %11482 = vmatprep.subr.mxu0 0.0
    %11483 = vmatpush2.msra.mxu0 0.0
    %11484 = vmatprep.subr.mxu0 0.0
    %11485 = vmatpush2.msra.mxu0 0.0
    %11486 = vmatprep.subr.mxu0 0.0
    %11487 = vmatpush2.msra.mxu0 0.0
    %11488 = vmatprep.subr.mxu0 0.0
    %11489 = vmatpush2.msra.mxu0 0.0
    %11490 = vmatprep.subr.mxu0 0.0
    %11491 = vmatpush2.msra.mxu0 0.0
    %11492 = vmatprep.subr.mxu0 0.0
    %11493 = vmatpush2.msra.mxu0 0.0
    %11494 = vmatprep.subr.mxu0 0.0
    %11495 = vmatpush2.msra.mxu0 0.0
    %11496 = vmatprep.mubr.f32.mxu0 0.0
    %11497 = vmatmul.mubr.f32.gmra.mxu0 %v11430
    %v11498 = vpop.f32.mrf.mxu0
    %v11499 = vadd.f32 %v11417, %v11498
    %v11500 = vpop.f32.mrf.mxu0
    %11501 = vdwg.mxu0
    %vm11502 = vcmask 33792
    %v11503 = vsel %vm11502, %v11499, -inf
    %11504 = vmax.xlane.f32.xlu0 %v11503
    %v11505 = vpop.xlane.xlu0 %11504
    %v11506 = vsub.f32 %v11499, %v11505
    %v11507 = vmul.f32 %v11506, 1.442695
    %v11508 = vpow.pop %v11507
    %v11509 = vsel %vm11502, %v11508, 0.0
    %11510 = vadd.xlane.f32.xlu0 %v11509
    %v11511 = vpop.xlane.xlu0 %11510
    %v11512 = vrcp.pop %v11511
    %v11513 = vmul.f32 %v11508, %v11512
    %11514 = vst.msk [vmem:[#allocation5] sm:$0x3] %vm11502, %v11513
    // Predicated region
    $region26: #{flower_forward.1} parent=1 // pred_check
      _
    $region27: #{flower_forward.1} parent=1 // pred_check_branch
      %11516 = sbr.rel (0) target = $region29
    $region28: #{flower_forward.1} parent=1 // pred_region
      %s11518 = ssub.s32 32, 32
      %11519 = vsyncadd [#allocation6], %s11518
      %s11521 = sshll.u32 [#allocation5], 4
      %s11522 = int_to_ptr.vmem [resolvable:$true] %s11521
      %11524 = dma.vmem_to_hbm [thread:$0]  %s11522, 32, %s6, [#allocation6]
    $region29: #{flower_forward.1} parent=1 // pred_fallthru
      _
    // Predicated region
    $region30: #{flower_forward.1} parent=1 // pred_check
      _
    $region31: #{flower_forward.1} parent=1 // pred_check_branch
      %11526 = sbr.rel (0) target = $region33
    $region32: #{flower_forward.1} parent=1 // pred_region
      %11527 = dma.done [#allocation6], 32
    $region33: #{flower_forward.1} parent=1 // pred_fallthru
      _
    %11528 = vsyncpa [#allocation6], 1

</llo_original>
